<compile_context>
chip_gen: v5e
topology: v5e:2x2
jax: 0.10.0
libtpu: 0.0.40
codegen_flags: <defaults>
</compile_context>

<pallas_src>
import functools
import math

import numpy as np

import jax
import jax.numpy as jnp
from jax import lax
from jax.experimental import pallas as pl
from jax.experimental.pallas import tpu as pltpu


FC_TK = 512    # K-tile of FC2 (= N-tile of FC1)
FC_TN = 2048   # N-tile of FC2 (2 tiles -> maps onto v7x's 2 TensorCores)


# ----------------------------------------------------------------------------
# Kernel 1: fused conv stack (conv3x3 + bias + ReLU + maxpool2) x num_layers
# ----------------------------------------------------------------------------
def _conv_stack_kernel(x_ref, *refs, num_layers):
    layer_refs = refs[:3 * num_layers]          # (w3, bias, gather) per layer
    o_ref = refs[3 * num_layers]
    z_refs = refs[3 * num_layers + 1:]          # per-layer VMEM scratch

    a = x_ref[...]                              # (N*H*W, Cin) bf16
    for l in range(num_layers):
        w_ref, b_ref, g_ref = layer_refs[3 * l: 3 * l + 3]
        z_ref = z_refs[l]
        nhw = a.shape[0]
        # 9 per-tap matmuls, staged into Z = [z_0; z_1; ...; z_8]  (f32)
        for t in range(9):
            z_ref[t * nhw:(t + 1) * nhw, :] = jnp.dot(
                a, w_ref[t], preferred_element_type=jnp.float32)
        z = z_ref[...]                          # (9*NHW, Cout) f32
        # 4 pool-phase gathers (0/1 matrices): shift + zero-pad + phase select
        c = jnp.dot(g_ref[0], z, preferred_element_type=jnp.float32)
        for q in range(1, 4):
            c = jnp.maximum(
                c, jnp.dot(g_ref[q], z, preferred_element_type=jnp.float32))
        # relu(max_q(conv_q) + b) == maxpool(relu(conv + b))
        a = jnp.maximum(c + b_ref[...], 0.0).astype(jnp.bfloat16)
    o_ref[...] = a                              # (N*Ho*Wo, Cout_last) bf16


def conv_stack(x2d, conv_params):
    """Single fused pallas_call over the whole conv stack. x2d: (N*H*W, Cin)."""
    num_layers = len(conv_params)
    args = [x2d]
    scratch = []
    flops = 0
    bytes_accessed = x2d.size * 2
    nhw = x2d.shape[0]
    for (w3, b2, g) in conv_params:
        cin_p, cout = w3.shape[1], w3.shape[2]
        p = g.shape[1]
        args += [w3, b2, g]
        scratch.append(pltpu.VMEM((9 * nhw, cout), jnp.float32))
        flops += 2 * 9 * nhw * cin_p * cout + 2 * 4 * p * 9 * nhw * cout
        bytes_accessed += w3.size * 2 + b2.size * 4 + g.size * 4
        nhw = p
    cout_last = conv_params[-1][0].shape[2]
    bytes_accessed += nhw * cout_last * 2

    kernel = functools.partial(_conv_stack_kernel, num_layers=num_layers)
    return pl.pallas_call(
        kernel,
        out_shape=jax.ShapeDtypeStruct((nhw, cout_last), jnp.bfloat16),
        scratch_shapes=tuple(scratch),
        cost_estimate=pl.CostEstimate(flops=int(flops), transcendentals=0,
                                      bytes_accessed=int(bytes_accessed)),
    )(*args)


# ----------------------------------------------------------------------------
# Kernel 2: fused classifier  relu(relu(x @ W1 + b1) @ W2 + b2)
# ----------------------------------------------------------------------------
def _fused_fc_kernel(x_ref, w1_ref, b1_ref, w2_ref, b2_ref, o_ref, acc_ref):
    k = pl.program_id(1)

    @pl.when(k == 0)
    def _():
        acc_ref[...] = jnp.zeros_like(acc_ref)

    # h slice for this K-tile of FC2 (= N-tile of FC1); h never leaves VMEM.
    h = jnp.dot(x_ref[...], w1_ref[...], preferred_element_type=jnp.float32)
    h = jnp.maximum(h + b1_ref[...], 0.0).astype(jnp.bfloat16)
    acc_ref[...] += jnp.dot(h, w2_ref[...], preferred_element_type=jnp.float32)

    @pl.when(k == pl.num_programs(1) - 1)
    def _():
        o_ref[...] = jnp.maximum(acc_ref[...] + b2_ref[...], 0.0
                                 ).astype(o_ref.dtype)


def fused_classifier(feat, fc):
    w1t, b1, w2t, b2 = fc
    m = feat.shape[0]
    kt, k1, tk = w1t.shape               # (8, 512, 512)
    jt, _, _, tn = w2t.shape             # (2, 8, 512, 2048)
    n_out = jt * tn

    flops = 2 * m * k1 * tk * kt * jt + 2 * m * tk * tn * kt * jt
    bytes_accessed = ((jt * w1t.size + w2t.size) * 2
                      + (b1.size + b2.size) * 4 + jt * feat.size * 2
                      + m * n_out * 4)

    return pl.pallas_call(
        _fused_fc_kernel,
        out_shape=jax.ShapeDtypeStruct((m, n_out), jnp.float32),
        grid_spec=pltpu.PrefetchScalarGridSpec(
            num_scalar_prefetch=0,
            grid=(jt, kt),
            in_specs=[
                pl.BlockSpec((m, k1), lambda j, k: (0, 0)),            # x (resident)
                pl.BlockSpec((None, k1, tk), lambda j, k: (k, 0, 0)),  # W1 tile
                pl.BlockSpec((1, tk), lambda j, k: (0, k)),            # b1 tile
                pl.BlockSpec((None, None, tk, tn),
                             lambda j, k: (j, k, 0, 0)),               # W2 tile
                pl.BlockSpec((1, tn), lambda j, k: (0, j)),            # b2 tile
            ],
            out_specs=pl.BlockSpec((m, tn), lambda j, k: (0, j)),
            scratch_shapes=[pltpu.VMEM((m, tn), jnp.float32)],
        ),
        compiler_params=pltpu.CompilerParams(
            # "parallel" N axis -> megacore-sharded on v7x (2 TCs), harmless
            # on single-TC v5e/v6e; K axis carries the accumulator.
            dimension_semantics=("parallel", "arbitrary"),
            # ~5 MiB actual usage; explicit limit keeps v5e's default scoped
            # VMEM budget safe and leaves headroom on v7x's 64 MiB physical.
            vmem_limit_bytes=32 * 1024 * 1024,
        ),
        cost_estimate=pl.CostEstimate(flops=int(flops), transcendentals=0,
                                      bytes_accessed=int(bytes_accessed)),
    )(feat.astype(jnp.bfloat16), w1t, b1, w2t, b2)


# ----------------------------------------------------------------------------
# Parameter construction (deterministic, mirrors the module __init__)
# ----------------------------------------------------------------------------
def init_params(key):
    conv_cfg = [(3, 32), (32, 128), (128, 512)]
    params = {"convs": [], "fcs": []}
    for cin, cout in conv_cfg:
        key, kw = jax.random.split(key)
        # nn.Conv2d init in VGG_mid: normal(0, sqrt(2/(k*k*out_ch))), bias = 0
        std = math.sqrt(2.0 / (3 * 3 * cout))
        w = std * jax.random.normal(kw, (cout, cin, 3, 3), dtype=jnp.float32)
        b = jnp.zeros((cout,), dtype=jnp.float32)
        params["convs"].append((w, b))
    for fin, fout in [(512, 4096), (4096, 4096)]:
        key, kw, kb = jax.random.split(key, 3)
        bound = 1.0 / math.sqrt(fin)
        w = jax.random.uniform(kw, (fin, fout), jnp.float32, -bound, bound)
        b = jax.random.uniform(kb, (fout,), jnp.float32, -bound, bound)
        params["fcs"].append((w, b))
    return params


def _pool_gather_matrices(n, h, w):
    """(4, P, 9*N*H*W) 0/1 matrices: phase q selects, for each pooled pixel
    and each 3x3 tap t, the row of the per-tap conv partial it needs (zero
    row == implicit zero padding at the border)."""
    ho, wo = h // 2, w // 2
    p, nhw = n * ho * wo, n * h * w
    g = np.zeros((4, p, 9 * nhw), dtype=np.float32)
    for q in range(4):
        pi, pj = divmod(q, 2)
        for nb in range(n):
            for io in range(ho):
                for jo in range(wo):
                    prow = (nb * ho + io) * wo + jo
                    for dy in range(3):
                        for dx in range(3):
                            i = 2 * io + pi + dy - 1
                            j = 2 * jo + pj + dx - 1
                            if 0 <= i < h and 0 <= j < w:
                                r = (nb * h + i) * w + j
                                g[q, prow, (dy * 3 + dx) * nhw + r] = 1.0
    return jnp.asarray(g)


def prepare_params(params, *, batch, in_hw):
    """One-time layout + dtype prep (NOT per forward call)."""
    kp = {"convs": []}
    h = w = in_hw
    for (wt, bt) in params["convs"]:
        cout, cin = wt.shape[0], wt.shape[1]
        cin_p = -(-cin // 8) * 8                       # pad tiny Cin (3 -> 8)
        w3 = jnp.transpose(wt, (2, 3, 1, 0)).reshape(9, cin, cout)   # (t,ci,co)
        w3 = jnp.pad(w3, ((0, 0), (0, cin_p - cin), (0, 0))).astype(jnp.bfloat16)
        b2 = bt.reshape(1, cout).astype(jnp.float32)
        g = _pool_gather_matrices(batch, h, w)
        kp["convs"].append((w3, b2, g))
        h, w = h // 2, w // 2

    (w1, b1), (w2, b2f) = params["fcs"]
    k1, n1 = w1.shape
    k2, n2 = w2.shape
    kt, jt = n1 // FC_TK, n2 // FC_TN
    assert k2 == n1 == kt * FC_TK and n2 == jt * FC_TN
    # Pre-tiled, contiguous per-grid-step weight blocks (one clean DMA each).
    w1t = jnp.transpose(w1.reshape(k1, kt, FC_TK), (1, 0, 2)).astype(jnp.bfloat16)
    w2t = jnp.transpose(w2.reshape(kt, FC_TK, jt, FC_TN),
                        (2, 0, 1, 3)).astype(jnp.bfloat16)
    kp["fc"] = (w1t, b1.reshape(1, -1).astype(jnp.float32),
                w2t, b2f.reshape(1, -1).astype(jnp.float32))
    return kp


# ----------------------------------------------------------------------------
# Forward passes
# ----------------------------------------------------------------------------
def vgg_mid_forward(x_nchw, kp):
    x = jnp.transpose(x_nchw, (0, 2, 3, 1)).astype(jnp.bfloat16)   # NCHW->NHWC
    n, h, w, c = x.shape
    x2d = x.reshape(n * h * w, c)
    cin_p = kp["convs"][0][0].shape[1]
    if cin_p > c:
        x2d = jnp.pad(x2d, ((0, 0), (0, cin_p - c)))    # zero channel padding
    feat = conv_stack(x2d, kp["convs"])                 # (n, 512) bf16 (1x1 spatial)
    assert feat.shape == (n, 512), feat.shape           # matches quan_Linear(512, 4096)
    # classifier: Linear -> ReLU -> Dropout -> Linear -> ReLU -> Dropout
    # (Dropout = identity in eval/inference semantics; self.linear unused)
    return fused_classifier(feat, kp["fc"])             # (n, 4096) f32


def vgg_mid_reference(x_nchw, params):
    """Pure-JAX/XLA reference mirroring the kernel's bf16/f32 dtype pipeline."""
    x = jnp.transpose(x_nchw, (0, 2, 3, 1)).astype(jnp.bfloat16)
    for (wt, bt) in params["convs"]:
        cout = wt.shape[0]
        w4 = jnp.transpose(wt, (2, 3, 1, 0)).astype(jnp.bfloat16)    # HWIO
        y = lax.conv_general_dilated(
            x, w4, window_strides=(1, 1), padding="SAME",
            dimension_numbers=("NHWC", "HWIO", "NHWC"),
            preferred_element_type=jnp.float32)
        y = jnp.maximum(y + bt.reshape(1, 1, 1, cout), 0.0)
        n, h, w, c = y.shape
        y = y.reshape(n, h // 2, 2, w // 2, 2, c).max(axis=(2, 4))
        x = y.astype(jnp.bfloat16)
    feat = x.reshape(x.shape[0], -1)
    w1, b1 = params["fcs"][0]
    h1 = jnp.maximum(
        jnp.dot(feat, w1.astype(jnp.bfloat16),
                preferred_element_type=jnp.float32) + b1, 0.0).astype(jnp.bfloat16)
    w2, b2 = params["fcs"][1]
    out = jnp.maximum(
        jnp.dot(h1, w2.astype(jnp.bfloat16),
                preferred_element_type=jnp.float32) + b2, 0.0)
    return out


# ----------------------------------------------------------------------------
if __name__ == "__main__":
    key = jax.random.PRNGKey(0)
    key, kx = jax.random.split(key)
    # Small NCHW input (PyTorch convention): batch=2, 3 channels, 8x8 spatial
    # (three 2x2 pools -> 1x1 spatial, so flatten dim = 512 = classifier in).
    x = jax.random.normal(kx, (2, 3, 8, 8), dtype=jnp.float32)
    params = init_params(key)
    kparams = prepare_params(params, batch=2, in_hw=8)

    fwd = jax.jit(vgg_mid_forward)
    out = jax.block_until_ready(fwd(x, kparams))

    assert out.shape == (2, 4096), out.shape
    assert bool(jnp.all(jnp.isfinite(out)))
    ref = vgg_mid_reference(x, params)
    assert bool(jnp.allclose(out, ref, rtol=2e-2, atol=2e-3)), \
        float(jnp.max(jnp.abs(out - ref)))

    print("KERNEL_OK")
</pallas_src>

<mosaic_0001>
module attributes {stable_mosaic.version = 11 : i64} {
  func.func @_conv_stack_kernel(%arg0: memref<128x8xbf16, #tpu.memory_space<vmem>>, %arg1: memref<9x8x32xbf16, #tpu.memory_space<vmem>>, %arg2: memref<1x32xf32, #tpu.memory_space<vmem>>, %arg3: memref<4x32x1152xf32, #tpu.memory_space<vmem>>, %arg4: memref<9x32x128xbf16, #tpu.memory_space<vmem>>, %arg5: memref<1x128xf32, #tpu.memory_space<vmem>>, %arg6: memref<4x8x288xf32, #tpu.memory_space<vmem>>, %arg7: memref<9x128x512xbf16, #tpu.memory_space<vmem>>, %arg8: memref<1x512xf32, #tpu.memory_space<vmem>>, %arg9: memref<4x2x72xf32, #tpu.memory_space<vmem>>, %arg10: memref<2x512xbf16, #tpu.memory_space<vmem>>, %arg11: memref<1152x32xf32, #tpu.memory_space<vmem>>, %arg12: memref<288x128xf32, #tpu.memory_space<vmem>>, %arg13: memref<72x512xf32, #tpu.memory_space<vmem>>) attributes {dimension_semantics = [], scalar_prefetch = 0 : i64, scratch_operands = 3 : i64, tpu.core_type = #tpu.core_type<tc>} {
    %c0 = arith.constant 0 : index
    %c0_0 = arith.constant 0 : index
    %0 = vector.load %arg0[%c0, %c0_0] : memref<128x8xbf16, #tpu.memory_space<vmem>>, vector<128x8xbf16>
    %c0_1 = arith.constant 0 : index
    %c0_2 = arith.constant 0 : index
    %c0_3 = arith.constant 0 : index
    %1 = vector.load %arg1[%c0_1, %c0_2, %c0_3] : memref<9x8x32xbf16, #tpu.memory_space<vmem>>, vector<1x8x32xbf16>
    %2 = vector.shape_cast %1 : vector<1x8x32xbf16> to vector<8x32xbf16>
    %cst = arith.constant dense<0.000000e+00> : vector<128x32xf32>
    %3 = tpu.matmul %0, %2, %cst {dimension_numbers = #tpu.dot_dimension_numbers<[1], [0], [0], [1], [0, 0, 1, 1], [], []>} : vector<128x8xbf16>, vector<8x32xbf16>, vector<128x32xf32> -> vector<128x32xf32>
    %c0_4 = arith.constant 0 : index
    %c0_5 = arith.constant 0 : index
    %4 = vector.load %arg11[%c0_4, %c0_5] : memref<1152x32xf32, #tpu.memory_space<vmem>>, vector<128x32xf32>
    tpu.vector_store %arg11[%c0_4, %c0_5], %3 {strides = array<i32>} : memref<1152x32xf32, #tpu.memory_space<vmem>>, vector<128x32xf32>,
    %c1 = arith.constant 1 : index
    %c0_6 = arith.constant 0 : index
    %c0_7 = arith.constant 0 : index
    %5 = vector.load %arg1[%c1, %c0_6, %c0_7] : memref<9x8x32xbf16, #tpu.memory_space<vmem>>, vector<1x8x32xbf16>
    %6 = vector.shape_cast %5 : vector<1x8x32xbf16> to vector<8x32xbf16>
    %cst_8 = arith.constant dense<0.000000e+00> : vector<128x32xf32>
    %7 = tpu.matmul %0, %6, %cst_8 {dimension_numbers = #tpu.dot_dimension_numbers<[1], [0], [0], [1], [0, 0, 1, 1], [], []>} : vector<128x8xbf16>, vector<8x32xbf16>, vector<128x32xf32> -> vector<128x32xf32>
    %c128 = arith.constant 128 : index
    %c0_9 = arith.constant 0 : index
    %8 = vector.load %arg11[%c128, %c0_9] : memref<1152x32xf32, #tpu.memory_space<vmem>>, vector<128x32xf32>
    tpu.vector_store %arg11[%c128, %c0_9], %7 {strides = array<i32>} : memref<1152x32xf32, #tpu.memory_space<vmem>>, vector<128x32xf32>,
    %c2 = arith.constant 2 : index
    %c0_10 = arith.constant 0 : index
    %c0_11 = arith.constant 0 : index
    %9 = vector.load %arg1[%c2, %c0_10, %c0_11] : memref<9x8x32xbf16, #tpu.memory_space<vmem>>, vector<1x8x32xbf16>
    %10 = vector.shape_cast %9 : vector<1x8x32xbf16> to vector<8x32xbf16>
    %cst_12 = arith.constant dense<0.000000e+00> : vector<128x32xf32>
    %11 = tpu.matmul %0, %10, %cst_12 {dimension_numbers = #tpu.dot_dimension_numbers<[1], [0], [0], [1], [0, 0, 1, 1], [], []>} : vector<128x8xbf16>, vector<8x32xbf16>, vector<128x32xf32> -> vector<128x32xf32>
    %c256 = arith.constant 256 : index
    %c0_13 = arith.constant 0 : index
    %12 = vector.load %arg11[%c256, %c0_13] : memref<1152x32xf32, #tpu.memory_space<vmem>>, vector<128x32xf32>
    tpu.vector_store %arg11[%c256, %c0_13], %11 {strides = array<i32>} : memref<1152x32xf32, #tpu.memory_space<vmem>>, vector<128x32xf32>,
    %c3 = arith.constant 3 : index
    %c0_14 = arith.constant 0 : index
    %c0_15 = arith.constant 0 : index
    %13 = vector.load %arg1[%c3, %c0_14, %c0_15] : memref<9x8x32xbf16, #tpu.memory_space<vmem>>, vector<1x8x32xbf16>
    %14 = vector.shape_cast %13 : vector<1x8x32xbf16> to vector<8x32xbf16>
    %cst_16 = arith.constant dense<0.000000e+00> : vector<128x32xf32>
    %15 = tpu.matmul %0, %14, %cst_16 {dimension_numbers = #tpu.dot_dimension_numbers<[1], [0], [0], [1], [0, 0, 1, 1], [], []>} : vector<128x8xbf16>, vector<8x32xbf16>, vector<128x32xf32> -> vector<128x32xf32>
    %c384 = arith.constant 384 : index
    %c0_17 = arith.constant 0 : index
    %16 = vector.load %arg11[%c384, %c0_17] : memref<1152x32xf32, #tpu.memory_space<vmem>>, vector<128x32xf32>
    tpu.vector_store %arg11[%c384, %c0_17], %15 {strides = array<i32>} : memref<1152x32xf32, #tpu.memory_space<vmem>>, vector<128x32xf32>,
    %c4 = arith.constant 4 : index
    %c0_18 = arith.constant 0 : index
    %c0_19 = arith.constant 0 : index
    %17 = vector.load %arg1[%c4, %c0_18, %c0_19] : memref<9x8x32xbf16, #tpu.memory_space<vmem>>, vector<1x8x32xbf16>
    %18 = vector.shape_cast %17 : vector<1x8x32xbf16> to vector<8x32xbf16>
    %cst_20 = arith.constant dense<0.000000e+00> : vector<128x32xf32>
    %19 = tpu.matmul %0, %18, %cst_20 {dimension_numbers = #tpu.dot_dimension_numbers<[1], [0], [0], [1], [0, 0, 1, 1], [], []>} : vector<128x8xbf16>, vector<8x32xbf16>, vector<128x32xf32> -> vector<128x32xf32>
    %c512 = arith.constant 512 : index
    %c0_21 = arith.constant 0 : index
    %20 = vector.load %arg11[%c512, %c0_21] : memref<1152x32xf32, #tpu.memory_space<vmem>>, vector<128x32xf32>
    tpu.vector_store %arg11[%c512, %c0_21], %19 {strides = array<i32>} : memref<1152x32xf32, #tpu.memory_space<vmem>>, vector<128x32xf32>,
    %c5 = arith.constant 5 : index
    %c0_22 = arith.constant 0 : index
    %c0_23 = arith.constant 0 : index
    %21 = vector.load %arg1[%c5, %c0_22, %c0_23] : memref<9x8x32xbf16, #tpu.memory_space<vmem>>, vector<1x8x32xbf16>
    %22 = vector.shape_cast %21 : vector<1x8x32xbf16> to vector<8x32xbf16>
    %cst_24 = arith.constant dense<0.000000e+00> : vector<128x32xf32>
    %23 = tpu.matmul %0, %22, %cst_24 {dimension_numbers = #tpu.dot_dimension_numbers<[1], [0], [0], [1], [0, 0, 1, 1], [], []>} : vector<128x8xbf16>, vector<8x32xbf16>, vector<128x32xf32> -> vector<128x32xf32>
    %c640 = arith.constant 640 : index
    %c0_25 = arith.constant 0 : index
    %24 = vector.load %arg11[%c640, %c0_25] : memref<1152x32xf32, #tpu.memory_space<vmem>>, vector<128x32xf32>
    tpu.vector_store %arg11[%c640, %c0_25], %23 {strides = array<i32>} : memref<1152x32xf32, #tpu.memory_space<vmem>>, vector<128x32xf32>,
    %c6 = arith.constant 6 : index
    %c0_26 = arith.constant 0 : index
    %c0_27 = arith.constant 0 : index
    %25 = vector.load %arg1[%c6, %c0_26, %c0_27] : memref<9x8x32xbf16, #tpu.memory_space<vmem>>, vector<1x8x32xbf16>
    %26 = vector.shape_cast %25 : vector<1x8x32xbf16> to vector<8x32xbf16>
    %cst_28 = arith.constant dense<0.000000e+00> : vector<128x32xf32>
    %27 = tpu.matmul %0, %26, %cst_28 {dimension_numbers = #tpu.dot_dimension_numbers<[1], [0], [0], [1], [0, 0, 1, 1], [], []>} : vector<128x8xbf16>, vector<8x32xbf16>, vector<128x32xf32> -> vector<128x32xf32>
    %c768 = arith.constant 768 : index
    %c0_29 = arith.constant 0 : index
    %28 = vector.load %arg11[%c768, %c0_29] : memref<1152x32xf32, #tpu.memory_space<vmem>>, vector<128x32xf32>
    tpu.vector_store %arg11[%c768, %c0_29], %27 {strides = array<i32>} : memref<1152x32xf32, #tpu.memory_space<vmem>>, vector<128x32xf32>,
    %c7 = arith.constant 7 : index
    %c0_30 = arith.constant 0 : index
    %c0_31 = arith.constant 0 : index
    %29 = vector.load %arg1[%c7, %c0_30, %c0_31] : memref<9x8x32xbf16, #tpu.memory_space<vmem>>, vector<1x8x32xbf16>
    %30 = vector.shape_cast %29 : vector<1x8x32xbf16> to vector<8x32xbf16>
    %cst_32 = arith.constant dense<0.000000e+00> : vector<128x32xf32>
    %31 = tpu.matmul %0, %30, %cst_32 {dimension_numbers = #tpu.dot_dimension_numbers<[1], [0], [0], [1], [0, 0, 1, 1], [], []>} : vector<128x8xbf16>, vector<8x32xbf16>, vector<128x32xf32> -> vector<128x32xf32>
    %c896 = arith.constant 896 : index
    %c0_33 = arith.constant 0 : index
    %32 = vector.load %arg11[%c896, %c0_33] : memref<1152x32xf32, #tpu.memory_space<vmem>>, vector<128x32xf32>
    tpu.vector_store %arg11[%c896, %c0_33], %31 {strides = array<i32>} : memref<1152x32xf32, #tpu.memory_space<vmem>>, vector<128x32xf32>,
    %c8 = arith.constant 8 : index
    %c0_34 = arith.constant 0 : index
    %c0_35 = arith.constant 0 : index
    %33 = vector.load %arg1[%c8, %c0_34, %c0_35] : memref<9x8x32xbf16, #tpu.memory_space<vmem>>, vector<1x8x32xbf16>
    %34 = vector.shape_cast %33 : vector<1x8x32xbf16> to vector<8x32xbf16>
    %cst_36 = arith.constant dense<0.000000e+00> : vector<128x32xf32>
    %35 = tpu.matmul %0, %34, %cst_36 {dimension_numbers = #tpu.dot_dimension_numbers<[1], [0], [0], [1], [0, 0, 1, 1], [], []>} : vector<128x8xbf16>, vector<8x32xbf16>, vector<128x32xf32> -> vector<128x32xf32>
    %c1024 = arith.constant 1024 : index
    %c0_37 = arith.constant 0 : index
    %36 = vector.load %arg11[%c1024, %c0_37] : memref<1152x32xf32, #tpu.memory_space<vmem>>, vector<128x32xf32>
    tpu.vector_store %arg11[%c1024, %c0_37], %35 {strides = array<i32>} : memref<1152x32xf32, #tpu.memory_space<vmem>>, vector<128x32xf32>,
    %c0_38 = arith.constant 0 : index
    %c0_39 = arith.constant 0 : index
    %37 = vector.load %arg11[%c0_38, %c0_39] : memref<1152x32xf32, #tpu.memory_space<vmem>>, vector<1152x32xf32>
    %c0_40 = arith.constant 0 : index
    %c0_41 = arith.constant 0 : index
    %c0_42 = arith.constant 0 : index
    %38 = vector.load %arg3[%c0_40, %c0_41, %c0_42] : memref<4x32x1152xf32, #tpu.memory_space<vmem>>, vector<1x32x1152xf32>
    %39 = vector.shape_cast %38 : vector<1x32x1152xf32> to vector<32x1152xf32>
    %cst_43 = arith.constant dense<0.000000e+00> : vector<32x32xf32>
    %40 = tpu.matmul %39, %37, %cst_43 {dimension_numbers = #tpu.dot_dimension_numbers<[1], [0], [0], [1], [0, 0, 1, 1], [], []>} : vector<32x1152xf32>, vector<1152x32xf32>, vector<32x32xf32> -> vector<32x32xf32>
    %c1_44 = arith.constant 1 : index
    %c0_45 = arith.constant 0 : index
    %c0_46 = arith.constant 0 : index
    %41 = vector.load %arg3[%c1_44, %c0_45, %c0_46] : memref<4x32x1152xf32, #tpu.memory_space<vmem>>, vector<1x32x1152xf32>
    %42 = vector.shape_cast %41 : vector<1x32x1152xf32> to vector<32x1152xf32>
    %cst_47 = arith.constant dense<0.000000e+00> : vector<32x32xf32>
    %43 = tpu.matmul %42, %37, %cst_47 {dimension_numbers = #tpu.dot_dimension_numbers<[1], [0], [0], [1], [0, 0, 1, 1], [], []>} : vector<32x1152xf32>, vector<1152x32xf32>, vector<32x32xf32> -> vector<32x32xf32>
    %44 = arith.maximumf %40, %43 : vector<32x32xf32>
    %c2_48 = arith.constant 2 : index
    %c0_49 = arith.constant 0 : index
    %c0_50 = arith.constant 0 : index
    %45 = vector.load %arg3[%c2_48, %c0_49, %c0_50] : memref<4x32x1152xf32, #tpu.memory_space<vmem>>, vector<1x32x1152xf32>
    %46 = vector.shape_cast %45 : vector<1x32x1152xf32> to vector<32x1152xf32>
    %cst_51 = arith.constant dense<0.000000e+00> : vector<32x32xf32>
    %47 = tpu.matmul %46, %37, %cst_51 {dimension_numbers = #tpu.dot_dimension_numbers<[1], [0], [0], [1], [0, 0, 1, 1], [], []>} : vector<32x1152xf32>, vector<1152x32xf32>, vector<32x32xf32> -> vector<32x32xf32>
    %48 = arith.maximumf %44, %47 : vector<32x32xf32>
    %c3_52 = arith.constant 3 : index
    %c0_53 = arith.constant 0 : index
    %c0_54 = arith.constant 0 : index
    %49 = vector.load %arg3[%c3_52, %c0_53, %c0_54] : memref<4x32x1152xf32, #tpu.memory_space<vmem>>, vector<1x32x1152xf32>
    %50 = vector.shape_cast %49 : vector<1x32x1152xf32> to vector<32x1152xf32>
    %cst_55 = arith.constant dense<0.000000e+00> : vector<32x32xf32>
    %51 = tpu.matmul %50, %37, %cst_55 {dimension_numbers = #tpu.dot_dimension_numbers<[1], [0], [0], [1], [0, 0, 1, 1], [], []>} : vector<32x1152xf32>, vector<1152x32xf32>, vector<32x32xf32> -> vector<32x32xf32>
    %52 = arith.maximumf %48, %51 : vector<32x32xf32>
    %c0_56 = arith.constant 0 : index
    %c0_57 = arith.constant 0 : index
    %53 = vector.load %arg2[%c0_56, %c0_57] : memref<1x32xf32, #tpu.memory_space<vmem>>, vector<1x32xf32>
    %54 = vector.broadcast %53 : vector<1x32xf32> to vector<32x32xf32>
    %55 = arith.addf %52, %54 : vector<32x32xf32>
    %cst_58 = arith.constant 0.000000e+00 : f32
    %56 = vector.broadcast %cst_58 : f32 to vector<32x32xf32>
    %57 = arith.maximumf %55, %56 : vector<32x32xf32>
    %58 = arith.truncf %57 : vector<32x32xf32> to vector<32x32xbf16>
    %c0_59 = arith.constant 0 : index
    %c0_60 = arith.constant 0 : index
    %c0_61 = arith.constant 0 : index
    %59 = vector.load %arg4[%c0_59, %c0_60, %c0_61] : memref<9x32x128xbf16, #tpu.memory_space<vmem>>, vector<1x32x128xbf16>
    %60 = vector.shape_cast %59 : vector<1x32x128xbf16> to vector<32x128xbf16>
    %cst_62 = arith.constant dense<0.000000e+00> : vector<32x128xf32>
    %61 = tpu.matmul %58, %60, %cst_62 {dimension_numbers = #tpu.dot_dimension_numbers<[1], [0], [0], [1], [0, 0, 1, 1], [], []>} : vector<32x32xbf16>, vector<32x128xbf16>, vector<32x128xf32> -> vector<32x128xf32>
    %c0_63 = arith.constant 0 : index
    %c0_64 = arith.constant 0 : index
    %62 = vector.load %arg12[%c0_63, %c0_64] : memref<288x128xf32, #tpu.memory_space<vmem>>, vector<32x128xf32>
    tpu.vector_store %arg12[%c0_63, %c0_64], %61 {strides = array<i32>} : memref<288x128xf32, #tpu.memory_space<vmem>>, vector<32x128xf32>,
    %c1_65 = arith.constant 1 : index
    %c0_66 = arith.constant 0 : index
    %c0_67 = arith.constant 0 : index
    %63 = vector.load %arg4[%c1_65, %c0_66, %c0_67] : memref<9x32x128xbf16, #tpu.memory_space<vmem>>, vector<1x32x128xbf16>
    %64 = vector.shape_cast %63 : vector<1x32x128xbf16> to vector<32x128xbf16>
    %cst_68 = arith.constant dense<0.000000e+00> : vector<32x128xf32>
    %65 = tpu.matmul %58, %64, %cst_68 {dimension_numbers = #tpu.dot_dimension_numbers<[1], [0], [0], [1], [0, 0, 1, 1], [], []>} : vector<32x32xbf16>, vector<32x128xbf16>, vector<32x128xf32> -> vector<32x128xf32>
    %c32 = arith.constant 32 : index
    %c0_69 = arith.constant 0 : index
    %66 = vector.load %arg12[%c32, %c0_69] : memref<288x128xf32, #tpu.memory_space<vmem>>, vector<32x128xf32>
    tpu.vector_store %arg12[%c32, %c0_69], %65 {strides = array<i32>} : memref<288x128xf32, #tpu.memory_space<vmem>>, vector<32x128xf32>,
    %c2_70 = arith.constant 2 : index
    %c0_71 = arith.constant 0 : index
    %c0_72 = arith.constant 0 : index
    %67 = vector.load %arg4[%c2_70, %c0_71, %c0_72] : memref<9x32x128xbf16, #tpu.memory_space<vmem>>, vector<1x32x128xbf16>
    %68 = vector.shape_cast %67 : vector<1x32x128xbf16> to vector<32x128xbf16>
    %cst_73 = arith.constant dense<0.000000e+00> : vector<32x128xf32>
    %69 = tpu.matmul %58, %68, %cst_73 {dimension_numbers = #tpu.dot_dimension_numbers<[1], [0], [0], [1], [0, 0, 1, 1], [], []>} : vector<32x32xbf16>, vector<32x128xbf16>, vector<32x128xf32> -> vector<32x128xf32>
    %c64 = arith.constant 64 : index
    %c0_74 = arith.constant 0 : index
    %70 = vector.load %arg12[%c64, %c0_74] : memref<288x128xf32, #tpu.memory_space<vmem>>, vector<32x128xf32>
    tpu.vector_store %arg12[%c64, %c0_74], %69 {strides = array<i32>} : memref<288x128xf32, #tpu.memory_space<vmem>>, vector<32x128xf32>,
    %c3_75 = arith.constant 3 : index
    %c0_76 = arith.constant 0 : index
    %c0_77 = arith.constant 0 : index
    %71 = vector.load %arg4[%c3_75, %c0_76, %c0_77] : memref<9x32x128xbf16, #tpu.memory_space<vmem>>, vector<1x32x128xbf16>
    %72 = vector.shape_cast %71 : vector<1x32x128xbf16> to vector<32x128xbf16>
    %cst_78 = arith.constant dense<0.000000e+00> : vector<32x128xf32>
    %73 = tpu.matmul %58, %72, %cst_78 {dimension_numbers = #tpu.dot_dimension_numbers<[1], [0], [0], [1], [0, 0, 1, 1], [], []>} : vector<32x32xbf16>, vector<32x128xbf16>, vector<32x128xf32> -> vector<32x128xf32>
    %c96 = arith.constant 96 : index
    %c0_79 = arith.constant 0 : index
    %74 = vector.load %arg12[%c96, %c0_79] : memref<288x128xf32, #tpu.memory_space<vmem>>, vector<32x128xf32>
    tpu.vector_store %arg12[%c96, %c0_79], %73 {strides = array<i32>} : memref<288x128xf32, #tpu.memory_space<vmem>>, vector<32x128xf32>,
    %c4_80 = arith.constant 4 : index
    %c0_81 = arith.constant 0 : index
    %c0_82 = arith.constant 0 : index
    %75 = vector.load %arg4[%c4_80, %c0_81, %c0_82] : memref<9x32x128xbf16, #tpu.memory_space<vmem>>, vector<1x32x128xbf16>
    %76 = vector.shape_cast %75 : vector<1x32x128xbf16> to vector<32x128xbf16>
    %cst_83 = arith.constant dense<0.000000e+00> : vector<32x128xf32>
    %77 = tpu.matmul %58, %76, %cst_83 {dimension_numbers = #tpu.dot_dimension_numbers<[1], [0], [0], [1], [0, 0, 1, 1], [], []>} : vector<32x32xbf16>, vector<32x128xbf16>, vector<32x128xf32> -> vector<32x128xf32>
    %c128_84 = arith.constant 128 : index
    %c0_85 = arith.constant 0 : index
    %78 = vector.load %arg12[%c128_84, %c0_85] : memref<288x128xf32, #tpu.memory_space<vmem>>, vector<32x128xf32>
    tpu.vector_store %arg12[%c128_84, %c0_85], %77 {strides = array<i32>} : memref<288x128xf32, #tpu.memory_space<vmem>>, vector<32x128xf32>,
    %c5_86 = arith.constant 5 : index
    %c0_87 = arith.constant 0 : index
    %c0_88 = arith.constant 0 : index
    %79 = vector.load %arg4[%c5_86, %c0_87, %c0_88] : memref<9x32x128xbf16, #tpu.memory_space<vmem>>, vector<1x32x128xbf16>
    %80 = vector.shape_cast %79 : vector<1x32x128xbf16> to vector<32x128xbf16>
    %cst_89 = arith.constant dense<0.000000e+00> : vector<32x128xf32>
    %81 = tpu.matmul %58, %80, %cst_89 {dimension_numbers = #tpu.dot_dimension_numbers<[1], [0], [0], [1], [0, 0, 1, 1], [], []>} : vector<32x32xbf16>, vector<32x128xbf16>, vector<32x128xf32> -> vector<32x128xf32>
    %c160 = arith.constant 160 : index
    %c0_90 = arith.constant 0 : index
    %82 = vector.load %arg12[%c160, %c0_90] : memref<288x128xf32, #tpu.memory_space<vmem>>, vector<32x128xf32>
    tpu.vector_store %arg12[%c160, %c0_90], %81 {strides = array<i32>} : memref<288x128xf32, #tpu.memory_space<vmem>>, vector<32x128xf32>,
    %c6_91 = arith.constant 6 : index
    %c0_92 = arith.constant 0 : index
    %c0_93 = arith.constant 0 : index
    %83 = vector.load %arg4[%c6_91, %c0_92, %c0_93] : memref<9x32x128xbf16, #tpu.memory_space<vmem>>, vector<1x32x128xbf16>
    %84 = vector.shape_cast %83 : vector<1x32x128xbf16> to vector<32x128xbf16>
    %cst_94 = arith.constant dense<0.000000e+00> : vector<32x128xf32>
    %85 = tpu.matmul %58, %84, %cst_94 {dimension_numbers = #tpu.dot_dimension_numbers<[1], [0], [0], [1], [0, 0, 1, 1], [], []>} : vector<32x32xbf16>, vector<32x128xbf16>, vector<32x128xf32> -> vector<32x128xf32>
    %c192 = arith.constant 192 : index
    %c0_95 = arith.constant 0 : index
    %86 = vector.load %arg12[%c192, %c0_95] : memref<288x128xf32, #tpu.memory_space<vmem>>, vector<32x128xf32>
    tpu.vector_store %arg12[%c192, %c0_95], %85 {strides = array<i32>} : memref<288x128xf32, #tpu.memory_space<vmem>>, vector<32x128xf32>,
    %c7_96 = arith.constant 7 : index
    %c0_97 = arith.constant 0 : index
    %c0_98 = arith.constant 0 : index
    %87 = vector.load %arg4[%c7_96, %c0_97, %c0_98] : memref<9x32x128xbf16, #tpu.memory_space<vmem>>, vector<1x32x128xbf16>
    %88 = vector.shape_cast %87 : vector<1x32x128xbf16> to vector<32x128xbf16>
    %cst_99 = arith.constant dense<0.000000e+00> : vector<32x128xf32>
    %89 = tpu.matmul %58, %88, %cst_99 {dimension_numbers = #tpu.dot_dimension_numbers<[1], [0], [0], [1], [0, 0, 1, 1], [], []>} : vector<32x32xbf16>, vector<32x128xbf16>, vector<32x128xf32> -> vector<32x128xf32>
    %c224 = arith.constant 224 : index
    %c0_100 = arith.constant 0 : index
    %90 = vector.load %arg12[%c224, %c0_100] : memref<288x128xf32, #tpu.memory_space<vmem>>, vector<32x128xf32>
    tpu.vector_store %arg12[%c224, %c0_100], %89 {strides = array<i32>} : memref<288x128xf32, #tpu.memory_space<vmem>>, vector<32x128xf32>,
    %c8_101 = arith.constant 8 : index
    %c0_102 = arith.constant 0 : index
    %c0_103 = arith.constant 0 : index
    %91 = vector.load %arg4[%c8_101, %c0_102, %c0_103] : memref<9x32x128xbf16, #tpu.memory_space<vmem>>, vector<1x32x128xbf16>
    %92 = vector.shape_cast %91 : vector<1x32x128xbf16> to vector<32x128xbf16>
    %cst_104 = arith.constant dense<0.000000e+00> : vector<32x128xf32>
    %93 = tpu.matmul %58, %92, %cst_104 {dimension_numbers = #tpu.dot_dimension_numbers<[1], [0], [0], [1], [0, 0, 1, 1], [], []>} : vector<32x32xbf16>, vector<32x128xbf16>, vector<32x128xf32> -> vector<32x128xf32>
    %c256_105 = arith.constant 256 : index
    %c0_106 = arith.constant 0 : index
    %94 = vector.load %arg12[%c256_105, %c0_106] : memref<288x128xf32, #tpu.memory_space<vmem>>, vector<32x128xf32>
    tpu.vector_store %arg12[%c256_105, %c0_106], %93 {strides = array<i32>} : memref<288x128xf32, #tpu.memory_space<vmem>>, vector<32x128xf32>,
    %c0_107 = arith.constant 0 : index
    %c0_108 = arith.constant 0 : index
    %95 = vector.load %arg12[%c0_107, %c0_108] : memref<288x128xf32, #tpu.memory_space<vmem>>, vector<288x128xf32>
    %c0_109 = arith.constant 0 : index
    %c0_110 = arith.constant 0 : index
    %c0_111 = arith.constant 0 : index
    %96 = vector.load %arg6[%c0_109, %c0_110, %c0_111] : memref<4x8x288xf32, #tpu.memory_space<vmem>>, vector<1x8x288xf32>
    %97 = vector.shape_cast %96 : vector<1x8x288xf32> to vector<8x288xf32>
    %cst_112 = arith.constant dense<0.000000e+00> : vector<8x128xf32>
    %98 = tpu.matmul %97, %95, %cst_112 {dimension_numbers = #tpu.dot_dimension_numbers<[1], [0], [0], [1], [0, 0, 1, 1], [], []>} : vector<8x288xf32>, vector<288x128xf32>, vector<8x128xf32> -> vector<8x128xf32>
    %c1_113 = arith.constant 1 : index
    %c0_114 = arith.constant 0 : index
    %c0_115 = arith.constant 0 : index
    %99 = vector.load %arg6[%c1_113, %c0_114, %c0_115] : memref<4x8x288xf32, #tpu.memory_space<vmem>>, vector<1x8x288xf32>
    %100 = vector.shape_cast %99 : vector<1x8x288xf32> to vector<8x288xf32>
    %cst_116 = arith.constant dense<0.000000e+00> : vector<8x128xf32>
    %101 = tpu.matmul %100, %95, %cst_116 {dimension_numbers = #tpu.dot_dimension_numbers<[1], [0], [0], [1], [0, 0, 1, 1], [], []>} : vector<8x288xf32>, vector<288x128xf32>, vector<8x128xf32> -> vector<8x128xf32>
    %102 = arith.maximumf %98, %101 : vector<8x128xf32>
    %c2_117 = arith.constant 2 : index
    %c0_118 = arith.constant 0 : index
    %c0_119 = arith.constant 0 : index
    %103 = vector.load %arg6[%c2_117, %c0_118, %c0_119] : memref<4x8x288xf32, #tpu.memory_space<vmem>>, vector<1x8x288xf32>
    %104 = vector.shape_cast %103 : vector<1x8x288xf32> to vector<8x288xf32>
    %cst_120 = arith.constant dense<0.000000e+00> : vector<8x128xf32>
    %105 = tpu.matmul %104, %95, %cst_120 {dimension_numbers = #tpu.dot_dimension_numbers<[1], [0], [0], [1], [0, 0, 1, 1], [], []>} : vector<8x288xf32>, vector<288x128xf32>, vector<8x128xf32> -> vector<8x128xf32>
    %106 = arith.maximumf %102, %105 : vector<8x128xf32>
    %c3_121 = arith.constant 3 : index
    %c0_122 = arith.constant 0 : index
    %c0_123 = arith.constant 0 : index
    %107 = vector.load %arg6[%c3_121, %c0_122, %c0_123] : memref<4x8x288xf32, #tpu.memory_space<vmem>>, vector<1x8x288xf32>
    %108 = vector.shape_cast %107 : vector<1x8x288xf32> to vector<8x288xf32>
    %cst_124 = arith.constant dense<0.000000e+00> : vector<8x128xf32>
    %109 = tpu.matmul %108, %95, %cst_124 {dimension_numbers = #tpu.dot_dimension_numbers<[1], [0], [0], [1], [0, 0, 1, 1], [], []>} : vector<8x288xf32>, vector<288x128xf32>, vector<8x128xf32> -> vector<8x128xf32>
    %110 = arith.maximumf %106, %109 : vector<8x128xf32>
    %c0_125 = arith.constant 0 : index
    %c0_126 = arith.constant 0 : index
    %111 = vector.load %arg5[%c0_125, %c0_126] : memref<1x128xf32, #tpu.memory_space<vmem>>, vector<1x128xf32>
    %112 = vector.broadcast %111 : vector<1x128xf32> to vector<8x128xf32>
    %113 = arith.addf %110, %112 : vector<8x128xf32>
    %cst_127 = arith.constant 0.000000e+00 : f32
    %114 = vector.broadcast %cst_127 : f32 to vector<8x128xf32>
    %115 = arith.maximumf %113, %114 : vector<8x128xf32>
    %116 = arith.truncf %115 : vector<8x128xf32> to vector<8x128xbf16>
    %c0_128 = arith.constant 0 : index
    %c0_129 = arith.constant 0 : index
    %c0_130 = arith.constant 0 : index
    %117 = vector.load %arg7[%c0_128, %c0_129, %c0_130] : memref<9x128x512xbf16, #tpu.memory_space<vmem>>, vector<1x128x512xbf16>
    %118 = vector.shape_cast %117 : vector<1x128x512xbf16> to vector<128x512xbf16>
    %cst_131 = arith.constant dense<0.000000e+00> : vector<8x512xf32>
    %119 = tpu.matmul %116, %118, %cst_131 {dimension_numbers = #tpu.dot_dimension_numbers<[1], [0], [0], [1], [0, 0, 1, 1], [], []>} : vector<8x128xbf16>, vector<128x512xbf16>, vector<8x512xf32> -> vector<8x512xf32>
    %c0_132 = arith.constant 0 : index
    %c0_133 = arith.constant 0 : index
    %120 = vector.load %arg13[%c0_132, %c0_133] : memref<72x512xf32, #tpu.memory_space<vmem>>, vector<8x512xf32>
    tpu.vector_store %arg13[%c0_132, %c0_133], %119 {strides = array<i32>} : memref<72x512xf32, #tpu.memory_space<vmem>>, vector<8x512xf32>,
    %c1_134 = arith.constant 1 : index
    %c0_135 = arith.constant 0 : index
    %c0_136 = arith.constant 0 : index
    %121 = vector.load %arg7[%c1_134, %c0_135, %c0_136] : memref<9x128x512xbf16, #tpu.memory_space<vmem>>, vector<1x128x512xbf16>
    %122 = vector.shape_cast %121 : vector<1x128x512xbf16> to vector<128x512xbf16>
    %cst_137 = arith.constant dense<0.000000e+00> : vector<8x512xf32>
    %123 = tpu.matmul %116, %122, %cst_137 {dimension_numbers = #tpu.dot_dimension_numbers<[1], [0], [0], [1], [0, 0, 1, 1], [], []>} : vector<8x128xbf16>, vector<128x512xbf16>, vector<8x512xf32> -> vector<8x512xf32>
    %c8_138 = arith.constant 8 : index
    %c0_139 = arith.constant 0 : index
    %124 = vector.load %arg13[%c8_138, %c0_139] : memref<72x512xf32, #tpu.memory_space<vmem>>, vector<8x512xf32>
    tpu.vector_store %arg13[%c8_138, %c0_139], %123 {strides = array<i32>} : memref<72x512xf32, #tpu.memory_space<vmem>>, vector<8x512xf32>,
    %c2_140 = arith.constant 2 : index
    %c0_141 = arith.constant 0 : index
    %c0_142 = arith.constant 0 : index
    %125 = vector.load %arg7[%c2_140, %c0_141, %c0_142] : memref<9x128x512xbf16, #tpu.memory_space<vmem>>, vector<1x128x512xbf16>
    %126 = vector.shape_cast %125 : vector<1x128x512xbf16> to vector<128x512xbf16>
    %cst_143 = arith.constant dense<0.000000e+00> : vector<8x512xf32>
    %127 = tpu.matmul %116, %126, %cst_143 {dimension_numbers = #tpu.dot_dimension_numbers<[1], [0], [0], [1], [0, 0, 1, 1], [], []>} : vector<8x128xbf16>, vector<128x512xbf16>, vector<8x512xf32> -> vector<8x512xf32>
    %c16 = arith.constant 16 : index
    %c0_144 = arith.constant 0 : index
    %128 = vector.load %arg13[%c16, %c0_144] : memref<72x512xf32, #tpu.memory_space<vmem>>, vector<8x512xf32>
    tpu.vector_store %arg13[%c16, %c0_144], %127 {strides = array<i32>} : memref<72x512xf32, #tpu.memory_space<vmem>>, vector<8x512xf32>,
    %c3_145 = arith.constant 3 : index
    %c0_146 = arith.constant 0 : index
    %c0_147 = arith.constant 0 : index
    %129 = vector.load %arg7[%c3_145, %c0_146, %c0_147] : memref<9x128x512xbf16, #tpu.memory_space<vmem>>, vector<1x128x512xbf16>
    %130 = vector.shape_cast %129 : vector<1x128x512xbf16> to vector<128x512xbf16>
    %cst_148 = arith.constant dense<0.000000e+00> : vector<8x512xf32>
    %131 = tpu.matmul %116, %130, %cst_148 {dimension_numbers = #tpu.dot_dimension_numbers<[1], [0], [0], [1], [0, 0, 1, 1], [], []>} : vector<8x128xbf16>, vector<128x512xbf16>, vector<8x512xf32> -> vector<8x512xf32>
    %c24 = arith.constant 24 : index
    %c0_149 = arith.constant 0 : index
    %132 = vector.load %arg13[%c24, %c0_149] : memref<72x512xf32, #tpu.memory_space<vmem>>, vector<8x512xf32>
    tpu.vector_store %arg13[%c24, %c0_149], %131 {strides = array<i32>} : memref<72x512xf32, #tpu.memory_space<vmem>>, vector<8x512xf32>,
    %c4_150 = arith.constant 4 : index
    %c0_151 = arith.constant 0 : index
    %c0_152 = arith.constant 0 : index
    %133 = vector.load %arg7[%c4_150, %c0_151, %c0_152] : memref<9x128x512xbf16, #tpu.memory_space<vmem>>, vector<1x128x512xbf16>
    %134 = vector.shape_cast %133 : vector<1x128x512xbf16> to vector<128x512xbf16>
    %cst_153 = arith.constant dense<0.000000e+00> : vector<8x512xf32>
    %135 = tpu.matmul %116, %134, %cst_153 {dimension_numbers = #tpu.dot_dimension_numbers<[1], [0], [0], [1], [0, 0, 1, 1], [], []>} : vector<8x128xbf16>, vector<128x512xbf16>, vector<8x512xf32> -> vector<8x512xf32>
    %c32_154 = arith.constant 32 : index
    %c0_155 = arith.constant 0 : index
    %136 = vector.load %arg13[%c32_154, %c0_155] : memref<72x512xf32, #tpu.memory_space<vmem>>, vector<8x512xf32>
    tpu.vector_store %arg13[%c32_154, %c0_155], %135 {strides = array<i32>} : memref<72x512xf32, #tpu.memory_space<vmem>>, vector<8x512xf32>,
    %c5_156 = arith.constant 5 : index
    %c0_157 = arith.constant 0 : index
    %c0_158 = arith.constant 0 : index
    %137 = vector.load %arg7[%c5_156, %c0_157, %c0_158] : memref<9x128x512xbf16, #tpu.memory_space<vmem>>, vector<1x128x512xbf16>
    %138 = vector.shape_cast %137 : vector<1x128x512xbf16> to vector<128x512xbf16>
    %cst_159 = arith.constant dense<0.000000e+00> : vector<8x512xf32>
    %139 = tpu.matmul %116, %138, %cst_159 {dimension_numbers = #tpu.dot_dimension_numbers<[1], [0], [0], [1], [0, 0, 1, 1], [], []>} : vector<8x128xbf16>, vector<128x512xbf16>, vector<8x512xf32> -> vector<8x512xf32>
    %c40 = arith.constant 40 : index
    %c0_160 = arith.constant 0 : index
    %140 = vector.load %arg13[%c40, %c0_160] : memref<72x512xf32, #tpu.memory_space<vmem>>, vector<8x512xf32>
    tpu.vector_store %arg13[%c40, %c0_160], %139 {strides = array<i32>} : memref<72x512xf32, #tpu.memory_space<vmem>>, vector<8x512xf32>,
    %c6_161 = arith.constant 6 : index
    %c0_162 = arith.constant 0 : index
    %c0_163 = arith.constant 0 : index
    %141 = vector.load %arg7[%c6_161, %c0_162, %c0_163] : memref<9x128x512xbf16, #tpu.memory_space<vmem>>, vector<1x128x512xbf16>
    %142 = vector.shape_cast %141 : vector<1x128x512xbf16> to vector<128x512xbf16>
    %cst_164 = arith.constant dense<0.000000e+00> : vector<8x512xf32>
    %143 = tpu.matmul %116, %142, %cst_164 {dimension_numbers = #tpu.dot_dimension_numbers<[1], [0], [0], [1], [0, 0, 1, 1], [], []>} : vector<8x128xbf16>, vector<128x512xbf16>, vector<8x512xf32> -> vector<8x512xf32>
    %c48 = arith.constant 48 : index
    %c0_165 = arith.constant 0 : index
    %144 = vector.load %arg13[%c48, %c0_165] : memref<72x512xf32, #tpu.memory_space<vmem>>, vector<8x512xf32>
    tpu.vector_store %arg13[%c48, %c0_165], %143 {strides = array<i32>} : memref<72x512xf32, #tpu.memory_space<vmem>>, vector<8x512xf32>,
    %c7_166 = arith.constant 7 : index
    %c0_167 = arith.constant 0 : index
    %c0_168 = arith.constant 0 : index
    %145 = vector.load %arg7[%c7_166, %c0_167, %c0_168] : memref<9x128x512xbf16, #tpu.memory_space<vmem>>, vector<1x128x512xbf16>
    %146 = vector.shape_cast %145 : vector<1x128x512xbf16> to vector<128x512xbf16>
    %cst_169 = arith.constant dense<0.000000e+00> : vector<8x512xf32>
    %147 = tpu.matmul %116, %146, %cst_169 {dimension_numbers = #tpu.dot_dimension_numbers<[1], [0], [0], [1], [0, 0, 1, 1], [], []>} : vector<8x128xbf16>, vector<128x512xbf16>, vector<8x512xf32> -> vector<8x512xf32>
    %c56 = arith.constant 56 : index
    %c0_170 = arith.constant 0 : index
    %148 = vector.load %arg13[%c56, %c0_170] : memref<72x512xf32, #tpu.memory_space<vmem>>, vector<8x512xf32>
    tpu.vector_store %arg13[%c56, %c0_170], %147 {strides = array<i32>} : memref<72x512xf32, #tpu.memory_space<vmem>>, vector<8x512xf32>,
    %c8_171 = arith.constant 8 : index
    %c0_172 = arith.constant 0 : index
    %c0_173 = arith.constant 0 : index
    %149 = vector.load %arg7[%c8_171, %c0_172, %c0_173] : memref<9x128x512xbf16, #tpu.memory_space<vmem>>, vector<1x128x512xbf16>
    %150 = vector.shape_cast %149 : vector<1x128x512xbf16> to vector<128x512xbf16>
    %cst_174 = arith.constant dense<0.000000e+00> : vector<8x512xf32>
    %151 = tpu.matmul %116, %150, %cst_174 {dimension_numbers = #tpu.dot_dimension_numbers<[1], [0], [0], [1], [0, 0, 1, 1], [], []>} : vector<8x128xbf16>, vector<128x512xbf16>, vector<8x512xf32> -> vector<8x512xf32>
    %c64_175 = arith.constant 64 : index
    %c0_176 = arith.constant 0 : index
    %152 = vector.load %arg13[%c64_175, %c0_176] : memref<72x512xf32, #tpu.memory_space<vmem>>, vector<8x512xf32>
    tpu.vector_store %arg13[%c64_175, %c0_176], %151 {strides = array<i32>} : memref<72x512xf32, #tpu.memory_space<vmem>>, vector<8x512xf32>,
    %c0_177 = arith.constant 0 : index
    %c0_178 = arith.constant 0 : index
    %153 = vector.load %arg13[%c0_177, %c0_178] : memref<72x512xf32, #tpu.memory_space<vmem>>, vector<72x512xf32>
    %c0_179 = arith.constant 0 : index
    %c0_180 = arith.constant 0 : index
    %c0_181 = arith.constant 0 : index
    %154 = vector.load %arg9[%c0_179, %c0_180, %c0_181] : memref<4x2x72xf32, #tpu.memory_space<vmem>>, vector<1x2x72xf32>
    %155 = vector.shape_cast %154 : vector<1x2x72xf32> to vector<2x72xf32>
    %cst_182 = arith.constant dense<0.000000e+00> : vector<2x512xf32>
    %156 = tpu.matmul %155, %153, %cst_182 {dimension_numbers = #tpu.dot_dimension_numbers<[1], [0], [0], [1], [0, 0, 1, 1], [], []>} : vector<2x72xf32>, vector<72x512xf32>, vector<2x512xf32> -> vector<2x512xf32>
    %c1_183 = arith.constant 1 : index
    %c0_184 = arith.constant 0 : index
    %c0_185 = arith.constant 0 : index
    %157 = vector.load %arg9[%c1_183, %c0_184, %c0_185] : memref<4x2x72xf32, #tpu.memory_space<vmem>>, vector<1x2x72xf32>
    %158 = vector.shape_cast %157 : vector<1x2x72xf32> to vector<2x72xf32>
    %cst_186 = arith.constant dense<0.000000e+00> : vector<2x512xf32>
    %159 = tpu.matmul %158, %153, %cst_186 {dimension_numbers = #tpu.dot_dimension_numbers<[1], [0], [0], [1], [0, 0, 1, 1], [], []>} : vector<2x72xf32>, vector<72x512xf32>, vector<2x512xf32> -> vector<2x512xf32>
    %160 = arith.maximumf %156, %159 : vector<2x512xf32>
    %c2_187 = arith.constant 2 : index
    %c0_188 = arith.constant 0 : index
    %c0_189 = arith.constant 0 : index
    %161 = vector.load %arg9[%c2_187, %c0_188, %c0_189] : memref<4x2x72xf32, #tpu.memory_space<vmem>>, vector<1x2x72xf32>
    %162 = vector.shape_cast %161 : vector<1x2x72xf32> to vector<2x72xf32>
    %cst_190 = arith.constant dense<0.000000e+00> : vector<2x512xf32>
    %163 = tpu.matmul %162, %153, %cst_190 {dimension_numbers = #tpu.dot_dimension_numbers<[1], [0], [0], [1], [0, 0, 1, 1], [], []>} : vector<2x72xf32>, vector<72x512xf32>, vector<2x512xf32> -> vector<2x512xf32>
    %164 = arith.maximumf %160, %163 : vector<2x512xf32>
    %c3_191 = arith.constant 3 : index
    %c0_192 = arith.constant 0 : index
    %c0_193 = arith.constant 0 : index
    %165 = vector.load %arg9[%c3_191, %c0_192, %c0_193] : memref<4x2x72xf32, #tpu.memory_space<vmem>>, vector<1x2x72xf32>
    %166 = vector.shape_cast %165 : vector<1x2x72xf32> to vector<2x72xf32>
    %cst_194 = arith.constant dense<0.000000e+00> : vector<2x512xf32>
    %167 = tpu.matmul %166, %153, %cst_194 {dimension_numbers = #tpu.dot_dimension_numbers<[1], [0], [0], [1], [0, 0, 1, 1], [], []>} : vector<2x72xf32>, vector<72x512xf32>, vector<2x512xf32> -> vector<2x512xf32>
    %168 = arith.maximumf %164, %167 : vector<2x512xf32>
    %c0_195 = arith.constant 0 : index
    %c0_196 = arith.constant 0 : index
    %169 = vector.load %arg8[%c0_195, %c0_196] : memref<1x512xf32, #tpu.memory_space<vmem>>, vector<1x512xf32>
    %170 = vector.broadcast %169 : vector<1x512xf32> to vector<2x512xf32>
    %171 = arith.addf %168, %170 : vector<2x512xf32>
    %cst_197 = arith.constant 0.000000e+00 : f32
    %172 = vector.broadcast %cst_197 : f32 to vector<2x512xf32>
    %173 = arith.maximumf %171, %172 : vector<2x512xf32>
    %174 = arith.truncf %173 : vector<2x512xf32> to vector<2x512xbf16>
    %c0_198 = arith.constant 0 : index
    %c0_199 = arith.constant 0 : index
    %175 = vector.load %arg10[%c0_198, %c0_199] : memref<2x512xbf16, #tpu.memory_space<vmem>>, vector<2x512xbf16>
    tpu.vector_store %arg10[%c0_198, %c0_199], %174 {strides = array<i32>} : memref<2x512xbf16, #tpu.memory_space<vmem>>, vector<2x512xbf16>,
    return
  }
}

module attributes {stable_mosaic.version = 11 : i64} {
  func.func @_fused_fc_kernel(%arg0: i32, %arg1: i32, %arg2: memref<2x512xbf16, #tpu.memory_space<vmem>>, %arg3: memref<1x512x512xbf16, #tpu.memory_space<vmem>>, %arg4: memref<1x512xf32, #tpu.memory_space<vmem>>, %arg5: memref<1x1x512x2048xbf16, #tpu.memory_space<vmem>>, %arg6: memref<1x2048xf32, #tpu.memory_space<vmem>>, %arg7: memref<2x2048xf32, #tpu.memory_space<vmem>>, %arg8: memref<2x2048xf32, #tpu.memory_space<vmem>>) attributes {dimension_semantics = [#tpu.dimension_semantics<parallel>, #tpu.dimension_semantics<arbitrary>], iteration_bounds = array<i64: 2, 8>, scalar_prefetch = 0 : i64, scratch_operands = 1 : i64, tpu.core_type = #tpu.core_type<tc>, window_params = [{pipeline_mode = #tpu.pipeline_mode<synchronous>, transform_indices = @transform_0, window_bounds = array<i64: 2, 512>}, {transform_indices = @transform_1, window_bounds = array<i64: 1, 512, 512>}, {transform_indices = @transform_2, window_bounds = array<i64: 1, 512>}, {transform_indices = @transform_3, window_bounds = array<i64: 1, 1, 512, 2048>}, {transform_indices = @transform_4, window_bounds = array<i64: 1, 2048>}, {transform_indices = @transform_5, window_bounds = array<i64: 2, 2048>}]} {
    %c0_i32 = arith.constant 0 : i32
    %0 = arith.cmpi eq, %arg1, %c0_i32 : i32
    %1 = arith.extui %0 : i1 to i32
    %c0_i32_0 = arith.constant 0 : i32
    %2 = arith.cmpi ne, %1, %c0_i32_0 : i32
    scf.if %2 {
      %cst_18 = arith.constant 0.000000e+00 : f32
      %22 = vector.broadcast %cst_18 : f32 to vector<2x2048xf32>
      %c0_19 = arith.constant 0 : index
      %c0_20 = arith.constant 0 : index
      %23 = vector.load %arg8[%c0_19, %c0_20] : memref<2x2048xf32, #tpu.memory_space<vmem>>, vector<2x2048xf32>
      tpu.vector_store %arg8[%c0_19, %c0_20], %22 {strides = array<i32>} : memref<2x2048xf32, #tpu.memory_space<vmem>>, vector<2x2048xf32>,
    } else {
    }
    %c0 = arith.constant 0 : index
    %c0_1 = arith.constant 0 : index
    %3 = vector.load %arg2[%c0, %c0_1] : memref<2x512xbf16, #tpu.memory_space<vmem>>, vector<2x512xbf16>
    %c0_2 = arith.constant 0 : index
    %c0_3 = arith.constant 0 : index
    %c0_4 = arith.constant 0 : index
    %4 = vector.load %arg3[%c0_2, %c0_3, %c0_4] : memref<1x512x512xbf16, #tpu.memory_space<vmem>>, vector<1x512x512xbf16>
    %5 = vector.shape_cast %4 : vector<1x512x512xbf16> to vector<512x512xbf16>
    %cst = arith.constant dense<0.000000e+00> : vector<2x512xf32>
    %6 = tpu.matmul %3, %5, %cst {dimension_numbers = #tpu.dot_dimension_numbers<[1], [0], [0], [1], [0, 0, 1, 1], [], []>} : vector<2x512xbf16>, vector<512x512xbf16>, vector<2x512xf32> -> vector<2x512xf32>
    %c0_5 = arith.constant 0 : index
    %c0_6 = arith.constant 0 : index
    %7 = vector.load %arg4[%c0_5, %c0_6] : memref<1x512xf32, #tpu.memory_space<vmem>>, vector<1x512xf32>
    %8 = vector.broadcast %7 : vector<1x512xf32> to vector<2x512xf32>
    %9 = arith.addf %6, %8 : vector<2x512xf32>
    %cst_7 = arith.constant 0.000000e+00 : f32
    %10 = vector.broadcast %cst_7 : f32 to vector<2x512xf32>
    %11 = arith.maximumf %9, %10 : vector<2x512xf32>
    %12 = arith.truncf %11 : vector<2x512xf32> to vector<2x512xbf16>
    %c0_8 = arith.constant 0 : index
    %c0_9 = arith.constant 0 : index
    %13 = vector.load %arg8[%c0_8, %c0_9] : memref<2x2048xf32, #tpu.memory_space<vmem>>, vector<2x2048xf32>
    %c0_10 = arith.constant 0 : index
    %c0_11 = arith.constant 0 : index
    %c0_12 = arith.constant 0 : index
    %c0_13 = arith.constant 0 : index
    %14 = vector.load %arg5[%c0_10, %c0_11, %c0_12, %c0_13] : memref<1x1x512x2048xbf16, #tpu.memory_space<vmem>>, vector<1x1x512x2048xbf16>
    %15 = vector.shape_cast %14 : vector<1x1x512x2048xbf16> to vector<512x2048xbf16>
    %cst_14 = arith.constant dense<0.000000e+00> : vector<2x2048xf32>
    %16 = tpu.matmul %12, %15, %cst_14 {dimension_numbers = #tpu.dot_dimension_numbers<[1], [0], [0], [1], [0, 0, 1, 1], [], []>} : vector<2x512xbf16>, vector<512x2048xbf16>, vector<2x2048xf32> -> vector<2x2048xf32>
    %17 = arith.addf %13, %16 : vector<2x2048xf32>
    %c0_15 = arith.constant 0 : index
    %c0_16 = arith.constant 0 : index
    %18 = vector.load %arg8[%c0_15, %c0_16] : memref<2x2048xf32, #tpu.memory_space<vmem>>, vector<2x2048xf32>
    tpu.vector_store %arg8[%c0_15, %c0_16], %17 {strides = array<i32>} : memref<2x2048xf32, #tpu.memory_space<vmem>>, vector<2x2048xf32>,
    %c7_i32 = arith.constant 7 : i32
    %19 = arith.cmpi eq, %arg1, %c7_i32 : i32
    %20 = arith.extui %19 : i1 to i32
    %c0_i32_17 = arith.constant 0 : i32
    %21 = arith.cmpi ne, %20, %c0_i32_17 : i32
    scf.if %21 {
      %c0_18 = arith.constant 0 : index
      %c0_19 = arith.constant 0 : index
      %22 = vector.load %arg8[%c0_18, %c0_19] : memref<2x2048xf32, #tpu.memory_space<vmem>>, vector<2x2048xf32>
      %c0_20 = arith.constant 0 : index
      %c0_21 = arith.constant 0 : index
      %23 = vector.load %arg6[%c0_20, %c0_21] : memref<1x2048xf32, #tpu.memory_space<vmem>>, vector<1x2048xf32>
      %24 = vector.broadcast %23 : vector<1x2048xf32> to vector<2x2048xf32>
      %25 = arith.addf %22, %24 : vector<2x2048xf32>
      %cst_22 = arith.constant 0.000000e+00 : f32
      %26 = vector.broadcast %cst_22 : f32 to vector<2x2048xf32>
      %27 = arith.maximumf %25, %26 : vector<2x2048xf32>
      %c0_23 = arith.constant 0 : index
      %c0_24 = arith.constant 0 : index
      %28 = vector.load %arg7[%c0_23, %c0_24] : memref<2x2048xf32, #tpu.memory_space<vmem>>, vector<2x2048xf32>
      tpu.vector_store %arg7[%c0_23, %c0_24], %27 {strides = array<i32>} : memref<2x2048xf32, #tpu.memory_space<vmem>>, vector<2x2048xf32>,
    } else {
    }
    return
  }
  func.func @transform_0(%arg0: i32, %arg1: i32) -> (i32, i32) {
    %c0_i32 = arith.constant 0 : i32
    %c0_i32_0 = arith.constant 0 : i32
    %c0_i32_1 = arith.constant 0 : i32
    return %c0_i32, %c0_i32_0 : i32, i32
  }
  func.func @transform_1(%arg0: i32, %arg1: i32) -> (i32, i32, i32) {
    %c0_i32 = arith.constant 0 : i32
    %c0_i32_0 = arith.constant 0 : i32
    %c0_i32_1 = arith.constant 0 : i32
    return %arg1, %c0_i32, %c0_i32_0 : i32, i32, i32
  }
  func.func @transform_2(%arg0: i32, %arg1: i32) -> (i32, i32) {
    %c0_i32 = arith.constant 0 : i32
    %c0_i32_0 = arith.constant 0 : i32
    return %c0_i32, %arg1 : i32, i32
  }
  func.func @transform_3(%arg0: i32, %arg1: i32) -> (i32, i32, i32, i32) {
    %c0_i32 = arith.constant 0 : i32
    %c0_i32_0 = arith.constant 0 : i32
    %c0_i32_1 = arith.constant 0 : i32
    return %arg0, %arg1, %c0_i32, %c0_i32_0 : i32, i32, i32, i32
  }
  func.func @transform_4(%arg0: i32, %arg1: i32) -> (i32, i32) {
    %c0_i32 = arith.constant 0 : i32
    %c0_i32_0 = arith.constant 0 : i32
    return %c0_i32, %arg0 : i32, i32
  }
  func.func @transform_5(%arg0: i32, %arg1: i32) -> (i32, i32) {
    %c0_i32 = arith.constant 0 : i32
    %c0_i32_0 = arith.constant 0 : i32
    return %c0_i32, %arg0 : i32, i32
  }
}

</mosaic_0001>

<llo_original>
// kernel: vgg_mid_forward.2
$region0: #{vgg_mid_forward.2}
  #allocation0 [shape = 'u32[]', space=smem, size = 0x4, offset = 0x4, fixed_abs, tag = 'smem constant byte address 0x4 - core index']
  #allocation1 [shape = 'u32[72,128]{1,0:T(1,128)}', space=vmem, size = 0x9000, scoped, tag = 'internal scratch']
  #allocation2 [shape = 'f32[1152,32]{1,0:T(8,128)}', space=vmem, size = 0x90000, scoped, tag = 'scratch operand']
  #allocation3 [shape = 'f32[288,128]{1,0:T(8,128)}', space=vmem, size = 0x24000, scoped, tag = 'scratch operand']
  #allocation4 [shape = 'f32[72,512]{1,0:T(8,128)}', space=vmem, size = 0x24000, scoped, tag = 'scratch operand']
  %s0 = inlined_call_operand.vmem [shape: bf16[128,8], index: 0, kind: input, shape index: {}]
  %s1 = inlined_call_operand.hbm [shape: bf16[9,8,32], index: 1, kind: input, shape index: {}]
  %s2 = inlined_call_operand.hbm [shape: f32[1,32], index: 2, kind: input, shape index: {}]
  %s3 = inlined_call_operand.hbm [shape: f32[4,32,1152], index: 3, kind: input, shape index: {}]
  %s4 = inlined_call_operand.hbm [shape: bf16[9,32,128], index: 4, kind: input, shape index: {}]
  %s5 = inlined_call_operand.hbm [shape: f32[1,128], index: 5, kind: input, shape index: {}]
  %s6 = inlined_call_operand.hbm [shape: f32[4,8,288], index: 6, kind: input, shape index: {}]
  %s7 = inlined_call_operand.hbm [shape: bf16[9,128,512], index: 7, kind: input, shape index: {}]
  %s8 = inlined_call_operand.hbm [shape: f32[1,512], index: 8, kind: input, shape index: {}]
  %s9 = inlined_call_operand.hbm [shape: f32[4,2,72], index: 9, kind: input, shape index: {}]
  %s10 = inlined_call_operand.vmem [shape: bf16[2,512], index: 10, kind: output, shape index: {}]
  %s11 = sld [smem:[#allocation0]]
  $region86: #{vgg_mid_forward.2} parent=0
    _
  %s13 = ssub.s32 1, %s11
  %s14 = scalar_select 0, %s13, %s11
  $region1: #{vgg_mid_forward.2} parent=0
    #allocation5 [shape = 'u8[18432]{0}', space=vmem, size = 0x4800, scoped, tag = 'input window, operand 1, single buffered']
    #allocation6 [shape = 's32[1]{0}', space=sflag, size = 0x4, scoped, tag = 'scoped memory for vgg_mid_forward.2']
    #allocation7 [shape = 'u8[512]{0}', space=vmem, size = 0x400, scoped, tag = 'input window, operand 2, single buffered']
    #allocation8 [shape = 's32[1]{0}', space=sflag, size = 0x4, scoped, tag = 'scoped memory for vgg_mid_forward.2']
    #allocation9 [shape = 'u8[589824]{0}', space=vmem, size = 0x90000, scoped, tag = 'input window, operand 3, single buffered']
    #allocation10 [shape = 'u8[73728]{0}', space=vmem, size = 0x12000, scoped, tag = 'input window, operand 4, single buffered']
    #allocation11 [shape = 's32[1]{0}', space=sflag, size = 0x4, scoped, tag = 'scoped memory for vgg_mid_forward.2']
    #allocation12 [shape = 'u8[512]{0}', space=vmem, size = 0x400, scoped, tag = 'input window, operand 5, single buffered']
    #allocation13 [shape = 'u8[49152]{0}', space=vmem, size = 0xc000, scoped, tag = 'input window, operand 6, single buffered']
    #allocation14 [shape = 's32[1]{0}', space=sflag, size = 0x4, scoped, tag = 'scoped memory for vgg_mid_forward.2']
    #allocation15 [shape = 'u8[1179648]{0}', space=vmem, size = 0x120000, scoped, tag = 'input window, operand 7, single buffered']
    #allocation16 [shape = 'u8[2048]{0}', space=vmem, size = 0x800, scoped, tag = 'input window, operand 8, single buffered']
    #allocation17 [shape = 's32[1]{0}', space=sflag, size = 0x4, scoped, tag = 'scoped memory for vgg_mid_forward.2']
    #allocation18 [shape = 'u8[4096]{0}', space=vmem, size = 0x1000, scoped, tag = 'input window, operand 9, single buffered']
    %15 = vsyncpa [#allocation6], 0
    %16 = vsyncpa [#allocation8], 0
    %17 = vsyncpa [#allocation11], 0
    %18 = vsyncpa [#allocation14], 0
    %19 = vsyncpa [#allocation17], 0
    // Predicated region
    $region2: #{vgg_mid_forward.2} parent=1 // pred_check
      _
    $region3: #{vgg_mid_forward.2} parent=1 // pred_check_branch
      %21 = sbr.rel (0) target = $region5
    $region4: #{vgg_mid_forward.2} parent=1 // pred_region
      _
    $region5: #{vgg_mid_forward.2} parent=1 // pred_fallthru
      _
    // Predicated region
    $region6: #{vgg_mid_forward.2} parent=1 // pred_check
      _
    $region7: #{vgg_mid_forward.2} parent=1 // pred_check_branch
      %23 = sbr.rel (0) target = $region9
    $region8: #{vgg_mid_forward.2} parent=1 // pred_region
      %25 = vsyncadd [#allocation6], 0
      %s26 = sshll.u32 %s1, 4
      %s27 = int_to_ptr.hbm [resolvable:$true] %s26
      %s28 = sshll.u32 [#allocation5], 4
      %s29 = int_to_ptr.vmem [resolvable:$true] %s28
      %34 = dma.hbm_to_vmem [thread:$0]  %s27, 576, %s29, [#allocation6], 64, 64, 4
    $region9: #{vgg_mid_forward.2} parent=1 // pred_fallthru
      _
    // Predicated region
    $region10: #{vgg_mid_forward.2} parent=1 // pred_check
      _
    $region11: #{vgg_mid_forward.2} parent=1 // pred_check_branch
      %36 = sbr.rel (0) target = $region13
    $region12: #{vgg_mid_forward.2} parent=1 // pred_region
      %38 = vsyncadd [#allocation8], 0
      %s40 = sshll.u32 %s2, 4
      %s41 = int_to_ptr.hbm [resolvable:$true] %s40
      %s42 = sshll.u32 [#allocation7], 4
      %s43 = int_to_ptr.vmem [resolvable:$true] %s42
      %45 = dma.hbm_to_vmem [thread:$0]  %s41, 16, %s43, [#allocation8]
    $region13: #{vgg_mid_forward.2} parent=1 // pred_fallthru
      _
    // Predicated region
    $region14: #{vgg_mid_forward.2} parent=1 // pred_check
      _
    $region15: #{vgg_mid_forward.2} parent=1 // pred_check_branch
      %47 = sbr.rel (0) target = $region17
    $region16: #{vgg_mid_forward.2} parent=1 // pred_region
      %49 = vsyncadd [#allocation8], 0
      %s50 = sshll.u32 %s3, 4
      %s51 = int_to_ptr.hbm [resolvable:$true] %s50
      %s52 = sshll.u32 [#allocation9], 4
      %s53 = int_to_ptr.vmem [resolvable:$true] %s52
      %58 = dma.hbm_to_vmem [thread:$0]  %s51, 18432, %s53, [#allocation8], 1152, 1152, 72
    $region17: #{vgg_mid_forward.2} parent=1 // pred_fallthru
      _
    // Predicated region
    $region18: #{vgg_mid_forward.2} parent=1 // pred_check
      _
    $region19: #{vgg_mid_forward.2} parent=1 // pred_check_branch
      %60 = sbr.rel (0) target = $region21
    $region20: #{vgg_mid_forward.2} parent=1 // pred_region
      %62 = vsyncadd [#allocation11], 0
      %s63 = sshll.u32 %s4, 4
      %s64 = int_to_ptr.hbm [resolvable:$true] %s63
      %s65 = sshll.u32 [#allocation10], 4
      %s66 = int_to_ptr.vmem [resolvable:$true] %s65
      %71 = dma.hbm_to_vmem [thread:$0]  %s64, 2304, %s66, [#allocation11], 64, 64, 4
    $region21: #{vgg_mid_forward.2} parent=1 // pred_fallthru
      _
    // Predicated region
    $region22: #{vgg_mid_forward.2} parent=1 // pred_check
      _
    $region23: #{vgg_mid_forward.2} parent=1 // pred_check_branch
      %73 = sbr.rel (0) target = $region25
    $region24: #{vgg_mid_forward.2} parent=1 // pred_region
      %75 = vsyncadd [#allocation11], 0
      %s77 = sshll.u32 %s5, 4
      %s78 = int_to_ptr.hbm [resolvable:$true] %s77
      %s79 = sshll.u32 [#allocation12], 4
      %s80 = int_to_ptr.vmem [resolvable:$true] %s79
      %82 = dma.hbm_to_vmem [thread:$0]  %s78, 16, %s80, [#allocation11]
    $region25: #{vgg_mid_forward.2} parent=1 // pred_fallthru
      _
    // Predicated region
    $region26: #{vgg_mid_forward.2} parent=1 // pred_check
      _
    $region27: #{vgg_mid_forward.2} parent=1 // pred_check_branch
      %84 = sbr.rel (0) target = $region29
    $region28: #{vgg_mid_forward.2} parent=1 // pred_region
      %86 = vsyncadd [#allocation14], 0
      %s87 = sshll.u32 %s6, 4
      %s88 = int_to_ptr.hbm [resolvable:$true] %s87
      %s89 = sshll.u32 [#allocation13], 4
      %s90 = int_to_ptr.vmem [resolvable:$true] %s89
      %95 = dma.hbm_to_vmem [thread:$0]  %s88, 1536, %s90, [#allocation14], 384, 384, 24
    $region29: #{vgg_mid_forward.2} parent=1 // pred_fallthru
      _
    // Predicated region
    $region30: #{vgg_mid_forward.2} parent=1 // pred_check
      _
    $region31: #{vgg_mid_forward.2} parent=1 // pred_check_branch
      %97 = sbr.rel (0) target = $region33
    $region32: #{vgg_mid_forward.2} parent=1 // pred_region
      %99 = vsyncadd [#allocation14], 0
      %s100 = sshll.u32 %s7, 4
      %s101 = int_to_ptr.hbm [resolvable:$true] %s100
      %s102 = sshll.u32 [#allocation15], 4
      %s103 = int_to_ptr.vmem [resolvable:$true] %s102
      %108 = dma.hbm_to_vmem [thread:$0]  %s101, 36864, %s103, [#allocation14], 256, 256, 16
    $region33: #{vgg_mid_forward.2} parent=1 // pred_fallthru
      _
    // Predicated region
    $region34: #{vgg_mid_forward.2} parent=1 // pred_check
      _
    $region35: #{vgg_mid_forward.2} parent=1 // pred_check_branch
      %110 = sbr.rel (0) target = $region37
    $region36: #{vgg_mid_forward.2} parent=1 // pred_region
      %112 = vsyncadd [#allocation17], 0
      %s114 = sshll.u32 %s8, 4
      %s115 = int_to_ptr.hbm [resolvable:$true] %s114
      %s116 = sshll.u32 [#allocation16], 4
      %s117 = int_to_ptr.vmem [resolvable:$true] %s116
      %119 = dma.hbm_to_vmem [thread:$0]  %s115, 64, %s117, [#allocation17]
    $region37: #{vgg_mid_forward.2} parent=1 // pred_fallthru
      _
    // Predicated region
    $region38: #{vgg_mid_forward.2} parent=1 // pred_check
      _
    $region39: #{vgg_mid_forward.2} parent=1 // pred_check_branch
      %121 = sbr.rel (0) target = $region41
    $region40: #{vgg_mid_forward.2} parent=1 // pred_region
      %123 = vsyncadd [#allocation17], 0
      %s124 = sshll.u32 %s9, 4
      %s125 = int_to_ptr.hbm [resolvable:$true] %s124
      %s126 = sshll.u32 [#allocation18], 4
      %s127 = int_to_ptr.vmem [resolvable:$true] %s126
      %132 = dma.hbm_to_vmem [thread:$0]  %s125, 128, %s127, [#allocation17], 32, 32, 2
    $region41: #{vgg_mid_forward.2} parent=1 // pred_fallthru
      _
    // Predicated region
    $region42: #{vgg_mid_forward.2} parent=1 // pred_check
      _
    $region43: #{vgg_mid_forward.2} parent=1 // pred_check_branch
      %134 = sbr.rel (0) target = $region45
    $region44: #{vgg_mid_forward.2} parent=1 // pred_region
      %136 = dma.done [#allocation6], 576
    $region45: #{vgg_mid_forward.2} parent=1 // pred_fallthru
      _
    // Predicated region
    $region46: #{vgg_mid_forward.2} parent=1 // pred_check
      _
    $region47: #{vgg_mid_forward.2} parent=1 // pred_check_branch
      %138 = sbr.rel (0) target = $region49
    $region48: #{vgg_mid_forward.2} parent=1 // pred_region
      %140 = dma.done [#allocation8], 16
    $region49: #{vgg_mid_forward.2} parent=1 // pred_fallthru
      _
    // Predicated region
    $region50: #{vgg_mid_forward.2} parent=1 // pred_check
      _
    $region51: #{vgg_mid_forward.2} parent=1 // pred_check_branch
      %142 = sbr.rel (0) target = $region53
    $region52: #{vgg_mid_forward.2} parent=1 // pred_region
      %144 = dma.done [#allocation8], 18432
    $region53: #{vgg_mid_forward.2} parent=1 // pred_fallthru
      _
    // Predicated region
    $region54: #{vgg_mid_forward.2} parent=1 // pred_check
      _
    $region55: #{vgg_mid_forward.2} parent=1 // pred_check_branch
      %146 = sbr.rel (0) target = $region57
    $region56: #{vgg_mid_forward.2} parent=1 // pred_region
      %148 = dma.done [#allocation11], 2304
    $region57: #{vgg_mid_forward.2} parent=1 // pred_fallthru
      _
    // Predicated region
    $region58: #{vgg_mid_forward.2} parent=1 // pred_check
      _
    $region59: #{vgg_mid_forward.2} parent=1 // pred_check_branch
      %150 = sbr.rel (0) target = $region61
    $region60: #{vgg_mid_forward.2} parent=1 // pred_region
      %152 = dma.done [#allocation11], 16
    $region61: #{vgg_mid_forward.2} parent=1 // pred_fallthru
      _
    // Predicated region
    $region62: #{vgg_mid_forward.2} parent=1 // pred_check
      _
    $region63: #{vgg_mid_forward.2} parent=1 // pred_check_branch
      %154 = sbr.rel (0) target = $region65
    $region64: #{vgg_mid_forward.2} parent=1 // pred_region
      %156 = dma.done [#allocation14], 1536
    $region65: #{vgg_mid_forward.2} parent=1 // pred_fallthru
      _
    // Predicated region
    $region66: #{vgg_mid_forward.2} parent=1 // pred_check
      _
    $region67: #{vgg_mid_forward.2} parent=1 // pred_check_branch
      %158 = sbr.rel (0) target = $region69
    $region68: #{vgg_mid_forward.2} parent=1 // pred_region
      %160 = dma.done [#allocation14], 36864
    $region69: #{vgg_mid_forward.2} parent=1 // pred_fallthru
      _
    // Predicated region
    $region70: #{vgg_mid_forward.2} parent=1 // pred_check
      _
    $region71: #{vgg_mid_forward.2} parent=1 // pred_check_branch
      %162 = sbr.rel (0) target = $region73
    $region72: #{vgg_mid_forward.2} parent=1 // pred_region
      %164 = dma.done [#allocation17], 64
    $region73: #{vgg_mid_forward.2} parent=1 // pred_fallthru
      _
    // Predicated region
    $region74: #{vgg_mid_forward.2} parent=1 // pred_check
      _
    $region75: #{vgg_mid_forward.2} parent=1 // pred_check_branch
      %166 = sbr.rel (0) target = $region77
    $region76: #{vgg_mid_forward.2} parent=1 // pred_region
      %168 = dma.done [#allocation17], 128
    $region77: #{vgg_mid_forward.2} parent=1 // pred_fallthru
      _
    %v170 = vld [vmem:[%s0] sm:$0xf]
    %v171 = vld [vmem:[%s0 + $0x4] sm:$0xf]
    %v172 = vld [vmem:[%s0 + $0x8] sm:$0xf]
    %v173 = vld [vmem:[%s0 + $0xc] sm:$0xf]
    %v174 = vld [vmem:[%s0 + $0x10] sm:$0xf]
    %v175 = vld [vmem:[%s0 + $0x14] sm:$0xf]
    %v176 = vld [vmem:[%s0 + $0x18] sm:$0xf]
    %v177 = vld [vmem:[%s0 + $0x1c] sm:$0xf]
    %v178 = vld [vmem:[%s0 + $0x20] sm:$0xf]
    %v179 = vld [vmem:[%s0 + $0x24] sm:$0xf]
    %v180 = vld [vmem:[%s0 + $0x28] sm:$0xf]
    %v181 = vld [vmem:[%s0 + $0x2c] sm:$0xf]
    %v182 = vld [vmem:[%s0 + $0x30] sm:$0xf]
    %v183 = vld [vmem:[%s0 + $0x34] sm:$0xf]
    %v184 = vld [vmem:[%s0 + $0x38] sm:$0xf]
    %v185 = vld [vmem:[%s0 + $0x3c] sm:$0xf]
    %v186 = vld [vmem:[#allocation5] sm:$0xf]
    %v203 = vunpack.c.l.b16 %v170
    %v204 = vunpack.c.l.b16 %v171
    %v205 = vunpack.c.l.b16 %v172
    %v206 = vunpack.c.l.b16 %v173
    %v207 = vunpack.c.l.b16 %v174
    %v208 = vunpack.c.l.b16 %v175
    %v209 = vunpack.c.l.b16 %v176
    %v210 = vunpack.c.l.b16 %v177
    %v211 = vunpack.c.l.b16 %v178
    %v212 = vunpack.c.l.b16 %v179
    %v213 = vunpack.c.l.b16 %v180
    %v214 = vunpack.c.l.b16 %v181
    %v215 = vunpack.c.l.b16 %v182
    %v216 = vunpack.c.l.b16 %v183
    %v217 = vunpack.c.l.b16 %v184
    %v218 = vunpack.c.l.b16 %v185
    %v219 = vpack.c.b16 %v204, %v203
    %v220 = vpack.c.b16 %v206, %v205
    %v221 = vpack.c.b16 %v208, %v207
    %v222 = vpack.c.b16 %v210, %v209
    %v223 = vpack.c.b16 %v212, %v211
    %v224 = vpack.c.b16 %v214, %v213
    %v225 = vpack.c.b16 %v216, %v215
    %v226 = vpack.c.b16 %v218, %v217
    %vm227 = vcmask 64512
    %v229 = vsel %vm227, %v219, 0
    %v232 = vsel %vm227, %v220, 0
    %v235 = vsel %vm227, %v221, 0
    %v238 = vsel %vm227, %v222, 0
    %v241 = vsel %vm227, %v223, 0
    %v244 = vsel %vm227, %v224, 0
    %v247 = vsel %vm227, %v225, 0
    %v250 = vsel %vm227, %v226, 0
    %vm252 = vcmask 1043456
    %v254 = vsel %vm252, %v186, 0
    %256 = vmatpush.bf16.msra.mxu0 0
    %257 = vmatpush.bf16.msra.mxu0 0
    %258 = vmatpush.bf16.msra.mxu0 0
    %259 = vmatpush.bf16.msra.mxu0 0
    %260 = vmatpush.bf16.msra.mxu0 0
    %261 = vmatpush.bf16.msra.mxu0 0
    %262 = vmatpush.bf16.msra.mxu0 0
    %263 = vmatpush.bf16.msra.mxu0 %v254
    %264 = vmatmul.bf16.gmra.mxu0 %v229
    %v265 = vpop.f32.mrf.mxu0
    %v266 = vadd.f32 0.0, %v265
    %v267 = vpop.f32.mrf.mxu0
    %v268 = vadd.f32 0.0, %v267
    %269 = vmatmul.bf16.gmra.mxu0 %v232
    %v270 = vpop.f32.mrf.mxu0
    %v271 = vadd.f32 0.0, %v270
    %v272 = vpop.f32.mrf.mxu0
    %v273 = vadd.f32 0.0, %v272
    %274 = vmatmul.bf16.gmra.mxu0 %v235
    %v275 = vpop.f32.mrf.mxu0
    %v276 = vadd.f32 0.0, %v275
    %v277 = vpop.f32.mrf.mxu0
    %v278 = vadd.f32 0.0, %v277
    %279 = vmatmul.bf16.gmra.mxu0 %v238
    %v280 = vpop.f32.mrf.mxu0
    %v281 = vadd.f32 0.0, %v280
    %v282 = vpop.f32.mrf.mxu0
    %v283 = vadd.f32 0.0, %v282
    %284 = vmatmul.bf16.gmra.mxu0 %v241
    %v285 = vpop.f32.mrf.mxu0
    %v286 = vadd.f32 0.0, %v285
    %v287 = vpop.f32.mrf.mxu0
    %v288 = vadd.f32 0.0, %v287
    %289 = vmatmul.bf16.gmra.mxu0 %v244
    %v290 = vpop.f32.mrf.mxu0
    %v291 = vadd.f32 0.0, %v290
    %v292 = vpop.f32.mrf.mxu0
    %v293 = vadd.f32 0.0, %v292
    %294 = vmatmul.bf16.gmra.mxu0 %v247
    %v295 = vpop.f32.mrf.mxu0
    %v296 = vadd.f32 0.0, %v295
    %v297 = vpop.f32.mrf.mxu0
    %v298 = vadd.f32 0.0, %v297
    %299 = vmatmul.bf16.gmra.mxu0 %v250
    %v300 = vpop.f32.mrf.mxu0
    %v301 = vadd.f32 0.0, %v300
    %v302 = vpop.f32.mrf.mxu0
    %v303 = vadd.f32 0.0, %v302
    %304 = vdwg.mxu0
    %vm305 = vcmask 261120
    %306 = vst.msk [vmem:[#allocation2] sm:$0xff] %vm305, %v266
    %307 = vst.msk [vmem:[#allocation2 + $0x8] sm:$0xff] %vm305, %v268
    %308 = vst.msk [vmem:[#allocation2 + $0x10] sm:$0xff] %vm305, %v271
    %309 = vst.msk [vmem:[#allocation2 + $0x18] sm:$0xff] %vm305, %v273
    %310 = vst.msk [vmem:[#allocation2 + $0x20] sm:$0xff] %vm305, %v276
    %311 = vst.msk [vmem:[#allocation2 + $0x28] sm:$0xff] %vm305, %v278
    %312 = vst.msk [vmem:[#allocation2 + $0x30] sm:$0xff] %vm305, %v281
    %313 = vst.msk [vmem:[#allocation2 + $0x38] sm:$0xff] %vm305, %v283
    %314 = vst.msk [vmem:[#allocation2 + $0x40] sm:$0xff] %vm305, %v286
    %315 = vst.msk [vmem:[#allocation2 + $0x48] sm:$0xff] %vm305, %v288
    %316 = vst.msk [vmem:[#allocation2 + $0x50] sm:$0xff] %vm305, %v291
    %317 = vst.msk [vmem:[#allocation2 + $0x58] sm:$0xff] %vm305, %v293
    %318 = vst.msk [vmem:[#allocation2 + $0x60] sm:$0xff] %vm305, %v296
    %319 = vst.msk [vmem:[#allocation2 + $0x68] sm:$0xff] %vm305, %v298
    %320 = vst.msk [vmem:[#allocation2 + $0x70] sm:$0xff] %vm305, %v301
    %321 = vst.msk [vmem:[#allocation2 + $0x78] sm:$0xff] %vm305, %v303
    %s322 = scalar_lea.vmem [#allocation5], 4
    %v323 = vld [vmem:[%s322] sm:$0xf]
    %v325 = vsel %vm252, %v323, 0
    %327 = vmatpush.bf16.msra.mxu0 0
    %328 = vmatpush.bf16.msra.mxu0 0
    %329 = vmatpush.bf16.msra.mxu0 0
    %330 = vmatpush.bf16.msra.mxu0 0
    %331 = vmatpush.bf16.msra.mxu0 0
    %332 = vmatpush.bf16.msra.mxu0 0
    %333 = vmatpush.bf16.msra.mxu0 0
    %334 = vmatpush.bf16.msra.mxu0 %v325
    %335 = vmatmul.bf16.gmra.mxu0 %v229
    %v336 = vpop.f32.mrf.mxu0
    %v337 = vadd.f32 0.0, %v336
    %v338 = vpop.f32.mrf.mxu0
    %v339 = vadd.f32 0.0, %v338
    %340 = vmatmul.bf16.gmra.mxu0 %v232
    %v341 = vpop.f32.mrf.mxu0
    %v342 = vadd.f32 0.0, %v341
    %v343 = vpop.f32.mrf.mxu0
    %v344 = vadd.f32 0.0, %v343
    %345 = vmatmul.bf16.gmra.mxu0 %v235
    %v346 = vpop.f32.mrf.mxu0
    %v347 = vadd.f32 0.0, %v346
    %v348 = vpop.f32.mrf.mxu0
    %v349 = vadd.f32 0.0, %v348
    %350 = vmatmul.bf16.gmra.mxu0 %v238
    %v351 = vpop.f32.mrf.mxu0
    %v352 = vadd.f32 0.0, %v351
    %v353 = vpop.f32.mrf.mxu0
    %v354 = vadd.f32 0.0, %v353
    %355 = vmatmul.bf16.gmra.mxu0 %v241
    %v356 = vpop.f32.mrf.mxu0
    %v357 = vadd.f32 0.0, %v356
    %v358 = vpop.f32.mrf.mxu0
    %v359 = vadd.f32 0.0, %v358
    %360 = vmatmul.bf16.gmra.mxu0 %v244
    %v361 = vpop.f32.mrf.mxu0
    %v362 = vadd.f32 0.0, %v361
    %v363 = vpop.f32.mrf.mxu0
    %v364 = vadd.f32 0.0, %v363
    %365 = vmatmul.bf16.gmra.mxu0 %v247
    %v366 = vpop.f32.mrf.mxu0
    %v367 = vadd.f32 0.0, %v366
    %v368 = vpop.f32.mrf.mxu0
    %v369 = vadd.f32 0.0, %v368
    %370 = vmatmul.bf16.gmra.mxu0 %v250
    %v371 = vpop.f32.mrf.mxu0
    %v372 = vadd.f32 0.0, %v371
    %v373 = vpop.f32.mrf.mxu0
    %v374 = vadd.f32 0.0, %v373
    %375 = vdwg.mxu0
    %376 = vst.msk [vmem:[#allocation2 + $0x80] sm:$0xff] %vm305, %v337
    %377 = vst.msk [vmem:[#allocation2 + $0x88] sm:$0xff] %vm305, %v339
    %378 = vst.msk [vmem:[#allocation2 + $0x90] sm:$0xff] %vm305, %v342
    %379 = vst.msk [vmem:[#allocation2 + $0x98] sm:$0xff] %vm305, %v344
    %380 = vst.msk [vmem:[#allocation2 + $0xa0] sm:$0xff] %vm305, %v347
    %381 = vst.msk [vmem:[#allocation2 + $0xa8] sm:$0xff] %vm305, %v349
    %382 = vst.msk [vmem:[#allocation2 + $0xb0] sm:$0xff] %vm305, %v352
    %383 = vst.msk [vmem:[#allocation2 + $0xb8] sm:$0xff] %vm305, %v354
    %384 = vst.msk [vmem:[#allocation2 + $0xc0] sm:$0xff] %vm305, %v357
    %385 = vst.msk [vmem:[#allocation2 + $0xc8] sm:$0xff] %vm305, %v359
    %386 = vst.msk [vmem:[#allocation2 + $0xd0] sm:$0xff] %vm305, %v362
    %387 = vst.msk [vmem:[#allocation2 + $0xd8] sm:$0xff] %vm305, %v364
    %388 = vst.msk [vmem:[#allocation2 + $0xe0] sm:$0xff] %vm305, %v367
    %389 = vst.msk [vmem:[#allocation2 + $0xe8] sm:$0xff] %vm305, %v369
    %390 = vst.msk [vmem:[#allocation2 + $0xf0] sm:$0xff] %vm305, %v372
    %391 = vst.msk [vmem:[#allocation2 + $0xf8] sm:$0xff] %vm305, %v374
    %s392 = scalar_lea.vmem [#allocation5], 8
    %v393 = vld [vmem:[%s392] sm:$0xf]
    %v395 = vsel %vm252, %v393, 0
    %397 = vmatpush.bf16.msra.mxu0 0
    %398 = vmatpush.bf16.msra.mxu0 0
    %399 = vmatpush.bf16.msra.mxu0 0
    %400 = vmatpush.bf16.msra.mxu0 0
    %401 = vmatpush.bf16.msra.mxu0 0
    %402 = vmatpush.bf16.msra.mxu0 0
    %403 = vmatpush.bf16.msra.mxu0 0
    %404 = vmatpush.bf16.msra.mxu0 %v395
    %405 = vmatmul.bf16.gmra.mxu0 %v229
    %v406 = vpop.f32.mrf.mxu0
    %v407 = vadd.f32 0.0, %v406
    %v408 = vpop.f32.mrf.mxu0
    %v409 = vadd.f32 0.0, %v408
    %410 = vmatmul.bf16.gmra.mxu0 %v232
    %v411 = vpop.f32.mrf.mxu0
    %v412 = vadd.f32 0.0, %v411
    %v413 = vpop.f32.mrf.mxu0
    %v414 = vadd.f32 0.0, %v413
    %415 = vmatmul.bf16.gmra.mxu0 %v235
    %v416 = vpop.f32.mrf.mxu0
    %v417 = vadd.f32 0.0, %v416
    %v418 = vpop.f32.mrf.mxu0
    %v419 = vadd.f32 0.0, %v418
    %420 = vmatmul.bf16.gmra.mxu0 %v238
    %v421 = vpop.f32.mrf.mxu0
    %v422 = vadd.f32 0.0, %v421
    %v423 = vpop.f32.mrf.mxu0
    %v424 = vadd.f32 0.0, %v423
    %425 = vmatmul.bf16.gmra.mxu0 %v241
    %v426 = vpop.f32.mrf.mxu0
    %v427 = vadd.f32 0.0, %v426
    %v428 = vpop.f32.mrf.mxu0
    %v429 = vadd.f32 0.0, %v428
    %430 = vmatmul.bf16.gmra.mxu0 %v244
    %v431 = vpop.f32.mrf.mxu0
    %v432 = vadd.f32 0.0, %v431
    %v433 = vpop.f32.mrf.mxu0
    %v434 = vadd.f32 0.0, %v433
    %435 = vmatmul.bf16.gmra.mxu0 %v247
    %v436 = vpop.f32.mrf.mxu0
    %v437 = vadd.f32 0.0, %v436
    %v438 = vpop.f32.mrf.mxu0
    %v439 = vadd.f32 0.0, %v438
    %440 = vmatmul.bf16.gmra.mxu0 %v250
    %v441 = vpop.f32.mrf.mxu0
    %v442 = vadd.f32 0.0, %v441
    %v443 = vpop.f32.mrf.mxu0
    %v444 = vadd.f32 0.0, %v443
    %445 = vdwg.mxu0
    %446 = vst.msk [vmem:[#allocation2 + $0x100] sm:$0xff] %vm305, %v407
    %447 = vst.msk [vmem:[#allocation2 + $0x108] sm:$0xff] %vm305, %v409
    %448 = vst.msk [vmem:[#allocation2 + $0x110] sm:$0xff] %vm305, %v412
    %449 = vst.msk [vmem:[#allocation2 + $0x118] sm:$0xff] %vm305, %v414
    %450 = vst.msk [vmem:[#allocation2 + $0x120] sm:$0xff] %vm305, %v417
    %451 = vst.msk [vmem:[#allocation2 + $0x128] sm:$0xff] %vm305, %v419
    %452 = vst.msk [vmem:[#allocation2 + $0x130] sm:$0xff] %vm305, %v422
    %453 = vst.msk [vmem:[#allocation2 + $0x138] sm:$0xff] %vm305, %v424
    %454 = vst.msk [vmem:[#allocation2 + $0x140] sm:$0xff] %vm305, %v427
    %455 = vst.msk [vmem:[#allocation2 + $0x148] sm:$0xff] %vm305, %v429
    %456 = vst.msk [vmem:[#allocation2 + $0x150] sm:$0xff] %vm305, %v432
    %457 = vst.msk [vmem:[#allocation2 + $0x158] sm:$0xff] %vm305, %v434
    %458 = vst.msk [vmem:[#allocation2 + $0x160] sm:$0xff] %vm305, %v437
    %459 = vst.msk [vmem:[#allocation2 + $0x168] sm:$0xff] %vm305, %v439
    %460 = vst.msk [vmem:[#allocation2 + $0x170] sm:$0xff] %vm305, %v442
    %461 = vst.msk [vmem:[#allocation2 + $0x178] sm:$0xff] %vm305, %v444
    %s462 = scalar_lea.vmem [#allocation5], 12
    %v463 = vld [vmem:[%s462] sm:$0xf]
    %v465 = vsel %vm252, %v463, 0
    %467 = vmatpush.bf16.msra.mxu0 0
    %468 = vmatpush.bf16.msra.mxu0 0
    %469 = vmatpush.bf16.msra.mxu0 0
    %470 = vmatpush.bf16.msra.mxu0 0
    %471 = vmatpush.bf16.msra.mxu0 0
    %472 = vmatpush.bf16.msra.mxu0 0
    %473 = vmatpush.bf16.msra.mxu0 0
    %474 = vmatpush.bf16.msra.mxu0 %v465
    %475 = vmatmul.bf16.gmra.mxu0 %v229
    %v476 = vpop.f32.mrf.mxu0
    %v477 = vadd.f32 0.0, %v476
    %v478 = vpop.f32.mrf.mxu0
    %v479 = vadd.f32 0.0, %v478
    %480 = vmatmul.bf16.gmra.mxu0 %v232
    %v481 = vpop.f32.mrf.mxu0
    %v482 = vadd.f32 0.0, %v481
    %v483 = vpop.f32.mrf.mxu0
    %v484 = vadd.f32 0.0, %v483
    %485 = vmatmul.bf16.gmra.mxu0 %v235
    %v486 = vpop.f32.mrf.mxu0
    %v487 = vadd.f32 0.0, %v486
    %v488 = vpop.f32.mrf.mxu0
    %v489 = vadd.f32 0.0, %v488
    %490 = vmatmul.bf16.gmra.mxu0 %v238
    %v491 = vpop.f32.mrf.mxu0
    %v492 = vadd.f32 0.0, %v491
    %v493 = vpop.f32.mrf.mxu0
    %v494 = vadd.f32 0.0, %v493
    %495 = vmatmul.bf16.gmra.mxu0 %v241
    %v496 = vpop.f32.mrf.mxu0
    %v497 = vadd.f32 0.0, %v496
    %v498 = vpop.f32.mrf.mxu0
    %v499 = vadd.f32 0.0, %v498
    %500 = vmatmul.bf16.gmra.mxu0 %v244
    %v501 = vpop.f32.mrf.mxu0
    %v502 = vadd.f32 0.0, %v501
    %v503 = vpop.f32.mrf.mxu0
    %v504 = vadd.f32 0.0, %v503
    %505 = vmatmul.bf16.gmra.mxu0 %v247
    %v506 = vpop.f32.mrf.mxu0
    %v507 = vadd.f32 0.0, %v506
    %v508 = vpop.f32.mrf.mxu0
    %v509 = vadd.f32 0.0, %v508
    %510 = vmatmul.bf16.gmra.mxu0 %v250
    %v511 = vpop.f32.mrf.mxu0
    %v512 = vadd.f32 0.0, %v511
    %v513 = vpop.f32.mrf.mxu0
    %v514 = vadd.f32 0.0, %v513
    %515 = vdwg.mxu0
    %516 = vst.msk [vmem:[#allocation2 + $0x180] sm:$0xff] %vm305, %v477
    %517 = vst.msk [vmem:[#allocation2 + $0x188] sm:$0xff] %vm305, %v479
    %518 = vst.msk [vmem:[#allocation2 + $0x190] sm:$0xff] %vm305, %v482
    %519 = vst.msk [vmem:[#allocation2 + $0x198] sm:$0xff] %vm305, %v484
    %520 = vst.msk [vmem:[#allocation2 + $0x1a0] sm:$0xff] %vm305, %v487
    %521 = vst.msk [vmem:[#allocation2 + $0x1a8] sm:$0xff] %vm305, %v489
    %522 = vst.msk [vmem:[#allocation2 + $0x1b0] sm:$0xff] %vm305, %v492
    %523 = vst.msk [vmem:[#allocation2 + $0x1b8] sm:$0xff] %vm305, %v494
    %524 = vst.msk [vmem:[#allocation2 + $0x1c0] sm:$0xff] %vm305, %v497
    %525 = vst.msk [vmem:[#allocation2 + $0x1c8] sm:$0xff] %vm305, %v499
    %526 = vst.msk [vmem:[#allocation2 + $0x1d0] sm:$0xff] %vm305, %v502
    %527 = vst.msk [vmem:[#allocation2 + $0x1d8] sm:$0xff] %vm305, %v504
    %528 = vst.msk [vmem:[#allocation2 + $0x1e0] sm:$0xff] %vm305, %v507
    %529 = vst.msk [vmem:[#allocation2 + $0x1e8] sm:$0xff] %vm305, %v509
    %530 = vst.msk [vmem:[#allocation2 + $0x1f0] sm:$0xff] %vm305, %v512
    %531 = vst.msk [vmem:[#allocation2 + $0x1f8] sm:$0xff] %vm305, %v514
    %s532 = scalar_lea.vmem [#allocation5], 16
    %v533 = vld [vmem:[%s532] sm:$0xf]
    %v535 = vsel %vm252, %v533, 0
    %537 = vmatpush.bf16.msra.mxu0 0
    %538 = vmatpush.bf16.msra.mxu0 0
    %539 = vmatpush.bf16.msra.mxu0 0
    %540 = vmatpush.bf16.msra.mxu0 0
    %541 = vmatpush.bf16.msra.mxu0 0
    %542 = vmatpush.bf16.msra.mxu0 0
    %543 = vmatpush.bf16.msra.mxu0 0
    %544 = vmatpush.bf16.msra.mxu0 %v535
    %545 = vmatmul.bf16.gmra.mxu0 %v229
    %v546 = vpop.f32.mrf.mxu0
    %v547 = vadd.f32 0.0, %v546
    %v548 = vpop.f32.mrf.mxu0
    %v549 = vadd.f32 0.0, %v548
    %550 = vmatmul.bf16.gmra.mxu0 %v232
    %v551 = vpop.f32.mrf.mxu0
    %v552 = vadd.f32 0.0, %v551
    %v553 = vpop.f32.mrf.mxu0
    %v554 = vadd.f32 0.0, %v553
    %555 = vmatmul.bf16.gmra.mxu0 %v235
    %v556 = vpop.f32.mrf.mxu0
    %v557 = vadd.f32 0.0, %v556
    %v558 = vpop.f32.mrf.mxu0
    %v559 = vadd.f32 0.0, %v558
    %560 = vmatmul.bf16.gmra.mxu0 %v238
    %v561 = vpop.f32.mrf.mxu0
    %v562 = vadd.f32 0.0, %v561
    %v563 = vpop.f32.mrf.mxu0
    %v564 = vadd.f32 0.0, %v563
    %565 = vmatmul.bf16.gmra.mxu0 %v241
    %v566 = vpop.f32.mrf.mxu0
    %v567 = vadd.f32 0.0, %v566
    %v568 = vpop.f32.mrf.mxu0
    %v569 = vadd.f32 0.0, %v568
    %570 = vmatmul.bf16.gmra.mxu0 %v244
    %v571 = vpop.f32.mrf.mxu0
    %v572 = vadd.f32 0.0, %v571
    %v573 = vpop.f32.mrf.mxu0
    %v574 = vadd.f32 0.0, %v573
    %575 = vmatmul.bf16.gmra.mxu0 %v247
    %v576 = vpop.f32.mrf.mxu0
    %v577 = vadd.f32 0.0, %v576
    %v578 = vpop.f32.mrf.mxu0
    %v579 = vadd.f32 0.0, %v578
    %580 = vmatmul.bf16.gmra.mxu0 %v250
    %v581 = vpop.f32.mrf.mxu0
    %v582 = vadd.f32 0.0, %v581
    %v583 = vpop.f32.mrf.mxu0
    %v584 = vadd.f32 0.0, %v583
    %585 = vdwg.mxu0
    %586 = vst.msk [vmem:[#allocation2 + $0x200] sm:$0xff] %vm305, %v547
    %587 = vst.msk [vmem:[#allocation2 + $0x208] sm:$0xff] %vm305, %v549
    %588 = vst.msk [vmem:[#allocation2 + $0x210] sm:$0xff] %vm305, %v552
    %589 = vst.msk [vmem:[#allocation2 + $0x218] sm:$0xff] %vm305, %v554
    %590 = vst.msk [vmem:[#allocation2 + $0x220] sm:$0xff] %vm305, %v557
    %591 = vst.msk [vmem:[#allocation2 + $0x228] sm:$0xff] %vm305, %v559
    %592 = vst.msk [vmem:[#allocation2 + $0x230] sm:$0xff] %vm305, %v562
    %593 = vst.msk [vmem:[#allocation2 + $0x238] sm:$0xff] %vm305, %v564
    %594 = vst.msk [vmem:[#allocation2 + $0x240] sm:$0xff] %vm305, %v567
    %595 = vst.msk [vmem:[#allocation2 + $0x248] sm:$0xff] %vm305, %v569
    %596 = vst.msk [vmem:[#allocation2 + $0x250] sm:$0xff] %vm305, %v572
    %597 = vst.msk [vmem:[#allocation2 + $0x258] sm:$0xff] %vm305, %v574
    %598 = vst.msk [vmem:[#allocation2 + $0x260] sm:$0xff] %vm305, %v577
    %599 = vst.msk [vmem:[#allocation2 + $0x268] sm:$0xff] %vm305, %v579
    %600 = vst.msk [vmem:[#allocation2 + $0x270] sm:$0xff] %vm305, %v582
    %601 = vst.msk [vmem:[#allocation2 + $0x278] sm:$0xff] %vm305, %v584
    %s602 = scalar_lea.vmem [#allocation5], 20
    %v603 = vld [vmem:[%s602] sm:$0xf]
    %v605 = vsel %vm252, %v603, 0
    %607 = vmatpush.bf16.msra.mxu0 0
    %608 = vmatpush.bf16.msra.mxu0 0
    %609 = vmatpush.bf16.msra.mxu0 0
    %610 = vmatpush.bf16.msra.mxu0 0
    %611 = vmatpush.bf16.msra.mxu0 0
    %612 = vmatpush.bf16.msra.mxu0 0
    %613 = vmatpush.bf16.msra.mxu0 0
    %614 = vmatpush.bf16.msra.mxu0 %v605
    %615 = vmatmul.bf16.gmra.mxu0 %v229
    %v616 = vpop.f32.mrf.mxu0
    %v617 = vadd.f32 0.0, %v616
    %v618 = vpop.f32.mrf.mxu0
    %v619 = vadd.f32 0.0, %v618
    %620 = vmatmul.bf16.gmra.mxu0 %v232
    %v621 = vpop.f32.mrf.mxu0
    %v622 = vadd.f32 0.0, %v621
    %v623 = vpop.f32.mrf.mxu0
    %v624 = vadd.f32 0.0, %v623
    %625 = vmatmul.bf16.gmra.mxu0 %v235
    %v626 = vpop.f32.mrf.mxu0
    %v627 = vadd.f32 0.0, %v626
    %v628 = vpop.f32.mrf.mxu0
    %v629 = vadd.f32 0.0, %v628
    %630 = vmatmul.bf16.gmra.mxu0 %v238
    %v631 = vpop.f32.mrf.mxu0
    %v632 = vadd.f32 0.0, %v631
    %v633 = vpop.f32.mrf.mxu0
    %v634 = vadd.f32 0.0, %v633
    %635 = vmatmul.bf16.gmra.mxu0 %v241
    %v636 = vpop.f32.mrf.mxu0
    %v637 = vadd.f32 0.0, %v636
    %v638 = vpop.f32.mrf.mxu0
    %v639 = vadd.f32 0.0, %v638
    %640 = vmatmul.bf16.gmra.mxu0 %v244
    %v641 = vpop.f32.mrf.mxu0
    %v642 = vadd.f32 0.0, %v641
    %v643 = vpop.f32.mrf.mxu0
    %v644 = vadd.f32 0.0, %v643
    %645 = vmatmul.bf16.gmra.mxu0 %v247
    %v646 = vpop.f32.mrf.mxu0
    %v647 = vadd.f32 0.0, %v646
    %v648 = vpop.f32.mrf.mxu0
    %v649 = vadd.f32 0.0, %v648
    %650 = vmatmul.bf16.gmra.mxu0 %v250
    %v651 = vpop.f32.mrf.mxu0
    %v652 = vadd.f32 0.0, %v651
    %v653 = vpop.f32.mrf.mxu0
    %v654 = vadd.f32 0.0, %v653
    %655 = vdwg.mxu0
    %656 = vst.msk [vmem:[#allocation2 + $0x280] sm:$0xff] %vm305, %v617
    %657 = vst.msk [vmem:[#allocation2 + $0x288] sm:$0xff] %vm305, %v619
    %658 = vst.msk [vmem:[#allocation2 + $0x290] sm:$0xff] %vm305, %v622
    %659 = vst.msk [vmem:[#allocation2 + $0x298] sm:$0xff] %vm305, %v624
    %660 = vst.msk [vmem:[#allocation2 + $0x2a0] sm:$0xff] %vm305, %v627
    %661 = vst.msk [vmem:[#allocation2 + $0x2a8] sm:$0xff] %vm305, %v629
    %662 = vst.msk [vmem:[#allocation2 + $0x2b0] sm:$0xff] %vm305, %v632
    %663 = vst.msk [vmem:[#allocation2 + $0x2b8] sm:$0xff] %vm305, %v634
    %664 = vst.msk [vmem:[#allocation2 + $0x2c0] sm:$0xff] %vm305, %v637
    %665 = vst.msk [vmem:[#allocation2 + $0x2c8] sm:$0xff] %vm305, %v639
    %666 = vst.msk [vmem:[#allocation2 + $0x2d0] sm:$0xff] %vm305, %v642
    %667 = vst.msk [vmem:[#allocation2 + $0x2d8] sm:$0xff] %vm305, %v644
    %668 = vst.msk [vmem:[#allocation2 + $0x2e0] sm:$0xff] %vm305, %v647
    %669 = vst.msk [vmem:[#allocation2 + $0x2e8] sm:$0xff] %vm305, %v649
    %670 = vst.msk [vmem:[#allocation2 + $0x2f0] sm:$0xff] %vm305, %v652
    %671 = vst.msk [vmem:[#allocation2 + $0x2f8] sm:$0xff] %vm305, %v654
    %s672 = scalar_lea.vmem [#allocation5], 24
    %v673 = vld [vmem:[%s672] sm:$0xf]
    %v675 = vsel %vm252, %v673, 0
    %677 = vmatpush.bf16.msra.mxu0 0
    %678 = vmatpush.bf16.msra.mxu0 0
    %679 = vmatpush.bf16.msra.mxu0 0
    %680 = vmatpush.bf16.msra.mxu0 0
    %681 = vmatpush.bf16.msra.mxu0 0
    %682 = vmatpush.bf16.msra.mxu0 0
    %683 = vmatpush.bf16.msra.mxu0 0
    %684 = vmatpush.bf16.msra.mxu0 %v675
    %685 = vmatmul.bf16.gmra.mxu0 %v229
    %v686 = vpop.f32.mrf.mxu0
    %v687 = vadd.f32 0.0, %v686
    %v688 = vpop.f32.mrf.mxu0
    %v689 = vadd.f32 0.0, %v688
    %690 = vmatmul.bf16.gmra.mxu0 %v232
    %v691 = vpop.f32.mrf.mxu0
    %v692 = vadd.f32 0.0, %v691
    %v693 = vpop.f32.mrf.mxu0
    %v694 = vadd.f32 0.0, %v693
    %695 = vmatmul.bf16.gmra.mxu0 %v235
    %v696 = vpop.f32.mrf.mxu0
    %v697 = vadd.f32 0.0, %v696
    %v698 = vpop.f32.mrf.mxu0
    %v699 = vadd.f32 0.0, %v698
    %700 = vmatmul.bf16.gmra.mxu0 %v238
    %v701 = vpop.f32.mrf.mxu0
    %v702 = vadd.f32 0.0, %v701
    %v703 = vpop.f32.mrf.mxu0
    %v704 = vadd.f32 0.0, %v703
    %705 = vmatmul.bf16.gmra.mxu0 %v241
    %v706 = vpop.f32.mrf.mxu0
    %v707 = vadd.f32 0.0, %v706
    %v708 = vpop.f32.mrf.mxu0
    %v709 = vadd.f32 0.0, %v708
    %710 = vmatmul.bf16.gmra.mxu0 %v244
    %v711 = vpop.f32.mrf.mxu0
    %v712 = vadd.f32 0.0, %v711
    %v713 = vpop.f32.mrf.mxu0
    %v714 = vadd.f32 0.0, %v713
    %715 = vmatmul.bf16.gmra.mxu0 %v247
    %v716 = vpop.f32.mrf.mxu0
    %v717 = vadd.f32 0.0, %v716
    %v718 = vpop.f32.mrf.mxu0
    %v719 = vadd.f32 0.0, %v718
    %720 = vmatmul.bf16.gmra.mxu0 %v250
    %v721 = vpop.f32.mrf.mxu0
    %v722 = vadd.f32 0.0, %v721
    %v723 = vpop.f32.mrf.mxu0
    %v724 = vadd.f32 0.0, %v723
    %725 = vdwg.mxu0
    %726 = vst.msk [vmem:[#allocation2 + $0x300] sm:$0xff] %vm305, %v687
    %727 = vst.msk [vmem:[#allocation2 + $0x308] sm:$0xff] %vm305, %v689
    %728 = vst.msk [vmem:[#allocation2 + $0x310] sm:$0xff] %vm305, %v692
    %729 = vst.msk [vmem:[#allocation2 + $0x318] sm:$0xff] %vm305, %v694
    %730 = vst.msk [vmem:[#allocation2 + $0x320] sm:$0xff] %vm305, %v697
    %731 = vst.msk [vmem:[#allocation2 + $0x328] sm:$0xff] %vm305, %v699
    %732 = vst.msk [vmem:[#allocation2 + $0x330] sm:$0xff] %vm305, %v702
    %733 = vst.msk [vmem:[#allocation2 + $0x338] sm:$0xff] %vm305, %v704
    %734 = vst.msk [vmem:[#allocation2 + $0x340] sm:$0xff] %vm305, %v707
    %735 = vst.msk [vmem:[#allocation2 + $0x348] sm:$0xff] %vm305, %v709
    %736 = vst.msk [vmem:[#allocation2 + $0x350] sm:$0xff] %vm305, %v712
    %737 = vst.msk [vmem:[#allocation2 + $0x358] sm:$0xff] %vm305, %v714
    %738 = vst.msk [vmem:[#allocation2 + $0x360] sm:$0xff] %vm305, %v717
    %739 = vst.msk [vmem:[#allocation2 + $0x368] sm:$0xff] %vm305, %v719
    %740 = vst.msk [vmem:[#allocation2 + $0x370] sm:$0xff] %vm305, %v722
    %741 = vst.msk [vmem:[#allocation2 + $0x378] sm:$0xff] %vm305, %v724
    %s742 = scalar_lea.vmem [#allocation5], 28
    %v743 = vld [vmem:[%s742] sm:$0xf]
    %v745 = vsel %vm252, %v743, 0
    %747 = vmatpush.bf16.msra.mxu0 0
    %748 = vmatpush.bf16.msra.mxu0 0
    %749 = vmatpush.bf16.msra.mxu0 0
    %750 = vmatpush.bf16.msra.mxu0 0
    %751 = vmatpush.bf16.msra.mxu0 0
    %752 = vmatpush.bf16.msra.mxu0 0
    %753 = vmatpush.bf16.msra.mxu0 0
    %754 = vmatpush.bf16.msra.mxu0 %v745
    %755 = vmatmul.bf16.gmra.mxu0 %v229
    %v756 = vpop.f32.mrf.mxu0
    %v757 = vadd.f32 0.0, %v756
    %v758 = vpop.f32.mrf.mxu0
    %v759 = vadd.f32 0.0, %v758
    %760 = vmatmul.bf16.gmra.mxu0 %v232
    %v761 = vpop.f32.mrf.mxu0
    %v762 = vadd.f32 0.0, %v761
    %v763 = vpop.f32.mrf.mxu0
    %v764 = vadd.f32 0.0, %v763
    %765 = vmatmul.bf16.gmra.mxu0 %v235
    %v766 = vpop.f32.mrf.mxu0
    %v767 = vadd.f32 0.0, %v766
    %v768 = vpop.f32.mrf.mxu0
    %v769 = vadd.f32 0.0, %v768
    %770 = vmatmul.bf16.gmra.mxu0 %v238
    %v771 = vpop.f32.mrf.mxu0
    %v772 = vadd.f32 0.0, %v771
    %v773 = vpop.f32.mrf.mxu0
    %v774 = vadd.f32 0.0, %v773
    %775 = vmatmul.bf16.gmra.mxu0 %v241
    %v776 = vpop.f32.mrf.mxu0
    %v777 = vadd.f32 0.0, %v776
    %v778 = vpop.f32.mrf.mxu0
    %v779 = vadd.f32 0.0, %v778
    %780 = vmatmul.bf16.gmra.mxu0 %v244
    %v781 = vpop.f32.mrf.mxu0
    %v782 = vadd.f32 0.0, %v781
    %v783 = vpop.f32.mrf.mxu0
    %v784 = vadd.f32 0.0, %v783
    %785 = vmatmul.bf16.gmra.mxu0 %v247
    %v786 = vpop.f32.mrf.mxu0
    %v787 = vadd.f32 0.0, %v786
    %v788 = vpop.f32.mrf.mxu0
    %v789 = vadd.f32 0.0, %v788
    %790 = vmatmul.bf16.gmra.mxu0 %v250
    %v791 = vpop.f32.mrf.mxu0
    %v792 = vadd.f32 0.0, %v791
    %v793 = vpop.f32.mrf.mxu0
    %v794 = vadd.f32 0.0, %v793
    %795 = vdwg.mxu0
    %796 = vst.msk [vmem:[#allocation2 + $0x380] sm:$0xff] %vm305, %v757
    %797 = vst.msk [vmem:[#allocation2 + $0x388] sm:$0xff] %vm305, %v759
    %798 = vst.msk [vmem:[#allocation2 + $0x390] sm:$0xff] %vm305, %v762
    %799 = vst.msk [vmem:[#allocation2 + $0x398] sm:$0xff] %vm305, %v764
    %800 = vst.msk [vmem:[#allocation2 + $0x3a0] sm:$0xff] %vm305, %v767
    %801 = vst.msk [vmem:[#allocation2 + $0x3a8] sm:$0xff] %vm305, %v769
    %802 = vst.msk [vmem:[#allocation2 + $0x3b0] sm:$0xff] %vm305, %v772
    %803 = vst.msk [vmem:[#allocation2 + $0x3b8] sm:$0xff] %vm305, %v774
    %804 = vst.msk [vmem:[#allocation2 + $0x3c0] sm:$0xff] %vm305, %v777
    %805 = vst.msk [vmem:[#allocation2 + $0x3c8] sm:$0xff] %vm305, %v779
    %806 = vst.msk [vmem:[#allocation2 + $0x3d0] sm:$0xff] %vm305, %v782
    %807 = vst.msk [vmem:[#allocation2 + $0x3d8] sm:$0xff] %vm305, %v784
    %808 = vst.msk [vmem:[#allocation2 + $0x3e0] sm:$0xff] %vm305, %v787
    %809 = vst.msk [vmem:[#allocation2 + $0x3e8] sm:$0xff] %vm305, %v789
    %810 = vst.msk [vmem:[#allocation2 + $0x3f0] sm:$0xff] %vm305, %v792
    %811 = vst.msk [vmem:[#allocation2 + $0x3f8] sm:$0xff] %vm305, %v794
    %s812 = scalar_lea.vmem [#allocation5], 32
    %v813 = vld [vmem:[%s812] sm:$0xf]
    %v815 = vsel %vm252, %v813, 0
    %817 = vmatpush.bf16.msra.mxu0 0
    %818 = vmatpush.bf16.msra.mxu0 0
    %819 = vmatpush.bf16.msra.mxu0 0
    %820 = vmatpush.bf16.msra.mxu0 0
    %821 = vmatpush.bf16.msra.mxu0 0
    %822 = vmatpush.bf16.msra.mxu0 0
    %823 = vmatpush.bf16.msra.mxu0 0
    %824 = vmatpush.bf16.msra.mxu0 %v815
    %825 = vmatmul.bf16.gmra.mxu0 %v229
    %v826 = vpop.f32.mrf.mxu0
    %v827 = vadd.f32 0.0, %v826
    %v828 = vpop.f32.mrf.mxu0
    %v829 = vadd.f32 0.0, %v828
    %830 = vmatmul.bf16.gmra.mxu0 %v232
    %v831 = vpop.f32.mrf.mxu0
    %v832 = vadd.f32 0.0, %v831
    %v833 = vpop.f32.mrf.mxu0
    %v834 = vadd.f32 0.0, %v833
    %835 = vmatmul.bf16.gmra.mxu0 %v235
    %v836 = vpop.f32.mrf.mxu0
    %v837 = vadd.f32 0.0, %v836
    %v838 = vpop.f32.mrf.mxu0
    %v839 = vadd.f32 0.0, %v838
    %840 = vmatmul.bf16.gmra.mxu0 %v238
    %v841 = vpop.f32.mrf.mxu0
    %v842 = vadd.f32 0.0, %v841
    %v843 = vpop.f32.mrf.mxu0
    %v844 = vadd.f32 0.0, %v843
    %845 = vmatmul.bf16.gmra.mxu0 %v241
    %v846 = vpop.f32.mrf.mxu0
    %v847 = vadd.f32 0.0, %v846
    %v848 = vpop.f32.mrf.mxu0
    %v849 = vadd.f32 0.0, %v848
    %850 = vmatmul.bf16.gmra.mxu0 %v244
    %v851 = vpop.f32.mrf.mxu0
    %v852 = vadd.f32 0.0, %v851
    %v853 = vpop.f32.mrf.mxu0
    %v854 = vadd.f32 0.0, %v853
    %855 = vmatmul.bf16.gmra.mxu0 %v247
    %v856 = vpop.f32.mrf.mxu0
    %v857 = vadd.f32 0.0, %v856
    %v858 = vpop.f32.mrf.mxu0
    %v859 = vadd.f32 0.0, %v858
    %860 = vmatmul.bf16.gmra.mxu0 %v250
    %v861 = vpop.f32.mrf.mxu0
    %v862 = vadd.f32 0.0, %v861
    %v863 = vpop.f32.mrf.mxu0
    %v864 = vadd.f32 0.0, %v863
    %865 = vdwg.mxu0
    %866 = vst.msk [vmem:[#allocation2 + $0x400] sm:$0xff] %vm305, %v827
    %867 = vst.msk [vmem:[#allocation2 + $0x408] sm:$0xff] %vm305, %v829
    %868 = vst.msk [vmem:[#allocation2 + $0x410] sm:$0xff] %vm305, %v832
    %869 = vst.msk [vmem:[#allocation2 + $0x418] sm:$0xff] %vm305, %v834
    %870 = vst.msk [vmem:[#allocation2 + $0x420] sm:$0xff] %vm305, %v837
    %871 = vst.msk [vmem:[#allocation2 + $0x428] sm:$0xff] %vm305, %v839
    %872 = vst.msk [vmem:[#allocation2 + $0x430] sm:$0xff] %vm305, %v842
    %873 = vst.msk [vmem:[#allocation2 + $0x438] sm:$0xff] %vm305, %v844
    %874 = vst.msk [vmem:[#allocation2 + $0x440] sm:$0xff] %vm305, %v847
    %875 = vst.msk [vmem:[#allocation2 + $0x448] sm:$0xff] %vm305, %v849
    %876 = vst.msk [vmem:[#allocation2 + $0x450] sm:$0xff] %vm305, %v852
    %877 = vst.msk [vmem:[#allocation2 + $0x458] sm:$0xff] %vm305, %v854
    %878 = vst.msk [vmem:[#allocation2 + $0x460] sm:$0xff] %vm305, %v857
    %879 = vst.msk [vmem:[#allocation2 + $0x468] sm:$0xff] %vm305, %v859
    %880 = vst.msk [vmem:[#allocation2 + $0x470] sm:$0xff] %vm305, %v862
    %881 = vst.msk [vmem:[#allocation2 + $0x478] sm:$0xff] %vm305, %v864
    %v882 = vld [vmem:[#allocation2] sm:$0xff]
    %v883 = vld [vmem:[#allocation2 + $0x8] sm:$0xff]
    %v884 = vld [vmem:[#allocation2 + $0x10] sm:$0xff]
    %v885 = vld [vmem:[#allocation2 + $0x18] sm:$0xff]
    %v886 = vld [vmem:[#allocation2 + $0x20] sm:$0xff]
    %v887 = vld [vmem:[#allocation2 + $0x28] sm:$0xff]
    %v888 = vld [vmem:[#allocation2 + $0x30] sm:$0xff]
    %v889 = vld [vmem:[#allocation2 + $0x38] sm:$0xff]
    %v890 = vld [vmem:[#allocation2 + $0x40] sm:$0xff]
    %v891 = vld [vmem:[#allocation2 + $0x48] sm:$0xff]
    %v892 = vld [vmem:[#allocation2 + $0x50] sm:$0xff]
    %v893 = vld [vmem:[#allocation2 + $0x58] sm:$0xff]
    %v894 = vld [vmem:[#allocation2 + $0x60] sm:$0xff]
    %v895 = vld [vmem:[#allocation2 + $0x68] sm:$0xff]
    %v896 = vld [vmem:[#allocation2 + $0x70] sm:$0xff]
    %v897 = vld [vmem:[#allocation2 + $0x78] sm:$0xff]
    %v898 = vld [vmem:[#allocation2 + $0x80] sm:$0xff]
    %v899 = vld [vmem:[#allocation2 + $0x88] sm:$0xff]
    %v900 = vld [vmem:[#allocation2 + $0x90] sm:$0xff]
    %v901 = vld [vmem:[#allocation2 + $0x98] sm:$0xff]
    %v902 = vld [vmem:[#allocation2 + $0xa0] sm:$0xff]
    %v903 = vld [vmem:[#allocation2 + $0xa8] sm:$0xff]
    %v904 = vld [vmem:[#allocation2 + $0xb0] sm:$0xff]
    %v905 = vld [vmem:[#allocation2 + $0xb8] sm:$0xff]
    %v906 = vld [vmem:[#allocation2 + $0xc0] sm:$0xff]
    %v907 = vld [vmem:[#allocation2 + $0xc8] sm:$0xff]
    %v908 = vld [vmem:[#allocation2 + $0xd0] sm:$0xff]
    %v909 = vld [vmem:[#allocation2 + $0xd8] sm:$0xff]
    %v910 = vld [vmem:[#allocation2 + $0xe0] sm:$0xff]
    %v911 = vld [vmem:[#allocation2 + $0xe8] sm:$0xff]
    %v912 = vld [vmem:[#allocation2 + $0xf0] sm:$0xff]
    %v913 = vld [vmem:[#allocation2 + $0xf8] sm:$0xff]
    %v914 = vld [vmem:[#allocation2 + $0x100] sm:$0xff]
    %v915 = vld [vmem:[#allocation2 + $0x108] sm:$0xff]
    %v916 = vld [vmem:[#allocation2 + $0x110] sm:$0xff]
    %v917 = vld [vmem:[#allocation2 + $0x118] sm:$0xff]
    %v918 = vld [vmem:[#allocation2 + $0x120] sm:$0xff]
    %v919 = vld [vmem:[#allocation2 + $0x128] sm:$0xff]
    %v920 = vld [vmem:[#allocation2 + $0x130] sm:$0xff]
    %v921 = vld [vmem:[#allocation2 + $0x138] sm:$0xff]
    %v922 = vld [vmem:[#allocation2 + $0x140] sm:$0xff]
    %v923 = vld [vmem:[#allocation2 + $0x148] sm:$0xff]
    %v924 = vld [vmem:[#allocation2 + $0x150] sm:$0xff]
    %v925 = vld [vmem:[#allocation2 + $0x158] sm:$0xff]
    %v926 = vld [vmem:[#allocation2 + $0x160] sm:$0xff]
    %v927 = vld [vmem:[#allocation2 + $0x168] sm:$0xff]
    %v928 = vld [vmem:[#allocation2 + $0x170] sm:$0xff]
    %v929 = vld [vmem:[#allocation2 + $0x178] sm:$0xff]
    %v930 = vld [vmem:[#allocation2 + $0x180] sm:$0xff]
    %v931 = vld [vmem:[#allocation2 + $0x188] sm:$0xff]
    %v932 = vld [vmem:[#allocation2 + $0x190] sm:$0xff]
    %v933 = vld [vmem:[#allocation2 + $0x198] sm:$0xff]
    %v934 = vld [vmem:[#allocation2 + $0x1a0] sm:$0xff]
    %v935 = vld [vmem:[#allocation2 + $0x1a8] sm:$0xff]
    %v936 = vld [vmem:[#allocation2 + $0x1b0] sm:$0xff]
    %v937 = vld [vmem:[#allocation2 + $0x1b8] sm:$0xff]
    %v938 = vld [vmem:[#allocation2 + $0x1c0] sm:$0xff]
    %v939 = vld [vmem:[#allocation2 + $0x1c8] sm:$0xff]
    %v940 = vld [vmem:[#allocation2 + $0x1d0] sm:$0xff]
    %v941 = vld [vmem:[#allocation2 + $0x1d8] sm:$0xff]
    %v942 = vld [vmem:[#allocation2 + $0x1e0] sm:$0xff]
    %v943 = vld [vmem:[#allocation2 + $0x1e8] sm:$0xff]
    %v944 = vld [vmem:[#allocation2 + $0x1f0] sm:$0xff]
    %v945 = vld [vmem:[#allocation2 + $0x1f8] sm:$0xff]
    %v946 = vld [vmem:[#allocation2 + $0x200] sm:$0xff]
    %v947 = vld [vmem:[#allocation2 + $0x208] sm:$0xff]
    %v948 = vld [vmem:[#allocation2 + $0x210] sm:$0xff]
    %v949 = vld [vmem:[#allocation2 + $0x218] sm:$0xff]
    %v950 = vld [vmem:[#allocation2 + $0x220] sm:$0xff]
    %v951 = vld [vmem:[#allocation2 + $0x228] sm:$0xff]
    %v952 = vld [vmem:[#allocation2 + $0x230] sm:$0xff]
    %v953 = vld [vmem:[#allocation2 + $0x238] sm:$0xff]
    %v954 = vld [vmem:[#allocation2 + $0x240] sm:$0xff]
    %v955 = vld [vmem:[#allocation2 + $0x248] sm:$0xff]
    %v956 = vld [vmem:[#allocation2 + $0x250] sm:$0xff]
    %v957 = vld [vmem:[#allocation2 + $0x258] sm:$0xff]
    %v958 = vld [vmem:[#allocation2 + $0x260] sm:$0xff]
    %v959 = vld [vmem:[#allocation2 + $0x268] sm:$0xff]
    %v960 = vld [vmem:[#allocation2 + $0x270] sm:$0xff]
    %v961 = vld [vmem:[#allocation2 + $0x278] sm:$0xff]
    %v962 = vld [vmem:[#allocation2 + $0x280] sm:$0xff]
    %v963 = vld [vmem:[#allocation2 + $0x288] sm:$0xff]
    %v964 = vld [vmem:[#allocation2 + $0x290] sm:$0xff]
    %v965 = vld [vmem:[#allocation2 + $0x298] sm:$0xff]
    %v966 = vld [vmem:[#allocation2 + $0x2a0] sm:$0xff]
    %v967 = vld [vmem:[#allocation2 + $0x2a8] sm:$0xff]
    %v968 = vld [vmem:[#allocation2 + $0x2b0] sm:$0xff]
    %v969 = vld [vmem:[#allocation2 + $0x2b8] sm:$0xff]
    %v970 = vld [vmem:[#allocation2 + $0x2c0] sm:$0xff]
    %v971 = vld [vmem:[#allocation2 + $0x2c8] sm:$0xff]
    %v972 = vld [vmem:[#allocation2 + $0x2d0] sm:$0xff]
    %v973 = vld [vmem:[#allocation2 + $0x2d8] sm:$0xff]
    %v974 = vld [vmem:[#allocation2 + $0x2e0] sm:$0xff]
    %v975 = vld [vmem:[#allocation2 + $0x2e8] sm:$0xff]
    %v976 = vld [vmem:[#allocation2 + $0x2f0] sm:$0xff]
    %v977 = vld [vmem:[#allocation2 + $0x2f8] sm:$0xff]
    %v978 = vld [vmem:[#allocation2 + $0x300] sm:$0xff]
    %v979 = vld [vmem:[#allocation2 + $0x308] sm:$0xff]
    %v980 = vld [vmem:[#allocation2 + $0x310] sm:$0xff]
    %v981 = vld [vmem:[#allocation2 + $0x318] sm:$0xff]
    %v982 = vld [vmem:[#allocation2 + $0x320] sm:$0xff]
    %v983 = vld [vmem:[#allocation2 + $0x328] sm:$0xff]
    %v984 = vld [vmem:[#allocation2 + $0x330] sm:$0xff]
    %v985 = vld [vmem:[#allocation2 + $0x338] sm:$0xff]
    %v986 = vld [vmem:[#allocation2 + $0x340] sm:$0xff]
    %v987 = vld [vmem:[#allocation2 + $0x348] sm:$0xff]
    %v988 = vld [vmem:[#allocation2 + $0x350] sm:$0xff]
    %v989 = vld [vmem:[#allocation2 + $0x358] sm:$0xff]
    %v990 = vld [vmem:[#allocation2 + $0x360] sm:$0xff]
    %v991 = vld [vmem:[#allocation2 + $0x368] sm:$0xff]
    %v992 = vld [vmem:[#allocation2 + $0x370] sm:$0xff]
    %v993 = vld [vmem:[#allocation2 + $0x378] sm:$0xff]
    %v994 = vld [vmem:[#allocation2 + $0x380] sm:$0xff]
    %v995 = vld [vmem:[#allocation2 + $0x388] sm:$0xff]
    %v996 = vld [vmem:[#allocation2 + $0x390] sm:$0xff]
    %v997 = vld [vmem:[#allocation2 + $0x398] sm:$0xff]
    %v998 = vld [vmem:[#allocation2 + $0x3a0] sm:$0xff]
    %v999 = vld [vmem:[#allocation2 + $0x3a8] sm:$0xff]
    %v1000 = vld [vmem:[#allocation2 + $0x3b0] sm:$0xff]
    %v1001 = vld [vmem:[#allocation2 + $0x3b8] sm:$0xff]
    %v1002 = vld [vmem:[#allocation2 + $0x3c0] sm:$0xff]
    %v1003 = vld [vmem:[#allocation2 + $0x3c8] sm:$0xff]
    %v1004 = vld [vmem:[#allocation2 + $0x3d0] sm:$0xff]
    %v1005 = vld [vmem:[#allocation2 + $0x3d8] sm:$0xff]
    %v1006 = vld [vmem:[#allocation2 + $0x3e0] sm:$0xff]
    %v1007 = vld [vmem:[#allocation2 + $0x3e8] sm:$0xff]
    %v1008 = vld [vmem:[#allocation2 + $0x3f0] sm:$0xff]
    %v1009 = vld [vmem:[#allocation2 + $0x3f8] sm:$0xff]
    %v1010 = vld [vmem:[#allocation2 + $0x400] sm:$0xff]
    %v1011 = vld [vmem:[#allocation2 + $0x408] sm:$0xff]
    %v1012 = vld [vmem:[#allocation2 + $0x410] sm:$0xff]
    %v1013 = vld [vmem:[#allocation2 + $0x418] sm:$0xff]
    %v1014 = vld [vmem:[#allocation2 + $0x420] sm:$0xff]
    %v1015 = vld [vmem:[#allocation2 + $0x428] sm:$0xff]
    %v1016 = vld [vmem:[#allocation2 + $0x430] sm:$0xff]
    %v1017 = vld [vmem:[#allocation2 + $0x438] sm:$0xff]
    %v1018 = vld [vmem:[#allocation2 + $0x440] sm:$0xff]
    %v1019 = vld [vmem:[#allocation2 + $0x448] sm:$0xff]
    %v1020 = vld [vmem:[#allocation2 + $0x450] sm:$0xff]
    %v1021 = vld [vmem:[#allocation2 + $0x458] sm:$0xff]
    %v1022 = vld [vmem:[#allocation2 + $0x460] sm:$0xff]
    %v1023 = vld [vmem:[#allocation2 + $0x468] sm:$0xff]
    %v1024 = vld [vmem:[#allocation2 + $0x470] sm:$0xff]
    %v1025 = vld [vmem:[#allocation2 + $0x478] sm:$0xff]
    %v1026 = vld [vmem:[#allocation9] sm:$0xff]
    %v1027 = vld [vmem:[#allocation9 + $0x8] sm:$0xff]
    %v1028 = vld [vmem:[#allocation9 + $0x10] sm:$0xff]
    %v1029 = vld [vmem:[#allocation9 + $0x18] sm:$0xff]
    %v1030 = vld [vmem:[#allocation9 + $0x20] sm:$0xff]
    %v1031 = vld [vmem:[#allocation9 + $0x28] sm:$0xff]
    %v1032 = vld [vmem:[#allocation9 + $0x30] sm:$0xff]
    %v1033 = vld [vmem:[#allocation9 + $0x38] sm:$0xff]
    %v1034 = vld [vmem:[#allocation9 + $0x40] sm:$0xff]
    %v1035 = vld [vmem:[#allocation9 + $0x48] sm:$0xff]
    %v1036 = vld [vmem:[#allocation9 + $0x50] sm:$0xff]
    %v1037 = vld [vmem:[#allocation9 + $0x58] sm:$0xff]
    %v1038 = vld [vmem:[#allocation9 + $0x60] sm:$0xff]
    %v1039 = vld [vmem:[#allocation9 + $0x68] sm:$0xff]
    %v1040 = vld [vmem:[#allocation9 + $0x70] sm:$0xff]
    %v1041 = vld [vmem:[#allocation9 + $0x78] sm:$0xff]
    %v1042 = vld [vmem:[#allocation9 + $0x80] sm:$0xff]
    %v1043 = vld [vmem:[#allocation9 + $0x88] sm:$0xff]
    %v1044 = vld [vmem:[#allocation9 + $0x90] sm:$0xff]
    %v1045 = vld [vmem:[#allocation9 + $0x98] sm:$0xff]
    %v1046 = vld [vmem:[#allocation9 + $0xa0] sm:$0xff]
    %v1047 = vld [vmem:[#allocation9 + $0xa8] sm:$0xff]
    %v1048 = vld [vmem:[#allocation9 + $0xb0] sm:$0xff]
    %v1049 = vld [vmem:[#allocation9 + $0xb8] sm:$0xff]
    %v1050 = vld [vmem:[#allocation9 + $0xc0] sm:$0xff]
    %v1051 = vld [vmem:[#allocation9 + $0xc8] sm:$0xff]
    %v1052 = vld [vmem:[#allocation9 + $0xd0] sm:$0xff]
    %v1053 = vld [vmem:[#allocation9 + $0xd8] sm:$0xff]
    %v1054 = vld [vmem:[#allocation9 + $0xe0] sm:$0xff]
    %v1055 = vld [vmem:[#allocation9 + $0xe8] sm:$0xff]
    %v1056 = vld [vmem:[#allocation9 + $0xf0] sm:$0xff]
    %v1057 = vld [vmem:[#allocation9 + $0xf8] sm:$0xff]
    %v1058 = vld [vmem:[#allocation9 + $0x100] sm:$0xff]
    %v1059 = vld [vmem:[#allocation9 + $0x108] sm:$0xff]
    %v1060 = vld [vmem:[#allocation9 + $0x110] sm:$0xff]
    %v1061 = vld [vmem:[#allocation9 + $0x118] sm:$0xff]
    %1062 = vmatpush.msra.mxu0 %v897
    %1063 = vmatpush.msra.mxu0 %v896
    %1064 = vmatpush.msra.mxu0 %v895
    %1065 = vmatpush.msra.mxu0 %v894
    %1066 = vmatpush.msra.mxu0 %v893
    %1067 = vmatpush.msra.mxu0 %v892
    %1068 = vmatpush.msra.mxu0 %v891
    %1069 = vmatpush.msra.mxu0 %v890
    %1070 = vmatpush.msra.mxu0 %v889
    %1071 = vmatpush.msra.mxu0 %v888
    %1072 = vmatpush.msra.mxu0 %v887
    %1073 = vmatpush.msra.mxu0 %v886
    %1074 = vmatpush.msra.mxu0 %v885
    %1075 = vmatpush.msra.mxu0 %v884
    %1076 = vmatpush.msra.mxu0 %v883
    %1077 = vmatpush.msra.mxu0 %v882
    %1078 = vmatmul.f32.gmra.mxu0 %v1026
    %v1079 = vpop.f32.mrf.mxu0
    %v1080 = vadd.f32 0.0, %v1079
    %1081 = vmatmul.f32.gmra.mxu0 %v1035
    %v1082 = vpop.f32.mrf.mxu0
    %v1083 = vadd.f32 0.0, %v1082
    %1084 = vmatmul.f32.gmra.mxu0 %v1044
    %v1085 = vpop.f32.mrf.mxu0
    %v1086 = vadd.f32 0.0, %v1085
    %1087 = vmatmul.f32.gmra.mxu0 %v1053
    %v1088 = vpop.f32.mrf.mxu0
    %v1089 = vadd.f32 0.0, %v1088
    %1090 = vdwg.mxu0
    %1091 = vmatpush.msra.mxu0 %v913
    %1092 = vmatpush.msra.mxu0 %v912
    %1093 = vmatpush.msra.mxu0 %v911
    %1094 = vmatpush.msra.mxu0 %v910
    %1095 = vmatpush.msra.mxu0 %v909
    %1096 = vmatpush.msra.mxu0 %v908
    %1097 = vmatpush.msra.mxu0 %v907
    %1098 = vmatpush.msra.mxu0 %v906
    %1099 = vmatpush.msra.mxu0 %v905
    %1100 = vmatpush.msra.mxu0 %v904
    %1101 = vmatpush.msra.mxu0 %v903
    %1102 = vmatpush.msra.mxu0 %v902
    %1103 = vmatpush.msra.mxu0 %v901
    %1104 = vmatpush.msra.mxu0 %v900
    %1105 = vmatpush.msra.mxu0 %v899
    %1106 = vmatpush.msra.mxu0 %v898
    %1107 = vmatmul.f32.gmra.mxu0 %v1027
    %v1108 = vpop.f32.mrf.mxu0
    %v1109 = vadd.f32 %v1080, %v1108
    %1110 = vmatmul.f32.gmra.mxu0 %v1036
    %v1111 = vpop.f32.mrf.mxu0
    %v1112 = vadd.f32 %v1083, %v1111
    %1113 = vmatmul.f32.gmra.mxu0 %v1045
    %v1114 = vpop.f32.mrf.mxu0
    %v1115 = vadd.f32 %v1086, %v1114
    %1116 = vmatmul.f32.gmra.mxu0 %v1054
    %v1117 = vpop.f32.mrf.mxu0
    %v1118 = vadd.f32 %v1089, %v1117
    %1119 = vdwg.mxu0
    %1120 = vmatpush.msra.mxu0 %v929
    %1121 = vmatpush.msra.mxu0 %v928
    %1122 = vmatpush.msra.mxu0 %v927
    %1123 = vmatpush.msra.mxu0 %v926
    %1124 = vmatpush.msra.mxu0 %v925
    %1125 = vmatpush.msra.mxu0 %v924
    %1126 = vmatpush.msra.mxu0 %v923
    %1127 = vmatpush.msra.mxu0 %v922
    %1128 = vmatpush.msra.mxu0 %v921
    %1129 = vmatpush.msra.mxu0 %v920
    %1130 = vmatpush.msra.mxu0 %v919
    %1131 = vmatpush.msra.mxu0 %v918
    %1132 = vmatpush.msra.mxu0 %v917
    %1133 = vmatpush.msra.mxu0 %v916
    %1134 = vmatpush.msra.mxu0 %v915
    %1135 = vmatpush.msra.mxu0 %v914
    %1136 = vmatmul.f32.gmra.mxu0 %v1028
    %v1137 = vpop.f32.mrf.mxu0
    %v1138 = vadd.f32 %v1109, %v1137
    %1139 = vmatmul.f32.gmra.mxu0 %v1037
    %v1140 = vpop.f32.mrf.mxu0
    %v1141 = vadd.f32 %v1112, %v1140
    %1142 = vmatmul.f32.gmra.mxu0 %v1046
    %v1143 = vpop.f32.mrf.mxu0
    %v1144 = vadd.f32 %v1115, %v1143
    %1145 = vmatmul.f32.gmra.mxu0 %v1055
    %v1146 = vpop.f32.mrf.mxu0
    %v1147 = vadd.f32 %v1118, %v1146
    %1148 = vdwg.mxu0
    %1149 = vmatpush.msra.mxu0 %v945
    %1150 = vmatpush.msra.mxu0 %v944
    %1151 = vmatpush.msra.mxu0 %v943
    %1152 = vmatpush.msra.mxu0 %v942
    %1153 = vmatpush.msra.mxu0 %v941
    %1154 = vmatpush.msra.mxu0 %v940
    %1155 = vmatpush.msra.mxu0 %v939
    %1156 = vmatpush.msra.mxu0 %v938
    %1157 = vmatpush.msra.mxu0 %v937
    %1158 = vmatpush.msra.mxu0 %v936
    %1159 = vmatpush.msra.mxu0 %v935
    %1160 = vmatpush.msra.mxu0 %v934
    %1161 = vmatpush.msra.mxu0 %v933
    %1162 = vmatpush.msra.mxu0 %v932
    %1163 = vmatpush.msra.mxu0 %v931
    %1164 = vmatpush.msra.mxu0 %v930
    %1165 = vmatmul.f32.gmra.mxu0 %v1029
    %v1166 = vpop.f32.mrf.mxu0
    %v1167 = vadd.f32 %v1138, %v1166
    %1168 = vmatmul.f32.gmra.mxu0 %v1038
    %v1169 = vpop.f32.mrf.mxu0
    %v1170 = vadd.f32 %v1141, %v1169
    %1171 = vmatmul.f32.gmra.mxu0 %v1047
    %v1172 = vpop.f32.mrf.mxu0
    %v1173 = vadd.f32 %v1144, %v1172
    %1174 = vmatmul.f32.gmra.mxu0 %v1056
    %v1175 = vpop.f32.mrf.mxu0
    %v1176 = vadd.f32 %v1147, %v1175
    %1177 = vdwg.mxu0
    %1178 = vmatpush.msra.mxu0 %v961
    %1179 = vmatpush.msra.mxu0 %v960
    %1180 = vmatpush.msra.mxu0 %v959
    %1181 = vmatpush.msra.mxu0 %v958
    %1182 = vmatpush.msra.mxu0 %v957
    %1183 = vmatpush.msra.mxu0 %v956
    %1184 = vmatpush.msra.mxu0 %v955
    %1185 = vmatpush.msra.mxu0 %v954
    %1186 = vmatpush.msra.mxu0 %v953
    %1187 = vmatpush.msra.mxu0 %v952
    %1188 = vmatpush.msra.mxu0 %v951
    %1189 = vmatpush.msra.mxu0 %v950
    %1190 = vmatpush.msra.mxu0 %v949
    %1191 = vmatpush.msra.mxu0 %v948
    %1192 = vmatpush.msra.mxu0 %v947
    %1193 = vmatpush.msra.mxu0 %v946
    %1194 = vmatmul.f32.gmra.mxu0 %v1030
    %v1195 = vpop.f32.mrf.mxu0
    %v1196 = vadd.f32 %v1167, %v1195
    %1197 = vmatmul.f32.gmra.mxu0 %v1039
    %v1198 = vpop.f32.mrf.mxu0
    %v1199 = vadd.f32 %v1170, %v1198
    %1200 = vmatmul.f32.gmra.mxu0 %v1048
    %v1201 = vpop.f32.mrf.mxu0
    %v1202 = vadd.f32 %v1173, %v1201
    %1203 = vmatmul.f32.gmra.mxu0 %v1057
    %v1204 = vpop.f32.mrf.mxu0
    %v1205 = vadd.f32 %v1176, %v1204
    %1206 = vdwg.mxu0
    %1207 = vmatpush.msra.mxu0 %v977
    %1208 = vmatpush.msra.mxu0 %v976
    %1209 = vmatpush.msra.mxu0 %v975
    %1210 = vmatpush.msra.mxu0 %v974
    %1211 = vmatpush.msra.mxu0 %v973
    %1212 = vmatpush.msra.mxu0 %v972
    %1213 = vmatpush.msra.mxu0 %v971
    %1214 = vmatpush.msra.mxu0 %v970
    %1215 = vmatpush.msra.mxu0 %v969
    %1216 = vmatpush.msra.mxu0 %v968
    %1217 = vmatpush.msra.mxu0 %v967
    %1218 = vmatpush.msra.mxu0 %v966
    %1219 = vmatpush.msra.mxu0 %v965
    %1220 = vmatpush.msra.mxu0 %v964
    %1221 = vmatpush.msra.mxu0 %v963
    %1222 = vmatpush.msra.mxu0 %v962
    %1223 = vmatmul.f32.gmra.mxu0 %v1031
    %v1224 = vpop.f32.mrf.mxu0
    %v1225 = vadd.f32 %v1196, %v1224
    %1226 = vmatmul.f32.gmra.mxu0 %v1040
    %v1227 = vpop.f32.mrf.mxu0
    %v1228 = vadd.f32 %v1199, %v1227
    %1229 = vmatmul.f32.gmra.mxu0 %v1049
    %v1230 = vpop.f32.mrf.mxu0
    %v1231 = vadd.f32 %v1202, %v1230
    %1232 = vmatmul.f32.gmra.mxu0 %v1058
    %v1233 = vpop.f32.mrf.mxu0
    %v1234 = vadd.f32 %v1205, %v1233
    %1235 = vdwg.mxu0
    %1236 = vmatpush.msra.mxu0 %v993
    %1237 = vmatpush.msra.mxu0 %v992
    %1238 = vmatpush.msra.mxu0 %v991
    %1239 = vmatpush.msra.mxu0 %v990
    %1240 = vmatpush.msra.mxu0 %v989
    %1241 = vmatpush.msra.mxu0 %v988
    %1242 = vmatpush.msra.mxu0 %v987
    %1243 = vmatpush.msra.mxu0 %v986
    %1244 = vmatpush.msra.mxu0 %v985
    %1245 = vmatpush.msra.mxu0 %v984
    %1246 = vmatpush.msra.mxu0 %v983
    %1247 = vmatpush.msra.mxu0 %v982
    %1248 = vmatpush.msra.mxu0 %v981
    %1249 = vmatpush.msra.mxu0 %v980
    %1250 = vmatpush.msra.mxu0 %v979
    %1251 = vmatpush.msra.mxu0 %v978
    %1252 = vmatmul.f32.gmra.mxu0 %v1032
    %v1253 = vpop.f32.mrf.mxu0
    %v1254 = vadd.f32 %v1225, %v1253
    %1255 = vmatmul.f32.gmra.mxu0 %v1041
    %v1256 = vpop.f32.mrf.mxu0
    %v1257 = vadd.f32 %v1228, %v1256
    %1258 = vmatmul.f32.gmra.mxu0 %v1050
    %v1259 = vpop.f32.mrf.mxu0
    %v1260 = vadd.f32 %v1231, %v1259
    %1261 = vmatmul.f32.gmra.mxu0 %v1059
    %v1262 = vpop.f32.mrf.mxu0
    %v1263 = vadd.f32 %v1234, %v1262
    %1264 = vdwg.mxu0
    %1265 = vmatpush.msra.mxu0 %v1009
    %1266 = vmatpush.msra.mxu0 %v1008
    %1267 = vmatpush.msra.mxu0 %v1007
    %1268 = vmatpush.msra.mxu0 %v1006
    %1269 = vmatpush.msra.mxu0 %v1005
    %1270 = vmatpush.msra.mxu0 %v1004
    %1271 = vmatpush.msra.mxu0 %v1003
    %1272 = vmatpush.msra.mxu0 %v1002
    %1273 = vmatpush.msra.mxu0 %v1001
    %1274 = vmatpush.msra.mxu0 %v1000
    %1275 = vmatpush.msra.mxu0 %v999
    %1276 = vmatpush.msra.mxu0 %v998
    %1277 = vmatpush.msra.mxu0 %v997
    %1278 = vmatpush.msra.mxu0 %v996
    %1279 = vmatpush.msra.mxu0 %v995
    %1280 = vmatpush.msra.mxu0 %v994
    %1281 = vmatmul.f32.gmra.mxu0 %v1033
    %v1282 = vpop.f32.mrf.mxu0
    %v1283 = vadd.f32 %v1254, %v1282
    %1284 = vmatmul.f32.gmra.mxu0 %v1042
    %v1285 = vpop.f32.mrf.mxu0
    %v1286 = vadd.f32 %v1257, %v1285
    %1287 = vmatmul.f32.gmra.mxu0 %v1051
    %v1288 = vpop.f32.mrf.mxu0
    %v1289 = vadd.f32 %v1260, %v1288
    %1290 = vmatmul.f32.gmra.mxu0 %v1060
    %v1291 = vpop.f32.mrf.mxu0
    %v1292 = vadd.f32 %v1263, %v1291
    %1293 = vdwg.mxu0
    %1294 = vmatpush.msra.mxu0 %v1025
    %1295 = vmatpush.msra.mxu0 %v1024
    %1296 = vmatpush.msra.mxu0 %v1023
    %1297 = vmatpush.msra.mxu0 %v1022
    %1298 = vmatpush.msra.mxu0 %v1021
    %1299 = vmatpush.msra.mxu0 %v1020
    %1300 = vmatpush.msra.mxu0 %v1019
    %1301 = vmatpush.msra.mxu0 %v1018
    %1302 = vmatpush.msra.mxu0 %v1017
    %1303 = vmatpush.msra.mxu0 %v1016
    %1304 = vmatpush.msra.mxu0 %v1015
    %1305 = vmatpush.msra.mxu0 %v1014
    %1306 = vmatpush.msra.mxu0 %v1013
    %1307 = vmatpush.msra.mxu0 %v1012
    %1308 = vmatpush.msra.mxu0 %v1011
    %1309 = vmatpush.msra.mxu0 %v1010
    %1310 = vmatmul.f32.gmra.mxu0 %v1034
    %v1311 = vpop.f32.mrf.mxu0
    %v1312 = vadd.f32 %v1283, %v1311
    %1313 = vmatmul.f32.gmra.mxu0 %v1043
    %v1314 = vpop.f32.mrf.mxu0
    %v1315 = vadd.f32 %v1286, %v1314
    %1316 = vmatmul.f32.gmra.mxu0 %v1052
    %v1317 = vpop.f32.mrf.mxu0
    %v1318 = vadd.f32 %v1289, %v1317
    %1319 = vmatmul.f32.gmra.mxu0 %v1061
    %v1320 = vpop.f32.mrf.mxu0
    %v1321 = vadd.f32 %v1292, %v1320
    %1322 = vdwg.mxu0
    %s1323 = scalar_lea.vmem [#allocation9], 288
    %v1324 = vld [vmem:[%s1323] sm:$0xff]
    %v1325 = vld [vmem:[%s1323 + $0x8] sm:$0xff]
    %v1326 = vld [vmem:[%s1323 + $0x10] sm:$0xff]
    %v1327 = vld [vmem:[%s1323 + $0x18] sm:$0xff]
    %v1328 = vld [vmem:[%s1323 + $0x20] sm:$0xff]
    %v1329 = vld [vmem:[%s1323 + $0x28] sm:$0xff]
    %v1330 = vld [vmem:[%s1323 + $0x30] sm:$0xff]
    %v1331 = vld [vmem:[%s1323 + $0x38] sm:$0xff]
    %v1332 = vld [vmem:[%s1323 + $0x40] sm:$0xff]
    %v1333 = vld [vmem:[%s1323 + $0x48] sm:$0xff]
    %v1334 = vld [vmem:[%s1323 + $0x50] sm:$0xff]
    %v1335 = vld [vmem:[%s1323 + $0x58] sm:$0xff]
    %v1336 = vld [vmem:[%s1323 + $0x60] sm:$0xff]
    %v1337 = vld [vmem:[%s1323 + $0x68] sm:$0xff]
    %v1338 = vld [vmem:[%s1323 + $0x70] sm:$0xff]
    %v1339 = vld [vmem:[%s1323 + $0x78] sm:$0xff]
    %v1340 = vld [vmem:[%s1323 + $0x80] sm:$0xff]
    %v1341 = vld [vmem:[%s1323 + $0x88] sm:$0xff]
    %v1342 = vld [vmem:[%s1323 + $0x90] sm:$0xff]
    %v1343 = vld [vmem:[%s1323 + $0x98] sm:$0xff]
    %v1344 = vld [vmem:[%s1323 + $0xa0] sm:$0xff]
    %v1345 = vld [vmem:[%s1323 + $0xa8] sm:$0xff]
    %v1346 = vld [vmem:[%s1323 + $0xb0] sm:$0xff]
    %v1347 = vld [vmem:[%s1323 + $0xb8] sm:$0xff]
    %v1348 = vld [vmem:[%s1323 + $0xc0] sm:$0xff]
    %v1349 = vld [vmem:[%s1323 + $0xc8] sm:$0xff]
    %v1350 = vld [vmem:[%s1323 + $0xd0] sm:$0xff]
    %v1351 = vld [vmem:[%s1323 + $0xd8] sm:$0xff]
    %v1352 = vld [vmem:[%s1323 + $0xe0] sm:$0xff]
    %v1353 = vld [vmem:[%s1323 + $0xe8] sm:$0xff]
    %v1354 = vld [vmem:[%s1323 + $0xf0] sm:$0xff]
    %v1355 = vld [vmem:[%s1323 + $0xf8] sm:$0xff]
    %v1356 = vld [vmem:[%s1323 + $0x100] sm:$0xff]
    %v1357 = vld [vmem:[%s1323 + $0x108] sm:$0xff]
    %v1358 = vld [vmem:[%s1323 + $0x110] sm:$0xff]
    %v1359 = vld [vmem:[%s1323 + $0x118] sm:$0xff]
    %1360 = vmatpush.msra.mxu0 %v897
    %1361 = vmatpush.msra.mxu0 %v896
    %1362 = vmatpush.msra.mxu0 %v895
    %1363 = vmatpush.msra.mxu0 %v894
    %1364 = vmatpush.msra.mxu0 %v893
    %1365 = vmatpush.msra.mxu0 %v892
    %1366 = vmatpush.msra.mxu0 %v891
    %1367 = vmatpush.msra.mxu0 %v890
    %1368 = vmatpush.msra.mxu0 %v889
    %1369 = vmatpush.msra.mxu0 %v888
    %1370 = vmatpush.msra.mxu0 %v887
    %1371 = vmatpush.msra.mxu0 %v886
    %1372 = vmatpush.msra.mxu0 %v885
    %1373 = vmatpush.msra.mxu0 %v884
    %1374 = vmatpush.msra.mxu0 %v883
    %1375 = vmatpush.msra.mxu0 %v882
    %1376 = vmatmul.f32.gmra.mxu0 %v1324
    %v1377 = vpop.f32.mrf.mxu0
    %v1378 = vadd.f32 0.0, %v1377
    %1379 = vmatmul.f32.gmra.mxu0 %v1333
    %v1380 = vpop.f32.mrf.mxu0
    %v1381 = vadd.f32 0.0, %v1380
    %1382 = vmatmul.f32.gmra.mxu0 %v1342
    %v1383 = vpop.f32.mrf.mxu0
    %v1384 = vadd.f32 0.0, %v1383
    %1385 = vmatmul.f32.gmra.mxu0 %v1351
    %v1386 = vpop.f32.mrf.mxu0
    %v1387 = vadd.f32 0.0, %v1386
    %1388 = vdwg.mxu0
    %1389 = vmatpush.msra.mxu0 %v913
    %1390 = vmatpush.msra.mxu0 %v912
    %1391 = vmatpush.msra.mxu0 %v911
    %1392 = vmatpush.msra.mxu0 %v910
    %1393 = vmatpush.msra.mxu0 %v909
    %1394 = vmatpush.msra.mxu0 %v908
    %1395 = vmatpush.msra.mxu0 %v907
    %1396 = vmatpush.msra.mxu0 %v906
    %1397 = vmatpush.msra.mxu0 %v905
    %1398 = vmatpush.msra.mxu0 %v904
    %1399 = vmatpush.msra.mxu0 %v903
    %1400 = vmatpush.msra.mxu0 %v902
    %1401 = vmatpush.msra.mxu0 %v901
    %1402 = vmatpush.msra.mxu0 %v900
    %1403 = vmatpush.msra.mxu0 %v899
    %1404 = vmatpush.msra.mxu0 %v898
    %1405 = vmatmul.f32.gmra.mxu0 %v1325
    %v1406 = vpop.f32.mrf.mxu0
    %v1407 = vadd.f32 %v1378, %v1406
    %1408 = vmatmul.f32.gmra.mxu0 %v1334
    %v1409 = vpop.f32.mrf.mxu0
    %v1410 = vadd.f32 %v1381, %v1409
    %1411 = vmatmul.f32.gmra.mxu0 %v1343
    %v1412 = vpop.f32.mrf.mxu0
    %v1413 = vadd.f32 %v1384, %v1412
    %1414 = vmatmul.f32.gmra.mxu0 %v1352
    %v1415 = vpop.f32.mrf.mxu0
    %v1416 = vadd.f32 %v1387, %v1415
    %1417 = vdwg.mxu0
    %1418 = vmatpush.msra.mxu0 %v929
    %1419 = vmatpush.msra.mxu0 %v928
    %1420 = vmatpush.msra.mxu0 %v927
    %1421 = vmatpush.msra.mxu0 %v926
    %1422 = vmatpush.msra.mxu0 %v925
    %1423 = vmatpush.msra.mxu0 %v924
    %1424 = vmatpush.msra.mxu0 %v923
    %1425 = vmatpush.msra.mxu0 %v922
    %1426 = vmatpush.msra.mxu0 %v921
    %1427 = vmatpush.msra.mxu0 %v920
    %1428 = vmatpush.msra.mxu0 %v919
    %1429 = vmatpush.msra.mxu0 %v918
    %1430 = vmatpush.msra.mxu0 %v917
    %1431 = vmatpush.msra.mxu0 %v916
    %1432 = vmatpush.msra.mxu0 %v915
    %1433 = vmatpush.msra.mxu0 %v914
    %1434 = vmatmul.f32.gmra.mxu0 %v1326
    %v1435 = vpop.f32.mrf.mxu0
    %v1436 = vadd.f32 %v1407, %v1435
    %1437 = vmatmul.f32.gmra.mxu0 %v1335
    %v1438 = vpop.f32.mrf.mxu0
    %v1439 = vadd.f32 %v1410, %v1438
    %1440 = vmatmul.f32.gmra.mxu0 %v1344
    %v1441 = vpop.f32.mrf.mxu0
    %v1442 = vadd.f32 %v1413, %v1441
    %1443 = vmatmul.f32.gmra.mxu0 %v1353
    %v1444 = vpop.f32.mrf.mxu0
    %v1445 = vadd.f32 %v1416, %v1444
    %1446 = vdwg.mxu0
    %1447 = vmatpush.msra.mxu0 %v945
    %1448 = vmatpush.msra.mxu0 %v944
    %1449 = vmatpush.msra.mxu0 %v943
    %1450 = vmatpush.msra.mxu0 %v942
    %1451 = vmatpush.msra.mxu0 %v941
    %1452 = vmatpush.msra.mxu0 %v940
    %1453 = vmatpush.msra.mxu0 %v939
    %1454 = vmatpush.msra.mxu0 %v938
    %1455 = vmatpush.msra.mxu0 %v937
    %1456 = vmatpush.msra.mxu0 %v936
    %1457 = vmatpush.msra.mxu0 %v935
    %1458 = vmatpush.msra.mxu0 %v934
    %1459 = vmatpush.msra.mxu0 %v933
    %1460 = vmatpush.msra.mxu0 %v932
    %1461 = vmatpush.msra.mxu0 %v931
    %1462 = vmatpush.msra.mxu0 %v930
    %1463 = vmatmul.f32.gmra.mxu0 %v1327
    %v1464 = vpop.f32.mrf.mxu0
    %v1465 = vadd.f32 %v1436, %v1464
    %1466 = vmatmul.f32.gmra.mxu0 %v1336
    %v1467 = vpop.f32.mrf.mxu0
    %v1468 = vadd.f32 %v1439, %v1467
    %1469 = vmatmul.f32.gmra.mxu0 %v1345
    %v1470 = vpop.f32.mrf.mxu0
    %v1471 = vadd.f32 %v1442, %v1470
    %1472 = vmatmul.f32.gmra.mxu0 %v1354
    %v1473 = vpop.f32.mrf.mxu0
    %v1474 = vadd.f32 %v1445, %v1473
    %1475 = vdwg.mxu0
    %1476 = vmatpush.msra.mxu0 %v961
    %1477 = vmatpush.msra.mxu0 %v960
    %1478 = vmatpush.msra.mxu0 %v959
    %1479 = vmatpush.msra.mxu0 %v958
    %1480 = vmatpush.msra.mxu0 %v957
    %1481 = vmatpush.msra.mxu0 %v956
    %1482 = vmatpush.msra.mxu0 %v955
    %1483 = vmatpush.msra.mxu0 %v954
    %1484 = vmatpush.msra.mxu0 %v953
    %1485 = vmatpush.msra.mxu0 %v952
    %1486 = vmatpush.msra.mxu0 %v951
    %1487 = vmatpush.msra.mxu0 %v950
    %1488 = vmatpush.msra.mxu0 %v949
    %1489 = vmatpush.msra.mxu0 %v948
    %1490 = vmatpush.msra.mxu0 %v947
    %1491 = vmatpush.msra.mxu0 %v946
    %1492 = vmatmul.f32.gmra.mxu0 %v1328
    %v1493 = vpop.f32.mrf.mxu0
    %v1494 = vadd.f32 %v1465, %v1493
    %1495 = vmatmul.f32.gmra.mxu0 %v1337
    %v1496 = vpop.f32.mrf.mxu0
    %v1497 = vadd.f32 %v1468, %v1496
    %1498 = vmatmul.f32.gmra.mxu0 %v1346
    %v1499 = vpop.f32.mrf.mxu0
    %v1500 = vadd.f32 %v1471, %v1499
    %1501 = vmatmul.f32.gmra.mxu0 %v1355
    %v1502 = vpop.f32.mrf.mxu0
    %v1503 = vadd.f32 %v1474, %v1502
    %1504 = vdwg.mxu0
    %1505 = vmatpush.msra.mxu0 %v977
    %1506 = vmatpush.msra.mxu0 %v976
    %1507 = vmatpush.msra.mxu0 %v975
    %1508 = vmatpush.msra.mxu0 %v974
    %1509 = vmatpush.msra.mxu0 %v973
    %1510 = vmatpush.msra.mxu0 %v972
    %1511 = vmatpush.msra.mxu0 %v971
    %1512 = vmatpush.msra.mxu0 %v970
    %1513 = vmatpush.msra.mxu0 %v969
    %1514 = vmatpush.msra.mxu0 %v968
    %1515 = vmatpush.msra.mxu0 %v967
    %1516 = vmatpush.msra.mxu0 %v966
    %1517 = vmatpush.msra.mxu0 %v965
    %1518 = vmatpush.msra.mxu0 %v964
    %1519 = vmatpush.msra.mxu0 %v963
    %1520 = vmatpush.msra.mxu0 %v962
    %1521 = vmatmul.f32.gmra.mxu0 %v1329
    %v1522 = vpop.f32.mrf.mxu0
    %v1523 = vadd.f32 %v1494, %v1522
    %1524 = vmatmul.f32.gmra.mxu0 %v1338
    %v1525 = vpop.f32.mrf.mxu0
    %v1526 = vadd.f32 %v1497, %v1525
    %1527 = vmatmul.f32.gmra.mxu0 %v1347
    %v1528 = vpop.f32.mrf.mxu0
    %v1529 = vadd.f32 %v1500, %v1528
    %1530 = vmatmul.f32.gmra.mxu0 %v1356
    %v1531 = vpop.f32.mrf.mxu0
    %v1532 = vadd.f32 %v1503, %v1531
    %1533 = vdwg.mxu0
    %1534 = vmatpush.msra.mxu0 %v993
    %1535 = vmatpush.msra.mxu0 %v992
    %1536 = vmatpush.msra.mxu0 %v991
    %1537 = vmatpush.msra.mxu0 %v990
    %1538 = vmatpush.msra.mxu0 %v989
    %1539 = vmatpush.msra.mxu0 %v988
    %1540 = vmatpush.msra.mxu0 %v987
    %1541 = vmatpush.msra.mxu0 %v986
    %1542 = vmatpush.msra.mxu0 %v985
    %1543 = vmatpush.msra.mxu0 %v984
    %1544 = vmatpush.msra.mxu0 %v983
    %1545 = vmatpush.msra.mxu0 %v982
    %1546 = vmatpush.msra.mxu0 %v981
    %1547 = vmatpush.msra.mxu0 %v980
    %1548 = vmatpush.msra.mxu0 %v979
    %1549 = vmatpush.msra.mxu0 %v978
    %1550 = vmatmul.f32.gmra.mxu0 %v1330
    %v1551 = vpop.f32.mrf.mxu0
    %v1552 = vadd.f32 %v1523, %v1551
    %1553 = vmatmul.f32.gmra.mxu0 %v1339
    %v1554 = vpop.f32.mrf.mxu0
    %v1555 = vadd.f32 %v1526, %v1554
    %1556 = vmatmul.f32.gmra.mxu0 %v1348
    %v1557 = vpop.f32.mrf.mxu0
    %v1558 = vadd.f32 %v1529, %v1557
    %1559 = vmatmul.f32.gmra.mxu0 %v1357
    %v1560 = vpop.f32.mrf.mxu0
    %v1561 = vadd.f32 %v1532, %v1560
    %1562 = vdwg.mxu0
    %1563 = vmatpush.msra.mxu0 %v1009
    %1564 = vmatpush.msra.mxu0 %v1008
    %1565 = vmatpush.msra.mxu0 %v1007
    %1566 = vmatpush.msra.mxu0 %v1006
    %1567 = vmatpush.msra.mxu0 %v1005
    %1568 = vmatpush.msra.mxu0 %v1004
    %1569 = vmatpush.msra.mxu0 %v1003
    %1570 = vmatpush.msra.mxu0 %v1002
    %1571 = vmatpush.msra.mxu0 %v1001
    %1572 = vmatpush.msra.mxu0 %v1000
    %1573 = vmatpush.msra.mxu0 %v999
    %1574 = vmatpush.msra.mxu0 %v998
    %1575 = vmatpush.msra.mxu0 %v997
    %1576 = vmatpush.msra.mxu0 %v996
    %1577 = vmatpush.msra.mxu0 %v995
    %1578 = vmatpush.msra.mxu0 %v994
    %1579 = vmatmul.f32.gmra.mxu0 %v1331
    %v1580 = vpop.f32.mrf.mxu0
    %v1581 = vadd.f32 %v1552, %v1580
    %1582 = vmatmul.f32.gmra.mxu0 %v1340
    %v1583 = vpop.f32.mrf.mxu0
    %v1584 = vadd.f32 %v1555, %v1583
    %1585 = vmatmul.f32.gmra.mxu0 %v1349
    %v1586 = vpop.f32.mrf.mxu0
    %v1587 = vadd.f32 %v1558, %v1586
    %1588 = vmatmul.f32.gmra.mxu0 %v1358
    %v1589 = vpop.f32.mrf.mxu0
    %v1590 = vadd.f32 %v1561, %v1589
    %1591 = vdwg.mxu0
    %1592 = vmatpush.msra.mxu0 %v1025
    %1593 = vmatpush.msra.mxu0 %v1024
    %1594 = vmatpush.msra.mxu0 %v1023
    %1595 = vmatpush.msra.mxu0 %v1022
    %1596 = vmatpush.msra.mxu0 %v1021
    %1597 = vmatpush.msra.mxu0 %v1020
    %1598 = vmatpush.msra.mxu0 %v1019
    %1599 = vmatpush.msra.mxu0 %v1018
    %1600 = vmatpush.msra.mxu0 %v1017
    %1601 = vmatpush.msra.mxu0 %v1016
    %1602 = vmatpush.msra.mxu0 %v1015
    %1603 = vmatpush.msra.mxu0 %v1014
    %1604 = vmatpush.msra.mxu0 %v1013
    %1605 = vmatpush.msra.mxu0 %v1012
    %1606 = vmatpush.msra.mxu0 %v1011
    %1607 = vmatpush.msra.mxu0 %v1010
    %1608 = vmatmul.f32.gmra.mxu0 %v1332
    %v1609 = vpop.f32.mrf.mxu0
    %v1610 = vadd.f32 %v1581, %v1609
    %1611 = vmatmul.f32.gmra.mxu0 %v1341
    %v1612 = vpop.f32.mrf.mxu0
    %v1613 = vadd.f32 %v1584, %v1612
    %1614 = vmatmul.f32.gmra.mxu0 %v1350
    %v1615 = vpop.f32.mrf.mxu0
    %v1616 = vadd.f32 %v1587, %v1615
    %1617 = vmatmul.f32.gmra.mxu0 %v1359
    %v1618 = vpop.f32.mrf.mxu0
    %v1619 = vadd.f32 %v1590, %v1618
    %1620 = vdwg.mxu0
    %v1621 = vmax.f32 %v1312, %v1610
    %v1622 = vmax.f32 %v1315, %v1613
    %v1623 = vmax.f32 %v1318, %v1616
    %v1624 = vmax.f32 %v1321, %v1619
    %s1625 = scalar_lea.vmem [#allocation9], 576
    %v1626 = vld [vmem:[%s1625] sm:$0xff]
    %v1627 = vld [vmem:[%s1625 + $0x8] sm:$0xff]
    %v1628 = vld [vmem:[%s1625 + $0x10] sm:$0xff]
    %v1629 = vld [vmem:[%s1625 + $0x18] sm:$0xff]
    %v1630 = vld [vmem:[%s1625 + $0x20] sm:$0xff]
    %v1631 = vld [vmem:[%s1625 + $0x28] sm:$0xff]
    %v1632 = vld [vmem:[%s1625 + $0x30] sm:$0xff]
    %v1633 = vld [vmem:[%s1625 + $0x38] sm:$0xff]
    %v1634 = vld [vmem:[%s1625 + $0x40] sm:$0xff]
    %v1635 = vld [vmem:[%s1625 + $0x48] sm:$0xff]
    %v1636 = vld [vmem:[%s1625 + $0x50] sm:$0xff]
    %v1637 = vld [vmem:[%s1625 + $0x58] sm:$0xff]
    %v1638 = vld [vmem:[%s1625 + $0x60] sm:$0xff]
    %v1639 = vld [vmem:[%s1625 + $0x68] sm:$0xff]
    %v1640 = vld [vmem:[%s1625 + $0x70] sm:$0xff]
    %v1641 = vld [vmem:[%s1625 + $0x78] sm:$0xff]
    %v1642 = vld [vmem:[%s1625 + $0x80] sm:$0xff]
    %v1643 = vld [vmem:[%s1625 + $0x88] sm:$0xff]
    %v1644 = vld [vmem:[%s1625 + $0x90] sm:$0xff]
    %v1645 = vld [vmem:[%s1625 + $0x98] sm:$0xff]
    %v1646 = vld [vmem:[%s1625 + $0xa0] sm:$0xff]
    %v1647 = vld [vmem:[%s1625 + $0xa8] sm:$0xff]
    %v1648 = vld [vmem:[%s1625 + $0xb0] sm:$0xff]
    %v1649 = vld [vmem:[%s1625 + $0xb8] sm:$0xff]
    %v1650 = vld [vmem:[%s1625 + $0xc0] sm:$0xff]
    %v1651 = vld [vmem:[%s1625 + $0xc8] sm:$0xff]
    %v1652 = vld [vmem:[%s1625 + $0xd0] sm:$0xff]
    %v1653 = vld [vmem:[%s1625 + $0xd8] sm:$0xff]
    %v1654 = vld [vmem:[%s1625 + $0xe0] sm:$0xff]
    %v1655 = vld [vmem:[%s1625 + $0xe8] sm:$0xff]
    %v1656 = vld [vmem:[%s1625 + $0xf0] sm:$0xff]
    %v1657 = vld [vmem:[%s1625 + $0xf8] sm:$0xff]
    %v1658 = vld [vmem:[%s1625 + $0x100] sm:$0xff]
    %v1659 = vld [vmem:[%s1625 + $0x108] sm:$0xff]
    %v1660 = vld [vmem:[%s1625 + $0x110] sm:$0xff]
    %v1661 = vld [vmem:[%s1625 + $0x118] sm:$0xff]
    %1662 = vmatpush.msra.mxu0 %v897
    %1663 = vmatpush.msra.mxu0 %v896
    %1664 = vmatpush.msra.mxu0 %v895
    %1665 = vmatpush.msra.mxu0 %v894
    %1666 = vmatpush.msra.mxu0 %v893
    %1667 = vmatpush.msra.mxu0 %v892
    %1668 = vmatpush.msra.mxu0 %v891
    %1669 = vmatpush.msra.mxu0 %v890
    %1670 = vmatpush.msra.mxu0 %v889
    %1671 = vmatpush.msra.mxu0 %v888
    %1672 = vmatpush.msra.mxu0 %v887
    %1673 = vmatpush.msra.mxu0 %v886
    %1674 = vmatpush.msra.mxu0 %v885
    %1675 = vmatpush.msra.mxu0 %v884
    %1676 = vmatpush.msra.mxu0 %v883
    %1677 = vmatpush.msra.mxu0 %v882
    %1678 = vmatmul.f32.gmra.mxu0 %v1626
    %v1679 = vpop.f32.mrf.mxu0
    %v1680 = vadd.f32 0.0, %v1679
    %1681 = vmatmul.f32.gmra.mxu0 %v1635
    %v1682 = vpop.f32.mrf.mxu0
    %v1683 = vadd.f32 0.0, %v1682
    %1684 = vmatmul.f32.gmra.mxu0 %v1644
    %v1685 = vpop.f32.mrf.mxu0
    %v1686 = vadd.f32 0.0, %v1685
    %1687 = vmatmul.f32.gmra.mxu0 %v1653
    %v1688 = vpop.f32.mrf.mxu0
    %v1689 = vadd.f32 0.0, %v1688
    %1690 = vdwg.mxu0
    %1691 = vmatpush.msra.mxu0 %v913
    %1692 = vmatpush.msra.mxu0 %v912
    %1693 = vmatpush.msra.mxu0 %v911
    %1694 = vmatpush.msra.mxu0 %v910
    %1695 = vmatpush.msra.mxu0 %v909
    %1696 = vmatpush.msra.mxu0 %v908
    %1697 = vmatpush.msra.mxu0 %v907
    %1698 = vmatpush.msra.mxu0 %v906
    %1699 = vmatpush.msra.mxu0 %v905
    %1700 = vmatpush.msra.mxu0 %v904
    %1701 = vmatpush.msra.mxu0 %v903
    %1702 = vmatpush.msra.mxu0 %v902
    %1703 = vmatpush.msra.mxu0 %v901
    %1704 = vmatpush.msra.mxu0 %v900
    %1705 = vmatpush.msra.mxu0 %v899
    %1706 = vmatpush.msra.mxu0 %v898
    %1707 = vmatmul.f32.gmra.mxu0 %v1627
    %v1708 = vpop.f32.mrf.mxu0
    %v1709 = vadd.f32 %v1680, %v1708
    %1710 = vmatmul.f32.gmra.mxu0 %v1636
    %v1711 = vpop.f32.mrf.mxu0
    %v1712 = vadd.f32 %v1683, %v1711
    %1713 = vmatmul.f32.gmra.mxu0 %v1645
    %v1714 = vpop.f32.mrf.mxu0
    %v1715 = vadd.f32 %v1686, %v1714
    %1716 = vmatmul.f32.gmra.mxu0 %v1654
    %v1717 = vpop.f32.mrf.mxu0
    %v1718 = vadd.f32 %v1689, %v1717
    %1719 = vdwg.mxu0
    %1720 = vmatpush.msra.mxu0 %v929
    %1721 = vmatpush.msra.mxu0 %v928
    %1722 = vmatpush.msra.mxu0 %v927
    %1723 = vmatpush.msra.mxu0 %v926
    %1724 = vmatpush.msra.mxu0 %v925
    %1725 = vmatpush.msra.mxu0 %v924
    %1726 = vmatpush.msra.mxu0 %v923
    %1727 = vmatpush.msra.mxu0 %v922
    %1728 = vmatpush.msra.mxu0 %v921
    %1729 = vmatpush.msra.mxu0 %v920
    %1730 = vmatpush.msra.mxu0 %v919
    %1731 = vmatpush.msra.mxu0 %v918
    %1732 = vmatpush.msra.mxu0 %v917
    %1733 = vmatpush.msra.mxu0 %v916
    %1734 = vmatpush.msra.mxu0 %v915
    %1735 = vmatpush.msra.mxu0 %v914
    %1736 = vmatmul.f32.gmra.mxu0 %v1628
    %v1737 = vpop.f32.mrf.mxu0
    %v1738 = vadd.f32 %v1709, %v1737
    %1739 = vmatmul.f32.gmra.mxu0 %v1637
    %v1740 = vpop.f32.mrf.mxu0
    %v1741 = vadd.f32 %v1712, %v1740
    %1742 = vmatmul.f32.gmra.mxu0 %v1646
    %v1743 = vpop.f32.mrf.mxu0
    %v1744 = vadd.f32 %v1715, %v1743
    %1745 = vmatmul.f32.gmra.mxu0 %v1655
    %v1746 = vpop.f32.mrf.mxu0
    %v1747 = vadd.f32 %v1718, %v1746
    %1748 = vdwg.mxu0
    %1749 = vmatpush.msra.mxu0 %v945
    %1750 = vmatpush.msra.mxu0 %v944
    %1751 = vmatpush.msra.mxu0 %v943
    %1752 = vmatpush.msra.mxu0 %v942
    %1753 = vmatpush.msra.mxu0 %v941
    %1754 = vmatpush.msra.mxu0 %v940
    %1755 = vmatpush.msra.mxu0 %v939
    %1756 = vmatpush.msra.mxu0 %v938
    %1757 = vmatpush.msra.mxu0 %v937
    %1758 = vmatpush.msra.mxu0 %v936
    %1759 = vmatpush.msra.mxu0 %v935
    %1760 = vmatpush.msra.mxu0 %v934
    %1761 = vmatpush.msra.mxu0 %v933
    %1762 = vmatpush.msra.mxu0 %v932
    %1763 = vmatpush.msra.mxu0 %v931
    %1764 = vmatpush.msra.mxu0 %v930
    %1765 = vmatmul.f32.gmra.mxu0 %v1629
    %v1766 = vpop.f32.mrf.mxu0
    %v1767 = vadd.f32 %v1738, %v1766
    %1768 = vmatmul.f32.gmra.mxu0 %v1638
    %v1769 = vpop.f32.mrf.mxu0
    %v1770 = vadd.f32 %v1741, %v1769
    %1771 = vmatmul.f32.gmra.mxu0 %v1647
    %v1772 = vpop.f32.mrf.mxu0
    %v1773 = vadd.f32 %v1744, %v1772
    %1774 = vmatmul.f32.gmra.mxu0 %v1656
    %v1775 = vpop.f32.mrf.mxu0
    %v1776 = vadd.f32 %v1747, %v1775
    %1777 = vdwg.mxu0
    %1778 = vmatpush.msra.mxu0 %v961
    %1779 = vmatpush.msra.mxu0 %v960
    %1780 = vmatpush.msra.mxu0 %v959
    %1781 = vmatpush.msra.mxu0 %v958
    %1782 = vmatpush.msra.mxu0 %v957
    %1783 = vmatpush.msra.mxu0 %v956
    %1784 = vmatpush.msra.mxu0 %v955
    %1785 = vmatpush.msra.mxu0 %v954
    %1786 = vmatpush.msra.mxu0 %v953
    %1787 = vmatpush.msra.mxu0 %v952
    %1788 = vmatpush.msra.mxu0 %v951
    %1789 = vmatpush.msra.mxu0 %v950
    %1790 = vmatpush.msra.mxu0 %v949
    %1791 = vmatpush.msra.mxu0 %v948
    %1792 = vmatpush.msra.mxu0 %v947
    %1793 = vmatpush.msra.mxu0 %v946
    %1794 = vmatmul.f32.gmra.mxu0 %v1630
    %v1795 = vpop.f32.mrf.mxu0
    %v1796 = vadd.f32 %v1767, %v1795
    %1797 = vmatmul.f32.gmra.mxu0 %v1639
    %v1798 = vpop.f32.mrf.mxu0
    %v1799 = vadd.f32 %v1770, %v1798
    %1800 = vmatmul.f32.gmra.mxu0 %v1648
    %v1801 = vpop.f32.mrf.mxu0
    %v1802 = vadd.f32 %v1773, %v1801
    %1803 = vmatmul.f32.gmra.mxu0 %v1657
    %v1804 = vpop.f32.mrf.mxu0
    %v1805 = vadd.f32 %v1776, %v1804
    %1806 = vdwg.mxu0
    %1807 = vmatpush.msra.mxu0 %v977
    %1808 = vmatpush.msra.mxu0 %v976
    %1809 = vmatpush.msra.mxu0 %v975
    %1810 = vmatpush.msra.mxu0 %v974
    %1811 = vmatpush.msra.mxu0 %v973
    %1812 = vmatpush.msra.mxu0 %v972
    %1813 = vmatpush.msra.mxu0 %v971
    %1814 = vmatpush.msra.mxu0 %v970
    %1815 = vmatpush.msra.mxu0 %v969
    %1816 = vmatpush.msra.mxu0 %v968
    %1817 = vmatpush.msra.mxu0 %v967
    %1818 = vmatpush.msra.mxu0 %v966
    %1819 = vmatpush.msra.mxu0 %v965
    %1820 = vmatpush.msra.mxu0 %v964
    %1821 = vmatpush.msra.mxu0 %v963
    %1822 = vmatpush.msra.mxu0 %v962
    %1823 = vmatmul.f32.gmra.mxu0 %v1631
    %v1824 = vpop.f32.mrf.mxu0
    %v1825 = vadd.f32 %v1796, %v1824
    %1826 = vmatmul.f32.gmra.mxu0 %v1640
    %v1827 = vpop.f32.mrf.mxu0
    %v1828 = vadd.f32 %v1799, %v1827
    %1829 = vmatmul.f32.gmra.mxu0 %v1649
    %v1830 = vpop.f32.mrf.mxu0
    %v1831 = vadd.f32 %v1802, %v1830
    %1832 = vmatmul.f32.gmra.mxu0 %v1658
    %v1833 = vpop.f32.mrf.mxu0
    %v1834 = vadd.f32 %v1805, %v1833
    %1835 = vdwg.mxu0
    %1836 = vmatpush.msra.mxu0 %v993
    %1837 = vmatpush.msra.mxu0 %v992
    %1838 = vmatpush.msra.mxu0 %v991
    %1839 = vmatpush.msra.mxu0 %v990
    %1840 = vmatpush.msra.mxu0 %v989
    %1841 = vmatpush.msra.mxu0 %v988
    %1842 = vmatpush.msra.mxu0 %v987
    %1843 = vmatpush.msra.mxu0 %v986
    %1844 = vmatpush.msra.mxu0 %v985
    %1845 = vmatpush.msra.mxu0 %v984
    %1846 = vmatpush.msra.mxu0 %v983
    %1847 = vmatpush.msra.mxu0 %v982
    %1848 = vmatpush.msra.mxu0 %v981
    %1849 = vmatpush.msra.mxu0 %v980
    %1850 = vmatpush.msra.mxu0 %v979
    %1851 = vmatpush.msra.mxu0 %v978
    %1852 = vmatmul.f32.gmra.mxu0 %v1632
    %v1853 = vpop.f32.mrf.mxu0
    %v1854 = vadd.f32 %v1825, %v1853
    %1855 = vmatmul.f32.gmra.mxu0 %v1641
    %v1856 = vpop.f32.mrf.mxu0
    %v1857 = vadd.f32 %v1828, %v1856
    %1858 = vmatmul.f32.gmra.mxu0 %v1650
    %v1859 = vpop.f32.mrf.mxu0
    %v1860 = vadd.f32 %v1831, %v1859
    %1861 = vmatmul.f32.gmra.mxu0 %v1659
    %v1862 = vpop.f32.mrf.mxu0
    %v1863 = vadd.f32 %v1834, %v1862
    %1864 = vdwg.mxu0
    %1865 = vmatpush.msra.mxu0 %v1009
    %1866 = vmatpush.msra.mxu0 %v1008
    %1867 = vmatpush.msra.mxu0 %v1007
    %1868 = vmatpush.msra.mxu0 %v1006
    %1869 = vmatpush.msra.mxu0 %v1005
    %1870 = vmatpush.msra.mxu0 %v1004
    %1871 = vmatpush.msra.mxu0 %v1003
    %1872 = vmatpush.msra.mxu0 %v1002
    %1873 = vmatpush.msra.mxu0 %v1001
    %1874 = vmatpush.msra.mxu0 %v1000
    %1875 = vmatpush.msra.mxu0 %v999
    %1876 = vmatpush.msra.mxu0 %v998
    %1877 = vmatpush.msra.mxu0 %v997
    %1878 = vmatpush.msra.mxu0 %v996
    %1879 = vmatpush.msra.mxu0 %v995
    %1880 = vmatpush.msra.mxu0 %v994
    %1881 = vmatmul.f32.gmra.mxu0 %v1633
    %v1882 = vpop.f32.mrf.mxu0
    %v1883 = vadd.f32 %v1854, %v1882
    %1884 = vmatmul.f32.gmra.mxu0 %v1642
    %v1885 = vpop.f32.mrf.mxu0
    %v1886 = vadd.f32 %v1857, %v1885
    %1887 = vmatmul.f32.gmra.mxu0 %v1651
    %v1888 = vpop.f32.mrf.mxu0
    %v1889 = vadd.f32 %v1860, %v1888
    %1890 = vmatmul.f32.gmra.mxu0 %v1660
    %v1891 = vpop.f32.mrf.mxu0
    %v1892 = vadd.f32 %v1863, %v1891
    %1893 = vdwg.mxu0
    %1894 = vmatpush.msra.mxu0 %v1025
    %1895 = vmatpush.msra.mxu0 %v1024
    %1896 = vmatpush.msra.mxu0 %v1023
    %1897 = vmatpush.msra.mxu0 %v1022
    %1898 = vmatpush.msra.mxu0 %v1021
    %1899 = vmatpush.msra.mxu0 %v1020
    %1900 = vmatpush.msra.mxu0 %v1019
    %1901 = vmatpush.msra.mxu0 %v1018
    %1902 = vmatpush.msra.mxu0 %v1017
    %1903 = vmatpush.msra.mxu0 %v1016
    %1904 = vmatpush.msra.mxu0 %v1015
    %1905 = vmatpush.msra.mxu0 %v1014
    %1906 = vmatpush.msra.mxu0 %v1013
    %1907 = vmatpush.msra.mxu0 %v1012
    %1908 = vmatpush.msra.mxu0 %v1011
    %1909 = vmatpush.msra.mxu0 %v1010
    %1910 = vmatmul.f32.gmra.mxu0 %v1634
    %v1911 = vpop.f32.mrf.mxu0
    %v1912 = vadd.f32 %v1883, %v1911
    %1913 = vmatmul.f32.gmra.mxu0 %v1643
    %v1914 = vpop.f32.mrf.mxu0
    %v1915 = vadd.f32 %v1886, %v1914
    %1916 = vmatmul.f32.gmra.mxu0 %v1652
    %v1917 = vpop.f32.mrf.mxu0
    %v1918 = vadd.f32 %v1889, %v1917
    %1919 = vmatmul.f32.gmra.mxu0 %v1661
    %v1920 = vpop.f32.mrf.mxu0
    %v1921 = vadd.f32 %v1892, %v1920
    %1922 = vdwg.mxu0
    %v1923 = vmax.f32 %v1621, %v1912
    %v1924 = vmax.f32 %v1622, %v1915
    %v1925 = vmax.f32 %v1623, %v1918
    %v1926 = vmax.f32 %v1624, %v1921
    %s1927 = scalar_lea.vmem [#allocation9], 864
    %v1928 = vld [vmem:[%s1927] sm:$0xff]
    %v1929 = vld [vmem:[%s1927 + $0x8] sm:$0xff]
    %v1930 = vld [vmem:[%s1927 + $0x10] sm:$0xff]
    %v1931 = vld [vmem:[%s1927 + $0x18] sm:$0xff]
    %v1932 = vld [vmem:[%s1927 + $0x20] sm:$0xff]
    %v1933 = vld [vmem:[%s1927 + $0x28] sm:$0xff]
    %v1934 = vld [vmem:[%s1927 + $0x30] sm:$0xff]
    %v1935 = vld [vmem:[%s1927 + $0x38] sm:$0xff]
    %v1936 = vld [vmem:[%s1927 + $0x40] sm:$0xff]
    %v1937 = vld [vmem:[%s1927 + $0x48] sm:$0xff]
    %v1938 = vld [vmem:[%s1927 + $0x50] sm:$0xff]
    %v1939 = vld [vmem:[%s1927 + $0x58] sm:$0xff]
    %v1940 = vld [vmem:[%s1927 + $0x60] sm:$0xff]
    %v1941 = vld [vmem:[%s1927 + $0x68] sm:$0xff]
    %v1942 = vld [vmem:[%s1927 + $0x70] sm:$0xff]
    %v1943 = vld [vmem:[%s1927 + $0x78] sm:$0xff]
    %v1944 = vld [vmem:[%s1927 + $0x80] sm:$0xff]
    %v1945 = vld [vmem:[%s1927 + $0x88] sm:$0xff]
    %v1946 = vld [vmem:[%s1927 + $0x90] sm:$0xff]
    %v1947 = vld [vmem:[%s1927 + $0x98] sm:$0xff]
    %v1948 = vld [vmem:[%s1927 + $0xa0] sm:$0xff]
    %v1949 = vld [vmem:[%s1927 + $0xa8] sm:$0xff]
    %v1950 = vld [vmem:[%s1927 + $0xb0] sm:$0xff]
    %v1951 = vld [vmem:[%s1927 + $0xb8] sm:$0xff]
    %v1952 = vld [vmem:[%s1927 + $0xc0] sm:$0xff]
    %v1953 = vld [vmem:[%s1927 + $0xc8] sm:$0xff]
    %v1954 = vld [vmem:[%s1927 + $0xd0] sm:$0xff]
    %v1955 = vld [vmem:[%s1927 + $0xd8] sm:$0xff]
    %v1956 = vld [vmem:[%s1927 + $0xe0] sm:$0xff]
    %v1957 = vld [vmem:[%s1927 + $0xe8] sm:$0xff]
    %v1958 = vld [vmem:[%s1927 + $0xf0] sm:$0xff]
    %v1959 = vld [vmem:[%s1927 + $0xf8] sm:$0xff]
    %v1960 = vld [vmem:[%s1927 + $0x100] sm:$0xff]
    %v1961 = vld [vmem:[%s1927 + $0x108] sm:$0xff]
    %v1962 = vld [vmem:[%s1927 + $0x110] sm:$0xff]
    %v1963 = vld [vmem:[%s1927 + $0x118] sm:$0xff]
    %1964 = vmatpush.msra.mxu0 %v897
    %1965 = vmatpush.msra.mxu0 %v896
    %1966 = vmatpush.msra.mxu0 %v895
    %1967 = vmatpush.msra.mxu0 %v894
    %1968 = vmatpush.msra.mxu0 %v893
    %1969 = vmatpush.msra.mxu0 %v892
    %1970 = vmatpush.msra.mxu0 %v891
    %1971 = vmatpush.msra.mxu0 %v890
    %1972 = vmatpush.msra.mxu0 %v889
    %1973 = vmatpush.msra.mxu0 %v888
    %1974 = vmatpush.msra.mxu0 %v887
    %1975 = vmatpush.msra.mxu0 %v886
    %1976 = vmatpush.msra.mxu0 %v885
    %1977 = vmatpush.msra.mxu0 %v884
    %1978 = vmatpush.msra.mxu0 %v883
    %1979 = vmatpush.msra.mxu0 %v882
    %1980 = vmatmul.f32.gmra.mxu0 %v1928
    %v1981 = vpop.f32.mrf.mxu0
    %v1982 = vadd.f32 0.0, %v1981
    %1983 = vmatmul.f32.gmra.mxu0 %v1937
    %v1984 = vpop.f32.mrf.mxu0
    %v1985 = vadd.f32 0.0, %v1984
    %1986 = vmatmul.f32.gmra.mxu0 %v1946
    %v1987 = vpop.f32.mrf.mxu0
    %v1988 = vadd.f32 0.0, %v1987
    %1989 = vmatmul.f32.gmra.mxu0 %v1955
    %v1990 = vpop.f32.mrf.mxu0
    %v1991 = vadd.f32 0.0, %v1990
    %1992 = vdwg.mxu0
    %1993 = vmatpush.msra.mxu0 %v913
    %1994 = vmatpush.msra.mxu0 %v912
    %1995 = vmatpush.msra.mxu0 %v911
    %1996 = vmatpush.msra.mxu0 %v910
    %1997 = vmatpush.msra.mxu0 %v909
    %1998 = vmatpush.msra.mxu0 %v908
    %1999 = vmatpush.msra.mxu0 %v907
    %2000 = vmatpush.msra.mxu0 %v906
    %2001 = vmatpush.msra.mxu0 %v905
    %2002 = vmatpush.msra.mxu0 %v904
    %2003 = vmatpush.msra.mxu0 %v903
    %2004 = vmatpush.msra.mxu0 %v902
    %2005 = vmatpush.msra.mxu0 %v901
    %2006 = vmatpush.msra.mxu0 %v900
    %2007 = vmatpush.msra.mxu0 %v899
    %2008 = vmatpush.msra.mxu0 %v898
    %2009 = vmatmul.f32.gmra.mxu0 %v1929
    %v2010 = vpop.f32.mrf.mxu0
    %v2011 = vadd.f32 %v1982, %v2010
    %2012 = vmatmul.f32.gmra.mxu0 %v1938
    %v2013 = vpop.f32.mrf.mxu0
    %v2014 = vadd.f32 %v1985, %v2013
    %2015 = vmatmul.f32.gmra.mxu0 %v1947
    %v2016 = vpop.f32.mrf.mxu0
    %v2017 = vadd.f32 %v1988, %v2016
    %2018 = vmatmul.f32.gmra.mxu0 %v1956
    %v2019 = vpop.f32.mrf.mxu0
    %v2020 = vadd.f32 %v1991, %v2019
    %2021 = vdwg.mxu0
    %2022 = vmatpush.msra.mxu0 %v929
    %2023 = vmatpush.msra.mxu0 %v928
    %2024 = vmatpush.msra.mxu0 %v927
    %2025 = vmatpush.msra.mxu0 %v926
    %2026 = vmatpush.msra.mxu0 %v925
    %2027 = vmatpush.msra.mxu0 %v924
    %2028 = vmatpush.msra.mxu0 %v923
    %2029 = vmatpush.msra.mxu0 %v922
    %2030 = vmatpush.msra.mxu0 %v921
    %2031 = vmatpush.msra.mxu0 %v920
    %2032 = vmatpush.msra.mxu0 %v919
    %2033 = vmatpush.msra.mxu0 %v918
    %2034 = vmatpush.msra.mxu0 %v917
    %2035 = vmatpush.msra.mxu0 %v916
    %2036 = vmatpush.msra.mxu0 %v915
    %2037 = vmatpush.msra.mxu0 %v914
    %2038 = vmatmul.f32.gmra.mxu0 %v1930
    %v2039 = vpop.f32.mrf.mxu0
    %v2040 = vadd.f32 %v2011, %v2039
    %2041 = vmatmul.f32.gmra.mxu0 %v1939
    %v2042 = vpop.f32.mrf.mxu0
    %v2043 = vadd.f32 %v2014, %v2042
    %2044 = vmatmul.f32.gmra.mxu0 %v1948
    %v2045 = vpop.f32.mrf.mxu0
    %v2046 = vadd.f32 %v2017, %v2045
    %2047 = vmatmul.f32.gmra.mxu0 %v1957
    %v2048 = vpop.f32.mrf.mxu0
    %v2049 = vadd.f32 %v2020, %v2048
    %2050 = vdwg.mxu0
    %2051 = vmatpush.msra.mxu0 %v945
    %2052 = vmatpush.msra.mxu0 %v944
    %2053 = vmatpush.msra.mxu0 %v943
    %2054 = vmatpush.msra.mxu0 %v942
    %2055 = vmatpush.msra.mxu0 %v941
    %2056 = vmatpush.msra.mxu0 %v940
    %2057 = vmatpush.msra.mxu0 %v939
    %2058 = vmatpush.msra.mxu0 %v938
    %2059 = vmatpush.msra.mxu0 %v937
    %2060 = vmatpush.msra.mxu0 %v936
    %2061 = vmatpush.msra.mxu0 %v935
    %2062 = vmatpush.msra.mxu0 %v934
    %2063 = vmatpush.msra.mxu0 %v933
    %2064 = vmatpush.msra.mxu0 %v932
    %2065 = vmatpush.msra.mxu0 %v931
    %2066 = vmatpush.msra.mxu0 %v930
    %2067 = vmatmul.f32.gmra.mxu0 %v1931
    %v2068 = vpop.f32.mrf.mxu0
    %v2069 = vadd.f32 %v2040, %v2068
    %2070 = vmatmul.f32.gmra.mxu0 %v1940
    %v2071 = vpop.f32.mrf.mxu0
    %v2072 = vadd.f32 %v2043, %v2071
    %2073 = vmatmul.f32.gmra.mxu0 %v1949
    %v2074 = vpop.f32.mrf.mxu0
    %v2075 = vadd.f32 %v2046, %v2074
    %2076 = vmatmul.f32.gmra.mxu0 %v1958
    %v2077 = vpop.f32.mrf.mxu0
    %v2078 = vadd.f32 %v2049, %v2077
    %2079 = vdwg.mxu0
    %2080 = vmatpush.msra.mxu0 %v961
    %2081 = vmatpush.msra.mxu0 %v960
    %2082 = vmatpush.msra.mxu0 %v959
    %2083 = vmatpush.msra.mxu0 %v958
    %2084 = vmatpush.msra.mxu0 %v957
    %2085 = vmatpush.msra.mxu0 %v956
    %2086 = vmatpush.msra.mxu0 %v955
    %2087 = vmatpush.msra.mxu0 %v954
    %2088 = vmatpush.msra.mxu0 %v953
    %2089 = vmatpush.msra.mxu0 %v952
    %2090 = vmatpush.msra.mxu0 %v951
    %2091 = vmatpush.msra.mxu0 %v950
    %2092 = vmatpush.msra.mxu0 %v949
    %2093 = vmatpush.msra.mxu0 %v948
    %2094 = vmatpush.msra.mxu0 %v947
    %2095 = vmatpush.msra.mxu0 %v946
    %2096 = vmatmul.f32.gmra.mxu0 %v1932
    %v2097 = vpop.f32.mrf.mxu0
    %v2098 = vadd.f32 %v2069, %v2097
    %2099 = vmatmul.f32.gmra.mxu0 %v1941
    %v2100 = vpop.f32.mrf.mxu0
    %v2101 = vadd.f32 %v2072, %v2100
    %2102 = vmatmul.f32.gmra.mxu0 %v1950
    %v2103 = vpop.f32.mrf.mxu0
    %v2104 = vadd.f32 %v2075, %v2103
    %2105 = vmatmul.f32.gmra.mxu0 %v1959
    %v2106 = vpop.f32.mrf.mxu0
    %v2107 = vadd.f32 %v2078, %v2106
    %2108 = vdwg.mxu0
    %2109 = vmatpush.msra.mxu0 %v977
    %2110 = vmatpush.msra.mxu0 %v976
    %2111 = vmatpush.msra.mxu0 %v975
    %2112 = vmatpush.msra.mxu0 %v974
    %2113 = vmatpush.msra.mxu0 %v973
    %2114 = vmatpush.msra.mxu0 %v972
    %2115 = vmatpush.msra.mxu0 %v971
    %2116 = vmatpush.msra.mxu0 %v970
    %2117 = vmatpush.msra.mxu0 %v969
    %2118 = vmatpush.msra.mxu0 %v968
    %2119 = vmatpush.msra.mxu0 %v967
    %2120 = vmatpush.msra.mxu0 %v966
    %2121 = vmatpush.msra.mxu0 %v965
    %2122 = vmatpush.msra.mxu0 %v964
    %2123 = vmatpush.msra.mxu0 %v963
    %2124 = vmatpush.msra.mxu0 %v962
    %2125 = vmatmul.f32.gmra.mxu0 %v1933
    %v2126 = vpop.f32.mrf.mxu0
    %v2127 = vadd.f32 %v2098, %v2126
    %2128 = vmatmul.f32.gmra.mxu0 %v1942
    %v2129 = vpop.f32.mrf.mxu0
    %v2130 = vadd.f32 %v2101, %v2129
    %2131 = vmatmul.f32.gmra.mxu0 %v1951
    %v2132 = vpop.f32.mrf.mxu0
    %v2133 = vadd.f32 %v2104, %v2132
    %2134 = vmatmul.f32.gmra.mxu0 %v1960
    %v2135 = vpop.f32.mrf.mxu0
    %v2136 = vadd.f32 %v2107, %v2135
    %2137 = vdwg.mxu0
    %2138 = vmatpush.msra.mxu0 %v993
    %2139 = vmatpush.msra.mxu0 %v992
    %2140 = vmatpush.msra.mxu0 %v991
    %2141 = vmatpush.msra.mxu0 %v990
    %2142 = vmatpush.msra.mxu0 %v989
    %2143 = vmatpush.msra.mxu0 %v988
    %2144 = vmatpush.msra.mxu0 %v987
    %2145 = vmatpush.msra.mxu0 %v986
    %2146 = vmatpush.msra.mxu0 %v985
    %2147 = vmatpush.msra.mxu0 %v984
    %2148 = vmatpush.msra.mxu0 %v983
    %2149 = vmatpush.msra.mxu0 %v982
    %2150 = vmatpush.msra.mxu0 %v981
    %2151 = vmatpush.msra.mxu0 %v980
    %2152 = vmatpush.msra.mxu0 %v979
    %2153 = vmatpush.msra.mxu0 %v978
    %2154 = vmatmul.f32.gmra.mxu0 %v1934
    %v2155 = vpop.f32.mrf.mxu0
    %v2156 = vadd.f32 %v2127, %v2155
    %2157 = vmatmul.f32.gmra.mxu0 %v1943
    %v2158 = vpop.f32.mrf.mxu0
    %v2159 = vadd.f32 %v2130, %v2158
    %2160 = vmatmul.f32.gmra.mxu0 %v1952
    %v2161 = vpop.f32.mrf.mxu0
    %v2162 = vadd.f32 %v2133, %v2161
    %2163 = vmatmul.f32.gmra.mxu0 %v1961
    %v2164 = vpop.f32.mrf.mxu0
    %v2165 = vadd.f32 %v2136, %v2164
    %2166 = vdwg.mxu0
    %2167 = vmatpush.msra.mxu0 %v1009
    %2168 = vmatpush.msra.mxu0 %v1008
    %2169 = vmatpush.msra.mxu0 %v1007
    %2170 = vmatpush.msra.mxu0 %v1006
    %2171 = vmatpush.msra.mxu0 %v1005
    %2172 = vmatpush.msra.mxu0 %v1004
    %2173 = vmatpush.msra.mxu0 %v1003
    %2174 = vmatpush.msra.mxu0 %v1002
    %2175 = vmatpush.msra.mxu0 %v1001
    %2176 = vmatpush.msra.mxu0 %v1000
    %2177 = vmatpush.msra.mxu0 %v999
    %2178 = vmatpush.msra.mxu0 %v998
    %2179 = vmatpush.msra.mxu0 %v997
    %2180 = vmatpush.msra.mxu0 %v996
    %2181 = vmatpush.msra.mxu0 %v995
    %2182 = vmatpush.msra.mxu0 %v994
    %2183 = vmatmul.f32.gmra.mxu0 %v1935
    %v2184 = vpop.f32.mrf.mxu0
    %v2185 = vadd.f32 %v2156, %v2184
    %2186 = vmatmul.f32.gmra.mxu0 %v1944
    %v2187 = vpop.f32.mrf.mxu0
    %v2188 = vadd.f32 %v2159, %v2187
    %2189 = vmatmul.f32.gmra.mxu0 %v1953
    %v2190 = vpop.f32.mrf.mxu0
    %v2191 = vadd.f32 %v2162, %v2190
    %2192 = vmatmul.f32.gmra.mxu0 %v1962
    %v2193 = vpop.f32.mrf.mxu0
    %v2194 = vadd.f32 %v2165, %v2193
    %2195 = vdwg.mxu0
    %2196 = vmatpush.msra.mxu0 %v1025
    %2197 = vmatpush.msra.mxu0 %v1024
    %2198 = vmatpush.msra.mxu0 %v1023
    %2199 = vmatpush.msra.mxu0 %v1022
    %2200 = vmatpush.msra.mxu0 %v1021
    %2201 = vmatpush.msra.mxu0 %v1020
    %2202 = vmatpush.msra.mxu0 %v1019
    %2203 = vmatpush.msra.mxu0 %v1018
    %2204 = vmatpush.msra.mxu0 %v1017
    %2205 = vmatpush.msra.mxu0 %v1016
    %2206 = vmatpush.msra.mxu0 %v1015
    %2207 = vmatpush.msra.mxu0 %v1014
    %2208 = vmatpush.msra.mxu0 %v1013
    %2209 = vmatpush.msra.mxu0 %v1012
    %2210 = vmatpush.msra.mxu0 %v1011
    %2211 = vmatpush.msra.mxu0 %v1010
    %2212 = vmatmul.f32.gmra.mxu0 %v1936
    %v2213 = vpop.f32.mrf.mxu0
    %v2214 = vadd.f32 %v2185, %v2213
    %2215 = vmatmul.f32.gmra.mxu0 %v1945
    %v2216 = vpop.f32.mrf.mxu0
    %v2217 = vadd.f32 %v2188, %v2216
    %2218 = vmatmul.f32.gmra.mxu0 %v1954
    %v2219 = vpop.f32.mrf.mxu0
    %v2220 = vadd.f32 %v2191, %v2219
    %2221 = vmatmul.f32.gmra.mxu0 %v1963
    %v2222 = vpop.f32.mrf.mxu0
    %v2223 = vadd.f32 %v2194, %v2222
    %2224 = vdwg.mxu0
    %v2225 = vmax.f32 %v1923, %v2214
    %v2226 = vmax.f32 %v1924, %v2217
    %v2227 = vmax.f32 %v1925, %v2220
    %v2228 = vmax.f32 %v1926, %v2223
    %v2229 = vld [vmem:[#allocation7] sm:$0x1]
    %v2231 = vperm.slane %v2229, 0
    %v2233 = vadd.f32 %v2225, %v2231
    %v2234 = vadd.f32 %v2226, %v2231
    %v2235 = vadd.f32 %v2227, %v2231
    %v2236 = vadd.f32 %v2228, %v2231
    %v2237 = vmax.f32 %v2233, 0.0
    %v2238 = vmax.f32 %v2234, 0.0
    %v2239 = vmax.f32 %v2235, 0.0
    %v2240 = vmax.f32 %v2236, 0.0
    %v2241 = vpack.c.bf16 %v2238, %v2237
    %v2242 = vpack.c.bf16 %v2240, %v2239
    %v2243 = vld [vmem:[#allocation10] sm:$0xf]
    %v2244 = vld [vmem:[#allocation10 + $0x4] sm:$0xf]
    %v2245 = vld [vmem:[#allocation10 + $0x8] sm:$0xf]
    %v2246 = vld [vmem:[#allocation10 + $0xc] sm:$0xf]
    %v2251 = vunpack.c.l.b16 %v2243
    %v2252 = vunpack.c.l.b16 %v2244
    %v2253 = vunpack.c.l.b16 %v2245
    %v2254 = vunpack.c.l.b16 %v2246
    %v2255 = vpack.c.b16 %v2252, %v2251
    %v2256 = vpack.c.b16 %v2254, %v2253
    %v2260 = vsel %vm305, %v2241, 0
    %v2263 = vsel %vm305, %v2242, 0
    %2265 = vmatpush.bf16.msra.mxu0 0
    %2266 = vmatpush.bf16.msra.mxu0 0
    %2267 = vmatpush.bf16.msra.mxu0 0
    %2268 = vmatpush.bf16.msra.mxu0 0
    %2269 = vmatpush.bf16.msra.mxu0 0
    %2270 = vmatpush.bf16.msra.mxu0 0
    %2271 = vmatpush.bf16.msra.mxu0 %v2256
    %2272 = vmatpush.bf16.msra.mxu0 %v2255
    %2273 = vmatmul.bf16.gmra.mxu0 %v2260
    %v2274 = vpop.f32.mrf.mxu0
    %v2275 = vadd.f32 0.0, %v2274
    %v2276 = vpop.f32.mrf.mxu0
    %v2277 = vadd.f32 0.0, %v2276
    %2278 = vmatmul.bf16.gmra.mxu0 %v2263
    %v2279 = vpop.f32.mrf.mxu0
    %v2280 = vadd.f32 0.0, %v2279
    %v2281 = vpop.f32.mrf.mxu0
    %v2282 = vadd.f32 0.0, %v2281
    %2283 = vdwg.mxu0
    %2284 = vst [vmem:[#allocation3] sm:$0xff] %v2275
    %2285 = vst [vmem:[#allocation3 + $0x8] sm:$0xff] %v2277
    %2286 = vst [vmem:[#allocation3 + $0x10] sm:$0xff] %v2280
    %2287 = vst [vmem:[#allocation3 + $0x18] sm:$0xff] %v2282
    %s2288 = scalar_lea.vmem [#allocation10], 16
    %v2289 = vld [vmem:[%s2288] sm:$0xf]
    %v2290 = vld [vmem:[%s2288 + $0x4] sm:$0xf]
    %v2291 = vld [vmem:[%s2288 + $0x8] sm:$0xf]
    %v2292 = vld [vmem:[%s2288 + $0xc] sm:$0xf]
    %v2297 = vunpack.c.l.b16 %v2289
    %v2298 = vunpack.c.l.b16 %v2290
    %v2299 = vunpack.c.l.b16 %v2291
    %v2300 = vunpack.c.l.b16 %v2292
    %v2301 = vpack.c.b16 %v2298, %v2297
    %v2302 = vpack.c.b16 %v2300, %v2299
    %2305 = vmatpush.bf16.msra.mxu0 0
    %2306 = vmatpush.bf16.msra.mxu0 0
    %2307 = vmatpush.bf16.msra.mxu0 0
    %2308 = vmatpush.bf16.msra.mxu0 0
    %2309 = vmatpush.bf16.msra.mxu0 0
    %2310 = vmatpush.bf16.msra.mxu0 0
    %2311 = vmatpush.bf16.msra.mxu0 %v2302
    %2312 = vmatpush.bf16.msra.mxu0 %v2301
    %2313 = vmatmul.bf16.gmra.mxu0 %v2260
    %v2314 = vpop.f32.mrf.mxu0
    %v2315 = vadd.f32 0.0, %v2314
    %v2316 = vpop.f32.mrf.mxu0
    %v2317 = vadd.f32 0.0, %v2316
    %2318 = vmatmul.bf16.gmra.mxu0 %v2263
    %v2319 = vpop.f32.mrf.mxu0
    %v2320 = vadd.f32 0.0, %v2319
    %v2321 = vpop.f32.mrf.mxu0
    %v2322 = vadd.f32 0.0, %v2321
    %2323 = vdwg.mxu0
    %2324 = vst [vmem:[#allocation3 + $0x20] sm:$0xff] %v2315
    %2325 = vst [vmem:[#allocation3 + $0x28] sm:$0xff] %v2317
    %2326 = vst [vmem:[#allocation3 + $0x30] sm:$0xff] %v2320
    %2327 = vst [vmem:[#allocation3 + $0x38] sm:$0xff] %v2322
    %s2328 = scalar_lea.vmem [#allocation10], 32
    %v2329 = vld [vmem:[%s2328] sm:$0xf]
    %v2330 = vld [vmem:[%s2328 + $0x4] sm:$0xf]
    %v2331 = vld [vmem:[%s2328 + $0x8] sm:$0xf]
    %v2332 = vld [vmem:[%s2328 + $0xc] sm:$0xf]
    %v2337 = vunpack.c.l.b16 %v2329
    %v2338 = vunpack.c.l.b16 %v2330
    %v2339 = vunpack.c.l.b16 %v2331
    %v2340 = vunpack.c.l.b16 %v2332
    %v2341 = vpack.c.b16 %v2338, %v2337
    %v2342 = vpack.c.b16 %v2340, %v2339
    %2345 = vmatpush.bf16.msra.mxu0 0
    %2346 = vmatpush.bf16.msra.mxu0 0
    %2347 = vmatpush.bf16.msra.mxu0 0
    %2348 = vmatpush.bf16.msra.mxu0 0
    %2349 = vmatpush.bf16.msra.mxu0 0
    %2350 = vmatpush.bf16.msra.mxu0 0
    %2351 = vmatpush.bf16.msra.mxu0 %v2342
    %2352 = vmatpush.bf16.msra.mxu0 %v2341
    %2353 = vmatmul.bf16.gmra.mxu0 %v2260
    %v2354 = vpop.f32.mrf.mxu0
    %v2355 = vadd.f32 0.0, %v2354
    %v2356 = vpop.f32.mrf.mxu0
    %v2357 = vadd.f32 0.0, %v2356
    %2358 = vmatmul.bf16.gmra.mxu0 %v2263
    %v2359 = vpop.f32.mrf.mxu0
    %v2360 = vadd.f32 0.0, %v2359
    %v2361 = vpop.f32.mrf.mxu0
    %v2362 = vadd.f32 0.0, %v2361
    %2363 = vdwg.mxu0
    %2364 = vst [vmem:[#allocation3 + $0x40] sm:$0xff] %v2355
    %2365 = vst [vmem:[#allocation3 + $0x48] sm:$0xff] %v2357
    %2366 = vst [vmem:[#allocation3 + $0x50] sm:$0xff] %v2360
    %2367 = vst [vmem:[#allocation3 + $0x58] sm:$0xff] %v2362
    %s2368 = scalar_lea.vmem [#allocation10], 48
    %v2369 = vld [vmem:[%s2368] sm:$0xf]
    %v2370 = vld [vmem:[%s2368 + $0x4] sm:$0xf]
    %v2371 = vld [vmem:[%s2368 + $0x8] sm:$0xf]
    %v2372 = vld [vmem:[%s2368 + $0xc] sm:$0xf]
    %v2377 = vunpack.c.l.b16 %v2369
    %v2378 = vunpack.c.l.b16 %v2370
    %v2379 = vunpack.c.l.b16 %v2371
    %v2380 = vunpack.c.l.b16 %v2372
    %v2381 = vpack.c.b16 %v2378, %v2377
    %v2382 = vpack.c.b16 %v2380, %v2379
    %2385 = vmatpush.bf16.msra.mxu0 0
    %2386 = vmatpush.bf16.msra.mxu0 0
    %2387 = vmatpush.bf16.msra.mxu0 0
    %2388 = vmatpush.bf16.msra.mxu0 0
    %2389 = vmatpush.bf16.msra.mxu0 0
    %2390 = vmatpush.bf16.msra.mxu0 0
    %2391 = vmatpush.bf16.msra.mxu0 %v2382
    %2392 = vmatpush.bf16.msra.mxu0 %v2381
    %2393 = vmatmul.bf16.gmra.mxu0 %v2260
    %v2394 = vpop.f32.mrf.mxu0
    %v2395 = vadd.f32 0.0, %v2394
    %v2396 = vpop.f32.mrf.mxu0
    %v2397 = vadd.f32 0.0, %v2396
    %2398 = vmatmul.bf16.gmra.mxu0 %v2263
    %v2399 = vpop.f32.mrf.mxu0
    %v2400 = vadd.f32 0.0, %v2399
    %v2401 = vpop.f32.mrf.mxu0
    %v2402 = vadd.f32 0.0, %v2401
    %2403 = vdwg.mxu0
    %2404 = vst [vmem:[#allocation3 + $0x60] sm:$0xff] %v2395
    %2405 = vst [vmem:[#allocation3 + $0x68] sm:$0xff] %v2397
    %2406 = vst [vmem:[#allocation3 + $0x70] sm:$0xff] %v2400
    %2407 = vst [vmem:[#allocation3 + $0x78] sm:$0xff] %v2402
    %s2408 = scalar_lea.vmem [#allocation10], 64
    %v2409 = vld [vmem:[%s2408] sm:$0xf]
    %v2410 = vld [vmem:[%s2408 + $0x4] sm:$0xf]
    %v2411 = vld [vmem:[%s2408 + $0x8] sm:$0xf]
    %v2412 = vld [vmem:[%s2408 + $0xc] sm:$0xf]
    %v2417 = vunpack.c.l.b16 %v2409
    %v2418 = vunpack.c.l.b16 %v2410
    %v2419 = vunpack.c.l.b16 %v2411
    %v2420 = vunpack.c.l.b16 %v2412
    %v2421 = vpack.c.b16 %v2418, %v2417
    %v2422 = vpack.c.b16 %v2420, %v2419
    %2425 = vmatpush.bf16.msra.mxu0 0
    %2426 = vmatpush.bf16.msra.mxu0 0
    %2427 = vmatpush.bf16.msra.mxu0 0
    %2428 = vmatpush.bf16.msra.mxu0 0
    %2429 = vmatpush.bf16.msra.mxu0 0
    %2430 = vmatpush.bf16.msra.mxu0 0
    %2431 = vmatpush.bf16.msra.mxu0 %v2422
    %2432 = vmatpush.bf16.msra.mxu0 %v2421
    %2433 = vmatmul.bf16.gmra.mxu0 %v2260
    %v2434 = vpop.f32.mrf.mxu0
    %v2435 = vadd.f32 0.0, %v2434
    %v2436 = vpop.f32.mrf.mxu0
    %v2437 = vadd.f32 0.0, %v2436
    %2438 = vmatmul.bf16.gmra.mxu0 %v2263
    %v2439 = vpop.f32.mrf.mxu0
    %v2440 = vadd.f32 0.0, %v2439
    %v2441 = vpop.f32.mrf.mxu0
    %v2442 = vadd.f32 0.0, %v2441
    %2443 = vdwg.mxu0
    %2444 = vst [vmem:[#allocation3 + $0x80] sm:$0xff] %v2435
    %2445 = vst [vmem:[#allocation3 + $0x88] sm:$0xff] %v2437
    %2446 = vst [vmem:[#allocation3 + $0x90] sm:$0xff] %v2440
    %2447 = vst [vmem:[#allocation3 + $0x98] sm:$0xff] %v2442
    %s2448 = scalar_lea.vmem [#allocation10], 80
    %v2449 = vld [vmem:[%s2448] sm:$0xf]
    %v2450 = vld [vmem:[%s2448 + $0x4] sm:$0xf]
    %v2451 = vld [vmem:[%s2448 + $0x8] sm:$0xf]
    %v2452 = vld [vmem:[%s2448 + $0xc] sm:$0xf]
    %v2457 = vunpack.c.l.b16 %v2449
    %v2458 = vunpack.c.l.b16 %v2450
    %v2459 = vunpack.c.l.b16 %v2451
    %v2460 = vunpack.c.l.b16 %v2452
    %v2461 = vpack.c.b16 %v2458, %v2457
    %v2462 = vpack.c.b16 %v2460, %v2459
    %2465 = vmatpush.bf16.msra.mxu0 0
    %2466 = vmatpush.bf16.msra.mxu0 0
    %2467 = vmatpush.bf16.msra.mxu0 0
    %2468 = vmatpush.bf16.msra.mxu0 0
    %2469 = vmatpush.bf16.msra.mxu0 0
    %2470 = vmatpush.bf16.msra.mxu0 0
    %2471 = vmatpush.bf16.msra.mxu0 %v2462
    %2472 = vmatpush.bf16.msra.mxu0 %v2461
    %2473 = vmatmul.bf16.gmra.mxu0 %v2260
    %v2474 = vpop.f32.mrf.mxu0
    %v2475 = vadd.f32 0.0, %v2474
    %v2476 = vpop.f32.mrf.mxu0
    %v2477 = vadd.f32 0.0, %v2476
    %2478 = vmatmul.bf16.gmra.mxu0 %v2263
    %v2479 = vpop.f32.mrf.mxu0
    %v2480 = vadd.f32 0.0, %v2479
    %v2481 = vpop.f32.mrf.mxu0
    %v2482 = vadd.f32 0.0, %v2481
    %2483 = vdwg.mxu0
    %2484 = vst [vmem:[#allocation3 + $0xa0] sm:$0xff] %v2475
    %2485 = vst [vmem:[#allocation3 + $0xa8] sm:$0xff] %v2477
    %2486 = vst [vmem:[#allocation3 + $0xb0] sm:$0xff] %v2480
    %2487 = vst [vmem:[#allocation3 + $0xb8] sm:$0xff] %v2482
    %s2488 = scalar_lea.vmem [#allocation10], 96
    %v2489 = vld [vmem:[%s2488] sm:$0xf]
    %v2490 = vld [vmem:[%s2488 + $0x4] sm:$0xf]
    %v2491 = vld [vmem:[%s2488 + $0x8] sm:$0xf]
    %v2492 = vld [vmem:[%s2488 + $0xc] sm:$0xf]
    %v2497 = vunpack.c.l.b16 %v2489
    %v2498 = vunpack.c.l.b16 %v2490
    %v2499 = vunpack.c.l.b16 %v2491
    %v2500 = vunpack.c.l.b16 %v2492
    %v2501 = vpack.c.b16 %v2498, %v2497
    %v2502 = vpack.c.b16 %v2500, %v2499
    %2505 = vmatpush.bf16.msra.mxu0 0
    %2506 = vmatpush.bf16.msra.mxu0 0
    %2507 = vmatpush.bf16.msra.mxu0 0
    %2508 = vmatpush.bf16.msra.mxu0 0
    %2509 = vmatpush.bf16.msra.mxu0 0
    %2510 = vmatpush.bf16.msra.mxu0 0
    %2511 = vmatpush.bf16.msra.mxu0 %v2502
    %2512 = vmatpush.bf16.msra.mxu0 %v2501
    %2513 = vmatmul.bf16.gmra.mxu0 %v2260
    %v2514 = vpop.f32.mrf.mxu0
    %v2515 = vadd.f32 0.0, %v2514
    %v2516 = vpop.f32.mrf.mxu0
    %v2517 = vadd.f32 0.0, %v2516
    %2518 = vmatmul.bf16.gmra.mxu0 %v2263
    %v2519 = vpop.f32.mrf.mxu0
    %v2520 = vadd.f32 0.0, %v2519
    %v2521 = vpop.f32.mrf.mxu0
    %v2522 = vadd.f32 0.0, %v2521
    %2523 = vdwg.mxu0
    %2524 = vst [vmem:[#allocation3 + $0xc0] sm:$0xff] %v2515
    %2525 = vst [vmem:[#allocation3 + $0xc8] sm:$0xff] %v2517
    %2526 = vst [vmem:[#allocation3 + $0xd0] sm:$0xff] %v2520
    %2527 = vst [vmem:[#allocation3 + $0xd8] sm:$0xff] %v2522
    %s2528 = scalar_lea.vmem [#allocation10], 112
    %v2529 = vld [vmem:[%s2528] sm:$0xf]
    %v2530 = vld [vmem:[%s2528 + $0x4] sm:$0xf]
    %v2531 = vld [vmem:[%s2528 + $0x8] sm:$0xf]
    %v2532 = vld [vmem:[%s2528 + $0xc] sm:$0xf]
    %v2537 = vunpack.c.l.b16 %v2529
    %v2538 = vunpack.c.l.b16 %v2530
    %v2539 = vunpack.c.l.b16 %v2531
    %v2540 = vunpack.c.l.b16 %v2532
    %v2541 = vpack.c.b16 %v2538, %v2537
    %v2542 = vpack.c.b16 %v2540, %v2539
    %2545 = vmatpush.bf16.msra.mxu0 0
    %2546 = vmatpush.bf16.msra.mxu0 0
    %2547 = vmatpush.bf16.msra.mxu0 0
    %2548 = vmatpush.bf16.msra.mxu0 0
    %2549 = vmatpush.bf16.msra.mxu0 0
    %2550 = vmatpush.bf16.msra.mxu0 0
    %2551 = vmatpush.bf16.msra.mxu0 %v2542
    %2552 = vmatpush.bf16.msra.mxu0 %v2541
    %2553 = vmatmul.bf16.gmra.mxu0 %v2260
    %v2554 = vpop.f32.mrf.mxu0
    %v2555 = vadd.f32 0.0, %v2554
    %v2556 = vpop.f32.mrf.mxu0
    %v2557 = vadd.f32 0.0, %v2556
    %2558 = vmatmul.bf16.gmra.mxu0 %v2263
    %v2559 = vpop.f32.mrf.mxu0
    %v2560 = vadd.f32 0.0, %v2559
    %v2561 = vpop.f32.mrf.mxu0
    %v2562 = vadd.f32 0.0, %v2561
    %2563 = vdwg.mxu0
    %2564 = vst [vmem:[#allocation3 + $0xe0] sm:$0xff] %v2555
    %2565 = vst [vmem:[#allocation3 + $0xe8] sm:$0xff] %v2557
    %2566 = vst [vmem:[#allocation3 + $0xf0] sm:$0xff] %v2560
    %2567 = vst [vmem:[#allocation3 + $0xf8] sm:$0xff] %v2562
    %s2568 = scalar_lea.vmem [#allocation10], 128
    %v2569 = vld [vmem:[%s2568] sm:$0xf]
    %v2570 = vld [vmem:[%s2568 + $0x4] sm:$0xf]
    %v2571 = vld [vmem:[%s2568 + $0x8] sm:$0xf]
    %v2572 = vld [vmem:[%s2568 + $0xc] sm:$0xf]
    %v2577 = vunpack.c.l.b16 %v2569
    %v2578 = vunpack.c.l.b16 %v2570
    %v2579 = vunpack.c.l.b16 %v2571
    %v2580 = vunpack.c.l.b16 %v2572
    %v2581 = vpack.c.b16 %v2578, %v2577
    %v2582 = vpack.c.b16 %v2580, %v2579
    %2585 = vmatpush.bf16.msra.mxu0 0
    %2586 = vmatpush.bf16.msra.mxu0 0
    %2587 = vmatpush.bf16.msra.mxu0 0
    %2588 = vmatpush.bf16.msra.mxu0 0
    %2589 = vmatpush.bf16.msra.mxu0 0
    %2590 = vmatpush.bf16.msra.mxu0 0
    %2591 = vmatpush.bf16.msra.mxu0 %v2582
    %2592 = vmatpush.bf16.msra.mxu0 %v2581
    %2593 = vmatmul.bf16.gmra.mxu0 %v2260
    %v2594 = vpop.f32.mrf.mxu0
    %v2595 = vadd.f32 0.0, %v2594
    %v2596 = vpop.f32.mrf.mxu0
    %v2597 = vadd.f32 0.0, %v2596
    %2598 = vmatmul.bf16.gmra.mxu0 %v2263
    %v2599 = vpop.f32.mrf.mxu0
    %v2600 = vadd.f32 0.0, %v2599
    %v2601 = vpop.f32.mrf.mxu0
    %v2602 = vadd.f32 0.0, %v2601
    %2603 = vdwg.mxu0
    %2604 = vst [vmem:[#allocation3 + $0x100] sm:$0xff] %v2595
    %2605 = vst [vmem:[#allocation3 + $0x108] sm:$0xff] %v2597
    %2606 = vst [vmem:[#allocation3 + $0x110] sm:$0xff] %v2600
    %2607 = vst [vmem:[#allocation3 + $0x118] sm:$0xff] %v2602
    %v2608 = vld [vmem:[#allocation3] sm:$0xff]
    %v2609 = vld [vmem:[#allocation3 + $0x8] sm:$0xff]
    %v2610 = vld [vmem:[#allocation3 + $0x10] sm:$0xff]
    %v2611 = vld [vmem:[#allocation3 + $0x18] sm:$0xff]
    %v2612 = vld [vmem:[#allocation3 + $0x20] sm:$0xff]
    %v2613 = vld [vmem:[#allocation3 + $0x28] sm:$0xff]
    %v2614 = vld [vmem:[#allocation3 + $0x30] sm:$0xff]
    %v2615 = vld [vmem:[#allocation3 + $0x38] sm:$0xff]
    %v2616 = vld [vmem:[#allocation3 + $0x40] sm:$0xff]
    %v2617 = vld [vmem:[#allocation3 + $0x48] sm:$0xff]
    %v2618 = vld [vmem:[#allocation3 + $0x50] sm:$0xff]
    %v2619 = vld [vmem:[#allocation3 + $0x58] sm:$0xff]
    %v2620 = vld [vmem:[#allocation3 + $0x60] sm:$0xff]
    %v2621 = vld [vmem:[#allocation3 + $0x68] sm:$0xff]
    %v2622 = vld [vmem:[#allocation3 + $0x70] sm:$0xff]
    %v2623 = vld [vmem:[#allocation3 + $0x78] sm:$0xff]
    %v2624 = vld [vmem:[#allocation3 + $0x80] sm:$0xff]
    %v2625 = vld [vmem:[#allocation3 + $0x88] sm:$0xff]
    %v2626 = vld [vmem:[#allocation3 + $0x90] sm:$0xff]
    %v2627 = vld [vmem:[#allocation3 + $0x98] sm:$0xff]
    %v2628 = vld [vmem:[#allocation3 + $0xa0] sm:$0xff]
    %v2629 = vld [vmem:[#allocation3 + $0xa8] sm:$0xff]
    %v2630 = vld [vmem:[#allocation3 + $0xb0] sm:$0xff]
    %v2631 = vld [vmem:[#allocation3 + $0xb8] sm:$0xff]
    %v2632 = vld [vmem:[#allocation3 + $0xc0] sm:$0xff]
    %v2633 = vld [vmem:[#allocation3 + $0xc8] sm:$0xff]
    %v2634 = vld [vmem:[#allocation3 + $0xd0] sm:$0xff]
    %v2635 = vld [vmem:[#allocation3 + $0xd8] sm:$0xff]
    %v2636 = vld [vmem:[#allocation3 + $0xe0] sm:$0xff]
    %v2637 = vld [vmem:[#allocation3 + $0xe8] sm:$0xff]
    %v2638 = vld [vmem:[#allocation3 + $0xf0] sm:$0xff]
    %v2639 = vld [vmem:[#allocation3 + $0xf8] sm:$0xff]
    %v2640 = vld [vmem:[#allocation3 + $0x100] sm:$0xff]
    %v2641 = vld [vmem:[#allocation3 + $0x108] sm:$0xff]
    %v2642 = vld [vmem:[#allocation3 + $0x110] sm:$0xff]
    %v2643 = vld [vmem:[#allocation3 + $0x118] sm:$0xff]
    %v2644 = vld [vmem:[#allocation13] sm:$0xff]
    %v2645 = vld [vmem:[#allocation13 + $0x8] sm:$0xff]
    %v2646 = vld [vmem:[#allocation13 + $0x10] sm:$0xff]
    %v2648 = vsel %vm305, %v2646, 0
    %2650 = vmatpush.msra.mxu0 %v2623
    %2651 = vmatpush.msra.mxu0 %v2622
    %2652 = vmatpush.msra.mxu0 %v2621
    %2653 = vmatpush.msra.mxu0 %v2620
    %2654 = vmatpush.msra.mxu0 %v2619
    %2655 = vmatpush.msra.mxu0 %v2618
    %2656 = vmatpush.msra.mxu0 %v2617
    %2657 = vmatpush.msra.mxu0 %v2616
    %2658 = vmatpush.msra.mxu0 %v2615
    %2659 = vmatpush.msra.mxu0 %v2614
    %2660 = vmatpush.msra.mxu0 %v2613
    %2661 = vmatpush.msra.mxu0 %v2612
    %2662 = vmatpush.msra.mxu0 %v2611
    %2663 = vmatpush.msra.mxu0 %v2610
    %2664 = vmatpush.msra.mxu0 %v2609
    %2665 = vmatpush.msra.mxu0 %v2608
    %2666 = vmatmul.f32.gmra.mxu0 %v2644
    %v2667 = vpop.f32.mrf.mxu0
    %v2668 = vadd.f32 0.0, %v2667
    %2669 = vdwg.mxu0
    %2670 = vmatpush.msra.mxu0 %v2639
    %2671 = vmatpush.msra.mxu0 %v2638
    %2672 = vmatpush.msra.mxu0 %v2637
    %2673 = vmatpush.msra.mxu0 %v2636
    %2674 = vmatpush.msra.mxu0 %v2635
    %2675 = vmatpush.msra.mxu0 %v2634
    %2676 = vmatpush.msra.mxu0 %v2633
    %2677 = vmatpush.msra.mxu0 %v2632
    %2678 = vmatpush.msra.mxu0 %v2631
    %2679 = vmatpush.msra.mxu0 %v2630
    %2680 = vmatpush.msra.mxu0 %v2629
    %2681 = vmatpush.msra.mxu0 %v2628
    %2682 = vmatpush.msra.mxu0 %v2627
    %2683 = vmatpush.msra.mxu0 %v2626
    %2684 = vmatpush.msra.mxu0 %v2625
    %2685 = vmatpush.msra.mxu0 %v2624
    %2686 = vmatmul.f32.gmra.mxu0 %v2645
    %v2687 = vpop.f32.mrf.mxu0
    %v2688 = vadd.f32 %v2668, %v2687
    %2689 = vdwg.mxu0
    %2690 = vmatpush.msra.mxu0 0.0
    %2691 = vmatpush.msra.mxu0 0.0
    %2692 = vmatpush.msra.mxu0 0.0
    %2693 = vmatpush.msra.mxu0 0.0
    %2694 = vmatpush.msra.mxu0 0.0
    %2695 = vmatpush.msra.mxu0 0.0
    %2696 = vmatpush.msra.mxu0 0.0
    %2697 = vmatpush.msra.mxu0 0.0
    %2698 = vmatpush.msra.mxu0 0.0
    %2699 = vmatpush.msra.mxu0 0.0
    %2700 = vmatpush.msra.mxu0 0.0
    %2701 = vmatpush.msra.mxu0 0.0
    %2702 = vmatpush.msra.mxu0 %v2643
    %2703 = vmatpush.msra.mxu0 %v2642
    %2704 = vmatpush.msra.mxu0 %v2641
    %2705 = vmatpush.msra.mxu0 %v2640
    %2706 = vmatmul.f32.gmra.mxu0 %v2648
    %v2707 = vpop.f32.mrf.mxu0
    %v2708 = vadd.f32 %v2688, %v2707
    %2709 = vdwg.mxu0
    %s2710 = scalar_lea.vmem [#allocation13], 24
    %v2711 = vld [vmem:[%s2710] sm:$0xff]
    %v2712 = vld [vmem:[%s2710 + $0x8] sm:$0xff]
    %v2713 = vld [vmem:[%s2710 + $0x10] sm:$0xff]
    %v2715 = vsel %vm305, %v2713, 0
    %2717 = vmatpush.msra.mxu0 %v2623
    %2718 = vmatpush.msra.mxu0 %v2622
    %2719 = vmatpush.msra.mxu0 %v2621
    %2720 = vmatpush.msra.mxu0 %v2620
    %2721 = vmatpush.msra.mxu0 %v2619
    %2722 = vmatpush.msra.mxu0 %v2618
    %2723 = vmatpush.msra.mxu0 %v2617
    %2724 = vmatpush.msra.mxu0 %v2616
    %2725 = vmatpush.msra.mxu0 %v2615
    %2726 = vmatpush.msra.mxu0 %v2614
    %2727 = vmatpush.msra.mxu0 %v2613
    %2728 = vmatpush.msra.mxu0 %v2612
    %2729 = vmatpush.msra.mxu0 %v2611
    %2730 = vmatpush.msra.mxu0 %v2610
    %2731 = vmatpush.msra.mxu0 %v2609
    %2732 = vmatpush.msra.mxu0 %v2608
    %2733 = vmatmul.f32.gmra.mxu0 %v2711
    %v2734 = vpop.f32.mrf.mxu0
    %v2735 = vadd.f32 0.0, %v2734
    %2736 = vdwg.mxu0
    %2737 = vmatpush.msra.mxu0 %v2639
    %2738 = vmatpush.msra.mxu0 %v2638
    %2739 = vmatpush.msra.mxu0 %v2637
    %2740 = vmatpush.msra.mxu0 %v2636
    %2741 = vmatpush.msra.mxu0 %v2635
    %2742 = vmatpush.msra.mxu0 %v2634
    %2743 = vmatpush.msra.mxu0 %v2633
    %2744 = vmatpush.msra.mxu0 %v2632
    %2745 = vmatpush.msra.mxu0 %v2631
    %2746 = vmatpush.msra.mxu0 %v2630
    %2747 = vmatpush.msra.mxu0 %v2629
    %2748 = vmatpush.msra.mxu0 %v2628
    %2749 = vmatpush.msra.mxu0 %v2627
    %2750 = vmatpush.msra.mxu0 %v2626
    %2751 = vmatpush.msra.mxu0 %v2625
    %2752 = vmatpush.msra.mxu0 %v2624
    %2753 = vmatmul.f32.gmra.mxu0 %v2712
    %v2754 = vpop.f32.mrf.mxu0
    %v2755 = vadd.f32 %v2735, %v2754
    %2756 = vdwg.mxu0
    %2757 = vmatpush.msra.mxu0 0.0
    %2758 = vmatpush.msra.mxu0 0.0
    %2759 = vmatpush.msra.mxu0 0.0
    %2760 = vmatpush.msra.mxu0 0.0
    %2761 = vmatpush.msra.mxu0 0.0
    %2762 = vmatpush.msra.mxu0 0.0
    %2763 = vmatpush.msra.mxu0 0.0
    %2764 = vmatpush.msra.mxu0 0.0
    %2765 = vmatpush.msra.mxu0 0.0
    %2766 = vmatpush.msra.mxu0 0.0
    %2767 = vmatpush.msra.mxu0 0.0
    %2768 = vmatpush.msra.mxu0 0.0
    %2769 = vmatpush.msra.mxu0 %v2643
    %2770 = vmatpush.msra.mxu0 %v2642
    %2771 = vmatpush.msra.mxu0 %v2641
    %2772 = vmatpush.msra.mxu0 %v2640
    %2773 = vmatmul.f32.gmra.mxu0 %v2715
    %v2774 = vpop.f32.mrf.mxu0
    %v2775 = vadd.f32 %v2755, %v2774
    %2776 = vdwg.mxu0
    %v2777 = vmax.f32 %v2708, %v2775
    %s2778 = scalar_lea.vmem [#allocation13], 48
    %v2779 = vld [vmem:[%s2778] sm:$0xff]
    %v2780 = vld [vmem:[%s2778 + $0x8] sm:$0xff]
    %v2781 = vld [vmem:[%s2778 + $0x10] sm:$0xff]
    %v2783 = vsel %vm305, %v2781, 0
    %2785 = vmatpush.msra.mxu0 %v2623
    %2786 = vmatpush.msra.mxu0 %v2622
    %2787 = vmatpush.msra.mxu0 %v2621
    %2788 = vmatpush.msra.mxu0 %v2620
    %2789 = vmatpush.msra.mxu0 %v2619
    %2790 = vmatpush.msra.mxu0 %v2618
    %2791 = vmatpush.msra.mxu0 %v2617
    %2792 = vmatpush.msra.mxu0 %v2616
    %2793 = vmatpush.msra.mxu0 %v2615
    %2794 = vmatpush.msra.mxu0 %v2614
    %2795 = vmatpush.msra.mxu0 %v2613
    %2796 = vmatpush.msra.mxu0 %v2612
    %2797 = vmatpush.msra.mxu0 %v2611
    %2798 = vmatpush.msra.mxu0 %v2610
    %2799 = vmatpush.msra.mxu0 %v2609
    %2800 = vmatpush.msra.mxu0 %v2608
    %2801 = vmatmul.f32.gmra.mxu0 %v2779
    %v2802 = vpop.f32.mrf.mxu0
    %v2803 = vadd.f32 0.0, %v2802
    %2804 = vdwg.mxu0
    %2805 = vmatpush.msra.mxu0 %v2639
    %2806 = vmatpush.msra.mxu0 %v2638
    %2807 = vmatpush.msra.mxu0 %v2637
    %2808 = vmatpush.msra.mxu0 %v2636
    %2809 = vmatpush.msra.mxu0 %v2635
    %2810 = vmatpush.msra.mxu0 %v2634
    %2811 = vmatpush.msra.mxu0 %v2633
    %2812 = vmatpush.msra.mxu0 %v2632
    %2813 = vmatpush.msra.mxu0 %v2631
    %2814 = vmatpush.msra.mxu0 %v2630
    %2815 = vmatpush.msra.mxu0 %v2629
    %2816 = vmatpush.msra.mxu0 %v2628
    %2817 = vmatpush.msra.mxu0 %v2627
    %2818 = vmatpush.msra.mxu0 %v2626
    %2819 = vmatpush.msra.mxu0 %v2625
    %2820 = vmatpush.msra.mxu0 %v2624
    %2821 = vmatmul.f32.gmra.mxu0 %v2780
    %v2822 = vpop.f32.mrf.mxu0
    %v2823 = vadd.f32 %v2803, %v2822
    %2824 = vdwg.mxu0
    %2825 = vmatpush.msra.mxu0 0.0
    %2826 = vmatpush.msra.mxu0 0.0
    %2827 = vmatpush.msra.mxu0 0.0
    %2828 = vmatpush.msra.mxu0 0.0
    %2829 = vmatpush.msra.mxu0 0.0
    %2830 = vmatpush.msra.mxu0 0.0
    %2831 = vmatpush.msra.mxu0 0.0
    %2832 = vmatpush.msra.mxu0 0.0
    %2833 = vmatpush.msra.mxu0 0.0
    %2834 = vmatpush.msra.mxu0 0.0
    %2835 = vmatpush.msra.mxu0 0.0
    %2836 = vmatpush.msra.mxu0 0.0
    %2837 = vmatpush.msra.mxu0 %v2643
    %2838 = vmatpush.msra.mxu0 %v2642
    %2839 = vmatpush.msra.mxu0 %v2641
    %2840 = vmatpush.msra.mxu0 %v2640
    %2841 = vmatmul.f32.gmra.mxu0 %v2783
    %v2842 = vpop.f32.mrf.mxu0
    %v2843 = vadd.f32 %v2823, %v2842
    %2844 = vdwg.mxu0
    %v2845 = vmax.f32 %v2777, %v2843
    %s2846 = scalar_lea.vmem [#allocation13], 72
    %v2847 = vld [vmem:[%s2846] sm:$0xff]
    %v2848 = vld [vmem:[%s2846 + $0x8] sm:$0xff]
    %v2849 = vld [vmem:[%s2846 + $0x10] sm:$0xff]
    %v2851 = vsel %vm305, %v2849, 0
    %2853 = vmatpush.msra.mxu0 %v2623
    %2854 = vmatpush.msra.mxu0 %v2622
    %2855 = vmatpush.msra.mxu0 %v2621
    %2856 = vmatpush.msra.mxu0 %v2620
    %2857 = vmatpush.msra.mxu0 %v2619
    %2858 = vmatpush.msra.mxu0 %v2618
    %2859 = vmatpush.msra.mxu0 %v2617
    %2860 = vmatpush.msra.mxu0 %v2616
    %2861 = vmatpush.msra.mxu0 %v2615
    %2862 = vmatpush.msra.mxu0 %v2614
    %2863 = vmatpush.msra.mxu0 %v2613
    %2864 = vmatpush.msra.mxu0 %v2612
    %2865 = vmatpush.msra.mxu0 %v2611
    %2866 = vmatpush.msra.mxu0 %v2610
    %2867 = vmatpush.msra.mxu0 %v2609
    %2868 = vmatpush.msra.mxu0 %v2608
    %2869 = vmatmul.f32.gmra.mxu0 %v2847
    %v2870 = vpop.f32.mrf.mxu0
    %v2871 = vadd.f32 0.0, %v2870
    %2872 = vdwg.mxu0
    %2873 = vmatpush.msra.mxu0 %v2639
    %2874 = vmatpush.msra.mxu0 %v2638
    %2875 = vmatpush.msra.mxu0 %v2637
    %2876 = vmatpush.msra.mxu0 %v2636
    %2877 = vmatpush.msra.mxu0 %v2635
    %2878 = vmatpush.msra.mxu0 %v2634
    %2879 = vmatpush.msra.mxu0 %v2633
    %2880 = vmatpush.msra.mxu0 %v2632
    %2881 = vmatpush.msra.mxu0 %v2631
    %2882 = vmatpush.msra.mxu0 %v2630
    %2883 = vmatpush.msra.mxu0 %v2629
    %2884 = vmatpush.msra.mxu0 %v2628
    %2885 = vmatpush.msra.mxu0 %v2627
    %2886 = vmatpush.msra.mxu0 %v2626
    %2887 = vmatpush.msra.mxu0 %v2625
    %2888 = vmatpush.msra.mxu0 %v2624
    %2889 = vmatmul.f32.gmra.mxu0 %v2848
    %v2890 = vpop.f32.mrf.mxu0
    %v2891 = vadd.f32 %v2871, %v2890
    %2892 = vdwg.mxu0
    %2893 = vmatpush.msra.mxu0 0.0
    %2894 = vmatpush.msra.mxu0 0.0
    %2895 = vmatpush.msra.mxu0 0.0
    %2896 = vmatpush.msra.mxu0 0.0
    %2897 = vmatpush.msra.mxu0 0.0
    %2898 = vmatpush.msra.mxu0 0.0
    %2899 = vmatpush.msra.mxu0 0.0
    %2900 = vmatpush.msra.mxu0 0.0
    %2901 = vmatpush.msra.mxu0 0.0
    %2902 = vmatpush.msra.mxu0 0.0
    %2903 = vmatpush.msra.mxu0 0.0
    %2904 = vmatpush.msra.mxu0 0.0
    %2905 = vmatpush.msra.mxu0 %v2643
    %2906 = vmatpush.msra.mxu0 %v2642
    %2907 = vmatpush.msra.mxu0 %v2641
    %2908 = vmatpush.msra.mxu0 %v2640
    %2909 = vmatmul.f32.gmra.mxu0 %v2851
    %v2910 = vpop.f32.mrf.mxu0
    %v2911 = vadd.f32 %v2891, %v2910
    %2912 = vdwg.mxu0
    %v2913 = vmax.f32 %v2845, %v2911
    %v2914 = vld [vmem:[#allocation12] sm:$0x1]
    %v2916 = vperm.slane %v2914, 0
    %v2918 = vadd.f32 %v2913, %v2916
    %v2919 = vmax.f32 %v2918, 0.0
    %v2920 = vpack.c.bf16 %v2919, %v2919
    %v2921 = vld [vmem:[#allocation15] sm:$0xff]
    %v2922 = vld [vmem:[#allocation15 + $0x8] sm:$0xff]
    %v2923 = vld [vmem:[#allocation15 + $0x10] sm:$0xff]
    %v2924 = vld [vmem:[#allocation15 + $0x18] sm:$0xff]
    %v2925 = vld [vmem:[#allocation15 + $0x20] sm:$0xff]
    %v2926 = vld [vmem:[#allocation15 + $0x28] sm:$0xff]
    %v2927 = vld [vmem:[#allocation15 + $0x30] sm:$0xff]
    %v2928 = vld [vmem:[#allocation15 + $0x38] sm:$0xff]
    %v2929 = vld [vmem:[#allocation15 + $0x40] sm:$0xff]
    %v2930 = vld [vmem:[#allocation15 + $0x48] sm:$0xff]
    %v2931 = vld [vmem:[#allocation15 + $0x50] sm:$0xff]
    %v2932 = vld [vmem:[#allocation15 + $0x58] sm:$0xff]
    %v2933 = vld [vmem:[#allocation15 + $0x60] sm:$0xff]
    %v2934 = vld [vmem:[#allocation15 + $0x68] sm:$0xff]
    %v2935 = vld [vmem:[#allocation15 + $0x70] sm:$0xff]
    %v2936 = vld [vmem:[#allocation15 + $0x78] sm:$0xff]
    %v2937 = vld [vmem:[#allocation15 + $0x80] sm:$0xff]
    %v2938 = vld [vmem:[#allocation15 + $0x88] sm:$0xff]
    %v2939 = vld [vmem:[#allocation15 + $0x90] sm:$0xff]
    %v2940 = vld [vmem:[#allocation15 + $0x98] sm:$0xff]
    %v2941 = vld [vmem:[#allocation15 + $0xa0] sm:$0xff]
    %v2942 = vld [vmem:[#allocation15 + $0xa8] sm:$0xff]
    %v2943 = vld [vmem:[#allocation15 + $0xb0] sm:$0xff]
    %v2944 = vld [vmem:[#allocation15 + $0xb8] sm:$0xff]
    %v2945 = vld [vmem:[#allocation15 + $0xc0] sm:$0xff]
    %v2946 = vld [vmem:[#allocation15 + $0xc8] sm:$0xff]
    %v2947 = vld [vmem:[#allocation15 + $0xd0] sm:$0xff]
    %v2948 = vld [vmem:[#allocation15 + $0xd8] sm:$0xff]
    %v2949 = vld [vmem:[#allocation15 + $0xe0] sm:$0xff]
    %v2950 = vld [vmem:[#allocation15 + $0xe8] sm:$0xff]
    %v2951 = vld [vmem:[#allocation15 + $0xf0] sm:$0xff]
    %v2952 = vld [vmem:[#allocation15 + $0xf8] sm:$0xff]
    %v2985 = vunpack.c.l.b16 %v2921
    %v2986 = vunpack.c.h.b16 %v2921
    %v2987 = vunpack.c.l.b16 %v2922
    %v2988 = vunpack.c.h.b16 %v2922
    %v2989 = vunpack.c.l.b16 %v2923
    %v2990 = vunpack.c.h.b16 %v2923
    %v2991 = vunpack.c.l.b16 %v2924
    %v2992 = vunpack.c.h.b16 %v2924
    %v2993 = vunpack.c.l.b16 %v2925
    %v2994 = vunpack.c.h.b16 %v2925
    %v2995 = vunpack.c.l.b16 %v2926
    %v2996 = vunpack.c.h.b16 %v2926
    %v2997 = vunpack.c.l.b16 %v2927
    %v2998 = vunpack.c.h.b16 %v2927
    %v2999 = vunpack.c.l.b16 %v2928
    %v3000 = vunpack.c.h.b16 %v2928
    %v3001 = vunpack.c.l.b16 %v2929
    %v3002 = vunpack.c.h.b16 %v2929
    %v3003 = vunpack.c.l.b16 %v2930
    %v3004 = vunpack.c.h.b16 %v2930
    %v3005 = vunpack.c.l.b16 %v2931
    %v3006 = vunpack.c.h.b16 %v2931
    %v3007 = vunpack.c.l.b16 %v2932
    %v3008 = vunpack.c.h.b16 %v2932
    %v3009 = vunpack.c.l.b16 %v2933
    %v3010 = vunpack.c.h.b16 %v2933
    %v3011 = vunpack.c.l.b16 %v2934
    %v3012 = vunpack.c.h.b16 %v2934
    %v3013 = vunpack.c.l.b16 %v2935
    %v3014 = vunpack.c.h.b16 %v2935
    %v3015 = vunpack.c.l.b16 %v2936
    %v3016 = vunpack.c.h.b16 %v2936
    %v3017 = vunpack.c.l.b16 %v2937
    %v3018 = vunpack.c.h.b16 %v2937
    %v3019 = vunpack.c.l.b16 %v2938
    %v3020 = vunpack.c.h.b16 %v2938
    %v3021 = vunpack.c.l.b16 %v2939
    %v3022 = vunpack.c.h.b16 %v2939
    %v3023 = vunpack.c.l.b16 %v2940
    %v3024 = vunpack.c.h.b16 %v2940
    %v3025 = vunpack.c.l.b16 %v2941
    %v3026 = vunpack.c.h.b16 %v2941
    %v3027 = vunpack.c.l.b16 %v2942
    %v3028 = vunpack.c.h.b16 %v2942
    %v3029 = vunpack.c.l.b16 %v2943
    %v3030 = vunpack.c.h.b16 %v2943
    %v3031 = vunpack.c.l.b16 %v2944
    %v3032 = vunpack.c.h.b16 %v2944
    %v3033 = vunpack.c.l.b16 %v2945
    %v3034 = vunpack.c.h.b16 %v2945
    %v3035 = vunpack.c.l.b16 %v2946
    %v3036 = vunpack.c.h.b16 %v2946
    %v3037 = vunpack.c.l.b16 %v2947
    %v3038 = vunpack.c.h.b16 %v2947
    %v3039 = vunpack.c.l.b16 %v2948
    %v3040 = vunpack.c.h.b16 %v2948
    %v3041 = vunpack.c.l.b16 %v2949
    %v3042 = vunpack.c.h.b16 %v2949
    %v3043 = vunpack.c.l.b16 %v2950
    %v3044 = vunpack.c.h.b16 %v2950
    %v3045 = vunpack.c.l.b16 %v2951
    %v3046 = vunpack.c.h.b16 %v2951
    %v3047 = vunpack.c.l.b16 %v2952
    %v3048 = vunpack.c.h.b16 %v2952
    %v3049 = vpack.c.b16 %v2989, %v2985
    %v3050 = vpack.c.b16 %v2990, %v2986
    %v3051 = vpack.c.b16 %v2991, %v2987
    %v3052 = vpack.c.b16 %v2992, %v2988
    %v3053 = vpack.c.b16 %v2997, %v2993
    %v3054 = vpack.c.b16 %v2998, %v2994
    %v3055 = vpack.c.b16 %v2999, %v2995
    %v3056 = vpack.c.b16 %v3000, %v2996
    %v3057 = vpack.c.b16 %v3005, %v3001
    %v3058 = vpack.c.b16 %v3006, %v3002
    %v3059 = vpack.c.b16 %v3007, %v3003
    %v3060 = vpack.c.b16 %v3008, %v3004
    %v3061 = vpack.c.b16 %v3013, %v3009
    %v3062 = vpack.c.b16 %v3014, %v3010
    %v3063 = vpack.c.b16 %v3015, %v3011
    %v3064 = vpack.c.b16 %v3016, %v3012
    %v3065 = vpack.c.b16 %v3021, %v3017
    %v3066 = vpack.c.b16 %v3022, %v3018
    %v3067 = vpack.c.b16 %v3023, %v3019
    %v3068 = vpack.c.b16 %v3024, %v3020
    %v3069 = vpack.c.b16 %v3029, %v3025
    %v3070 = vpack.c.b16 %v3030, %v3026
    %v3071 = vpack.c.b16 %v3031, %v3027
    %v3072 = vpack.c.b16 %v3032, %v3028
    %v3073 = vpack.c.b16 %v3037, %v3033
    %v3074 = vpack.c.b16 %v3038, %v3034
    %v3075 = vpack.c.b16 %v3039, %v3035
    %v3076 = vpack.c.b16 %v3040, %v3036
    %v3077 = vpack.c.b16 %v3045, %v3041
    %v3078 = vpack.c.b16 %v3046, %v3042
    %v3079 = vpack.c.b16 %v3047, %v3043
    %v3080 = vpack.c.b16 %v3048, %v3044
    %3113 = vmatpush.bf16.msra.mxu0 %v3077
    %3114 = vmatpush.bf16.msra.mxu0 %v3073
    %3115 = vmatpush.bf16.msra.mxu0 %v3069
    %3116 = vmatpush.bf16.msra.mxu0 %v3065
    %3117 = vmatpush.bf16.msra.mxu0 %v3061
    %3118 = vmatpush.bf16.msra.mxu0 %v3057
    %3119 = vmatpush.bf16.msra.mxu0 %v3053
    %3120 = vmatpush.bf16.msra.mxu0 %v3049
    %3121 = vmatmul.bf16.gmra.mxu0 %v2920
    %v3122 = vpop.f32.mrf.mxu0
    %v3123 = vadd.f32 0.0, %v3122
    %v3124 = vpop.f32.mrf.mxu0
    %3125 = vdwg.mxu0
    %3126 = vmatpush.bf16.msra.mxu0 %v3078
    %3127 = vmatpush.bf16.msra.mxu0 %v3074
    %3128 = vmatpush.bf16.msra.mxu0 %v3070
    %3129 = vmatpush.bf16.msra.mxu0 %v3066
    %3130 = vmatpush.bf16.msra.mxu0 %v3062
    %3131 = vmatpush.bf16.msra.mxu0 %v3058
    %3132 = vmatpush.bf16.msra.mxu0 %v3054
    %3133 = vmatpush.bf16.msra.mxu0 %v3050
    %3134 = vmatmul.bf16.gmra.mxu0 %v2920
    %v3135 = vpop.f32.mrf.mxu0
    %v3136 = vadd.f32 0.0, %v3135
    %v3137 = vpop.f32.mrf.mxu0
    %3138 = vdwg.mxu0
    %3139 = vmatpush.bf16.msra.mxu0 %v3079
    %3140 = vmatpush.bf16.msra.mxu0 %v3075
    %3141 = vmatpush.bf16.msra.mxu0 %v3071
    %3142 = vmatpush.bf16.msra.mxu0 %v3067
    %3143 = vmatpush.bf16.msra.mxu0 %v3063
    %3144 = vmatpush.bf16.msra.mxu0 %v3059
    %3145 = vmatpush.bf16.msra.mxu0 %v3055
    %3146 = vmatpush.bf16.msra.mxu0 %v3051
    %3147 = vmatmul.bf16.gmra.mxu0 %v2920
    %v3148 = vpop.f32.mrf.mxu0
    %v3149 = vadd.f32 0.0, %v3148
    %v3150 = vpop.f32.mrf.mxu0
    %3151 = vdwg.mxu0
    %3152 = vmatpush.bf16.msra.mxu0 %v3080
    %3153 = vmatpush.bf16.msra.mxu0 %v3076
    %3154 = vmatpush.bf16.msra.mxu0 %v3072
    %3155 = vmatpush.bf16.msra.mxu0 %v3068
    %3156 = vmatpush.bf16.msra.mxu0 %v3064
    %3157 = vmatpush.bf16.msra.mxu0 %v3060
    %3158 = vmatpush.bf16.msra.mxu0 %v3056
    %3159 = vmatpush.bf16.msra.mxu0 %v3052
    %3160 = vmatmul.bf16.gmra.mxu0 %v2920
    %v3161 = vpop.f32.mrf.mxu0
    %v3162 = vadd.f32 0.0, %v3161
    %v3163 = vpop.f32.mrf.mxu0
    %3164 = vdwg.mxu0
    %3165 = vst [vmem:[#allocation4] sm:$0xff] %v3123
    %3166 = vst [vmem:[#allocation4 + $0x8] sm:$0xff] %v3136
    %3167 = vst [vmem:[#allocation4 + $0x10] sm:$0xff] %v3149
    %3168 = vst [vmem:[#allocation4 + $0x18] sm:$0xff] %v3162
    %s3169 = scalar_lea.vmem [#allocation15], 256
    %v3170 = vld [vmem:[%s3169] sm:$0xff]
    %v3171 = vld [vmem:[%s3169 + $0x8] sm:$0xff]
    %v3172 = vld [vmem:[%s3169 + $0x10] sm:$0xff]
    %v3173 = vld [vmem:[%s3169 + $0x18] sm:$0xff]
    %v3174 = vld [vmem:[%s3169 + $0x20] sm:$0xff]
    %v3175 = vld [vmem:[%s3169 + $0x28] sm:$0xff]
    %v3176 = vld [vmem:[%s3169 + $0x30] sm:$0xff]
    %v3177 = vld [vmem:[%s3169 + $0x38] sm:$0xff]
    %v3178 = vld [vmem:[%s3169 + $0x40] sm:$0xff]
    %v3179 = vld [vmem:[%s3169 + $0x48] sm:$0xff]
    %v3180 = vld [vmem:[%s3169 + $0x50] sm:$0xff]
    %v3181 = vld [vmem:[%s3169 + $0x58] sm:$0xff]
    %v3182 = vld [vmem:[%s3169 + $0x60] sm:$0xff]
    %v3183 = vld [vmem:[%s3169 + $0x68] sm:$0xff]
    %v3184 = vld [vmem:[%s3169 + $0x70] sm:$0xff]
    %v3185 = vld [vmem:[%s3169 + $0x78] sm:$0xff]
    %v3186 = vld [vmem:[%s3169 + $0x80] sm:$0xff]
    %v3187 = vld [vmem:[%s3169 + $0x88] sm:$0xff]
    %v3188 = vld [vmem:[%s3169 + $0x90] sm:$0xff]
    %v3189 = vld [vmem:[%s3169 + $0x98] sm:$0xff]
    %v3190 = vld [vmem:[%s3169 + $0xa0] sm:$0xff]
    %v3191 = vld [vmem:[%s3169 + $0xa8] sm:$0xff]
    %v3192 = vld [vmem:[%s3169 + $0xb0] sm:$0xff]
    %v3193 = vld [vmem:[%s3169 + $0xb8] sm:$0xff]
    %v3194 = vld [vmem:[%s3169 + $0xc0] sm:$0xff]
    %v3195 = vld [vmem:[%s3169 + $0xc8] sm:$0xff]
    %v3196 = vld [vmem:[%s3169 + $0xd0] sm:$0xff]
    %v3197 = vld [vmem:[%s3169 + $0xd8] sm:$0xff]
    %v3198 = vld [vmem:[%s3169 + $0xe0] sm:$0xff]
    %v3199 = vld [vmem:[%s3169 + $0xe8] sm:$0xff]
    %v3200 = vld [vmem:[%s3169 + $0xf0] sm:$0xff]
    %v3201 = vld [vmem:[%s3169 + $0xf8] sm:$0xff]
    %v3234 = vunpack.c.l.b16 %v3170
    %v3235 = vunpack.c.h.b16 %v3170
    %v3236 = vunpack.c.l.b16 %v3171
    %v3237 = vunpack.c.h.b16 %v3171
    %v3238 = vunpack.c.l.b16 %v3172
    %v3239 = vunpack.c.h.b16 %v3172
    %v3240 = vunpack.c.l.b16 %v3173
    %v3241 = vunpack.c.h.b16 %v3173
    %v3242 = vunpack.c.l.b16 %v3174
    %v3243 = vunpack.c.h.b16 %v3174
    %v3244 = vunpack.c.l.b16 %v3175
    %v3245 = vunpack.c.h.b16 %v3175
    %v3246 = vunpack.c.l.b16 %v3176
    %v3247 = vunpack.c.h.b16 %v3176
    %v3248 = vunpack.c.l.b16 %v3177
    %v3249 = vunpack.c.h.b16 %v3177
    %v3250 = vunpack.c.l.b16 %v3178
    %v3251 = vunpack.c.h.b16 %v3178
    %v3252 = vunpack.c.l.b16 %v3179
    %v3253 = vunpack.c.h.b16 %v3179
    %v3254 = vunpack.c.l.b16 %v3180
    %v3255 = vunpack.c.h.b16 %v3180
    %v3256 = vunpack.c.l.b16 %v3181
    %v3257 = vunpack.c.h.b16 %v3181
    %v3258 = vunpack.c.l.b16 %v3182
    %v3259 = vunpack.c.h.b16 %v3182
    %v3260 = vunpack.c.l.b16 %v3183
    %v3261 = vunpack.c.h.b16 %v3183
    %v3262 = vunpack.c.l.b16 %v3184
    %v3263 = vunpack.c.h.b16 %v3184
    %v3264 = vunpack.c.l.b16 %v3185
    %v3265 = vunpack.c.h.b16 %v3185
    %v3266 = vunpack.c.l.b16 %v3186
    %v3267 = vunpack.c.h.b16 %v3186
    %v3268 = vunpack.c.l.b16 %v3187
    %v3269 = vunpack.c.h.b16 %v3187
    %v3270 = vunpack.c.l.b16 %v3188
    %v3271 = vunpack.c.h.b16 %v3188
    %v3272 = vunpack.c.l.b16 %v3189
    %v3273 = vunpack.c.h.b16 %v3189
    %v3274 = vunpack.c.l.b16 %v3190
    %v3275 = vunpack.c.h.b16 %v3190
    %v3276 = vunpack.c.l.b16 %v3191
    %v3277 = vunpack.c.h.b16 %v3191
    %v3278 = vunpack.c.l.b16 %v3192
    %v3279 = vunpack.c.h.b16 %v3192
    %v3280 = vunpack.c.l.b16 %v3193
    %v3281 = vunpack.c.h.b16 %v3193
    %v3282 = vunpack.c.l.b16 %v3194
    %v3283 = vunpack.c.h.b16 %v3194
    %v3284 = vunpack.c.l.b16 %v3195
    %v3285 = vunpack.c.h.b16 %v3195
    %v3286 = vunpack.c.l.b16 %v3196
    %v3287 = vunpack.c.h.b16 %v3196
    %v3288 = vunpack.c.l.b16 %v3197
    %v3289 = vunpack.c.h.b16 %v3197
    %v3290 = vunpack.c.l.b16 %v3198
    %v3291 = vunpack.c.h.b16 %v3198
    %v3292 = vunpack.c.l.b16 %v3199
    %v3293 = vunpack.c.h.b16 %v3199
    %v3294 = vunpack.c.l.b16 %v3200
    %v3295 = vunpack.c.h.b16 %v3200
    %v3296 = vunpack.c.l.b16 %v3201
    %v3297 = vunpack.c.h.b16 %v3201
    %v3298 = vpack.c.b16 %v3238, %v3234
    %v3299 = vpack.c.b16 %v3239, %v3235
    %v3300 = vpack.c.b16 %v3240, %v3236
    %v3301 = vpack.c.b16 %v3241, %v3237
    %v3302 = vpack.c.b16 %v3246, %v3242
    %v3303 = vpack.c.b16 %v3247, %v3243
    %v3304 = vpack.c.b16 %v3248, %v3244
    %v3305 = vpack.c.b16 %v3249, %v3245
    %v3306 = vpack.c.b16 %v3254, %v3250
    %v3307 = vpack.c.b16 %v3255, %v3251
    %v3308 = vpack.c.b16 %v3256, %v3252
    %v3309 = vpack.c.b16 %v3257, %v3253
    %v3310 = vpack.c.b16 %v3262, %v3258
    %v3311 = vpack.c.b16 %v3263, %v3259
    %v3312 = vpack.c.b16 %v3264, %v3260
    %v3313 = vpack.c.b16 %v3265, %v3261
    %v3314 = vpack.c.b16 %v3270, %v3266
    %v3315 = vpack.c.b16 %v3271, %v3267
    %v3316 = vpack.c.b16 %v3272, %v3268
    %v3317 = vpack.c.b16 %v3273, %v3269
    %v3318 = vpack.c.b16 %v3278, %v3274
    %v3319 = vpack.c.b16 %v3279, %v3275
    %v3320 = vpack.c.b16 %v3280, %v3276
    %v3321 = vpack.c.b16 %v3281, %v3277
    %v3322 = vpack.c.b16 %v3286, %v3282
    %v3323 = vpack.c.b16 %v3287, %v3283
    %v3324 = vpack.c.b16 %v3288, %v3284
    %v3325 = vpack.c.b16 %v3289, %v3285
    %v3326 = vpack.c.b16 %v3294, %v3290
    %v3327 = vpack.c.b16 %v3295, %v3291
    %v3328 = vpack.c.b16 %v3296, %v3292
    %v3329 = vpack.c.b16 %v3297, %v3293
    %3362 = vmatpush.bf16.msra.mxu0 %v3326
    %3363 = vmatpush.bf16.msra.mxu0 %v3322
    %3364 = vmatpush.bf16.msra.mxu0 %v3318
    %3365 = vmatpush.bf16.msra.mxu0 %v3314
    %3366 = vmatpush.bf16.msra.mxu0 %v3310
    %3367 = vmatpush.bf16.msra.mxu0 %v3306
    %3368 = vmatpush.bf16.msra.mxu0 %v3302
    %3369 = vmatpush.bf16.msra.mxu0 %v3298
    %3370 = vmatmul.bf16.gmra.mxu0 %v2920
    %v3371 = vpop.f32.mrf.mxu0
    %v3372 = vadd.f32 0.0, %v3371
    %v3373 = vpop.f32.mrf.mxu0
    %3374 = vdwg.mxu0
    %3375 = vmatpush.bf16.msra.mxu0 %v3327
    %3376 = vmatpush.bf16.msra.mxu0 %v3323
    %3377 = vmatpush.bf16.msra.mxu0 %v3319
    %3378 = vmatpush.bf16.msra.mxu0 %v3315
    %3379 = vmatpush.bf16.msra.mxu0 %v3311
    %3380 = vmatpush.bf16.msra.mxu0 %v3307
    %3381 = vmatpush.bf16.msra.mxu0 %v3303
    %3382 = vmatpush.bf16.msra.mxu0 %v3299
    %3383 = vmatmul.bf16.gmra.mxu0 %v2920
    %v3384 = vpop.f32.mrf.mxu0
    %v3385 = vadd.f32 0.0, %v3384
    %v3386 = vpop.f32.mrf.mxu0
    %3387 = vdwg.mxu0
    %3388 = vmatpush.bf16.msra.mxu0 %v3328
    %3389 = vmatpush.bf16.msra.mxu0 %v3324
    %3390 = vmatpush.bf16.msra.mxu0 %v3320
    %3391 = vmatpush.bf16.msra.mxu0 %v3316
    %3392 = vmatpush.bf16.msra.mxu0 %v3312
    %3393 = vmatpush.bf16.msra.mxu0 %v3308
    %3394 = vmatpush.bf16.msra.mxu0 %v3304
    %3395 = vmatpush.bf16.msra.mxu0 %v3300
    %3396 = vmatmul.bf16.gmra.mxu0 %v2920
    %v3397 = vpop.f32.mrf.mxu0
    %v3398 = vadd.f32 0.0, %v3397
    %v3399 = vpop.f32.mrf.mxu0
    %3400 = vdwg.mxu0
    %3401 = vmatpush.bf16.msra.mxu0 %v3329
    %3402 = vmatpush.bf16.msra.mxu0 %v3325
    %3403 = vmatpush.bf16.msra.mxu0 %v3321
    %3404 = vmatpush.bf16.msra.mxu0 %v3317
    %3405 = vmatpush.bf16.msra.mxu0 %v3313
    %3406 = vmatpush.bf16.msra.mxu0 %v3309
    %3407 = vmatpush.bf16.msra.mxu0 %v3305
    %3408 = vmatpush.bf16.msra.mxu0 %v3301
    %3409 = vmatmul.bf16.gmra.mxu0 %v2920
    %v3410 = vpop.f32.mrf.mxu0
    %v3411 = vadd.f32 0.0, %v3410
    %v3412 = vpop.f32.mrf.mxu0
    %3413 = vdwg.mxu0
    %3414 = vst [vmem:[#allocation4 + $0x20] sm:$0xff] %v3372
    %3415 = vst [vmem:[#allocation4 + $0x28] sm:$0xff] %v3385
    %3416 = vst [vmem:[#allocation4 + $0x30] sm:$0xff] %v3398
    %3417 = vst [vmem:[#allocation4 + $0x38] sm:$0xff] %v3411
    %s3418 = scalar_lea.vmem [#allocation15], 512
    %v3419 = vld [vmem:[%s3418] sm:$0xff]
    %v3420 = vld [vmem:[%s3418 + $0x8] sm:$0xff]
    %v3421 = vld [vmem:[%s3418 + $0x10] sm:$0xff]
    %v3422 = vld [vmem:[%s3418 + $0x18] sm:$0xff]
    %v3423 = vld [vmem:[%s3418 + $0x20] sm:$0xff]
    %v3424 = vld [vmem:[%s3418 + $0x28] sm:$0xff]
    %v3425 = vld [vmem:[%s3418 + $0x30] sm:$0xff]
    %v3426 = vld [vmem:[%s3418 + $0x38] sm:$0xff]
    %v3427 = vld [vmem:[%s3418 + $0x40] sm:$0xff]
    %v3428 = vld [vmem:[%s3418 + $0x48] sm:$0xff]
    %v3429 = vld [vmem:[%s3418 + $0x50] sm:$0xff]
    %v3430 = vld [vmem:[%s3418 + $0x58] sm:$0xff]
    %v3431 = vld [vmem:[%s3418 + $0x60] sm:$0xff]
    %v3432 = vld [vmem:[%s3418 + $0x68] sm:$0xff]
    %v3433 = vld [vmem:[%s3418 + $0x70] sm:$0xff]
    %v3434 = vld [vmem:[%s3418 + $0x78] sm:$0xff]
    %v3435 = vld [vmem:[%s3418 + $0x80] sm:$0xff]
    %v3436 = vld [vmem:[%s3418 + $0x88] sm:$0xff]
    %v3437 = vld [vmem:[%s3418 + $0x90] sm:$0xff]
    %v3438 = vld [vmem:[%s3418 + $0x98] sm:$0xff]
    %v3439 = vld [vmem:[%s3418 + $0xa0] sm:$0xff]
    %v3440 = vld [vmem:[%s3418 + $0xa8] sm:$0xff]
    %v3441 = vld [vmem:[%s3418 + $0xb0] sm:$0xff]
    %v3442 = vld [vmem:[%s3418 + $0xb8] sm:$0xff]
    %v3443 = vld [vmem:[%s3418 + $0xc0] sm:$0xff]
    %v3444 = vld [vmem:[%s3418 + $0xc8] sm:$0xff]
    %v3445 = vld [vmem:[%s3418 + $0xd0] sm:$0xff]
    %v3446 = vld [vmem:[%s3418 + $0xd8] sm:$0xff]
    %v3447 = vld [vmem:[%s3418 + $0xe0] sm:$0xff]
    %v3448 = vld [vmem:[%s3418 + $0xe8] sm:$0xff]
    %v3449 = vld [vmem:[%s3418 + $0xf0] sm:$0xff]
    %v3450 = vld [vmem:[%s3418 + $0xf8] sm:$0xff]
    %v3483 = vunpack.c.l.b16 %v3419
    %v3484 = vunpack.c.h.b16 %v3419
    %v3485 = vunpack.c.l.b16 %v3420
    %v3486 = vunpack.c.h.b16 %v3420
    %v3487 = vunpack.c.l.b16 %v3421
    %v3488 = vunpack.c.h.b16 %v3421
    %v3489 = vunpack.c.l.b16 %v3422
    %v3490 = vunpack.c.h.b16 %v3422
    %v3491 = vunpack.c.l.b16 %v3423
    %v3492 = vunpack.c.h.b16 %v3423
    %v3493 = vunpack.c.l.b16 %v3424
    %v3494 = vunpack.c.h.b16 %v3424
    %v3495 = vunpack.c.l.b16 %v3425
    %v3496 = vunpack.c.h.b16 %v3425
    %v3497 = vunpack.c.l.b16 %v3426
    %v3498 = vunpack.c.h.b16 %v3426
    %v3499 = vunpack.c.l.b16 %v3427
    %v3500 = vunpack.c.h.b16 %v3427
    %v3501 = vunpack.c.l.b16 %v3428
    %v3502 = vunpack.c.h.b16 %v3428
    %v3503 = vunpack.c.l.b16 %v3429
    %v3504 = vunpack.c.h.b16 %v3429
    %v3505 = vunpack.c.l.b16 %v3430
    %v3506 = vunpack.c.h.b16 %v3430
    %v3507 = vunpack.c.l.b16 %v3431
    %v3508 = vunpack.c.h.b16 %v3431
    %v3509 = vunpack.c.l.b16 %v3432
    %v3510 = vunpack.c.h.b16 %v3432
    %v3511 = vunpack.c.l.b16 %v3433
    %v3512 = vunpack.c.h.b16 %v3433
    %v3513 = vunpack.c.l.b16 %v3434
    %v3514 = vunpack.c.h.b16 %v3434
    %v3515 = vunpack.c.l.b16 %v3435
    %v3516 = vunpack.c.h.b16 %v3435
    %v3517 = vunpack.c.l.b16 %v3436
    %v3518 = vunpack.c.h.b16 %v3436
    %v3519 = vunpack.c.l.b16 %v3437
    %v3520 = vunpack.c.h.b16 %v3437
    %v3521 = vunpack.c.l.b16 %v3438
    %v3522 = vunpack.c.h.b16 %v3438
    %v3523 = vunpack.c.l.b16 %v3439
    %v3524 = vunpack.c.h.b16 %v3439
    %v3525 = vunpack.c.l.b16 %v3440
    %v3526 = vunpack.c.h.b16 %v3440
    %v3527 = vunpack.c.l.b16 %v3441
    %v3528 = vunpack.c.h.b16 %v3441
    %v3529 = vunpack.c.l.b16 %v3442
    %v3530 = vunpack.c.h.b16 %v3442
    %v3531 = vunpack.c.l.b16 %v3443
    %v3532 = vunpack.c.h.b16 %v3443
    %v3533 = vunpack.c.l.b16 %v3444
    %v3534 = vunpack.c.h.b16 %v3444
    %v3535 = vunpack.c.l.b16 %v3445
    %v3536 = vunpack.c.h.b16 %v3445
    %v3537 = vunpack.c.l.b16 %v3446
    %v3538 = vunpack.c.h.b16 %v3446
    %v3539 = vunpack.c.l.b16 %v3447
    %v3540 = vunpack.c.h.b16 %v3447
    %v3541 = vunpack.c.l.b16 %v3448
    %v3542 = vunpack.c.h.b16 %v3448
    %v3543 = vunpack.c.l.b16 %v3449
    %v3544 = vunpack.c.h.b16 %v3449
    %v3545 = vunpack.c.l.b16 %v3450
    %v3546 = vunpack.c.h.b16 %v3450
    %v3547 = vpack.c.b16 %v3487, %v3483
    %v3548 = vpack.c.b16 %v3488, %v3484
    %v3549 = vpack.c.b16 %v3489, %v3485
    %v3550 = vpack.c.b16 %v3490, %v3486
    %v3551 = vpack.c.b16 %v3495, %v3491
    %v3552 = vpack.c.b16 %v3496, %v3492
    %v3553 = vpack.c.b16 %v3497, %v3493
    %v3554 = vpack.c.b16 %v3498, %v3494
    %v3555 = vpack.c.b16 %v3503, %v3499
    %v3556 = vpack.c.b16 %v3504, %v3500
    %v3557 = vpack.c.b16 %v3505, %v3501
    %v3558 = vpack.c.b16 %v3506, %v3502
    %v3559 = vpack.c.b16 %v3511, %v3507
    %v3560 = vpack.c.b16 %v3512, %v3508
    %v3561 = vpack.c.b16 %v3513, %v3509
    %v3562 = vpack.c.b16 %v3514, %v3510
    %v3563 = vpack.c.b16 %v3519, %v3515
    %v3564 = vpack.c.b16 %v3520, %v3516
    %v3565 = vpack.c.b16 %v3521, %v3517
    %v3566 = vpack.c.b16 %v3522, %v3518
    %v3567 = vpack.c.b16 %v3527, %v3523
    %v3568 = vpack.c.b16 %v3528, %v3524
    %v3569 = vpack.c.b16 %v3529, %v3525
    %v3570 = vpack.c.b16 %v3530, %v3526
    %v3571 = vpack.c.b16 %v3535, %v3531
    %v3572 = vpack.c.b16 %v3536, %v3532
    %v3573 = vpack.c.b16 %v3537, %v3533
    %v3574 = vpack.c.b16 %v3538, %v3534
    %v3575 = vpack.c.b16 %v3543, %v3539
    %v3576 = vpack.c.b16 %v3544, %v3540
    %v3577 = vpack.c.b16 %v3545, %v3541
    %v3578 = vpack.c.b16 %v3546, %v3542
    %3611 = vmatpush.bf16.msra.mxu0 %v3575
    %3612 = vmatpush.bf16.msra.mxu0 %v3571
    %3613 = vmatpush.bf16.msra.mxu0 %v3567
    %3614 = vmatpush.bf16.msra.mxu0 %v3563
    %3615 = vmatpush.bf16.msra.mxu0 %v3559
    %3616 = vmatpush.bf16.msra.mxu0 %v3555
    %3617 = vmatpush.bf16.msra.mxu0 %v3551
    %3618 = vmatpush.bf16.msra.mxu0 %v3547
    %3619 = vmatmul.bf16.gmra.mxu0 %v2920
    %v3620 = vpop.f32.mrf.mxu0
    %v3621 = vadd.f32 0.0, %v3620
    %v3622 = vpop.f32.mrf.mxu0
    %3623 = vdwg.mxu0
    %3624 = vmatpush.bf16.msra.mxu0 %v3576
    %3625 = vmatpush.bf16.msra.mxu0 %v3572
    %3626 = vmatpush.bf16.msra.mxu0 %v3568
    %3627 = vmatpush.bf16.msra.mxu0 %v3564
    %3628 = vmatpush.bf16.msra.mxu0 %v3560
    %3629 = vmatpush.bf16.msra.mxu0 %v3556
    %3630 = vmatpush.bf16.msra.mxu0 %v3552
    %3631 = vmatpush.bf16.msra.mxu0 %v3548
    %3632 = vmatmul.bf16.gmra.mxu0 %v2920
    %v3633 = vpop.f32.mrf.mxu0
    %v3634 = vadd.f32 0.0, %v3633
    %v3635 = vpop.f32.mrf.mxu0
    %3636 = vdwg.mxu0
    %3637 = vmatpush.bf16.msra.mxu0 %v3577
    %3638 = vmatpush.bf16.msra.mxu0 %v3573
    %3639 = vmatpush.bf16.msra.mxu0 %v3569
    %3640 = vmatpush.bf16.msra.mxu0 %v3565
    %3641 = vmatpush.bf16.msra.mxu0 %v3561
    %3642 = vmatpush.bf16.msra.mxu0 %v3557
    %3643 = vmatpush.bf16.msra.mxu0 %v3553
    %3644 = vmatpush.bf16.msra.mxu0 %v3549
    %3645 = vmatmul.bf16.gmra.mxu0 %v2920
    %v3646 = vpop.f32.mrf.mxu0
    %v3647 = vadd.f32 0.0, %v3646
    %v3648 = vpop.f32.mrf.mxu0
    %3649 = vdwg.mxu0
    %3650 = vmatpush.bf16.msra.mxu0 %v3578
    %3651 = vmatpush.bf16.msra.mxu0 %v3574
    %3652 = vmatpush.bf16.msra.mxu0 %v3570
    %3653 = vmatpush.bf16.msra.mxu0 %v3566
    %3654 = vmatpush.bf16.msra.mxu0 %v3562
    %3655 = vmatpush.bf16.msra.mxu0 %v3558
    %3656 = vmatpush.bf16.msra.mxu0 %v3554
    %3657 = vmatpush.bf16.msra.mxu0 %v3550
    %3658 = vmatmul.bf16.gmra.mxu0 %v2920
    %v3659 = vpop.f32.mrf.mxu0
    %v3660 = vadd.f32 0.0, %v3659
    %v3661 = vpop.f32.mrf.mxu0
    %3662 = vdwg.mxu0
    %3663 = vst [vmem:[#allocation4 + $0x40] sm:$0xff] %v3621
    %3664 = vst [vmem:[#allocation4 + $0x48] sm:$0xff] %v3634
    %3665 = vst [vmem:[#allocation4 + $0x50] sm:$0xff] %v3647
    %3666 = vst [vmem:[#allocation4 + $0x58] sm:$0xff] %v3660
    %s3667 = scalar_lea.vmem [#allocation15], 768
    %v3668 = vld [vmem:[%s3667] sm:$0xff]
    %v3669 = vld [vmem:[%s3667 + $0x8] sm:$0xff]
    %v3670 = vld [vmem:[%s3667 + $0x10] sm:$0xff]
    %v3671 = vld [vmem:[%s3667 + $0x18] sm:$0xff]
    %v3672 = vld [vmem:[%s3667 + $0x20] sm:$0xff]
    %v3673 = vld [vmem:[%s3667 + $0x28] sm:$0xff]
    %v3674 = vld [vmem:[%s3667 + $0x30] sm:$0xff]
    %v3675 = vld [vmem:[%s3667 + $0x38] sm:$0xff]
    %v3676 = vld [vmem:[%s3667 + $0x40] sm:$0xff]
    %v3677 = vld [vmem:[%s3667 + $0x48] sm:$0xff]
    %v3678 = vld [vmem:[%s3667 + $0x50] sm:$0xff]
    %v3679 = vld [vmem:[%s3667 + $0x58] sm:$0xff]
    %v3680 = vld [vmem:[%s3667 + $0x60] sm:$0xff]
    %v3681 = vld [vmem:[%s3667 + $0x68] sm:$0xff]
    %v3682 = vld [vmem:[%s3667 + $0x70] sm:$0xff]
    %v3683 = vld [vmem:[%s3667 + $0x78] sm:$0xff]
    %v3684 = vld [vmem:[%s3667 + $0x80] sm:$0xff]
    %v3685 = vld [vmem:[%s3667 + $0x88] sm:$0xff]
    %v3686 = vld [vmem:[%s3667 + $0x90] sm:$0xff]
    %v3687 = vld [vmem:[%s3667 + $0x98] sm:$0xff]
    %v3688 = vld [vmem:[%s3667 + $0xa0] sm:$0xff]
    %v3689 = vld [vmem:[%s3667 + $0xa8] sm:$0xff]
    %v3690 = vld [vmem:[%s3667 + $0xb0] sm:$0xff]
    %v3691 = vld [vmem:[%s3667 + $0xb8] sm:$0xff]
    %v3692 = vld [vmem:[%s3667 + $0xc0] sm:$0xff]
    %v3693 = vld [vmem:[%s3667 + $0xc8] sm:$0xff]
    %v3694 = vld [vmem:[%s3667 + $0xd0] sm:$0xff]
    %v3695 = vld [vmem:[%s3667 + $0xd8] sm:$0xff]
    %v3696 = vld [vmem:[%s3667 + $0xe0] sm:$0xff]
    %v3697 = vld [vmem:[%s3667 + $0xe8] sm:$0xff]
    %v3698 = vld [vmem:[%s3667 + $0xf0] sm:$0xff]
    %v3699 = vld [vmem:[%s3667 + $0xf8] sm:$0xff]
    %v3732 = vunpack.c.l.b16 %v3668
    %v3733 = vunpack.c.h.b16 %v3668
    %v3734 = vunpack.c.l.b16 %v3669
    %v3735 = vunpack.c.h.b16 %v3669
    %v3736 = vunpack.c.l.b16 %v3670
    %v3737 = vunpack.c.h.b16 %v3670
    %v3738 = vunpack.c.l.b16 %v3671
    %v3739 = vunpack.c.h.b16 %v3671
    %v3740 = vunpack.c.l.b16 %v3672
    %v3741 = vunpack.c.h.b16 %v3672
    %v3742 = vunpack.c.l.b16 %v3673
    %v3743 = vunpack.c.h.b16 %v3673
    %v3744 = vunpack.c.l.b16 %v3674
    %v3745 = vunpack.c.h.b16 %v3674
    %v3746 = vunpack.c.l.b16 %v3675
    %v3747 = vunpack.c.h.b16 %v3675
    %v3748 = vunpack.c.l.b16 %v3676
    %v3749 = vunpack.c.h.b16 %v3676
    %v3750 = vunpack.c.l.b16 %v3677
    %v3751 = vunpack.c.h.b16 %v3677
    %v3752 = vunpack.c.l.b16 %v3678
    %v3753 = vunpack.c.h.b16 %v3678
    %v3754 = vunpack.c.l.b16 %v3679
    %v3755 = vunpack.c.h.b16 %v3679
    %v3756 = vunpack.c.l.b16 %v3680
    %v3757 = vunpack.c.h.b16 %v3680
    %v3758 = vunpack.c.l.b16 %v3681
    %v3759 = vunpack.c.h.b16 %v3681
    %v3760 = vunpack.c.l.b16 %v3682
    %v3761 = vunpack.c.h.b16 %v3682
    %v3762 = vunpack.c.l.b16 %v3683
    %v3763 = vunpack.c.h.b16 %v3683
    %v3764 = vunpack.c.l.b16 %v3684
    %v3765 = vunpack.c.h.b16 %v3684
    %v3766 = vunpack.c.l.b16 %v3685
    %v3767 = vunpack.c.h.b16 %v3685
    %v3768 = vunpack.c.l.b16 %v3686
    %v3769 = vunpack.c.h.b16 %v3686
    %v3770 = vunpack.c.l.b16 %v3687
    %v3771 = vunpack.c.h.b16 %v3687
    %v3772 = vunpack.c.l.b16 %v3688
    %v3773 = vunpack.c.h.b16 %v3688
    %v3774 = vunpack.c.l.b16 %v3689
    %v3775 = vunpack.c.h.b16 %v3689
    %v3776 = vunpack.c.l.b16 %v3690
    %v3777 = vunpack.c.h.b16 %v3690
    %v3778 = vunpack.c.l.b16 %v3691
    %v3779 = vunpack.c.h.b16 %v3691
    %v3780 = vunpack.c.l.b16 %v3692
    %v3781 = vunpack.c.h.b16 %v3692
    %v3782 = vunpack.c.l.b16 %v3693
    %v3783 = vunpack.c.h.b16 %v3693
    %v3784 = vunpack.c.l.b16 %v3694
    %v3785 = vunpack.c.h.b16 %v3694
    %v3786 = vunpack.c.l.b16 %v3695
    %v3787 = vunpack.c.h.b16 %v3695
    %v3788 = vunpack.c.l.b16 %v3696
    %v3789 = vunpack.c.h.b16 %v3696
    %v3790 = vunpack.c.l.b16 %v3697
    %v3791 = vunpack.c.h.b16 %v3697
    %v3792 = vunpack.c.l.b16 %v3698
    %v3793 = vunpack.c.h.b16 %v3698
    %v3794 = vunpack.c.l.b16 %v3699
    %v3795 = vunpack.c.h.b16 %v3699
    %v3796 = vpack.c.b16 %v3736, %v3732
    %v3797 = vpack.c.b16 %v3737, %v3733
    %v3798 = vpack.c.b16 %v3738, %v3734
    %v3799 = vpack.c.b16 %v3739, %v3735
    %v3800 = vpack.c.b16 %v3744, %v3740
    %v3801 = vpack.c.b16 %v3745, %v3741
    %v3802 = vpack.c.b16 %v3746, %v3742
    %v3803 = vpack.c.b16 %v3747, %v3743
    %v3804 = vpack.c.b16 %v3752, %v3748
    %v3805 = vpack.c.b16 %v3753, %v3749
    %v3806 = vpack.c.b16 %v3754, %v3750
    %v3807 = vpack.c.b16 %v3755, %v3751
    %v3808 = vpack.c.b16 %v3760, %v3756
    %v3809 = vpack.c.b16 %v3761, %v3757
    %v3810 = vpack.c.b16 %v3762, %v3758
    %v3811 = vpack.c.b16 %v3763, %v3759
    %v3812 = vpack.c.b16 %v3768, %v3764
    %v3813 = vpack.c.b16 %v3769, %v3765
    %v3814 = vpack.c.b16 %v3770, %v3766
    %v3815 = vpack.c.b16 %v3771, %v3767
    %v3816 = vpack.c.b16 %v3776, %v3772
    %v3817 = vpack.c.b16 %v3777, %v3773
    %v3818 = vpack.c.b16 %v3778, %v3774
    %v3819 = vpack.c.b16 %v3779, %v3775
    %v3820 = vpack.c.b16 %v3784, %v3780
    %v3821 = vpack.c.b16 %v3785, %v3781
    %v3822 = vpack.c.b16 %v3786, %v3782
    %v3823 = vpack.c.b16 %v3787, %v3783
    %v3824 = vpack.c.b16 %v3792, %v3788
    %v3825 = vpack.c.b16 %v3793, %v3789
    %v3826 = vpack.c.b16 %v3794, %v3790
    %v3827 = vpack.c.b16 %v3795, %v3791
    %3860 = vmatpush.bf16.msra.mxu0 %v3824
    %3861 = vmatpush.bf16.msra.mxu0 %v3820
    %3862 = vmatpush.bf16.msra.mxu0 %v3816
    %3863 = vmatpush.bf16.msra.mxu0 %v3812
    %3864 = vmatpush.bf16.msra.mxu0 %v3808
    %3865 = vmatpush.bf16.msra.mxu0 %v3804
    %3866 = vmatpush.bf16.msra.mxu0 %v3800
    %3867 = vmatpush.bf16.msra.mxu0 %v3796
    %3868 = vmatmul.bf16.gmra.mxu0 %v2920
    %v3869 = vpop.f32.mrf.mxu0
    %v3870 = vadd.f32 0.0, %v3869
    %v3871 = vpop.f32.mrf.mxu0
    %3872 = vdwg.mxu0
    %3873 = vmatpush.bf16.msra.mxu0 %v3825
    %3874 = vmatpush.bf16.msra.mxu0 %v3821
    %3875 = vmatpush.bf16.msra.mxu0 %v3817
    %3876 = vmatpush.bf16.msra.mxu0 %v3813
    %3877 = vmatpush.bf16.msra.mxu0 %v3809
    %3878 = vmatpush.bf16.msra.mxu0 %v3805
    %3879 = vmatpush.bf16.msra.mxu0 %v3801
    %3880 = vmatpush.bf16.msra.mxu0 %v3797
    %3881 = vmatmul.bf16.gmra.mxu0 %v2920
    %v3882 = vpop.f32.mrf.mxu0
    %v3883 = vadd.f32 0.0, %v3882
    %v3884 = vpop.f32.mrf.mxu0
    %3885 = vdwg.mxu0
    %3886 = vmatpush.bf16.msra.mxu0 %v3826
    %3887 = vmatpush.bf16.msra.mxu0 %v3822
    %3888 = vmatpush.bf16.msra.mxu0 %v3818
    %3889 = vmatpush.bf16.msra.mxu0 %v3814
    %3890 = vmatpush.bf16.msra.mxu0 %v3810
    %3891 = vmatpush.bf16.msra.mxu0 %v3806
    %3892 = vmatpush.bf16.msra.mxu0 %v3802
    %3893 = vmatpush.bf16.msra.mxu0 %v3798
    %3894 = vmatmul.bf16.gmra.mxu0 %v2920
    %v3895 = vpop.f32.mrf.mxu0
    %v3896 = vadd.f32 0.0, %v3895
    %v3897 = vpop.f32.mrf.mxu0
    %3898 = vdwg.mxu0
    %3899 = vmatpush.bf16.msra.mxu0 %v3827
    %3900 = vmatpush.bf16.msra.mxu0 %v3823
    %3901 = vmatpush.bf16.msra.mxu0 %v3819
    %3902 = vmatpush.bf16.msra.mxu0 %v3815
    %3903 = vmatpush.bf16.msra.mxu0 %v3811
    %3904 = vmatpush.bf16.msra.mxu0 %v3807
    %3905 = vmatpush.bf16.msra.mxu0 %v3803
    %3906 = vmatpush.bf16.msra.mxu0 %v3799
    %3907 = vmatmul.bf16.gmra.mxu0 %v2920
    %v3908 = vpop.f32.mrf.mxu0
    %v3909 = vadd.f32 0.0, %v3908
    %v3910 = vpop.f32.mrf.mxu0
    %3911 = vdwg.mxu0
    %3912 = vst [vmem:[#allocation4 + $0x60] sm:$0xff] %v3870
    %3913 = vst [vmem:[#allocation4 + $0x68] sm:$0xff] %v3883
    %3914 = vst [vmem:[#allocation4 + $0x70] sm:$0xff] %v3896
    %3915 = vst [vmem:[#allocation4 + $0x78] sm:$0xff] %v3909
    %s3916 = scalar_lea.vmem [#allocation15], 1024
    %v3917 = vld [vmem:[%s3916] sm:$0xff]
    %v3918 = vld [vmem:[%s3916 + $0x8] sm:$0xff]
    %v3919 = vld [vmem:[%s3916 + $0x10] sm:$0xff]
    %v3920 = vld [vmem:[%s3916 + $0x18] sm:$0xff]
    %v3921 = vld [vmem:[%s3916 + $0x20] sm:$0xff]
    %v3922 = vld [vmem:[%s3916 + $0x28] sm:$0xff]
    %v3923 = vld [vmem:[%s3916 + $0x30] sm:$0xff]
    %v3924 = vld [vmem:[%s3916 + $0x38] sm:$0xff]
    %v3925 = vld [vmem:[%s3916 + $0x40] sm:$0xff]
    %v3926 = vld [vmem:[%s3916 + $0x48] sm:$0xff]
    %v3927 = vld [vmem:[%s3916 + $0x50] sm:$0xff]
    %v3928 = vld [vmem:[%s3916 + $0x58] sm:$0xff]
    %v3929 = vld [vmem:[%s3916 + $0x60] sm:$0xff]
    %v3930 = vld [vmem:[%s3916 + $0x68] sm:$0xff]
    %v3931 = vld [vmem:[%s3916 + $0x70] sm:$0xff]
    %v3932 = vld [vmem:[%s3916 + $0x78] sm:$0xff]
    %v3933 = vld [vmem:[%s3916 + $0x80] sm:$0xff]
    %v3934 = vld [vmem:[%s3916 + $0x88] sm:$0xff]
    %v3935 = vld [vmem:[%s3916 + $0x90] sm:$0xff]
    %v3936 = vld [vmem:[%s3916 + $0x98] sm:$0xff]
    %v3937 = vld [vmem:[%s3916 + $0xa0] sm:$0xff]
    %v3938 = vld [vmem:[%s3916 + $0xa8] sm:$0xff]
    %v3939 = vld [vmem:[%s3916 + $0xb0] sm:$0xff]
    %v3940 = vld [vmem:[%s3916 + $0xb8] sm:$0xff]
    %v3941 = vld [vmem:[%s3916 + $0xc0] sm:$0xff]
    %v3942 = vld [vmem:[%s3916 + $0xc8] sm:$0xff]
    %v3943 = vld [vmem:[%s3916 + $0xd0] sm:$0xff]
    %v3944 = vld [vmem:[%s3916 + $0xd8] sm:$0xff]
    %v3945 = vld [vmem:[%s3916 + $0xe0] sm:$0xff]
    %v3946 = vld [vmem:[%s3916 + $0xe8] sm:$0xff]
    %v3947 = vld [vmem:[%s3916 + $0xf0] sm:$0xff]
    %v3948 = vld [vmem:[%s3916 + $0xf8] sm:$0xff]
    %v3981 = vunpack.c.l.b16 %v3917
    %v3982 = vunpack.c.h.b16 %v3917
    %v3983 = vunpack.c.l.b16 %v3918
    %v3984 = vunpack.c.h.b16 %v3918
    %v3985 = vunpack.c.l.b16 %v3919
    %v3986 = vunpack.c.h.b16 %v3919
    %v3987 = vunpack.c.l.b16 %v3920
    %v3988 = vunpack.c.h.b16 %v3920
    %v3989 = vunpack.c.l.b16 %v3921
    %v3990 = vunpack.c.h.b16 %v3921
    %v3991 = vunpack.c.l.b16 %v3922
    %v3992 = vunpack.c.h.b16 %v3922
    %v3993 = vunpack.c.l.b16 %v3923
    %v3994 = vunpack.c.h.b16 %v3923
    %v3995 = vunpack.c.l.b16 %v3924
    %v3996 = vunpack.c.h.b16 %v3924
    %v3997 = vunpack.c.l.b16 %v3925
    %v3998 = vunpack.c.h.b16 %v3925
    %v3999 = vunpack.c.l.b16 %v3926
    %v4000 = vunpack.c.h.b16 %v3926
    %v4001 = vunpack.c.l.b16 %v3927
    %v4002 = vunpack.c.h.b16 %v3927
    %v4003 = vunpack.c.l.b16 %v3928
    %v4004 = vunpack.c.h.b16 %v3928
    %v4005 = vunpack.c.l.b16 %v3929
    %v4006 = vunpack.c.h.b16 %v3929
    %v4007 = vunpack.c.l.b16 %v3930
    %v4008 = vunpack.c.h.b16 %v3930
    %v4009 = vunpack.c.l.b16 %v3931
    %v4010 = vunpack.c.h.b16 %v3931
    %v4011 = vunpack.c.l.b16 %v3932
    %v4012 = vunpack.c.h.b16 %v3932
    %v4013 = vunpack.c.l.b16 %v3933
    %v4014 = vunpack.c.h.b16 %v3933
    %v4015 = vunpack.c.l.b16 %v3934
    %v4016 = vunpack.c.h.b16 %v3934
    %v4017 = vunpack.c.l.b16 %v3935
    %v4018 = vunpack.c.h.b16 %v3935
    %v4019 = vunpack.c.l.b16 %v3936
    %v4020 = vunpack.c.h.b16 %v3936
    %v4021 = vunpack.c.l.b16 %v3937
    %v4022 = vunpack.c.h.b16 %v3937
    %v4023 = vunpack.c.l.b16 %v3938
    %v4024 = vunpack.c.h.b16 %v3938
    %v4025 = vunpack.c.l.b16 %v3939
    %v4026 = vunpack.c.h.b16 %v3939
    %v4027 = vunpack.c.l.b16 %v3940
    %v4028 = vunpack.c.h.b16 %v3940
    %v4029 = vunpack.c.l.b16 %v3941
    %v4030 = vunpack.c.h.b16 %v3941
    %v4031 = vunpack.c.l.b16 %v3942
    %v4032 = vunpack.c.h.b16 %v3942
    %v4033 = vunpack.c.l.b16 %v3943
    %v4034 = vunpack.c.h.b16 %v3943
    %v4035 = vunpack.c.l.b16 %v3944
    %v4036 = vunpack.c.h.b16 %v3944
    %v4037 = vunpack.c.l.b16 %v3945
    %v4038 = vunpack.c.h.b16 %v3945
    %v4039 = vunpack.c.l.b16 %v3946
    %v4040 = vunpack.c.h.b16 %v3946
    %v4041 = vunpack.c.l.b16 %v3947
    %v4042 = vunpack.c.h.b16 %v3947
    %v4043 = vunpack.c.l.b16 %v3948
    %v4044 = vunpack.c.h.b16 %v3948
    %v4045 = vpack.c.b16 %v3985, %v3981
    %v4046 = vpack.c.b16 %v3986, %v3982
    %v4047 = vpack.c.b16 %v3987, %v3983
    %v4048 = vpack.c.b16 %v3988, %v3984
    %v4049 = vpack.c.b16 %v3993, %v3989
    %v4050 = vpack.c.b16 %v3994, %v3990
    %v4051 = vpack.c.b16 %v3995, %v3991
    %v4052 = vpack.c.b16 %v3996, %v3992
    %v4053 = vpack.c.b16 %v4001, %v3997
    %v4054 = vpack.c.b16 %v4002, %v3998
    %v4055 = vpack.c.b16 %v4003, %v3999
    %v4056 = vpack.c.b16 %v4004, %v4000
    %v4057 = vpack.c.b16 %v4009, %v4005
    %v4058 = vpack.c.b16 %v4010, %v4006
    %v4059 = vpack.c.b16 %v4011, %v4007
    %v4060 = vpack.c.b16 %v4012, %v4008
    %v4061 = vpack.c.b16 %v4017, %v4013
    %v4062 = vpack.c.b16 %v4018, %v4014
    %v4063 = vpack.c.b16 %v4019, %v4015
    %v4064 = vpack.c.b16 %v4020, %v4016
    %v4065 = vpack.c.b16 %v4025, %v4021
    %v4066 = vpack.c.b16 %v4026, %v4022
    %v4067 = vpack.c.b16 %v4027, %v4023
    %v4068 = vpack.c.b16 %v4028, %v4024
    %v4069 = vpack.c.b16 %v4033, %v4029
    %v4070 = vpack.c.b16 %v4034, %v4030
    %v4071 = vpack.c.b16 %v4035, %v4031
    %v4072 = vpack.c.b16 %v4036, %v4032
    %v4073 = vpack.c.b16 %v4041, %v4037
    %v4074 = vpack.c.b16 %v4042, %v4038
    %v4075 = vpack.c.b16 %v4043, %v4039
    %v4076 = vpack.c.b16 %v4044, %v4040
    %4109 = vmatpush.bf16.msra.mxu0 %v4073
    %4110 = vmatpush.bf16.msra.mxu0 %v4069
    %4111 = vmatpush.bf16.msra.mxu0 %v4065
    %4112 = vmatpush.bf16.msra.mxu0 %v4061
    %4113 = vmatpush.bf16.msra.mxu0 %v4057
    %4114 = vmatpush.bf16.msra.mxu0 %v4053
    %4115 = vmatpush.bf16.msra.mxu0 %v4049
    %4116 = vmatpush.bf16.msra.mxu0 %v4045
    %4117 = vmatmul.bf16.gmra.mxu0 %v2920
    %v4118 = vpop.f32.mrf.mxu0
    %v4119 = vadd.f32 0.0, %v4118
    %v4120 = vpop.f32.mrf.mxu0
    %4121 = vdwg.mxu0
    %4122 = vmatpush.bf16.msra.mxu0 %v4074
    %4123 = vmatpush.bf16.msra.mxu0 %v4070
    %4124 = vmatpush.bf16.msra.mxu0 %v4066
    %4125 = vmatpush.bf16.msra.mxu0 %v4062
    %4126 = vmatpush.bf16.msra.mxu0 %v4058
    %4127 = vmatpush.bf16.msra.mxu0 %v4054
    %4128 = vmatpush.bf16.msra.mxu0 %v4050
    %4129 = vmatpush.bf16.msra.mxu0 %v4046
    %4130 = vmatmul.bf16.gmra.mxu0 %v2920
    %v4131 = vpop.f32.mrf.mxu0
    %v4132 = vadd.f32 0.0, %v4131
    %v4133 = vpop.f32.mrf.mxu0
    %4134 = vdwg.mxu0
    %4135 = vmatpush.bf16.msra.mxu0 %v4075
    %4136 = vmatpush.bf16.msra.mxu0 %v4071
    %4137 = vmatpush.bf16.msra.mxu0 %v4067
    %4138 = vmatpush.bf16.msra.mxu0 %v4063
    %4139 = vmatpush.bf16.msra.mxu0 %v4059
    %4140 = vmatpush.bf16.msra.mxu0 %v4055
    %4141 = vmatpush.bf16.msra.mxu0 %v4051
    %4142 = vmatpush.bf16.msra.mxu0 %v4047
    %4143 = vmatmul.bf16.gmra.mxu0 %v2920
    %v4144 = vpop.f32.mrf.mxu0
    %v4145 = vadd.f32 0.0, %v4144
    %v4146 = vpop.f32.mrf.mxu0
    %4147 = vdwg.mxu0
    %4148 = vmatpush.bf16.msra.mxu0 %v4076
    %4149 = vmatpush.bf16.msra.mxu0 %v4072
    %4150 = vmatpush.bf16.msra.mxu0 %v4068
    %4151 = vmatpush.bf16.msra.mxu0 %v4064
    %4152 = vmatpush.bf16.msra.mxu0 %v4060
    %4153 = vmatpush.bf16.msra.mxu0 %v4056
    %4154 = vmatpush.bf16.msra.mxu0 %v4052
    %4155 = vmatpush.bf16.msra.mxu0 %v4048
    %4156 = vmatmul.bf16.gmra.mxu0 %v2920
    %v4157 = vpop.f32.mrf.mxu0
    %v4158 = vadd.f32 0.0, %v4157
    %v4159 = vpop.f32.mrf.mxu0
    %4160 = vdwg.mxu0
    %4161 = vst [vmem:[#allocation4 + $0x80] sm:$0xff] %v4119
    %4162 = vst [vmem:[#allocation4 + $0x88] sm:$0xff] %v4132
    %4163 = vst [vmem:[#allocation4 + $0x90] sm:$0xff] %v4145
    %4164 = vst [vmem:[#allocation4 + $0x98] sm:$0xff] %v4158
    %s4165 = scalar_lea.vmem [#allocation15], 1280
    %v4166 = vld [vmem:[%s4165] sm:$0xff]
    %v4167 = vld [vmem:[%s4165 + $0x8] sm:$0xff]
    %v4168 = vld [vmem:[%s4165 + $0x10] sm:$0xff]
    %v4169 = vld [vmem:[%s4165 + $0x18] sm:$0xff]
    %v4170 = vld [vmem:[%s4165 + $0x20] sm:$0xff]
    %v4171 = vld [vmem:[%s4165 + $0x28] sm:$0xff]
    %v4172 = vld [vmem:[%s4165 + $0x30] sm:$0xff]
    %v4173 = vld [vmem:[%s4165 + $0x38] sm:$0xff]
    %v4174 = vld [vmem:[%s4165 + $0x40] sm:$0xff]
    %v4175 = vld [vmem:[%s4165 + $0x48] sm:$0xff]
    %v4176 = vld [vmem:[%s4165 + $0x50] sm:$0xff]
    %v4177 = vld [vmem:[%s4165 + $0x58] sm:$0xff]
    %v4178 = vld [vmem:[%s4165 + $0x60] sm:$0xff]
    %v4179 = vld [vmem:[%s4165 + $0x68] sm:$0xff]
    %v4180 = vld [vmem:[%s4165 + $0x70] sm:$0xff]
    %v4181 = vld [vmem:[%s4165 + $0x78] sm:$0xff]
    %v4182 = vld [vmem:[%s4165 + $0x80] sm:$0xff]
    %v4183 = vld [vmem:[%s4165 + $0x88] sm:$0xff]
    %v4184 = vld [vmem:[%s4165 + $0x90] sm:$0xff]
    %v4185 = vld [vmem:[%s4165 + $0x98] sm:$0xff]
    %v4186 = vld [vmem:[%s4165 + $0xa0] sm:$0xff]
    %v4187 = vld [vmem:[%s4165 + $0xa8] sm:$0xff]
    %v4188 = vld [vmem:[%s4165 + $0xb0] sm:$0xff]
    %v4189 = vld [vmem:[%s4165 + $0xb8] sm:$0xff]
    %v4190 = vld [vmem:[%s4165 + $0xc0] sm:$0xff]
    %v4191 = vld [vmem:[%s4165 + $0xc8] sm:$0xff]
    %v4192 = vld [vmem:[%s4165 + $0xd0] sm:$0xff]
    %v4193 = vld [vmem:[%s4165 + $0xd8] sm:$0xff]
    %v4194 = vld [vmem:[%s4165 + $0xe0] sm:$0xff]
    %v4195 = vld [vmem:[%s4165 + $0xe8] sm:$0xff]
    %v4196 = vld [vmem:[%s4165 + $0xf0] sm:$0xff]
    %v4197 = vld [vmem:[%s4165 + $0xf8] sm:$0xff]
    %v4230 = vunpack.c.l.b16 %v4166
    %v4231 = vunpack.c.h.b16 %v4166
    %v4232 = vunpack.c.l.b16 %v4167
    %v4233 = vunpack.c.h.b16 %v4167
    %v4234 = vunpack.c.l.b16 %v4168
    %v4235 = vunpack.c.h.b16 %v4168
    %v4236 = vunpack.c.l.b16 %v4169
    %v4237 = vunpack.c.h.b16 %v4169
    %v4238 = vunpack.c.l.b16 %v4170
    %v4239 = vunpack.c.h.b16 %v4170
    %v4240 = vunpack.c.l.b16 %v4171
    %v4241 = vunpack.c.h.b16 %v4171
    %v4242 = vunpack.c.l.b16 %v4172
    %v4243 = vunpack.c.h.b16 %v4172
    %v4244 = vunpack.c.l.b16 %v4173
    %v4245 = vunpack.c.h.b16 %v4173
    %v4246 = vunpack.c.l.b16 %v4174
    %v4247 = vunpack.c.h.b16 %v4174
    %v4248 = vunpack.c.l.b16 %v4175
    %v4249 = vunpack.c.h.b16 %v4175
    %v4250 = vunpack.c.l.b16 %v4176
    %v4251 = vunpack.c.h.b16 %v4176
    %v4252 = vunpack.c.l.b16 %v4177
    %v4253 = vunpack.c.h.b16 %v4177
    %v4254 = vunpack.c.l.b16 %v4178
    %v4255 = vunpack.c.h.b16 %v4178
    %v4256 = vunpack.c.l.b16 %v4179
    %v4257 = vunpack.c.h.b16 %v4179
    %v4258 = vunpack.c.l.b16 %v4180
    %v4259 = vunpack.c.h.b16 %v4180
    %v4260 = vunpack.c.l.b16 %v4181
    %v4261 = vunpack.c.h.b16 %v4181
    %v4262 = vunpack.c.l.b16 %v4182
    %v4263 = vunpack.c.h.b16 %v4182
    %v4264 = vunpack.c.l.b16 %v4183
    %v4265 = vunpack.c.h.b16 %v4183
    %v4266 = vunpack.c.l.b16 %v4184
    %v4267 = vunpack.c.h.b16 %v4184
    %v4268 = vunpack.c.l.b16 %v4185
    %v4269 = vunpack.c.h.b16 %v4185
    %v4270 = vunpack.c.l.b16 %v4186
    %v4271 = vunpack.c.h.b16 %v4186
    %v4272 = vunpack.c.l.b16 %v4187
    %v4273 = vunpack.c.h.b16 %v4187
    %v4274 = vunpack.c.l.b16 %v4188
    %v4275 = vunpack.c.h.b16 %v4188
    %v4276 = vunpack.c.l.b16 %v4189
    %v4277 = vunpack.c.h.b16 %v4189
    %v4278 = vunpack.c.l.b16 %v4190
    %v4279 = vunpack.c.h.b16 %v4190
    %v4280 = vunpack.c.l.b16 %v4191
    %v4281 = vunpack.c.h.b16 %v4191
    %v4282 = vunpack.c.l.b16 %v4192
    %v4283 = vunpack.c.h.b16 %v4192
    %v4284 = vunpack.c.l.b16 %v4193
    %v4285 = vunpack.c.h.b16 %v4193
    %v4286 = vunpack.c.l.b16 %v4194
    %v4287 = vunpack.c.h.b16 %v4194
    %v4288 = vunpack.c.l.b16 %v4195
    %v4289 = vunpack.c.h.b16 %v4195
    %v4290 = vunpack.c.l.b16 %v4196
    %v4291 = vunpack.c.h.b16 %v4196
    %v4292 = vunpack.c.l.b16 %v4197
    %v4293 = vunpack.c.h.b16 %v4197
    %v4294 = vpack.c.b16 %v4234, %v4230
    %v4295 = vpack.c.b16 %v4235, %v4231
    %v4296 = vpack.c.b16 %v4236, %v4232
    %v4297 = vpack.c.b16 %v4237, %v4233
    %v4298 = vpack.c.b16 %v4242, %v4238
    %v4299 = vpack.c.b16 %v4243, %v4239
    %v4300 = vpack.c.b16 %v4244, %v4240
    %v4301 = vpack.c.b16 %v4245, %v4241
    %v4302 = vpack.c.b16 %v4250, %v4246
    %v4303 = vpack.c.b16 %v4251, %v4247
    %v4304 = vpack.c.b16 %v4252, %v4248
    %v4305 = vpack.c.b16 %v4253, %v4249
    %v4306 = vpack.c.b16 %v4258, %v4254
    %v4307 = vpack.c.b16 %v4259, %v4255
    %v4308 = vpack.c.b16 %v4260, %v4256
    %v4309 = vpack.c.b16 %v4261, %v4257
    %v4310 = vpack.c.b16 %v4266, %v4262
    %v4311 = vpack.c.b16 %v4267, %v4263
    %v4312 = vpack.c.b16 %v4268, %v4264
    %v4313 = vpack.c.b16 %v4269, %v4265
    %v4314 = vpack.c.b16 %v4274, %v4270
    %v4315 = vpack.c.b16 %v4275, %v4271
    %v4316 = vpack.c.b16 %v4276, %v4272
    %v4317 = vpack.c.b16 %v4277, %v4273
    %v4318 = vpack.c.b16 %v4282, %v4278
    %v4319 = vpack.c.b16 %v4283, %v4279
    %v4320 = vpack.c.b16 %v4284, %v4280
    %v4321 = vpack.c.b16 %v4285, %v4281
    %v4322 = vpack.c.b16 %v4290, %v4286
    %v4323 = vpack.c.b16 %v4291, %v4287
    %v4324 = vpack.c.b16 %v4292, %v4288
    %v4325 = vpack.c.b16 %v4293, %v4289
    %4358 = vmatpush.bf16.msra.mxu0 %v4322
    %4359 = vmatpush.bf16.msra.mxu0 %v4318
    %4360 = vmatpush.bf16.msra.mxu0 %v4314
    %4361 = vmatpush.bf16.msra.mxu0 %v4310
    %4362 = vmatpush.bf16.msra.mxu0 %v4306
    %4363 = vmatpush.bf16.msra.mxu0 %v4302
    %4364 = vmatpush.bf16.msra.mxu0 %v4298
    %4365 = vmatpush.bf16.msra.mxu0 %v4294
    %4366 = vmatmul.bf16.gmra.mxu0 %v2920
    %v4367 = vpop.f32.mrf.mxu0
    %v4368 = vadd.f32 0.0, %v4367
    %v4369 = vpop.f32.mrf.mxu0
    %4370 = vdwg.mxu0
    %4371 = vmatpush.bf16.msra.mxu0 %v4323
    %4372 = vmatpush.bf16.msra.mxu0 %v4319
    %4373 = vmatpush.bf16.msra.mxu0 %v4315
    %4374 = vmatpush.bf16.msra.mxu0 %v4311
    %4375 = vmatpush.bf16.msra.mxu0 %v4307
    %4376 = vmatpush.bf16.msra.mxu0 %v4303
    %4377 = vmatpush.bf16.msra.mxu0 %v4299
    %4378 = vmatpush.bf16.msra.mxu0 %v4295
    %4379 = vmatmul.bf16.gmra.mxu0 %v2920
    %v4380 = vpop.f32.mrf.mxu0
    %v4381 = vadd.f32 0.0, %v4380
    %v4382 = vpop.f32.mrf.mxu0
    %4383 = vdwg.mxu0
    %4384 = vmatpush.bf16.msra.mxu0 %v4324
    %4385 = vmatpush.bf16.msra.mxu0 %v4320
    %4386 = vmatpush.bf16.msra.mxu0 %v4316
    %4387 = vmatpush.bf16.msra.mxu0 %v4312
    %4388 = vmatpush.bf16.msra.mxu0 %v4308
    %4389 = vmatpush.bf16.msra.mxu0 %v4304
    %4390 = vmatpush.bf16.msra.mxu0 %v4300
    %4391 = vmatpush.bf16.msra.mxu0 %v4296
    %4392 = vmatmul.bf16.gmra.mxu0 %v2920
    %v4393 = vpop.f32.mrf.mxu0
    %v4394 = vadd.f32 0.0, %v4393
    %v4395 = vpop.f32.mrf.mxu0
    %4396 = vdwg.mxu0
    %4397 = vmatpush.bf16.msra.mxu0 %v4325
    %4398 = vmatpush.bf16.msra.mxu0 %v4321
    %4399 = vmatpush.bf16.msra.mxu0 %v4317
    %4400 = vmatpush.bf16.msra.mxu0 %v4313
    %4401 = vmatpush.bf16.msra.mxu0 %v4309
    %4402 = vmatpush.bf16.msra.mxu0 %v4305
    %4403 = vmatpush.bf16.msra.mxu0 %v4301
    %4404 = vmatpush.bf16.msra.mxu0 %v4297
    %4405 = vmatmul.bf16.gmra.mxu0 %v2920
    %v4406 = vpop.f32.mrf.mxu0
    %v4407 = vadd.f32 0.0, %v4406
    %v4408 = vpop.f32.mrf.mxu0
    %4409 = vdwg.mxu0
    %4410 = vst [vmem:[#allocation4 + $0xa0] sm:$0xff] %v4368
    %4411 = vst [vmem:[#allocation4 + $0xa8] sm:$0xff] %v4381
    %4412 = vst [vmem:[#allocation4 + $0xb0] sm:$0xff] %v4394
    %4413 = vst [vmem:[#allocation4 + $0xb8] sm:$0xff] %v4407
    %s4414 = scalar_lea.vmem [#allocation15], 1536
    %v4415 = vld [vmem:[%s4414] sm:$0xff]
    %v4416 = vld [vmem:[%s4414 + $0x8] sm:$0xff]
    %v4417 = vld [vmem:[%s4414 + $0x10] sm:$0xff]
    %v4418 = vld [vmem:[%s4414 + $0x18] sm:$0xff]
    %v4419 = vld [vmem:[%s4414 + $0x20] sm:$0xff]
    %v4420 = vld [vmem:[%s4414 + $0x28] sm:$0xff]
    %v4421 = vld [vmem:[%s4414 + $0x30] sm:$0xff]
    %v4422 = vld [vmem:[%s4414 + $0x38] sm:$0xff]
    %v4423 = vld [vmem:[%s4414 + $0x40] sm:$0xff]
    %v4424 = vld [vmem:[%s4414 + $0x48] sm:$0xff]
    %v4425 = vld [vmem:[%s4414 + $0x50] sm:$0xff]
    %v4426 = vld [vmem:[%s4414 + $0x58] sm:$0xff]
    %v4427 = vld [vmem:[%s4414 + $0x60] sm:$0xff]
    %v4428 = vld [vmem:[%s4414 + $0x68] sm:$0xff]
    %v4429 = vld [vmem:[%s4414 + $0x70] sm:$0xff]
    %v4430 = vld [vmem:[%s4414 + $0x78] sm:$0xff]
    %v4431 = vld [vmem:[%s4414 + $0x80] sm:$0xff]
    %v4432 = vld [vmem:[%s4414 + $0x88] sm:$0xff]
    %v4433 = vld [vmem:[%s4414 + $0x90] sm:$0xff]
    %v4434 = vld [vmem:[%s4414 + $0x98] sm:$0xff]
    %v4435 = vld [vmem:[%s4414 + $0xa0] sm:$0xff]
    %v4436 = vld [vmem:[%s4414 + $0xa8] sm:$0xff]
    %v4437 = vld [vmem:[%s4414 + $0xb0] sm:$0xff]
    %v4438 = vld [vmem:[%s4414 + $0xb8] sm:$0xff]
    %v4439 = vld [vmem:[%s4414 + $0xc0] sm:$0xff]
    %v4440 = vld [vmem:[%s4414 + $0xc8] sm:$0xff]
    %v4441 = vld [vmem:[%s4414 + $0xd0] sm:$0xff]
    %v4442 = vld [vmem:[%s4414 + $0xd8] sm:$0xff]
    %v4443 = vld [vmem:[%s4414 + $0xe0] sm:$0xff]
    %v4444 = vld [vmem:[%s4414 + $0xe8] sm:$0xff]
    %v4445 = vld [vmem:[%s4414 + $0xf0] sm:$0xff]
    %v4446 = vld [vmem:[%s4414 + $0xf8] sm:$0xff]
    %v4479 = vunpack.c.l.b16 %v4415
    %v4480 = vunpack.c.h.b16 %v4415
    %v4481 = vunpack.c.l.b16 %v4416
    %v4482 = vunpack.c.h.b16 %v4416
    %v4483 = vunpack.c.l.b16 %v4417
    %v4484 = vunpack.c.h.b16 %v4417
    %v4485 = vunpack.c.l.b16 %v4418
    %v4486 = vunpack.c.h.b16 %v4418
    %v4487 = vunpack.c.l.b16 %v4419
    %v4488 = vunpack.c.h.b16 %v4419
    %v4489 = vunpack.c.l.b16 %v4420
    %v4490 = vunpack.c.h.b16 %v4420
    %v4491 = vunpack.c.l.b16 %v4421
    %v4492 = vunpack.c.h.b16 %v4421
    %v4493 = vunpack.c.l.b16 %v4422
    %v4494 = vunpack.c.h.b16 %v4422
    %v4495 = vunpack.c.l.b16 %v4423
    %v4496 = vunpack.c.h.b16 %v4423
    %v4497 = vunpack.c.l.b16 %v4424
    %v4498 = vunpack.c.h.b16 %v4424
    %v4499 = vunpack.c.l.b16 %v4425
    %v4500 = vunpack.c.h.b16 %v4425
    %v4501 = vunpack.c.l.b16 %v4426
    %v4502 = vunpack.c.h.b16 %v4426
    %v4503 = vunpack.c.l.b16 %v4427
    %v4504 = vunpack.c.h.b16 %v4427
    %v4505 = vunpack.c.l.b16 %v4428
    %v4506 = vunpack.c.h.b16 %v4428
    %v4507 = vunpack.c.l.b16 %v4429
    %v4508 = vunpack.c.h.b16 %v4429
    %v4509 = vunpack.c.l.b16 %v4430
    %v4510 = vunpack.c.h.b16 %v4430
    %v4511 = vunpack.c.l.b16 %v4431
    %v4512 = vunpack.c.h.b16 %v4431
    %v4513 = vunpack.c.l.b16 %v4432
    %v4514 = vunpack.c.h.b16 %v4432
    %v4515 = vunpack.c.l.b16 %v4433
    %v4516 = vunpack.c.h.b16 %v4433
    %v4517 = vunpack.c.l.b16 %v4434
    %v4518 = vunpack.c.h.b16 %v4434
    %v4519 = vunpack.c.l.b16 %v4435
    %v4520 = vunpack.c.h.b16 %v4435
    %v4521 = vunpack.c.l.b16 %v4436
    %v4522 = vunpack.c.h.b16 %v4436
    %v4523 = vunpack.c.l.b16 %v4437
    %v4524 = vunpack.c.h.b16 %v4437
    %v4525 = vunpack.c.l.b16 %v4438
    %v4526 = vunpack.c.h.b16 %v4438
    %v4527 = vunpack.c.l.b16 %v4439
    %v4528 = vunpack.c.h.b16 %v4439
    %v4529 = vunpack.c.l.b16 %v4440
    %v4530 = vunpack.c.h.b16 %v4440
    %v4531 = vunpack.c.l.b16 %v4441
    %v4532 = vunpack.c.h.b16 %v4441
    %v4533 = vunpack.c.l.b16 %v4442
    %v4534 = vunpack.c.h.b16 %v4442
    %v4535 = vunpack.c.l.b16 %v4443
    %v4536 = vunpack.c.h.b16 %v4443
    %v4537 = vunpack.c.l.b16 %v4444
    %v4538 = vunpack.c.h.b16 %v4444
    %v4539 = vunpack.c.l.b16 %v4445
    %v4540 = vunpack.c.h.b16 %v4445
    %v4541 = vunpack.c.l.b16 %v4446
    %v4542 = vunpack.c.h.b16 %v4446
    %v4543 = vpack.c.b16 %v4483, %v4479
    %v4544 = vpack.c.b16 %v4484, %v4480
    %v4545 = vpack.c.b16 %v4485, %v4481
    %v4546 = vpack.c.b16 %v4486, %v4482
    %v4547 = vpack.c.b16 %v4491, %v4487
    %v4548 = vpack.c.b16 %v4492, %v4488
    %v4549 = vpack.c.b16 %v4493, %v4489
    %v4550 = vpack.c.b16 %v4494, %v4490
    %v4551 = vpack.c.b16 %v4499, %v4495
    %v4552 = vpack.c.b16 %v4500, %v4496
    %v4553 = vpack.c.b16 %v4501, %v4497
    %v4554 = vpack.c.b16 %v4502, %v4498
    %v4555 = vpack.c.b16 %v4507, %v4503
    %v4556 = vpack.c.b16 %v4508, %v4504
    %v4557 = vpack.c.b16 %v4509, %v4505
    %v4558 = vpack.c.b16 %v4510, %v4506
    %v4559 = vpack.c.b16 %v4515, %v4511
    %v4560 = vpack.c.b16 %v4516, %v4512
    %v4561 = vpack.c.b16 %v4517, %v4513
    %v4562 = vpack.c.b16 %v4518, %v4514
    %v4563 = vpack.c.b16 %v4523, %v4519
    %v4564 = vpack.c.b16 %v4524, %v4520
    %v4565 = vpack.c.b16 %v4525, %v4521
    %v4566 = vpack.c.b16 %v4526, %v4522
    %v4567 = vpack.c.b16 %v4531, %v4527
    %v4568 = vpack.c.b16 %v4532, %v4528
    %v4569 = vpack.c.b16 %v4533, %v4529
    %v4570 = vpack.c.b16 %v4534, %v4530
    %v4571 = vpack.c.b16 %v4539, %v4535
    %v4572 = vpack.c.b16 %v4540, %v4536
    %v4573 = vpack.c.b16 %v4541, %v4537
    %v4574 = vpack.c.b16 %v4542, %v4538
    %4607 = vmatpush.bf16.msra.mxu0 %v4571
    %4608 = vmatpush.bf16.msra.mxu0 %v4567
    %4609 = vmatpush.bf16.msra.mxu0 %v4563
    %4610 = vmatpush.bf16.msra.mxu0 %v4559
    %4611 = vmatpush.bf16.msra.mxu0 %v4555
    %4612 = vmatpush.bf16.msra.mxu0 %v4551
    %4613 = vmatpush.bf16.msra.mxu0 %v4547
    %4614 = vmatpush.bf16.msra.mxu0 %v4543
    %4615 = vmatmul.bf16.gmra.mxu0 %v2920
    %v4616 = vpop.f32.mrf.mxu0
    %v4617 = vadd.f32 0.0, %v4616
    %v4618 = vpop.f32.mrf.mxu0
    %4619 = vdwg.mxu0
    %4620 = vmatpush.bf16.msra.mxu0 %v4572
    %4621 = vmatpush.bf16.msra.mxu0 %v4568
    %4622 = vmatpush.bf16.msra.mxu0 %v4564
    %4623 = vmatpush.bf16.msra.mxu0 %v4560
    %4624 = vmatpush.bf16.msra.mxu0 %v4556
    %4625 = vmatpush.bf16.msra.mxu0 %v4552
    %4626 = vmatpush.bf16.msra.mxu0 %v4548
    %4627 = vmatpush.bf16.msra.mxu0 %v4544
    %4628 = vmatmul.bf16.gmra.mxu0 %v2920
    %v4629 = vpop.f32.mrf.mxu0
    %v4630 = vadd.f32 0.0, %v4629
    %v4631 = vpop.f32.mrf.mxu0
    %4632 = vdwg.mxu0
    %4633 = vmatpush.bf16.msra.mxu0 %v4573
    %4634 = vmatpush.bf16.msra.mxu0 %v4569
    %4635 = vmatpush.bf16.msra.mxu0 %v4565
    %4636 = vmatpush.bf16.msra.mxu0 %v4561
    %4637 = vmatpush.bf16.msra.mxu0 %v4557
    %4638 = vmatpush.bf16.msra.mxu0 %v4553
    %4639 = vmatpush.bf16.msra.mxu0 %v4549
    %4640 = vmatpush.bf16.msra.mxu0 %v4545
    %4641 = vmatmul.bf16.gmra.mxu0 %v2920
    %v4642 = vpop.f32.mrf.mxu0
    %v4643 = vadd.f32 0.0, %v4642
    %v4644 = vpop.f32.mrf.mxu0
    %4645 = vdwg.mxu0
    %4646 = vmatpush.bf16.msra.mxu0 %v4574
    %4647 = vmatpush.bf16.msra.mxu0 %v4570
    %4648 = vmatpush.bf16.msra.mxu0 %v4566
    %4649 = vmatpush.bf16.msra.mxu0 %v4562
    %4650 = vmatpush.bf16.msra.mxu0 %v4558
    %4651 = vmatpush.bf16.msra.mxu0 %v4554
    %4652 = vmatpush.bf16.msra.mxu0 %v4550
    %4653 = vmatpush.bf16.msra.mxu0 %v4546
    %4654 = vmatmul.bf16.gmra.mxu0 %v2920
    %v4655 = vpop.f32.mrf.mxu0
    %v4656 = vadd.f32 0.0, %v4655
    %v4657 = vpop.f32.mrf.mxu0
    %4658 = vdwg.mxu0
    %4659 = vst [vmem:[#allocation4 + $0xc0] sm:$0xff] %v4617
    %4660 = vst [vmem:[#allocation4 + $0xc8] sm:$0xff] %v4630
    %4661 = vst [vmem:[#allocation4 + $0xd0] sm:$0xff] %v4643
    %4662 = vst [vmem:[#allocation4 + $0xd8] sm:$0xff] %v4656
    %s4663 = scalar_lea.vmem [#allocation15], 1792
    %v4664 = vld [vmem:[%s4663] sm:$0xff]
    %v4665 = vld [vmem:[%s4663 + $0x8] sm:$0xff]
    %v4666 = vld [vmem:[%s4663 + $0x10] sm:$0xff]
    %v4667 = vld [vmem:[%s4663 + $0x18] sm:$0xff]
    %v4668 = vld [vmem:[%s4663 + $0x20] sm:$0xff]
    %v4669 = vld [vmem:[%s4663 + $0x28] sm:$0xff]
    %v4670 = vld [vmem:[%s4663 + $0x30] sm:$0xff]
    %v4671 = vld [vmem:[%s4663 + $0x38] sm:$0xff]
    %v4672 = vld [vmem:[%s4663 + $0x40] sm:$0xff]
    %v4673 = vld [vmem:[%s4663 + $0x48] sm:$0xff]
    %v4674 = vld [vmem:[%s4663 + $0x50] sm:$0xff]
    %v4675 = vld [vmem:[%s4663 + $0x58] sm:$0xff]
    %v4676 = vld [vmem:[%s4663 + $0x60] sm:$0xff]
    %v4677 = vld [vmem:[%s4663 + $0x68] sm:$0xff]
    %v4678 = vld [vmem:[%s4663 + $0x70] sm:$0xff]
    %v4679 = vld [vmem:[%s4663 + $0x78] sm:$0xff]
    %v4680 = vld [vmem:[%s4663 + $0x80] sm:$0xff]
    %v4681 = vld [vmem:[%s4663 + $0x88] sm:$0xff]
    %v4682 = vld [vmem:[%s4663 + $0x90] sm:$0xff]
    %v4683 = vld [vmem:[%s4663 + $0x98] sm:$0xff]
    %v4684 = vld [vmem:[%s4663 + $0xa0] sm:$0xff]
    %v4685 = vld [vmem:[%s4663 + $0xa8] sm:$0xff]
    %v4686 = vld [vmem:[%s4663 + $0xb0] sm:$0xff]
    %v4687 = vld [vmem:[%s4663 + $0xb8] sm:$0xff]
    %v4688 = vld [vmem:[%s4663 + $0xc0] sm:$0xff]
    %v4689 = vld [vmem:[%s4663 + $0xc8] sm:$0xff]
    %v4690 = vld [vmem:[%s4663 + $0xd0] sm:$0xff]
    %v4691 = vld [vmem:[%s4663 + $0xd8] sm:$0xff]
    %v4692 = vld [vmem:[%s4663 + $0xe0] sm:$0xff]
    %v4693 = vld [vmem:[%s4663 + $0xe8] sm:$0xff]
    %v4694 = vld [vmem:[%s4663 + $0xf0] sm:$0xff]
    %v4695 = vld [vmem:[%s4663 + $0xf8] sm:$0xff]
    %v4728 = vunpack.c.l.b16 %v4664
    %v4729 = vunpack.c.h.b16 %v4664
    %v4730 = vunpack.c.l.b16 %v4665
    %v4731 = vunpack.c.h.b16 %v4665
    %v4732 = vunpack.c.l.b16 %v4666
    %v4733 = vunpack.c.h.b16 %v4666
    %v4734 = vunpack.c.l.b16 %v4667
    %v4735 = vunpack.c.h.b16 %v4667
    %v4736 = vunpack.c.l.b16 %v4668
    %v4737 = vunpack.c.h.b16 %v4668
    %v4738 = vunpack.c.l.b16 %v4669
    %v4739 = vunpack.c.h.b16 %v4669
    %v4740 = vunpack.c.l.b16 %v4670
    %v4741 = vunpack.c.h.b16 %v4670
    %v4742 = vunpack.c.l.b16 %v4671
    %v4743 = vunpack.c.h.b16 %v4671
    %v4744 = vunpack.c.l.b16 %v4672
    %v4745 = vunpack.c.h.b16 %v4672
    %v4746 = vunpack.c.l.b16 %v4673
    %v4747 = vunpack.c.h.b16 %v4673
    %v4748 = vunpack.c.l.b16 %v4674
    %v4749 = vunpack.c.h.b16 %v4674
    %v4750 = vunpack.c.l.b16 %v4675
    %v4751 = vunpack.c.h.b16 %v4675
    %v4752 = vunpack.c.l.b16 %v4676
    %v4753 = vunpack.c.h.b16 %v4676
    %v4754 = vunpack.c.l.b16 %v4677
    %v4755 = vunpack.c.h.b16 %v4677
    %v4756 = vunpack.c.l.b16 %v4678
    %v4757 = vunpack.c.h.b16 %v4678
    %v4758 = vunpack.c.l.b16 %v4679
    %v4759 = vunpack.c.h.b16 %v4679
    %v4760 = vunpack.c.l.b16 %v4680
    %v4761 = vunpack.c.h.b16 %v4680
    %v4762 = vunpack.c.l.b16 %v4681
    %v4763 = vunpack.c.h.b16 %v4681
    %v4764 = vunpack.c.l.b16 %v4682
    %v4765 = vunpack.c.h.b16 %v4682
    %v4766 = vunpack.c.l.b16 %v4683
    %v4767 = vunpack.c.h.b16 %v4683
    %v4768 = vunpack.c.l.b16 %v4684
    %v4769 = vunpack.c.h.b16 %v4684
    %v4770 = vunpack.c.l.b16 %v4685
    %v4771 = vunpack.c.h.b16 %v4685
    %v4772 = vunpack.c.l.b16 %v4686
    %v4773 = vunpack.c.h.b16 %v4686
    %v4774 = vunpack.c.l.b16 %v4687
    %v4775 = vunpack.c.h.b16 %v4687
    %v4776 = vunpack.c.l.b16 %v4688
    %v4777 = vunpack.c.h.b16 %v4688
    %v4778 = vunpack.c.l.b16 %v4689
    %v4779 = vunpack.c.h.b16 %v4689
    %v4780 = vunpack.c.l.b16 %v4690
    %v4781 = vunpack.c.h.b16 %v4690
    %v4782 = vunpack.c.l.b16 %v4691
    %v4783 = vunpack.c.h.b16 %v4691
    %v4784 = vunpack.c.l.b16 %v4692
    %v4785 = vunpack.c.h.b16 %v4692
    %v4786 = vunpack.c.l.b16 %v4693
    %v4787 = vunpack.c.h.b16 %v4693
    %v4788 = vunpack.c.l.b16 %v4694
    %v4789 = vunpack.c.h.b16 %v4694
    %v4790 = vunpack.c.l.b16 %v4695
    %v4791 = vunpack.c.h.b16 %v4695
    %v4792 = vpack.c.b16 %v4732, %v4728
    %v4793 = vpack.c.b16 %v4733, %v4729
    %v4794 = vpack.c.b16 %v4734, %v4730
    %v4795 = vpack.c.b16 %v4735, %v4731
    %v4796 = vpack.c.b16 %v4740, %v4736
    %v4797 = vpack.c.b16 %v4741, %v4737
    %v4798 = vpack.c.b16 %v4742, %v4738
    %v4799 = vpack.c.b16 %v4743, %v4739
    %v4800 = vpack.c.b16 %v4748, %v4744
    %v4801 = vpack.c.b16 %v4749, %v4745
    %v4802 = vpack.c.b16 %v4750, %v4746
    %v4803 = vpack.c.b16 %v4751, %v4747
    %v4804 = vpack.c.b16 %v4756, %v4752
    %v4805 = vpack.c.b16 %v4757, %v4753
    %v4806 = vpack.c.b16 %v4758, %v4754
    %v4807 = vpack.c.b16 %v4759, %v4755
    %v4808 = vpack.c.b16 %v4764, %v4760
    %v4809 = vpack.c.b16 %v4765, %v4761
    %v4810 = vpack.c.b16 %v4766, %v4762
    %v4811 = vpack.c.b16 %v4767, %v4763
    %v4812 = vpack.c.b16 %v4772, %v4768
    %v4813 = vpack.c.b16 %v4773, %v4769
    %v4814 = vpack.c.b16 %v4774, %v4770
    %v4815 = vpack.c.b16 %v4775, %v4771
    %v4816 = vpack.c.b16 %v4780, %v4776
    %v4817 = vpack.c.b16 %v4781, %v4777
    %v4818 = vpack.c.b16 %v4782, %v4778
    %v4819 = vpack.c.b16 %v4783, %v4779
    %v4820 = vpack.c.b16 %v4788, %v4784
    %v4821 = vpack.c.b16 %v4789, %v4785
    %v4822 = vpack.c.b16 %v4790, %v4786
    %v4823 = vpack.c.b16 %v4791, %v4787
    %4856 = vmatpush.bf16.msra.mxu0 %v4820
    %4857 = vmatpush.bf16.msra.mxu0 %v4816
    %4858 = vmatpush.bf16.msra.mxu0 %v4812
    %4859 = vmatpush.bf16.msra.mxu0 %v4808
    %4860 = vmatpush.bf16.msra.mxu0 %v4804
    %4861 = vmatpush.bf16.msra.mxu0 %v4800
    %4862 = vmatpush.bf16.msra.mxu0 %v4796
    %4863 = vmatpush.bf16.msra.mxu0 %v4792
    %4864 = vmatmul.bf16.gmra.mxu0 %v2920
    %v4865 = vpop.f32.mrf.mxu0
    %v4866 = vadd.f32 0.0, %v4865
    %v4867 = vpop.f32.mrf.mxu0
    %4868 = vdwg.mxu0
    %4869 = vmatpush.bf16.msra.mxu0 %v4821
    %4870 = vmatpush.bf16.msra.mxu0 %v4817
    %4871 = vmatpush.bf16.msra.mxu0 %v4813
    %4872 = vmatpush.bf16.msra.mxu0 %v4809
    %4873 = vmatpush.bf16.msra.mxu0 %v4805
    %4874 = vmatpush.bf16.msra.mxu0 %v4801
    %4875 = vmatpush.bf16.msra.mxu0 %v4797
    %4876 = vmatpush.bf16.msra.mxu0 %v4793
    %4877 = vmatmul.bf16.gmra.mxu0 %v2920
    %v4878 = vpop.f32.mrf.mxu0
    %v4879 = vadd.f32 0.0, %v4878
    %v4880 = vpop.f32.mrf.mxu0
    %4881 = vdwg.mxu0
    %4882 = vmatpush.bf16.msra.mxu0 %v4822
    %4883 = vmatpush.bf16.msra.mxu0 %v4818
    %4884 = vmatpush.bf16.msra.mxu0 %v4814
    %4885 = vmatpush.bf16.msra.mxu0 %v4810
    %4886 = vmatpush.bf16.msra.mxu0 %v4806
    %4887 = vmatpush.bf16.msra.mxu0 %v4802
    %4888 = vmatpush.bf16.msra.mxu0 %v4798
    %4889 = vmatpush.bf16.msra.mxu0 %v4794
    %4890 = vmatmul.bf16.gmra.mxu0 %v2920
    %v4891 = vpop.f32.mrf.mxu0
    %v4892 = vadd.f32 0.0, %v4891
    %v4893 = vpop.f32.mrf.mxu0
    %4894 = vdwg.mxu0
    %4895 = vmatpush.bf16.msra.mxu0 %v4823
    %4896 = vmatpush.bf16.msra.mxu0 %v4819
    %4897 = vmatpush.bf16.msra.mxu0 %v4815
    %4898 = vmatpush.bf16.msra.mxu0 %v4811
    %4899 = vmatpush.bf16.msra.mxu0 %v4807
    %4900 = vmatpush.bf16.msra.mxu0 %v4803
    %4901 = vmatpush.bf16.msra.mxu0 %v4799
    %4902 = vmatpush.bf16.msra.mxu0 %v4795
    %4903 = vmatmul.bf16.gmra.mxu0 %v2920
    %v4904 = vpop.f32.mrf.mxu0
    %v4905 = vadd.f32 0.0, %v4904
    %v4906 = vpop.f32.mrf.mxu0
    %4907 = vdwg.mxu0
    %4908 = vst [vmem:[#allocation4 + $0xe0] sm:$0xff] %v4866
    %4909 = vst [vmem:[#allocation4 + $0xe8] sm:$0xff] %v4879
    %4910 = vst [vmem:[#allocation4 + $0xf0] sm:$0xff] %v4892
    %4911 = vst [vmem:[#allocation4 + $0xf8] sm:$0xff] %v4905
    %s4912 = scalar_lea.vmem [#allocation15], 2048
    %v4913 = vld [vmem:[%s4912] sm:$0xff]
    %v4914 = vld [vmem:[%s4912 + $0x8] sm:$0xff]
    %v4915 = vld [vmem:[%s4912 + $0x10] sm:$0xff]
    %v4916 = vld [vmem:[%s4912 + $0x18] sm:$0xff]
    %v4917 = vld [vmem:[%s4912 + $0x20] sm:$0xff]
    %v4918 = vld [vmem:[%s4912 + $0x28] sm:$0xff]
    %v4919 = vld [vmem:[%s4912 + $0x30] sm:$0xff]
    %v4920 = vld [vmem:[%s4912 + $0x38] sm:$0xff]
    %v4921 = vld [vmem:[%s4912 + $0x40] sm:$0xff]
    %v4922 = vld [vmem:[%s4912 + $0x48] sm:$0xff]
    %v4923 = vld [vmem:[%s4912 + $0x50] sm:$0xff]
    %v4924 = vld [vmem:[%s4912 + $0x58] sm:$0xff]
    %v4925 = vld [vmem:[%s4912 + $0x60] sm:$0xff]
    %v4926 = vld [vmem:[%s4912 + $0x68] sm:$0xff]
    %v4927 = vld [vmem:[%s4912 + $0x70] sm:$0xff]
    %v4928 = vld [vmem:[%s4912 + $0x78] sm:$0xff]
    %v4929 = vld [vmem:[%s4912 + $0x80] sm:$0xff]
    %v4930 = vld [vmem:[%s4912 + $0x88] sm:$0xff]
    %v4931 = vld [vmem:[%s4912 + $0x90] sm:$0xff]
    %v4932 = vld [vmem:[%s4912 + $0x98] sm:$0xff]
    %v4933 = vld [vmem:[%s4912 + $0xa0] sm:$0xff]
    %v4934 = vld [vmem:[%s4912 + $0xa8] sm:$0xff]
    %v4935 = vld [vmem:[%s4912 + $0xb0] sm:$0xff]
    %v4936 = vld [vmem:[%s4912 + $0xb8] sm:$0xff]
    %v4937 = vld [vmem:[%s4912 + $0xc0] sm:$0xff]
    %v4938 = vld [vmem:[%s4912 + $0xc8] sm:$0xff]
    %v4939 = vld [vmem:[%s4912 + $0xd0] sm:$0xff]
    %v4940 = vld [vmem:[%s4912 + $0xd8] sm:$0xff]
    %v4941 = vld [vmem:[%s4912 + $0xe0] sm:$0xff]
    %v4942 = vld [vmem:[%s4912 + $0xe8] sm:$0xff]
    %v4943 = vld [vmem:[%s4912 + $0xf0] sm:$0xff]
    %v4944 = vld [vmem:[%s4912 + $0xf8] sm:$0xff]
    %v4977 = vunpack.c.l.b16 %v4913
    %v4978 = vunpack.c.h.b16 %v4913
    %v4979 = vunpack.c.l.b16 %v4914
    %v4980 = vunpack.c.h.b16 %v4914
    %v4981 = vunpack.c.l.b16 %v4915
    %v4982 = vunpack.c.h.b16 %v4915
    %v4983 = vunpack.c.l.b16 %v4916
    %v4984 = vunpack.c.h.b16 %v4916
    %v4985 = vunpack.c.l.b16 %v4917
    %v4986 = vunpack.c.h.b16 %v4917
    %v4987 = vunpack.c.l.b16 %v4918
    %v4988 = vunpack.c.h.b16 %v4918
    %v4989 = vunpack.c.l.b16 %v4919
    %v4990 = vunpack.c.h.b16 %v4919
    %v4991 = vunpack.c.l.b16 %v4920
    %v4992 = vunpack.c.h.b16 %v4920
    %v4993 = vunpack.c.l.b16 %v4921
    %v4994 = vunpack.c.h.b16 %v4921
    %v4995 = vunpack.c.l.b16 %v4922
    %v4996 = vunpack.c.h.b16 %v4922
    %v4997 = vunpack.c.l.b16 %v4923
    %v4998 = vunpack.c.h.b16 %v4923
    %v4999 = vunpack.c.l.b16 %v4924
    %v5000 = vunpack.c.h.b16 %v4924
    %v5001 = vunpack.c.l.b16 %v4925
    %v5002 = vunpack.c.h.b16 %v4925
    %v5003 = vunpack.c.l.b16 %v4926
    %v5004 = vunpack.c.h.b16 %v4926
    %v5005 = vunpack.c.l.b16 %v4927
    %v5006 = vunpack.c.h.b16 %v4927
    %v5007 = vunpack.c.l.b16 %v4928
    %v5008 = vunpack.c.h.b16 %v4928
    %v5009 = vunpack.c.l.b16 %v4929
    %v5010 = vunpack.c.h.b16 %v4929
    %v5011 = vunpack.c.l.b16 %v4930
    %v5012 = vunpack.c.h.b16 %v4930
    %v5013 = vunpack.c.l.b16 %v4931
    %v5014 = vunpack.c.h.b16 %v4931
    %v5015 = vunpack.c.l.b16 %v4932
    %v5016 = vunpack.c.h.b16 %v4932
    %v5017 = vunpack.c.l.b16 %v4933
    %v5018 = vunpack.c.h.b16 %v4933
    %v5019 = vunpack.c.l.b16 %v4934
    %v5020 = vunpack.c.h.b16 %v4934
    %v5021 = vunpack.c.l.b16 %v4935
    %v5022 = vunpack.c.h.b16 %v4935
    %v5023 = vunpack.c.l.b16 %v4936
    %v5024 = vunpack.c.h.b16 %v4936
    %v5025 = vunpack.c.l.b16 %v4937
    %v5026 = vunpack.c.h.b16 %v4937
    %v5027 = vunpack.c.l.b16 %v4938
    %v5028 = vunpack.c.h.b16 %v4938
    %v5029 = vunpack.c.l.b16 %v4939
    %v5030 = vunpack.c.h.b16 %v4939
    %v5031 = vunpack.c.l.b16 %v4940
    %v5032 = vunpack.c.h.b16 %v4940
    %v5033 = vunpack.c.l.b16 %v4941
    %v5034 = vunpack.c.h.b16 %v4941
    %v5035 = vunpack.c.l.b16 %v4942
    %v5036 = vunpack.c.h.b16 %v4942
    %v5037 = vunpack.c.l.b16 %v4943
    %v5038 = vunpack.c.h.b16 %v4943
    %v5039 = vunpack.c.l.b16 %v4944
    %v5040 = vunpack.c.h.b16 %v4944
    %v5041 = vpack.c.b16 %v4981, %v4977
    %v5042 = vpack.c.b16 %v4982, %v4978
    %v5043 = vpack.c.b16 %v4983, %v4979
    %v5044 = vpack.c.b16 %v4984, %v4980
    %v5045 = vpack.c.b16 %v4989, %v4985
    %v5046 = vpack.c.b16 %v4990, %v4986
    %v5047 = vpack.c.b16 %v4991, %v4987
    %v5048 = vpack.c.b16 %v4992, %v4988
    %v5049 = vpack.c.b16 %v4997, %v4993
    %v5050 = vpack.c.b16 %v4998, %v4994
    %v5051 = vpack.c.b16 %v4999, %v4995
    %v5052 = vpack.c.b16 %v5000, %v4996
    %v5053 = vpack.c.b16 %v5005, %v5001
    %v5054 = vpack.c.b16 %v5006, %v5002
    %v5055 = vpack.c.b16 %v5007, %v5003
    %v5056 = vpack.c.b16 %v5008, %v5004
    %v5057 = vpack.c.b16 %v5013, %v5009
    %v5058 = vpack.c.b16 %v5014, %v5010
    %v5059 = vpack.c.b16 %v5015, %v5011
    %v5060 = vpack.c.b16 %v5016, %v5012
    %v5061 = vpack.c.b16 %v5021, %v5017
    %v5062 = vpack.c.b16 %v5022, %v5018
    %v5063 = vpack.c.b16 %v5023, %v5019
    %v5064 = vpack.c.b16 %v5024, %v5020
    %v5065 = vpack.c.b16 %v5029, %v5025
    %v5066 = vpack.c.b16 %v5030, %v5026
    %v5067 = vpack.c.b16 %v5031, %v5027
    %v5068 = vpack.c.b16 %v5032, %v5028
    %v5069 = vpack.c.b16 %v5037, %v5033
    %v5070 = vpack.c.b16 %v5038, %v5034
    %v5071 = vpack.c.b16 %v5039, %v5035
    %v5072 = vpack.c.b16 %v5040, %v5036
    %5105 = vmatpush.bf16.msra.mxu0 %v5069
    %5106 = vmatpush.bf16.msra.mxu0 %v5065
    %5107 = vmatpush.bf16.msra.mxu0 %v5061
    %5108 = vmatpush.bf16.msra.mxu0 %v5057
    %5109 = vmatpush.bf16.msra.mxu0 %v5053
    %5110 = vmatpush.bf16.msra.mxu0 %v5049
    %5111 = vmatpush.bf16.msra.mxu0 %v5045
    %5112 = vmatpush.bf16.msra.mxu0 %v5041
    %5113 = vmatmul.bf16.gmra.mxu0 %v2920
    %v5114 = vpop.f32.mrf.mxu0
    %v5115 = vadd.f32 0.0, %v5114
    %v5116 = vpop.f32.mrf.mxu0
    %5117 = vdwg.mxu0
    %5118 = vmatpush.bf16.msra.mxu0 %v5070
    %5119 = vmatpush.bf16.msra.mxu0 %v5066
    %5120 = vmatpush.bf16.msra.mxu0 %v5062
    %5121 = vmatpush.bf16.msra.mxu0 %v5058
    %5122 = vmatpush.bf16.msra.mxu0 %v5054
    %5123 = vmatpush.bf16.msra.mxu0 %v5050
    %5124 = vmatpush.bf16.msra.mxu0 %v5046
    %5125 = vmatpush.bf16.msra.mxu0 %v5042
    %5126 = vmatmul.bf16.gmra.mxu0 %v2920
    %v5127 = vpop.f32.mrf.mxu0
    %v5128 = vadd.f32 0.0, %v5127
    %v5129 = vpop.f32.mrf.mxu0
    %5130 = vdwg.mxu0
    %5131 = vmatpush.bf16.msra.mxu0 %v5071
    %5132 = vmatpush.bf16.msra.mxu0 %v5067
    %5133 = vmatpush.bf16.msra.mxu0 %v5063
    %5134 = vmatpush.bf16.msra.mxu0 %v5059
    %5135 = vmatpush.bf16.msra.mxu0 %v5055
    %5136 = vmatpush.bf16.msra.mxu0 %v5051
    %5137 = vmatpush.bf16.msra.mxu0 %v5047
    %5138 = vmatpush.bf16.msra.mxu0 %v5043
    %5139 = vmatmul.bf16.gmra.mxu0 %v2920
    %v5140 = vpop.f32.mrf.mxu0
    %v5141 = vadd.f32 0.0, %v5140
    %v5142 = vpop.f32.mrf.mxu0
    %5143 = vdwg.mxu0
    %5144 = vmatpush.bf16.msra.mxu0 %v5072
    %5145 = vmatpush.bf16.msra.mxu0 %v5068
    %5146 = vmatpush.bf16.msra.mxu0 %v5064
    %5147 = vmatpush.bf16.msra.mxu0 %v5060
    %5148 = vmatpush.bf16.msra.mxu0 %v5056
    %5149 = vmatpush.bf16.msra.mxu0 %v5052
    %5150 = vmatpush.bf16.msra.mxu0 %v5048
    %5151 = vmatpush.bf16.msra.mxu0 %v5044
    %5152 = vmatmul.bf16.gmra.mxu0 %v2920
    %v5153 = vpop.f32.mrf.mxu0
    %v5154 = vadd.f32 0.0, %v5153
    %v5155 = vpop.f32.mrf.mxu0
    %5156 = vdwg.mxu0
    %5157 = vst [vmem:[#allocation4 + $0x100] sm:$0xff] %v5115
    %5158 = vst [vmem:[#allocation4 + $0x108] sm:$0xff] %v5128
    %5159 = vst [vmem:[#allocation4 + $0x110] sm:$0xff] %v5141
    %5160 = vst [vmem:[#allocation4 + $0x118] sm:$0xff] %v5154
    %v5161 = vld [vmem:[#allocation4] sm:$0xff]
    %v5162 = vld [vmem:[#allocation4 + $0x8] sm:$0xff]
    %v5163 = vld [vmem:[#allocation4 + $0x10] sm:$0xff]
    %v5164 = vld [vmem:[#allocation4 + $0x18] sm:$0xff]
    %v5165 = vld [vmem:[#allocation4 + $0x20] sm:$0xff]
    %v5166 = vld [vmem:[#allocation4 + $0x28] sm:$0xff]
    %v5167 = vld [vmem:[#allocation4 + $0x30] sm:$0xff]
    %v5168 = vld [vmem:[#allocation4 + $0x38] sm:$0xff]
    %v5169 = vld [vmem:[#allocation4 + $0x40] sm:$0xff]
    %v5170 = vld [vmem:[#allocation4 + $0x48] sm:$0xff]
    %v5171 = vld [vmem:[#allocation4 + $0x50] sm:$0xff]
    %v5172 = vld [vmem:[#allocation4 + $0x58] sm:$0xff]
    %v5173 = vld [vmem:[#allocation4 + $0x60] sm:$0xff]
    %v5174 = vld [vmem:[#allocation4 + $0x68] sm:$0xff]
    %v5175 = vld [vmem:[#allocation4 + $0x70] sm:$0xff]
    %v5176 = vld [vmem:[#allocation4 + $0x78] sm:$0xff]
    %v5177 = vld [vmem:[#allocation4 + $0x80] sm:$0xff]
    %v5178 = vld [vmem:[#allocation4 + $0x88] sm:$0xff]
    %v5179 = vld [vmem:[#allocation4 + $0x90] sm:$0xff]
    %v5180 = vld [vmem:[#allocation4 + $0x98] sm:$0xff]
    %v5181 = vld [vmem:[#allocation4 + $0xa0] sm:$0xff]
    %v5182 = vld [vmem:[#allocation4 + $0xa8] sm:$0xff]
    %v5183 = vld [vmem:[#allocation4 + $0xb0] sm:$0xff]
    %v5184 = vld [vmem:[#allocation4 + $0xb8] sm:$0xff]
    %v5185 = vld [vmem:[#allocation4 + $0xc0] sm:$0xff]
    %v5186 = vld [vmem:[#allocation4 + $0xc8] sm:$0xff]
    %v5187 = vld [vmem:[#allocation4 + $0xd0] sm:$0xff]
    %v5188 = vld [vmem:[#allocation4 + $0xd8] sm:$0xff]
    %v5189 = vld [vmem:[#allocation4 + $0xe0] sm:$0xff]
    %v5190 = vld [vmem:[#allocation4 + $0xe8] sm:$0xff]
    %v5191 = vld [vmem:[#allocation4 + $0xf0] sm:$0xff]
    %v5192 = vld [vmem:[#allocation4 + $0xf8] sm:$0xff]
    %v5193 = vld [vmem:[#allocation4 + $0x100] sm:$0xff]
    %v5194 = vld [vmem:[#allocation4 + $0x108] sm:$0xff]
    %v5195 = vld [vmem:[#allocation4 + $0x110] sm:$0xff]
    %v5196 = vld [vmem:[#allocation4 + $0x118] sm:$0xff]
    %v5197 = vld [vmem:[#allocation18] sm:$0x3]
    %vm5198 = vcmask 588800
    %v5200 = vsel %vm5198, %v5197, 0
    %5202 = vmatpush.msra.mxu0 0.0
    %5203 = vmatpush.msra.mxu0 0.0
    %5204 = vmatpush.msra.mxu0 0.0
    %5205 = vmatpush.msra.mxu0 0.0
    %5206 = vmatpush.msra.mxu0 0.0
    %5207 = vmatpush.msra.mxu0 0.0
    %5208 = vmatpush.msra.mxu0 0.0
    %5209 = vmatpush.msra.mxu0 %v5193
    %5210 = vmatpush.msra.mxu0 %v5189
    %5211 = vmatpush.msra.mxu0 %v5185
    %5212 = vmatpush.msra.mxu0 %v5181
    %5213 = vmatpush.msra.mxu0 %v5177
    %5214 = vmatpush.msra.mxu0 %v5173
    %5215 = vmatpush.msra.mxu0 %v5169
    %5216 = vmatpush.msra.mxu0 %v5165
    %5217 = vmatpush.msra.mxu0 %v5161
    %5218 = vmatmul.f32.gmra.mxu0 %v5200
    %v5219 = vpop.f32.mrf.mxu0
    %v5220 = vadd.f32 0.0, %v5219
    %5221 = vdwg.mxu0
    %5222 = vmatpush.msra.mxu0 0.0
    %5223 = vmatpush.msra.mxu0 0.0
    %5224 = vmatpush.msra.mxu0 0.0
    %5225 = vmatpush.msra.mxu0 0.0
    %5226 = vmatpush.msra.mxu0 0.0
    %5227 = vmatpush.msra.mxu0 0.0
    %5228 = vmatpush.msra.mxu0 0.0
    %5229 = vmatpush.msra.mxu0 %v5194
    %5230 = vmatpush.msra.mxu0 %v5190
    %5231 = vmatpush.msra.mxu0 %v5186
    %5232 = vmatpush.msra.mxu0 %v5182
    %5233 = vmatpush.msra.mxu0 %v5178
    %5234 = vmatpush.msra.mxu0 %v5174
    %5235 = vmatpush.msra.mxu0 %v5170
    %5236 = vmatpush.msra.mxu0 %v5166
    %5237 = vmatpush.msra.mxu0 %v5162
    %5238 = vmatmul.f32.gmra.mxu0 %v5200
    %v5239 = vpop.f32.mrf.mxu0
    %v5240 = vadd.f32 0.0, %v5239
    %5241 = vdwg.mxu0
    %5242 = vmatpush.msra.mxu0 0.0
    %5243 = vmatpush.msra.mxu0 0.0
    %5244 = vmatpush.msra.mxu0 0.0
    %5245 = vmatpush.msra.mxu0 0.0
    %5246 = vmatpush.msra.mxu0 0.0
    %5247 = vmatpush.msra.mxu0 0.0
    %5248 = vmatpush.msra.mxu0 0.0
    %5249 = vmatpush.msra.mxu0 %v5195
    %5250 = vmatpush.msra.mxu0 %v5191
    %5251 = vmatpush.msra.mxu0 %v5187
    %5252 = vmatpush.msra.mxu0 %v5183
    %5253 = vmatpush.msra.mxu0 %v5179
    %5254 = vmatpush.msra.mxu0 %v5175
    %5255 = vmatpush.msra.mxu0 %v5171
    %5256 = vmatpush.msra.mxu0 %v5167
    %5257 = vmatpush.msra.mxu0 %v5163
    %5258 = vmatmul.f32.gmra.mxu0 %v5200
    %v5259 = vpop.f32.mrf.mxu0
    %v5260 = vadd.f32 0.0, %v5259
    %5261 = vdwg.mxu0
    %5262 = vmatpush.msra.mxu0 0.0
    %5263 = vmatpush.msra.mxu0 0.0
    %5264 = vmatpush.msra.mxu0 0.0
    %5265 = vmatpush.msra.mxu0 0.0
    %5266 = vmatpush.msra.mxu0 0.0
    %5267 = vmatpush.msra.mxu0 0.0
    %5268 = vmatpush.msra.mxu0 0.0
    %5269 = vmatpush.msra.mxu0 %v5196
    %5270 = vmatpush.msra.mxu0 %v5192
    %5271 = vmatpush.msra.mxu0 %v5188
    %5272 = vmatpush.msra.mxu0 %v5184
    %5273 = vmatpush.msra.mxu0 %v5180
    %5274 = vmatpush.msra.mxu0 %v5176
    %5275 = vmatpush.msra.mxu0 %v5172
    %5276 = vmatpush.msra.mxu0 %v5168
    %5277 = vmatpush.msra.mxu0 %v5164
    %5278 = vmatmul.f32.gmra.mxu0 %v5200
    %v5279 = vpop.f32.mrf.mxu0
    %v5280 = vadd.f32 0.0, %v5279
    %5281 = vdwg.mxu0
    %s5282 = scalar_lea.vmem [#allocation18], 2
    %v5283 = vld [vmem:[%s5282] sm:$0x3]
    %v5285 = vsel %vm5198, %v5283, 0
    %5287 = vmatpush.msra.mxu0 0.0
    %5288 = vmatpush.msra.mxu0 0.0
    %5289 = vmatpush.msra.mxu0 0.0
    %5290 = vmatpush.msra.mxu0 0.0
    %5291 = vmatpush.msra.mxu0 0.0
    %5292 = vmatpush.msra.mxu0 0.0
    %5293 = vmatpush.msra.mxu0 0.0
    %5294 = vmatpush.msra.mxu0 %v5193
    %5295 = vmatpush.msra.mxu0 %v5189
    %5296 = vmatpush.msra.mxu0 %v5185
    %5297 = vmatpush.msra.mxu0 %v5181
    %5298 = vmatpush.msra.mxu0 %v5177
    %5299 = vmatpush.msra.mxu0 %v5173
    %5300 = vmatpush.msra.mxu0 %v5169
    %5301 = vmatpush.msra.mxu0 %v5165
    %5302 = vmatpush.msra.mxu0 %v5161
    %5303 = vmatmul.f32.gmra.mxu0 %v5285
    %v5304 = vpop.f32.mrf.mxu0
    %v5305 = vadd.f32 0.0, %v5304
    %5306 = vdwg.mxu0
    %5307 = vmatpush.msra.mxu0 0.0
    %5308 = vmatpush.msra.mxu0 0.0
    %5309 = vmatpush.msra.mxu0 0.0
    %5310 = vmatpush.msra.mxu0 0.0
    %5311 = vmatpush.msra.mxu0 0.0
    %5312 = vmatpush.msra.mxu0 0.0
    %5313 = vmatpush.msra.mxu0 0.0
    %5314 = vmatpush.msra.mxu0 %v5194
    %5315 = vmatpush.msra.mxu0 %v5190
    %5316 = vmatpush.msra.mxu0 %v5186
    %5317 = vmatpush.msra.mxu0 %v5182
    %5318 = vmatpush.msra.mxu0 %v5178
    %5319 = vmatpush.msra.mxu0 %v5174
    %5320 = vmatpush.msra.mxu0 %v5170
    %5321 = vmatpush.msra.mxu0 %v5166
    %5322 = vmatpush.msra.mxu0 %v5162
    %5323 = vmatmul.f32.gmra.mxu0 %v5285
    %v5324 = vpop.f32.mrf.mxu0
    %v5325 = vadd.f32 0.0, %v5324
    %5326 = vdwg.mxu0
    %5327 = vmatpush.msra.mxu0 0.0
    %5328 = vmatpush.msra.mxu0 0.0
    %5329 = vmatpush.msra.mxu0 0.0
    %5330 = vmatpush.msra.mxu0 0.0
    %5331 = vmatpush.msra.mxu0 0.0
    %5332 = vmatpush.msra.mxu0 0.0
    %5333 = vmatpush.msra.mxu0 0.0
    %5334 = vmatpush.msra.mxu0 %v5195
    %5335 = vmatpush.msra.mxu0 %v5191
    %5336 = vmatpush.msra.mxu0 %v5187
    %5337 = vmatpush.msra.mxu0 %v5183
    %5338 = vmatpush.msra.mxu0 %v5179
    %5339 = vmatpush.msra.mxu0 %v5175
    %5340 = vmatpush.msra.mxu0 %v5171
    %5341 = vmatpush.msra.mxu0 %v5167
    %5342 = vmatpush.msra.mxu0 %v5163
    %5343 = vmatmul.f32.gmra.mxu0 %v5285
    %v5344 = vpop.f32.mrf.mxu0
    %v5345 = vadd.f32 0.0, %v5344
    %5346 = vdwg.mxu0
    %5347 = vmatpush.msra.mxu0 0.0
    %5348 = vmatpush.msra.mxu0 0.0
    %5349 = vmatpush.msra.mxu0 0.0
    %5350 = vmatpush.msra.mxu0 0.0
    %5351 = vmatpush.msra.mxu0 0.0
    %5352 = vmatpush.msra.mxu0 0.0
    %5353 = vmatpush.msra.mxu0 0.0
    %5354 = vmatpush.msra.mxu0 %v5196
    %5355 = vmatpush.msra.mxu0 %v5192
    %5356 = vmatpush.msra.mxu0 %v5188
    %5357 = vmatpush.msra.mxu0 %v5184
    %5358 = vmatpush.msra.mxu0 %v5180
    %5359 = vmatpush.msra.mxu0 %v5176
    %5360 = vmatpush.msra.mxu0 %v5172
    %5361 = vmatpush.msra.mxu0 %v5168
    %5362 = vmatpush.msra.mxu0 %v5164
    %5363 = vmatmul.f32.gmra.mxu0 %v5285
    %v5364 = vpop.f32.mrf.mxu0
    %v5365 = vadd.f32 0.0, %v5364
    %5366 = vdwg.mxu0
    %v5367 = vmax.f32 %v5220, %v5305
    %v5368 = vmax.f32 %v5240, %v5325
    %v5369 = vmax.f32 %v5260, %v5345
    %v5370 = vmax.f32 %v5280, %v5365
    %s5371 = scalar_lea.vmem [#allocation18], 4
    %v5372 = vld [vmem:[%s5371] sm:$0x3]
    %v5374 = vsel %vm5198, %v5372, 0
    %5376 = vmatpush.msra.mxu0 0.0
    %5377 = vmatpush.msra.mxu0 0.0
    %5378 = vmatpush.msra.mxu0 0.0
    %5379 = vmatpush.msra.mxu0 0.0
    %5380 = vmatpush.msra.mxu0 0.0
    %5381 = vmatpush.msra.mxu0 0.0
    %5382 = vmatpush.msra.mxu0 0.0
    %5383 = vmatpush.msra.mxu0 %v5193
    %5384 = vmatpush.msra.mxu0 %v5189
    %5385 = vmatpush.msra.mxu0 %v5185
    %5386 = vmatpush.msra.mxu0 %v5181
    %5387 = vmatpush.msra.mxu0 %v5177
    %5388 = vmatpush.msra.mxu0 %v5173
    %5389 = vmatpush.msra.mxu0 %v5169
    %5390 = vmatpush.msra.mxu0 %v5165
    %5391 = vmatpush.msra.mxu0 %v5161
    %5392 = vmatmul.f32.gmra.mxu0 %v5374
    %v5393 = vpop.f32.mrf.mxu0
    %v5394 = vadd.f32 0.0, %v5393
    %5395 = vdwg.mxu0
    %5396 = vmatpush.msra.mxu0 0.0
    %5397 = vmatpush.msra.mxu0 0.0
    %5398 = vmatpush.msra.mxu0 0.0
    %5399 = vmatpush.msra.mxu0 0.0
    %5400 = vmatpush.msra.mxu0 0.0
    %5401 = vmatpush.msra.mxu0 0.0
    %5402 = vmatpush.msra.mxu0 0.0
    %5403 = vmatpush.msra.mxu0 %v5194
    %5404 = vmatpush.msra.mxu0 %v5190
    %5405 = vmatpush.msra.mxu0 %v5186
    %5406 = vmatpush.msra.mxu0 %v5182
    %5407 = vmatpush.msra.mxu0 %v5178
    %5408 = vmatpush.msra.mxu0 %v5174
    %5409 = vmatpush.msra.mxu0 %v5170
    %5410 = vmatpush.msra.mxu0 %v5166
    %5411 = vmatpush.msra.mxu0 %v5162
    %5412 = vmatmul.f32.gmra.mxu0 %v5374
    %v5413 = vpop.f32.mrf.mxu0
    %v5414 = vadd.f32 0.0, %v5413
    %5415 = vdwg.mxu0
    %5416 = vmatpush.msra.mxu0 0.0
    %5417 = vmatpush.msra.mxu0 0.0
    %5418 = vmatpush.msra.mxu0 0.0
    %5419 = vmatpush.msra.mxu0 0.0
    %5420 = vmatpush.msra.mxu0 0.0
    %5421 = vmatpush.msra.mxu0 0.0
    %5422 = vmatpush.msra.mxu0 0.0
    %5423 = vmatpush.msra.mxu0 %v5195
    %5424 = vmatpush.msra.mxu0 %v5191
    %5425 = vmatpush.msra.mxu0 %v5187
    %5426 = vmatpush.msra.mxu0 %v5183
    %5427 = vmatpush.msra.mxu0 %v5179
    %5428 = vmatpush.msra.mxu0 %v5175
    %5429 = vmatpush.msra.mxu0 %v5171
    %5430 = vmatpush.msra.mxu0 %v5167
    %5431 = vmatpush.msra.mxu0 %v5163
    %5432 = vmatmul.f32.gmra.mxu0 %v5374
    %v5433 = vpop.f32.mrf.mxu0
    %v5434 = vadd.f32 0.0, %v5433
    %5435 = vdwg.mxu0
    %5436 = vmatpush.msra.mxu0 0.0
    %5437 = vmatpush.msra.mxu0 0.0
    %5438 = vmatpush.msra.mxu0 0.0
    %5439 = vmatpush.msra.mxu0 0.0
    %5440 = vmatpush.msra.mxu0 0.0
    %5441 = vmatpush.msra.mxu0 0.0
    %5442 = vmatpush.msra.mxu0 0.0
    %5443 = vmatpush.msra.mxu0 %v5196
    %5444 = vmatpush.msra.mxu0 %v5192
    %5445 = vmatpush.msra.mxu0 %v5188
    %5446 = vmatpush.msra.mxu0 %v5184
    %5447 = vmatpush.msra.mxu0 %v5180
    %5448 = vmatpush.msra.mxu0 %v5176
    %5449 = vmatpush.msra.mxu0 %v5172
    %5450 = vmatpush.msra.mxu0 %v5168
    %5451 = vmatpush.msra.mxu0 %v5164
    %5452 = vmatmul.f32.gmra.mxu0 %v5374
    %v5453 = vpop.f32.mrf.mxu0
    %v5454 = vadd.f32 0.0, %v5453
    %5455 = vdwg.mxu0
    %v5456 = vmax.f32 %v5367, %v5394
    %v5457 = vmax.f32 %v5368, %v5414
    %v5458 = vmax.f32 %v5369, %v5434
    %v5459 = vmax.f32 %v5370, %v5454
    %s5460 = scalar_lea.vmem [#allocation18], 6
    %v5461 = vld [vmem:[%s5460] sm:$0x3]
    %v5463 = vsel %vm5198, %v5461, 0
    %5465 = vmatpush.msra.mxu0 0.0
    %5466 = vmatpush.msra.mxu0 0.0
    %5467 = vmatpush.msra.mxu0 0.0
    %5468 = vmatpush.msra.mxu0 0.0
    %5469 = vmatpush.msra.mxu0 0.0
    %5470 = vmatpush.msra.mxu0 0.0
    %5471 = vmatpush.msra.mxu0 0.0
    %5472 = vmatpush.msra.mxu0 %v5193
    %5473 = vmatpush.msra.mxu0 %v5189
    %5474 = vmatpush.msra.mxu0 %v5185
    %5475 = vmatpush.msra.mxu0 %v5181
    %5476 = vmatpush.msra.mxu0 %v5177
    %5477 = vmatpush.msra.mxu0 %v5173
    %5478 = vmatpush.msra.mxu0 %v5169
    %5479 = vmatpush.msra.mxu0 %v5165
    %5480 = vmatpush.msra.mxu0 %v5161
    %5481 = vmatmul.f32.gmra.mxu0 %v5463
    %v5482 = vpop.f32.mrf.mxu0
    %v5483 = vadd.f32 0.0, %v5482
    %5484 = vdwg.mxu0
    %5485 = vmatpush.msra.mxu0 0.0
    %5486 = vmatpush.msra.mxu0 0.0
    %5487 = vmatpush.msra.mxu0 0.0
    %5488 = vmatpush.msra.mxu0 0.0
    %5489 = vmatpush.msra.mxu0 0.0
    %5490 = vmatpush.msra.mxu0 0.0
    %5491 = vmatpush.msra.mxu0 0.0
    %5492 = vmatpush.msra.mxu0 %v5194
    %5493 = vmatpush.msra.mxu0 %v5190
    %5494 = vmatpush.msra.mxu0 %v5186
    %5495 = vmatpush.msra.mxu0 %v5182
    %5496 = vmatpush.msra.mxu0 %v5178
    %5497 = vmatpush.msra.mxu0 %v5174
    %5498 = vmatpush.msra.mxu0 %v5170
    %5499 = vmatpush.msra.mxu0 %v5166
    %5500 = vmatpush.msra.mxu0 %v5162
    %5501 = vmatmul.f32.gmra.mxu0 %v5463
    %v5502 = vpop.f32.mrf.mxu0
    %v5503 = vadd.f32 0.0, %v5502
    %5504 = vdwg.mxu0
    %5505 = vmatpush.msra.mxu0 0.0
    %5506 = vmatpush.msra.mxu0 0.0
    %5507 = vmatpush.msra.mxu0 0.0
    %5508 = vmatpush.msra.mxu0 0.0
    %5509 = vmatpush.msra.mxu0 0.0
    %5510 = vmatpush.msra.mxu0 0.0
    %5511 = vmatpush.msra.mxu0 0.0
    %5512 = vmatpush.msra.mxu0 %v5195
    %5513 = vmatpush.msra.mxu0 %v5191
    %5514 = vmatpush.msra.mxu0 %v5187
    %5515 = vmatpush.msra.mxu0 %v5183
    %5516 = vmatpush.msra.mxu0 %v5179
    %5517 = vmatpush.msra.mxu0 %v5175
    %5518 = vmatpush.msra.mxu0 %v5171
    %5519 = vmatpush.msra.mxu0 %v5167
    %5520 = vmatpush.msra.mxu0 %v5163
    %5521 = vmatmul.f32.gmra.mxu0 %v5463
    %v5522 = vpop.f32.mrf.mxu0
    %v5523 = vadd.f32 0.0, %v5522
    %5524 = vdwg.mxu0
    %5525 = vmatpush.msra.mxu0 0.0
    %5526 = vmatpush.msra.mxu0 0.0
    %5527 = vmatpush.msra.mxu0 0.0
    %5528 = vmatpush.msra.mxu0 0.0
    %5529 = vmatpush.msra.mxu0 0.0
    %5530 = vmatpush.msra.mxu0 0.0
    %5531 = vmatpush.msra.mxu0 0.0
    %5532 = vmatpush.msra.mxu0 %v5196
    %5533 = vmatpush.msra.mxu0 %v5192
    %5534 = vmatpush.msra.mxu0 %v5188
    %5535 = vmatpush.msra.mxu0 %v5184
    %5536 = vmatpush.msra.mxu0 %v5180
    %5537 = vmatpush.msra.mxu0 %v5176
    %5538 = vmatpush.msra.mxu0 %v5172
    %5539 = vmatpush.msra.mxu0 %v5168
    %5540 = vmatpush.msra.mxu0 %v5164
    %5541 = vmatmul.f32.gmra.mxu0 %v5463
    %v5542 = vpop.f32.mrf.mxu0
    %v5543 = vadd.f32 0.0, %v5542
    %5544 = vdwg.mxu0
    %v5545 = vmax.f32 %v5456, %v5483
    %v5546 = vmax.f32 %v5457, %v5503
    %v5547 = vmax.f32 %v5458, %v5523
    %v5548 = vmax.f32 %v5459, %v5543
    %v5549 = vld [vmem:[#allocation16] sm:$0xf]
    %v5551 = vperm.slane %v5549, 0
    %v5552 = vperm.slane %v5549, 1
    %v5553 = vperm.slane %v5549, 2
    %v5554 = vperm.slane %v5549, 3
    %v5559 = vadd.f32 %v5545, %v5551
    %v5560 = vadd.f32 %v5546, %v5552
    %v5561 = vadd.f32 %v5547, %v5553
    %v5562 = vadd.f32 %v5548, %v5554
    %v5563 = vmax.f32 %v5559, 0.0
    %v5564 = vmax.f32 %v5560, 0.0
    %v5565 = vmax.f32 %v5561, 0.0
    %v5566 = vmax.f32 %v5562, 0.0
    %v5567 = vpack.c.bf16 %v5564, %v5563
    %v5568 = vpack.c.bf16 %v5566, %v5565
    %v5571 = vrot.slane %v5567, 3
    %v5572 = vrot.slane %v5568, 6
    %v5573 = vrot.slane %v5568, 1
    %vm5574 = vcmask 1040384
    %v5577 = vsel %vm5574, %v5567, %v5571
    %vm5578 = vcmask 1042434
    %v5581 = vsel %vm5578, %v5572, %v5573
    %vm5582 = vcmask 1041408
    %v5583 = vsel %vm5582, %v5577, %v5581
    %5585 = vst [vmem:[%s10] sm:$0xf] %v5583
    // Predicated region
    $region78: #{vgg_mid_forward.2} parent=1 // pred_check
      _
    $region79: #{vgg_mid_forward.2} parent=1 // pred_check_branch
      %5587 = sbr.rel (0) target = $region81
    $region80: #{vgg_mid_forward.2} parent=1 // pred_region
      _
    $region81: #{vgg_mid_forward.2} parent=1 // pred_fallthru
      _
    // Predicated region
    $region82: #{vgg_mid_forward.2} parent=1 // pred_check
      _
    $region83: #{vgg_mid_forward.2} parent=1 // pred_check_branch
      %5589 = sbr.rel (0) target = $region85
    $region84: #{vgg_mid_forward.2} parent=1 // pred_region
      _
    $region85: #{vgg_mid_forward.2} parent=1 // pred_fallthru
      _
    %5590 = vsyncpa [#allocation6], 1
    %5591 = vsyncpa [#allocation8], 1
    %5592 = vsyncpa [#allocation11], 1
    %5593 = vsyncpa [#allocation14], 1
    %5594 = vsyncpa [#allocation17], 1

// kernel: vgg_mid_forward.3
$region0: #{vgg_mid_forward.3}
  #allocation0 [shape = 'u32[]', space=smem, size = 0x4, offset = 0x4, fixed_abs, tag = 'smem constant byte address 0x4 - core index']
  #allocation1 [shape = 'u32[72,128]{1,0:T(1,128)}', space=vmem, size = 0x9000, scoped, tag = 'internal scratch']
  #allocation2 [shape = 'f32[2,2048]{1,0:T(2,128)}', space=vmem, size = 0x4000, scoped, tag = 'scratch operand']
  %s0 = inlined_call_operand.vmem [shape: bf16[2,512], index: 0, kind: input, shape index: {}]
  %s1 = inlined_call_operand.hbm [shape: bf16[8,512,512], index: 1, kind: input, shape index: {}]
  %s2 = inlined_call_operand.hbm [shape: f32[1,4096], index: 2, kind: input, shape index: {}]
  %s3 = inlined_call_operand.hbm [shape: bf16[2,8,512,2048], index: 3, kind: input, shape index: {}]
  %s4 = inlined_call_operand.hbm [shape: f32[1,4096], index: 4, kind: input, shape index: {}]
  %s5 = inlined_call_operand.hbm [shape: f32[2,4096], index: 5, kind: output, shape index: {}]
  %s6 = sld [smem:[#allocation0]]
  $region77: #{vgg_mid_forward.3} parent=0
    _
  %s8 = ssub.s32 1, %s6
  %s9 = scalar_select 0, %s8, %s6
  $region1: #{vgg_mid_forward.3} parent=0
    #allocation3 [shape = 'u8[1048576]{0}', space=vmem, size = 0x100000, scoped, tag = 'input window, operand 1']
    #allocation4 [shape = 's32[2]{0}', space=sflag, size = 0x8, scoped, tag = 'scoped memory for vgg_mid_forward.3']
    #allocation5 [shape = 's32[2]{0}', space=sflag, size = 0x8, scoped, tag = 'scoped memory for vgg_mid_forward.3']
    #allocation6 [shape = 'u8[4096]{0}', space=vmem, size = 0x1000, scoped, tag = 'input window, operand 2']
    #allocation7 [shape = 's32[2]{0}', space=sflag, size = 0x8, scoped, tag = 'scoped memory for vgg_mid_forward.3']
    #allocation8 [shape = 'u8[4194304]{0}', space=vmem, size = 0x400000, scoped, tag = 'input window, operand 3']
    #allocation9 [shape = 'u8[16384]{0}', space=vmem, size = 0x4000, scoped, tag = 'input window, operand 4']
    #allocation10 [shape = 's32[2]{0}', space=sflag, size = 0x8, scoped, tag = 'scoped memory for vgg_mid_forward.3']
    #allocation11 [shape = 'u8[32768]{0}', space=vmem, size = 0x8000, scoped, tag = 'output window, operand 0']
    %10 = vsyncpa [#allocation4], 0
    %s11 = scalar_lea.sflag [#allocation4], 1
    %12 = vsyncpa %s11, 0
    %13 = vsyncpa [#allocation7], 0
    %s14 = scalar_lea.sflag [#allocation7], 1
    %15 = vsyncpa %s14, 0
    %16 = vsyncpa [#allocation10], 0
    %s17 = scalar_lea.sflag [#allocation10], 1
    %18 = vsyncpa %s17, 0
    %19 = vsyncpa [#allocation5], 0
    %s20 = scalar_lea.sflag [#allocation5], 1
    %21 = vsyncpa %s20, 0
    loop: start=0, step=1, limit=18
    $region2: #{vgg_mid_forward.3} parent=1 // loop_pre_header
      _
    $region3: #{vgg_mid_forward.3} parent=1 // loop_header
      %s23 = sphi 0, %s27
      %p24 = scmp.ge.s32.totalorder %s23, 18
      %s30 = sphi 0, %s42
      %s31 = sphi 0, %s38
      %s32 = sphi 0, %s30
      %s33 = sphi 0, %s31
      %s34 = sphi 0, %s32
      %s35 = sphi 0, %s33
      %s43 = sphi 0, %s43
      %s45 = sphi 0, %s43
      %s46 = sphi 0, %s45
      %s60 = sphi 0, %s46
      %s66 = sphi 0, %s68
      %s69 = sphi 0, %s66
      %s70 = sphi 0, %s69
      %s86 = sphi 0, %s70
      %s92 = sphi 0, %s94
      %s95 = sphi 0, %s92
      %s96 = sphi 0, %s95
      %s112 = sphi 0, %s96
      %s120 = sphi 0, %s122
      %s123 = sphi 0, %s120
      %s124 = sphi 0, %s123
      %s140 = sphi 0, %s124
      %s146 = sphi 0, %s148
      %s149 = sphi 0, %s146
      %s150 = sphi 0, %s149
      %s166 = sphi 0, %s150
      %s172 = sphi 0, %s174
      %s175 = sphi 0, %s172
      %s176 = sphi 0, %s175
      %s192 = sphi 0, %s176
    $region4: #{vgg_mid_forward.3} parent=1 // loop_header_branch
      %26 = sbr.rel (%p24) target = $region8
    $region5: #{vgg_mid_forward.3} parent=1 // loop_body
      %s28 = ssub.s32 %s23, 1
      %s29 = ssub.s32 %s23, 2
      %s36 = sadd.s32 1, %s31
      %p37 = scmp.ge.s32.totalorder %s36, 8
      %s38 = scalar_select %p37, 0, %s36
      %s39 = sadd.s32 1, %s30
      %s40 = scalar_select %p37, %s39, %s30
      %p41 = scmp.ge.s32.totalorder %s40, 2
      %s42 = scalar_select %p41, 0, %s40
      %s44 = sadd.s32 %s43, 1
      %p47 = scmp.eq.s32.totalorder %s23, 15
      %p48 = scmp.ne.s32.totalorder %s43, %s45
      %p49 = scmp.eq.s32.totalorder %s23, 0
      %p50 = por %p48, %p49
      %p51 = scmp.ne.s32.totalorder %s43, %s45
      %p52 = scmp.eq.s32.totalorder %s28, 15
      %p53 = por %p51, %p52
      %p54 = scmp.ne.s32.totalorder %s45, %s46
      %p55 = scmp.eq.s32.totalorder %s28, 0
      %p56 = por %p54, %p55
      %p57 = scmp.ne.s32.totalorder %s45, %s46
      %p58 = scmp.eq.s32.totalorder %s29, 15
      %p59 = por %p57, %p58
      %p61 = scmp.ne.s32.totalorder %s46, %s60
      %p62 = scmp.eq.s32.totalorder %s29, 0
      %p63 = por %p61, %p62
      %s64 = ssub.s32 %s31, %s38
      %p65 = scmp.eq.s32.totalorder %s64, 0
      %s67 = sadd.s32 %s66, 1
      %s68 = scalar_select %p65, %s66, %s67
      %p71 = pneg %p65
      %p72 = scmp.eq.s32.totalorder %s23, 15
      %p73 = por %p71, %p72
      %p74 = scmp.ne.s32.totalorder %s66, %s69
      %p75 = scmp.eq.s32.totalorder %s23, 0
      %p76 = por %p74, %p75
      %p77 = scmp.ne.s32.totalorder %s66, %s69
      %p78 = scmp.eq.s32.totalorder %s28, 15
      %p79 = por %p77, %p78
      %p80 = scmp.ne.s32.totalorder %s69, %s70
      %p81 = scmp.eq.s32.totalorder %s28, 0
      %p82 = por %p80, %p81
      %p83 = scmp.ne.s32.totalorder %s69, %s70
      %p84 = scmp.eq.s32.totalorder %s29, 15
      %p85 = por %p83, %p84
      %p87 = scmp.ne.s32.totalorder %s70, %s86
      %p88 = scmp.eq.s32.totalorder %s29, 0
      %p89 = por %p87, %p88
      %s90 = ssub.s32 %s31, %s38
      %p91 = scmp.eq.s32.totalorder %s90, 0
      %s93 = sadd.s32 %s92, 1
      %s94 = scalar_select %p91, %s92, %s93
      %p97 = pneg %p91
      %p98 = scmp.eq.s32.totalorder %s23, 15
      %p99 = por %p97, %p98
      %p100 = scmp.ne.s32.totalorder %s92, %s95
      %p101 = scmp.eq.s32.totalorder %s23, 0
      %p102 = por %p100, %p101
      %p103 = scmp.ne.s32.totalorder %s92, %s95
      %p104 = scmp.eq.s32.totalorder %s28, 15
      %p105 = por %p103, %p104
      %p106 = scmp.ne.s32.totalorder %s95, %s96
      %p107 = scmp.eq.s32.totalorder %s28, 0
      %p108 = por %p106, %p107
      %p109 = scmp.ne.s32.totalorder %s95, %s96
      %p110 = scmp.eq.s32.totalorder %s29, 15
      %p111 = por %p109, %p110
      %p113 = scmp.ne.s32.totalorder %s96, %s112
      %p114 = scmp.eq.s32.totalorder %s29, 0
      %p115 = por %p113, %p114
      %s116 = ssub.s32 %s30, %s42
      %s117 = ssub.s32 %s31, %s38
      %s118 = sor.u32 %s116, %s117
      %p119 = scmp.eq.s32.totalorder %s118, 0
      %s121 = sadd.s32 %s120, 1
      %s122 = scalar_select %p119, %s120, %s121
      %p125 = pneg %p119
      %p126 = scmp.eq.s32.totalorder %s23, 15
      %p127 = por %p125, %p126
      %p128 = scmp.ne.s32.totalorder %s120, %s123
      %p129 = scmp.eq.s32.totalorder %s23, 0
      %p130 = por %p128, %p129
      %p131 = scmp.ne.s32.totalorder %s120, %s123
      %p132 = scmp.eq.s32.totalorder %s28, 15
      %p133 = por %p131, %p132
      %p134 = scmp.ne.s32.totalorder %s123, %s124
      %p135 = scmp.eq.s32.totalorder %s28, 0
      %p136 = por %p134, %p135
      %p137 = scmp.ne.s32.totalorder %s123, %s124
      %p138 = scmp.eq.s32.totalorder %s29, 15
      %p139 = por %p137, %p138
      %p141 = scmp.ne.s32.totalorder %s124, %s140
      %p142 = scmp.eq.s32.totalorder %s29, 0
      %p143 = por %p141, %p142
      %s144 = ssub.s32 %s30, %s42
      %p145 = scmp.eq.s32.totalorder %s144, 0
      %s147 = sadd.s32 %s146, 1
      %s148 = scalar_select %p145, %s146, %s147
      %p151 = pneg %p145
      %p152 = scmp.eq.s32.totalorder %s23, 15
      %p153 = por %p151, %p152
      %p154 = scmp.ne.s32.totalorder %s146, %s149
      %p155 = scmp.eq.s32.totalorder %s23, 0
      %p156 = por %p154, %p155
      %p157 = scmp.ne.s32.totalorder %s146, %s149
      %p158 = scmp.eq.s32.totalorder %s28, 15
      %p159 = por %p157, %p158
      %p160 = scmp.ne.s32.totalorder %s149, %s150
      %p161 = scmp.eq.s32.totalorder %s28, 0
      %p162 = por %p160, %p161
      %p163 = scmp.ne.s32.totalorder %s149, %s150
      %p164 = scmp.eq.s32.totalorder %s29, 15
      %p165 = por %p163, %p164
      %p167 = scmp.ne.s32.totalorder %s150, %s166
      %p168 = scmp.eq.s32.totalorder %s29, 0
      %p169 = por %p167, %p168
      %s170 = ssub.s32 %s30, %s42
      %p171 = scmp.eq.s32.totalorder %s170, 0
      %s173 = sadd.s32 %s172, 1
      %s174 = scalar_select %p171, %s172, %s173
      %p177 = pneg %p171
      %p178 = scmp.eq.s32.totalorder %s23, 15
      %p179 = por %p177, %p178
      %p180 = scmp.ne.s32.totalorder %s172, %s175
      %p181 = scmp.eq.s32.totalorder %s23, 0
      %p182 = por %p180, %p181
      %p183 = scmp.ne.s32.totalorder %s172, %s175
      %p184 = scmp.eq.s32.totalorder %s28, 15
      %p185 = por %p183, %p184
      %p186 = scmp.ne.s32.totalorder %s175, %s176
      %p187 = scmp.eq.s32.totalorder %s28, 0
      %p188 = por %p186, %p187
      %p189 = scmp.ne.s32.totalorder %s175, %s176
      %p190 = scmp.eq.s32.totalorder %s29, 15
      %p191 = por %p189, %p190
      %p193 = scmp.ne.s32.totalorder %s176, %s192
      %p194 = scmp.eq.s32.totalorder %s29, 0
      %p195 = por %p193, %p194
      %p196 = scmp.le.s32.totalorder 1, %s23
      %p197 = scmp.lt.s32.totalorder %s23, 17
      %p198 = pnand %p196, %p197
      %p199 = pneg %p198
      // Predicated region
      $region9: #{vgg_mid_forward.3} parent=5 // pred_check
        _
      $region10: #{vgg_mid_forward.3} parent=5 // pred_check_branch
        %201 = sbr.rel (%p198) target = $region12
      $region11: #{vgg_mid_forward.3} parent=5 // pred_region
        %s202 = ssub.s32 %s23, 1
        // Predicated region
        $region13: #{vgg_mid_forward.3} parent=11 // pred_check
          %p203 = pneg %p56
        $region14: #{vgg_mid_forward.3} parent=11 // pred_check_branch
          %205 = sbr.rel (%p203) target = $region16
        $region15: #{vgg_mid_forward.3} parent=11 // pred_region
          _
        $region16: #{vgg_mid_forward.3} parent=11 // pred_fallthru
          _
      $region12: #{vgg_mid_forward.3} parent=5 // pred_fallthru
        _
      %p206 = scmp.lt.s32.totalorder %s23, 16
      // Predicated region
      $region17: #{vgg_mid_forward.3} parent=5 // pred_check
        %p207 = pneg %p206
      $region18: #{vgg_mid_forward.3} parent=5 // pred_check_branch
        %209 = sbr.rel (%p207) target = $region20
      $region19: #{vgg_mid_forward.3} parent=5 // pred_region
        // Predicated region
        $region21: #{vgg_mid_forward.3} parent=19 // pred_check
          %p210 = pneg %p76
        $region22: #{vgg_mid_forward.3} parent=19 // pred_check_branch
          %212 = sbr.rel (%p210) target = $region24
        $region23: #{vgg_mid_forward.3} parent=19 // pred_region
          %s213 = sand.u32 %s66, 1
          %s214 = scalar_lea.sflag [#allocation4], %s213
          %s215 = sand.u32 %s66, 1
          %s216 = smul.addr %s215, 1024
          %s217 = scalar_lea.vmem [#allocation3], %s216
          %219 = vsyncadd %s214, 0
          %s220 = smul.addr %s31, 256
          %s221 = smul.addr %s220, 4
          %s222 = scalar_lea.hbm %s1, %s221
          %s223 = sshll.u32 %s222, 4
          %s224 = int_to_ptr.hbm [resolvable:$true] %s223
          %s225 = sshll.u32 %s217, 4
          %s226 = int_to_ptr.vmem [resolvable:$true] %s225
          %231 = dma.hbm_to_vmem [thread:$0]  %s224, 16384, %s226, %s214, 256, 256, 16
        $region24: #{vgg_mid_forward.3} parent=19 // pred_fallthru
          _
        // Predicated region
        $region25: #{vgg_mid_forward.3} parent=19 // pred_check
          %p232 = pneg %p102
        $region26: #{vgg_mid_forward.3} parent=19 // pred_check_branch
          %234 = sbr.rel (%p232) target = $region28
        $region27: #{vgg_mid_forward.3} parent=19 // pred_region
          %s235 = sand.u32 %s23, 1
          %s236 = scalar_lea.sflag [#allocation7], %s235
          %s237 = sand.u32 %s92, 1
          %s238 = smul.addr %s237, 4
          %s239 = scalar_lea.vmem [#allocation6], %s238
          %s240 = smul.u32 4, %s31
          %242 = vsyncadd %s236, 0
          %s243 = scalar_lea.hbm %s2, %s240
          %s245 = sshll.u32 %s243, 4
          %s246 = int_to_ptr.hbm [resolvable:$true] %s245
          %s247 = sshll.u32 %s239, 4
          %s248 = int_to_ptr.vmem [resolvable:$true] %s247
          %250 = dma.hbm_to_vmem [thread:$0]  %s246, 64, %s248, %s236
        $region28: #{vgg_mid_forward.3} parent=19 // pred_fallthru
          _
        // Predicated region
        $region29: #{vgg_mid_forward.3} parent=19 // pred_check
          %p251 = pneg %p130
        $region30: #{vgg_mid_forward.3} parent=19 // pred_check_branch
          %253 = sbr.rel (%p251) target = $region32
        $region31: #{vgg_mid_forward.3} parent=19 // pred_region
          %s254 = sand.u32 %s23, 1
          %s255 = scalar_lea.sflag [#allocation7], %s254
          %s256 = sand.u32 %s120, 1
          %s257 = smul.addr %s256, 4096
          %s258 = scalar_lea.vmem [#allocation8], %s257
          %260 = vsyncadd %s255, 0
          %s261 = smul.addr %s31, 1024
          %s262 = smul.addr %s30, 8192
          %s263 = sadd.s32 %s261, %s262
          %s264 = smul.addr %s263, 4
          %s265 = scalar_lea.hbm %s3, %s264
          %s266 = sshll.u32 %s265, 4
          %s267 = int_to_ptr.hbm [resolvable:$true] %s266
          %s268 = sshll.u32 %s258, 4
          %s269 = int_to_ptr.vmem [resolvable:$true] %s268
          %274 = dma.hbm_to_vmem [thread:$0]  %s267, 65536, %s269, %s255, 1024, 1024, 64
        $region32: #{vgg_mid_forward.3} parent=19 // pred_fallthru
          _
        // Predicated region
        $region33: #{vgg_mid_forward.3} parent=19 // pred_check
          %p275 = pneg %p156
        $region34: #{vgg_mid_forward.3} parent=19 // pred_check_branch
          %277 = sbr.rel (%p275) target = $region36
        $region35: #{vgg_mid_forward.3} parent=19 // pred_region
          %s278 = sand.u32 %s146, 1
          %s279 = scalar_lea.sflag [#allocation10], %s278
          %s280 = sand.u32 %s146, 1
          %s281 = smul.addr %s280, 16
          %s282 = scalar_lea.vmem [#allocation9], %s281
          %s283 = smul.u32 16, %s30
          %285 = vsyncadd %s279, 0
          %s286 = scalar_lea.hbm %s4, %s283
          %s288 = sshll.u32 %s286, 4
          %s289 = int_to_ptr.hbm [resolvable:$true] %s288
          %s290 = sshll.u32 %s282, 4
          %s291 = int_to_ptr.vmem [resolvable:$true] %s290
          %293 = dma.hbm_to_vmem [thread:$0]  %s289, 256, %s291, %s279
        $region36: #{vgg_mid_forward.3} parent=19 // pred_fallthru
          _
      $region20: #{vgg_mid_forward.3} parent=5 // pred_fallthru
        _
      %p294 = scmp.le.s32.totalorder 1, %s23
      %p295 = scmp.lt.s32.totalorder %s23, 17
      %p296 = pnand %p294, %p295
      %p297 = pneg %p296
      // Predicated region
      $region37: #{vgg_mid_forward.3} parent=5 // pred_check
        _
      $region38: #{vgg_mid_forward.3} parent=5 // pred_check_branch
        %299 = sbr.rel (%p296) target = $region40
      $region39: #{vgg_mid_forward.3} parent=5 // pred_region
        %s300 = ssub.s32 %s23, 1
        %s301 = sand.u32 %s69, 1
        %s302 = scalar_lea.sflag [#allocation4], %s301
        %s303 = sand.u32 %s69, 1
        %s304 = smul.addr %s303, 1024
        %s305 = scalar_lea.vmem [#allocation3], %s304
        // Predicated region
        $region41: #{vgg_mid_forward.3} parent=39 // pred_check
          %p306 = pneg %p82
        $region42: #{vgg_mid_forward.3} parent=39 // pred_check_branch
          %308 = sbr.rel (%p306) target = $region44
        $region43: #{vgg_mid_forward.3} parent=39 // pred_region
          %310 = dma.done %s302, 16384
        $region44: #{vgg_mid_forward.3} parent=39 // pred_fallthru
          _
        %s311 = sand.u32 %s28, 1
        %s312 = scalar_lea.sflag [#allocation7], %s311
        %s313 = sand.u32 %s95, 1
        %s314 = smul.addr %s313, 4
        %s315 = scalar_lea.vmem [#allocation6], %s314
        // Predicated region
        $region45: #{vgg_mid_forward.3} parent=39 // pred_check
          %p316 = pneg %p108
        $region46: #{vgg_mid_forward.3} parent=39 // pred_check_branch
          %318 = sbr.rel (%p316) target = $region48
        $region47: #{vgg_mid_forward.3} parent=39 // pred_region
          %320 = dma.done %s312, 64
        $region48: #{vgg_mid_forward.3} parent=39 // pred_fallthru
          _
        %s321 = sand.u32 %s28, 1
        %s322 = scalar_lea.sflag [#allocation7], %s321
        %s323 = sand.u32 %s123, 1
        %s324 = smul.addr %s323, 4096
        %s325 = scalar_lea.vmem [#allocation8], %s324
        // Predicated region
        $region49: #{vgg_mid_forward.3} parent=39 // pred_check
          %p326 = pneg %p136
        $region50: #{vgg_mid_forward.3} parent=39 // pred_check_branch
          %328 = sbr.rel (%p326) target = $region52
        $region51: #{vgg_mid_forward.3} parent=39 // pred_region
          %330 = dma.done %s322, 65536
        $region52: #{vgg_mid_forward.3} parent=39 // pred_fallthru
          _
        %s331 = sand.u32 %s149, 1
        %s332 = scalar_lea.sflag [#allocation10], %s331
        %s333 = sand.u32 %s149, 1
        %s334 = smul.addr %s333, 16
        %s335 = scalar_lea.vmem [#allocation9], %s334
        // Predicated region
        $region53: #{vgg_mid_forward.3} parent=39 // pred_check
          %p336 = pneg %p162
        $region54: #{vgg_mid_forward.3} parent=39 // pred_check_branch
          %338 = sbr.rel (%p336) target = $region56
        $region55: #{vgg_mid_forward.3} parent=39 // pred_region
          %340 = dma.done %s332, 256
        $region56: #{vgg_mid_forward.3} parent=39 // pred_fallthru
          _
        %p341 = pneg %p56
        %p342 = pneg %p53
        %s343 = sand.u32 %s69, 1
        %s344 = scalar_lea.sflag [#allocation4], %s343
        %s345 = sand.u32 %s69, 1
        %s346 = smul.addr %s345, 1024
        %s347 = scalar_lea.vmem [#allocation3], %s346
        %p348 = pneg %p82
        %p349 = pneg %p79
        %s350 = sand.u32 %s28, 1
        %s351 = scalar_lea.sflag [#allocation7], %s350
        %s352 = sand.u32 %s95, 1
        %s353 = smul.addr %s352, 4
        %s354 = scalar_lea.vmem [#allocation6], %s353
        %p355 = pneg %p108
        %p356 = pneg %p105
        %s357 = sand.u32 %s28, 1
        %s358 = scalar_lea.sflag [#allocation7], %s357
        %s359 = sand.u32 %s123, 1
        %s360 = smul.addr %s359, 4096
        %s361 = scalar_lea.vmem [#allocation8], %s360
        %p362 = pneg %p136
        %p363 = pneg %p133
        %s364 = sand.u32 %s149, 1
        %s365 = scalar_lea.sflag [#allocation10], %s364
        %s366 = sand.u32 %s149, 1
        %s367 = smul.addr %s366, 16
        %s368 = scalar_lea.vmem [#allocation9], %s367
        %p369 = pneg %p162
        %p370 = pneg %p159
        %p371 = pneg %p188
        %p372 = pneg %p185
        %s373 = sand.u32 %s175, 1
        %s374 = scalar_lea.sflag [#allocation5], %s373
        %s375 = sand.u32 %s175, 1
        %s376 = smul.addr %s375, 32
        %s377 = scalar_lea.vmem [#allocation11], %s376
        %s378 = smul.u32 4, %s33
        %s379 = smul.u32 16, %s32
        %s380 = smul.u32 16, %s32
        %p381 = scmp.eq.s32.totalorder %s33, 0
        // Predicated region
        $region57: #{vgg_mid_forward.3} parent=39 // pred_check
          %p382 = pneg %p381
        $region58: #{vgg_mid_forward.3} parent=39 // pred_check_branch
          %384 = sbr.rel (%p382) target = $region60
        $region59: #{vgg_mid_forward.3} parent=39 // pred_region
          %385 = vst [vmem:[#allocation2] sm:$0xff] 0.0
          %386 = vst [vmem:[#allocation2 + $0x8] sm:$0xff] 0.0
          %387 = vst [vmem:[#allocation2 + $0x10] sm:$0xff] 0.0
          %388 = vst [vmem:[#allocation2 + $0x18] sm:$0xff] 0.0
        $region60: #{vgg_mid_forward.3} parent=39 // pred_fallthru
          _
        %v389 = vld [vmem:[%s0] sm:$0xf]
        %v390 = vld [vmem:[%s305] sm:$0xff]
        %v391 = vld [vmem:[%s305 + $0x8] sm:$0xff]
        %v392 = vld [vmem:[%s305 + $0x10] sm:$0xff]
        %v393 = vld [vmem:[%s305 + $0x18] sm:$0xff]
        %v394 = vld [vmem:[%s305 + $0x20] sm:$0xff]
        %v395 = vld [vmem:[%s305 + $0x28] sm:$0xff]
        %v396 = vld [vmem:[%s305 + $0x30] sm:$0xff]
        %v397 = vld [vmem:[%s305 + $0x38] sm:$0xff]
        %v398 = vld [vmem:[%s305 + $0x40] sm:$0xff]
        %v399 = vld [vmem:[%s305 + $0x48] sm:$0xff]
        %v400 = vld [vmem:[%s305 + $0x50] sm:$0xff]
        %v401 = vld [vmem:[%s305 + $0x58] sm:$0xff]
        %v402 = vld [vmem:[%s305 + $0x60] sm:$0xff]
        %v403 = vld [vmem:[%s305 + $0x68] sm:$0xff]
        %v404 = vld [vmem:[%s305 + $0x70] sm:$0xff]
        %v405 = vld [vmem:[%s305 + $0x78] sm:$0xff]
        %v406 = vld [vmem:[%s305 + $0x80] sm:$0xff]
        %v407 = vld [vmem:[%s305 + $0x88] sm:$0xff]
        %v408 = vld [vmem:[%s305 + $0x90] sm:$0xff]
        %v409 = vld [vmem:[%s305 + $0x98] sm:$0xff]
        %v410 = vld [vmem:[%s305 + $0xa0] sm:$0xff]
        %v411 = vld [vmem:[%s305 + $0xa8] sm:$0xff]
        %v412 = vld [vmem:[%s305 + $0xb0] sm:$0xff]
        %v413 = vld [vmem:[%s305 + $0xb8] sm:$0xff]
        %v414 = vld [vmem:[%s305 + $0xc0] sm:$0xff]
        %v415 = vld [vmem:[%s305 + $0xc8] sm:$0xff]
        %v416 = vld [vmem:[%s305 + $0xd0] sm:$0xff]
        %v417 = vld [vmem:[%s305 + $0xd8] sm:$0xff]
        %v418 = vld [vmem:[%s305 + $0xe0] sm:$0xff]
        %v419 = vld [vmem:[%s305 + $0xe8] sm:$0xff]
        %v420 = vld [vmem:[%s305 + $0xf0] sm:$0xff]
        %v421 = vld [vmem:[%s305 + $0xf8] sm:$0xff]
        %v422 = vld [vmem:[%s305 + $0x100] sm:$0xff]
        %v423 = vld [vmem:[%s305 + $0x108] sm:$0xff]
        %v424 = vld [vmem:[%s305 + $0x110] sm:$0xff]
        %v425 = vld [vmem:[%s305 + $0x118] sm:$0xff]
        %v426 = vld [vmem:[%s305 + $0x120] sm:$0xff]
        %v427 = vld [vmem:[%s305 + $0x128] sm:$0xff]
        %v428 = vld [vmem:[%s305 + $0x130] sm:$0xff]
        %v429 = vld [vmem:[%s305 + $0x138] sm:$0xff]
        %v430 = vld [vmem:[%s305 + $0x140] sm:$0xff]
        %v431 = vld [vmem:[%s305 + $0x148] sm:$0xff]
        %v432 = vld [vmem:[%s305 + $0x150] sm:$0xff]
        %v433 = vld [vmem:[%s305 + $0x158] sm:$0xff]
        %v434 = vld [vmem:[%s305 + $0x160] sm:$0xff]
        %v435 = vld [vmem:[%s305 + $0x168] sm:$0xff]
        %v436 = vld [vmem:[%s305 + $0x170] sm:$0xff]
        %v437 = vld [vmem:[%s305 + $0x178] sm:$0xff]
        %v438 = vld [vmem:[%s305 + $0x180] sm:$0xff]
        %v439 = vld [vmem:[%s305 + $0x188] sm:$0xff]
        %v440 = vld [vmem:[%s305 + $0x190] sm:$0xff]
        %v441 = vld [vmem:[%s305 + $0x198] sm:$0xff]
        %v442 = vld [vmem:[%s305 + $0x1a0] sm:$0xff]
        %v443 = vld [vmem:[%s305 + $0x1a8] sm:$0xff]
        %v444 = vld [vmem:[%s305 + $0x1b0] sm:$0xff]
        %v445 = vld [vmem:[%s305 + $0x1b8] sm:$0xff]
        %v446 = vld [vmem:[%s305 + $0x1c0] sm:$0xff]
        %v447 = vld [vmem:[%s305 + $0x1c8] sm:$0xff]
        %v448 = vld [vmem:[%s305 + $0x1d0] sm:$0xff]
        %v449 = vld [vmem:[%s305 + $0x1d8] sm:$0xff]
        %v450 = vld [vmem:[%s305 + $0x1e0] sm:$0xff]
        %v451 = vld [vmem:[%s305 + $0x1e8] sm:$0xff]
        %v452 = vld [vmem:[%s305 + $0x1f0] sm:$0xff]
        %v453 = vld [vmem:[%s305 + $0x1f8] sm:$0xff]
        %v454 = vld [vmem:[%s305 + $0x200] sm:$0xff]
        %v455 = vld [vmem:[%s305 + $0x208] sm:$0xff]
        %v456 = vld [vmem:[%s305 + $0x210] sm:$0xff]
        %v457 = vld [vmem:[%s305 + $0x218] sm:$0xff]
        %v458 = vld [vmem:[%s305 + $0x220] sm:$0xff]
        %v459 = vld [vmem:[%s305 + $0x228] sm:$0xff]
        %v460 = vld [vmem:[%s305 + $0x230] sm:$0xff]
        %v461 = vld [vmem:[%s305 + $0x238] sm:$0xff]
        %v462 = vld [vmem:[%s305 + $0x240] sm:$0xff]
        %v463 = vld [vmem:[%s305 + $0x248] sm:$0xff]
        %v464 = vld [vmem:[%s305 + $0x250] sm:$0xff]
        %v465 = vld [vmem:[%s305 + $0x258] sm:$0xff]
        %v466 = vld [vmem:[%s305 + $0x260] sm:$0xff]
        %v467 = vld [vmem:[%s305 + $0x268] sm:$0xff]
        %v468 = vld [vmem:[%s305 + $0x270] sm:$0xff]
        %v469 = vld [vmem:[%s305 + $0x278] sm:$0xff]
        %v470 = vld [vmem:[%s305 + $0x280] sm:$0xff]
        %v471 = vld [vmem:[%s305 + $0x288] sm:$0xff]
        %v472 = vld [vmem:[%s305 + $0x290] sm:$0xff]
        %v473 = vld [vmem:[%s305 + $0x298] sm:$0xff]
        %v474 = vld [vmem:[%s305 + $0x2a0] sm:$0xff]
        %v475 = vld [vmem:[%s305 + $0x2a8] sm:$0xff]
        %v476 = vld [vmem:[%s305 + $0x2b0] sm:$0xff]
        %v477 = vld [vmem:[%s305 + $0x2b8] sm:$0xff]
        %v478 = vld [vmem:[%s305 + $0x2c0] sm:$0xff]
        %v479 = vld [vmem:[%s305 + $0x2c8] sm:$0xff]
        %v480 = vld [vmem:[%s305 + $0x2d0] sm:$0xff]
        %v481 = vld [vmem:[%s305 + $0x2d8] sm:$0xff]
        %v482 = vld [vmem:[%s305 + $0x2e0] sm:$0xff]
        %v483 = vld [vmem:[%s305 + $0x2e8] sm:$0xff]
        %v484 = vld [vmem:[%s305 + $0x2f0] sm:$0xff]
        %v485 = vld [vmem:[%s305 + $0x2f8] sm:$0xff]
        %v486 = vld [vmem:[%s305 + $0x300] sm:$0xff]
        %v487 = vld [vmem:[%s305 + $0x308] sm:$0xff]
        %v488 = vld [vmem:[%s305 + $0x310] sm:$0xff]
        %v489 = vld [vmem:[%s305 + $0x318] sm:$0xff]
        %v490 = vld [vmem:[%s305 + $0x320] sm:$0xff]
        %v491 = vld [vmem:[%s305 + $0x328] sm:$0xff]
        %v492 = vld [vmem:[%s305 + $0x330] sm:$0xff]
        %v493 = vld [vmem:[%s305 + $0x338] sm:$0xff]
        %v494 = vld [vmem:[%s305 + $0x340] sm:$0xff]
        %v495 = vld [vmem:[%s305 + $0x348] sm:$0xff]
        %v496 = vld [vmem:[%s305 + $0x350] sm:$0xff]
        %v497 = vld [vmem:[%s305 + $0x358] sm:$0xff]
        %v498 = vld [vmem:[%s305 + $0x360] sm:$0xff]
        %v499 = vld [vmem:[%s305 + $0x368] sm:$0xff]
        %v500 = vld [vmem:[%s305 + $0x370] sm:$0xff]
        %v501 = vld [vmem:[%s305 + $0x378] sm:$0xff]
        %v502 = vld [vmem:[%s305 + $0x380] sm:$0xff]
        %v503 = vld [vmem:[%s305 + $0x388] sm:$0xff]
        %v504 = vld [vmem:[%s305 + $0x390] sm:$0xff]
        %v505 = vld [vmem:[%s305 + $0x398] sm:$0xff]
        %v506 = vld [vmem:[%s305 + $0x3a0] sm:$0xff]
        %v507 = vld [vmem:[%s305 + $0x3a8] sm:$0xff]
        %v508 = vld [vmem:[%s305 + $0x3b0] sm:$0xff]
        %v509 = vld [vmem:[%s305 + $0x3b8] sm:$0xff]
        %v510 = vld [vmem:[%s305 + $0x3c0] sm:$0xff]
        %v511 = vld [vmem:[%s305 + $0x3c8] sm:$0xff]
        %v512 = vld [vmem:[%s305 + $0x3d0] sm:$0xff]
        %v513 = vld [vmem:[%s305 + $0x3d8] sm:$0xff]
        %v514 = vld [vmem:[%s305 + $0x3e0] sm:$0xff]
        %v515 = vld [vmem:[%s305 + $0x3e8] sm:$0xff]
        %v516 = vld [vmem:[%s305 + $0x3f0] sm:$0xff]
        %v517 = vld [vmem:[%s305 + $0x3f8] sm:$0xff]
        %v518 = vld [vmem:[%s315] sm:$0xf]
        %v520 = vperm.slane %v518, 0
        %v521 = vperm.slane %v518, 1
        %v522 = vperm.slane %v518, 2
        %v523 = vperm.slane %v518, 3
        %529 = vst [vmem:[#allocation1] ss:$9 sm:$0xff] %v389
        %v530 = vld [vmem:[#allocation1] sm:$0xff]
        %v531 = vld [vmem:[#allocation1 + $0x9] sm:$0xff]
        %v532 = vld [vmem:[#allocation1 + $0x12] sm:$0xff]
        %v533 = vld [vmem:[#allocation1 + $0x1b] sm:$0xff]
        %v666 = vunpack.c.l.b16 %v390
        %v667 = vunpack.c.h.b16 %v390
        %v668 = vunpack.c.l.b16 %v391
        %v669 = vunpack.c.h.b16 %v391
        %v670 = vunpack.c.l.b16 %v392
        %v671 = vunpack.c.h.b16 %v392
        %v672 = vunpack.c.l.b16 %v393
        %v673 = vunpack.c.h.b16 %v393
        %v674 = vunpack.c.l.b16 %v394
        %v675 = vunpack.c.h.b16 %v394
        %v676 = vunpack.c.l.b16 %v395
        %v677 = vunpack.c.h.b16 %v395
        %v678 = vunpack.c.l.b16 %v396
        %v679 = vunpack.c.h.b16 %v396
        %v680 = vunpack.c.l.b16 %v397
        %v681 = vunpack.c.h.b16 %v397
        %v682 = vunpack.c.l.b16 %v398
        %v683 = vunpack.c.h.b16 %v398
        %v684 = vunpack.c.l.b16 %v399
        %v685 = vunpack.c.h.b16 %v399
        %v686 = vunpack.c.l.b16 %v400
        %v687 = vunpack.c.h.b16 %v400
        %v688 = vunpack.c.l.b16 %v401
        %v689 = vunpack.c.h.b16 %v401
        %v690 = vunpack.c.l.b16 %v402
        %v691 = vunpack.c.h.b16 %v402
        %v692 = vunpack.c.l.b16 %v403
        %v693 = vunpack.c.h.b16 %v403
        %v694 = vunpack.c.l.b16 %v404
        %v695 = vunpack.c.h.b16 %v404
        %v696 = vunpack.c.l.b16 %v405
        %v697 = vunpack.c.h.b16 %v405
        %v698 = vunpack.c.l.b16 %v406
        %v699 = vunpack.c.h.b16 %v406
        %v700 = vunpack.c.l.b16 %v407
        %v701 = vunpack.c.h.b16 %v407
        %v702 = vunpack.c.l.b16 %v408
        %v703 = vunpack.c.h.b16 %v408
        %v704 = vunpack.c.l.b16 %v409
        %v705 = vunpack.c.h.b16 %v409
        %v706 = vunpack.c.l.b16 %v410
        %v707 = vunpack.c.h.b16 %v410
        %v708 = vunpack.c.l.b16 %v411
        %v709 = vunpack.c.h.b16 %v411
        %v710 = vunpack.c.l.b16 %v412
        %v711 = vunpack.c.h.b16 %v412
        %v712 = vunpack.c.l.b16 %v413
        %v713 = vunpack.c.h.b16 %v413
        %v714 = vunpack.c.l.b16 %v414
        %v715 = vunpack.c.h.b16 %v414
        %v716 = vunpack.c.l.b16 %v415
        %v717 = vunpack.c.h.b16 %v415
        %v718 = vunpack.c.l.b16 %v416
        %v719 = vunpack.c.h.b16 %v416
        %v720 = vunpack.c.l.b16 %v417
        %v721 = vunpack.c.h.b16 %v417
        %v722 = vunpack.c.l.b16 %v418
        %v723 = vunpack.c.h.b16 %v418
        %v724 = vunpack.c.l.b16 %v419
        %v725 = vunpack.c.h.b16 %v419
        %v726 = vunpack.c.l.b16 %v420
        %v727 = vunpack.c.h.b16 %v420
        %v728 = vunpack.c.l.b16 %v421
        %v729 = vunpack.c.h.b16 %v421
        %v730 = vunpack.c.l.b16 %v422
        %v731 = vunpack.c.h.b16 %v422
        %v732 = vunpack.c.l.b16 %v423
        %v733 = vunpack.c.h.b16 %v423
        %v734 = vunpack.c.l.b16 %v424
        %v735 = vunpack.c.h.b16 %v424
        %v736 = vunpack.c.l.b16 %v425
        %v737 = vunpack.c.h.b16 %v425
        %v738 = vunpack.c.l.b16 %v426
        %v739 = vunpack.c.h.b16 %v426
        %v740 = vunpack.c.l.b16 %v427
        %v741 = vunpack.c.h.b16 %v427
        %v742 = vunpack.c.l.b16 %v428
        %v743 = vunpack.c.h.b16 %v428
        %v744 = vunpack.c.l.b16 %v429
        %v745 = vunpack.c.h.b16 %v429
        %v746 = vunpack.c.l.b16 %v430
        %v747 = vunpack.c.h.b16 %v430
        %v748 = vunpack.c.l.b16 %v431
        %v749 = vunpack.c.h.b16 %v431
        %v750 = vunpack.c.l.b16 %v432
        %v751 = vunpack.c.h.b16 %v432
        %v752 = vunpack.c.l.b16 %v433
        %v753 = vunpack.c.h.b16 %v433
        %v754 = vunpack.c.l.b16 %v434
        %v755 = vunpack.c.h.b16 %v434
        %v756 = vunpack.c.l.b16 %v435
        %v757 = vunpack.c.h.b16 %v435
        %v758 = vunpack.c.l.b16 %v436
        %v759 = vunpack.c.h.b16 %v436
        %v760 = vunpack.c.l.b16 %v437
        %v761 = vunpack.c.h.b16 %v437
        %v762 = vunpack.c.l.b16 %v438
        %v763 = vunpack.c.h.b16 %v438
        %v764 = vunpack.c.l.b16 %v439
        %v765 = vunpack.c.h.b16 %v439
        %v766 = vunpack.c.l.b16 %v440
        %v767 = vunpack.c.h.b16 %v440
        %v768 = vunpack.c.l.b16 %v441
        %v769 = vunpack.c.h.b16 %v441
        %v770 = vunpack.c.l.b16 %v442
        %v771 = vunpack.c.h.b16 %v442
        %v772 = vunpack.c.l.b16 %v443
        %v773 = vunpack.c.h.b16 %v443
        %v774 = vunpack.c.l.b16 %v444
        %v775 = vunpack.c.h.b16 %v444
        %v776 = vunpack.c.l.b16 %v445
        %v777 = vunpack.c.h.b16 %v445
        %v778 = vunpack.c.l.b16 %v446
        %v779 = vunpack.c.h.b16 %v446
        %v780 = vunpack.c.l.b16 %v447
        %v781 = vunpack.c.h.b16 %v447
        %v782 = vunpack.c.l.b16 %v448
        %v783 = vunpack.c.h.b16 %v448
        %v784 = vunpack.c.l.b16 %v449
        %v785 = vunpack.c.h.b16 %v449
        %v786 = vunpack.c.l.b16 %v450
        %v787 = vunpack.c.h.b16 %v450
        %v788 = vunpack.c.l.b16 %v451
        %v789 = vunpack.c.h.b16 %v451
        %v790 = vunpack.c.l.b16 %v452
        %v791 = vunpack.c.h.b16 %v452
        %v792 = vunpack.c.l.b16 %v453
        %v793 = vunpack.c.h.b16 %v453
        %v794 = vunpack.c.l.b16 %v454
        %v795 = vunpack.c.h.b16 %v454
        %v796 = vunpack.c.l.b16 %v455
        %v797 = vunpack.c.h.b16 %v455
        %v798 = vunpack.c.l.b16 %v456
        %v799 = vunpack.c.h.b16 %v456
        %v800 = vunpack.c.l.b16 %v457
        %v801 = vunpack.c.h.b16 %v457
        %v802 = vunpack.c.l.b16 %v458
        %v803 = vunpack.c.h.b16 %v458
        %v804 = vunpack.c.l.b16 %v459
        %v805 = vunpack.c.h.b16 %v459
        %v806 = vunpack.c.l.b16 %v460
        %v807 = vunpack.c.h.b16 %v460
        %v808 = vunpack.c.l.b16 %v461
        %v809 = vunpack.c.h.b16 %v461
        %v810 = vunpack.c.l.b16 %v462
        %v811 = vunpack.c.h.b16 %v462
        %v812 = vunpack.c.l.b16 %v463
        %v813 = vunpack.c.h.b16 %v463
        %v814 = vunpack.c.l.b16 %v464
        %v815 = vunpack.c.h.b16 %v464
        %v816 = vunpack.c.l.b16 %v465
        %v817 = vunpack.c.h.b16 %v465
        %v818 = vunpack.c.l.b16 %v466
        %v819 = vunpack.c.h.b16 %v466
        %v820 = vunpack.c.l.b16 %v467
        %v821 = vunpack.c.h.b16 %v467
        %v822 = vunpack.c.l.b16 %v468
        %v823 = vunpack.c.h.b16 %v468
        %v824 = vunpack.c.l.b16 %v469
        %v825 = vunpack.c.h.b16 %v469
        %v826 = vunpack.c.l.b16 %v470
        %v827 = vunpack.c.h.b16 %v470
        %v828 = vunpack.c.l.b16 %v471
        %v829 = vunpack.c.h.b16 %v471
        %v830 = vunpack.c.l.b16 %v472
        %v831 = vunpack.c.h.b16 %v472
        %v832 = vunpack.c.l.b16 %v473
        %v833 = vunpack.c.h.b16 %v473
        %v834 = vunpack.c.l.b16 %v474
        %v835 = vunpack.c.h.b16 %v474
        %v836 = vunpack.c.l.b16 %v475
        %v837 = vunpack.c.h.b16 %v475
        %v838 = vunpack.c.l.b16 %v476
        %v839 = vunpack.c.h.b16 %v476
        %v840 = vunpack.c.l.b16 %v477
        %v841 = vunpack.c.h.b16 %v477
        %v842 = vunpack.c.l.b16 %v478
        %v843 = vunpack.c.h.b16 %v478
        %v844 = vunpack.c.l.b16 %v479
        %v845 = vunpack.c.h.b16 %v479
        %v846 = vunpack.c.l.b16 %v480
        %v847 = vunpack.c.h.b16 %v480
        %v848 = vunpack.c.l.b16 %v481
        %v849 = vunpack.c.h.b16 %v481
        %v850 = vunpack.c.l.b16 %v482
        %v851 = vunpack.c.h.b16 %v482
        %v852 = vunpack.c.l.b16 %v483
        %v853 = vunpack.c.h.b16 %v483
        %v854 = vunpack.c.l.b16 %v484
        %v855 = vunpack.c.h.b16 %v484
        %v856 = vunpack.c.l.b16 %v485
        %v857 = vunpack.c.h.b16 %v485
        %v858 = vunpack.c.l.b16 %v486
        %v859 = vunpack.c.h.b16 %v486
        %v860 = vunpack.c.l.b16 %v487
        %v861 = vunpack.c.h.b16 %v487
        %v862 = vunpack.c.l.b16 %v488
        %v863 = vunpack.c.h.b16 %v488
        %v864 = vunpack.c.l.b16 %v489
        %v865 = vunpack.c.h.b16 %v489
        %v866 = vunpack.c.l.b16 %v490
        %v867 = vunpack.c.h.b16 %v490
        %v868 = vunpack.c.l.b16 %v491
        %v869 = vunpack.c.h.b16 %v491
        %v870 = vunpack.c.l.b16 %v492
        %v871 = vunpack.c.h.b16 %v492
        %v872 = vunpack.c.l.b16 %v493
        %v873 = vunpack.c.h.b16 %v493
        %v874 = vunpack.c.l.b16 %v494
        %v875 = vunpack.c.h.b16 %v494
        %v876 = vunpack.c.l.b16 %v495
        %v877 = vunpack.c.h.b16 %v495
        %v878 = vunpack.c.l.b16 %v496
        %v879 = vunpack.c.h.b16 %v496
        %v880 = vunpack.c.l.b16 %v497
        %v881 = vunpack.c.h.b16 %v497
        %v882 = vunpack.c.l.b16 %v498
        %v883 = vunpack.c.h.b16 %v498
        %v884 = vunpack.c.l.b16 %v499
        %v885 = vunpack.c.h.b16 %v499
        %v886 = vunpack.c.l.b16 %v500
        %v887 = vunpack.c.h.b16 %v500
        %v888 = vunpack.c.l.b16 %v501
        %v889 = vunpack.c.h.b16 %v501
        %v890 = vunpack.c.l.b16 %v502
        %v891 = vunpack.c.h.b16 %v502
        %v892 = vunpack.c.l.b16 %v503
        %v893 = vunpack.c.h.b16 %v503
        %v894 = vunpack.c.l.b16 %v504
        %v895 = vunpack.c.h.b16 %v504
        %v896 = vunpack.c.l.b16 %v505
        %v897 = vunpack.c.h.b16 %v505
        %v898 = vunpack.c.l.b16 %v506
        %v899 = vunpack.c.h.b16 %v506
        %v900 = vunpack.c.l.b16 %v507
        %v901 = vunpack.c.h.b16 %v507
        %v902 = vunpack.c.l.b16 %v508
        %v903 = vunpack.c.h.b16 %v508
        %v904 = vunpack.c.l.b16 %v509
        %v905 = vunpack.c.h.b16 %v509
        %v906 = vunpack.c.l.b16 %v510
        %v907 = vunpack.c.h.b16 %v510
        %v908 = vunpack.c.l.b16 %v511
        %v909 = vunpack.c.h.b16 %v511
        %v910 = vunpack.c.l.b16 %v512
        %v911 = vunpack.c.h.b16 %v512
        %v912 = vunpack.c.l.b16 %v513
        %v913 = vunpack.c.h.b16 %v513
        %v914 = vunpack.c.l.b16 %v514
        %v915 = vunpack.c.h.b16 %v514
        %v916 = vunpack.c.l.b16 %v515
        %v917 = vunpack.c.h.b16 %v515
        %v918 = vunpack.c.l.b16 %v516
        %v919 = vunpack.c.h.b16 %v516
        %v920 = vunpack.c.l.b16 %v517
        %v921 = vunpack.c.h.b16 %v517
        %v922 = vpack.c.b16 %v670, %v666
        %v923 = vpack.c.b16 %v671, %v667
        %v924 = vpack.c.b16 %v672, %v668
        %v925 = vpack.c.b16 %v673, %v669
        %v926 = vpack.c.b16 %v678, %v674
        %v927 = vpack.c.b16 %v679, %v675
        %v928 = vpack.c.b16 %v680, %v676
        %v929 = vpack.c.b16 %v681, %v677
        %v930 = vpack.c.b16 %v686, %v682
        %v931 = vpack.c.b16 %v687, %v683
        %v932 = vpack.c.b16 %v688, %v684
        %v933 = vpack.c.b16 %v689, %v685
        %v934 = vpack.c.b16 %v694, %v690
        %v935 = vpack.c.b16 %v695, %v691
        %v936 = vpack.c.b16 %v696, %v692
        %v937 = vpack.c.b16 %v697, %v693
        %v938 = vpack.c.b16 %v702, %v698
        %v939 = vpack.c.b16 %v703, %v699
        %v940 = vpack.c.b16 %v704, %v700
        %v941 = vpack.c.b16 %v705, %v701
        %v942 = vpack.c.b16 %v710, %v706
        %v943 = vpack.c.b16 %v711, %v707
        %v944 = vpack.c.b16 %v712, %v708
        %v945 = vpack.c.b16 %v713, %v709
        %v946 = vpack.c.b16 %v718, %v714
        %v947 = vpack.c.b16 %v719, %v715
        %v948 = vpack.c.b16 %v720, %v716
        %v949 = vpack.c.b16 %v721, %v717
        %v950 = vpack.c.b16 %v726, %v722
        %v951 = vpack.c.b16 %v727, %v723
        %v952 = vpack.c.b16 %v728, %v724
        %v953 = vpack.c.b16 %v729, %v725
        %v954 = vpack.c.b16 %v734, %v730
        %v955 = vpack.c.b16 %v735, %v731
        %v956 = vpack.c.b16 %v736, %v732
        %v957 = vpack.c.b16 %v737, %v733
        %v958 = vpack.c.b16 %v742, %v738
        %v959 = vpack.c.b16 %v743, %v739
        %v960 = vpack.c.b16 %v744, %v740
        %v961 = vpack.c.b16 %v745, %v741
        %v962 = vpack.c.b16 %v750, %v746
        %v963 = vpack.c.b16 %v751, %v747
        %v964 = vpack.c.b16 %v752, %v748
        %v965 = vpack.c.b16 %v753, %v749
        %v966 = vpack.c.b16 %v758, %v754
        %v967 = vpack.c.b16 %v759, %v755
        %v968 = vpack.c.b16 %v760, %v756
        %v969 = vpack.c.b16 %v761, %v757
        %v970 = vpack.c.b16 %v766, %v762
        %v971 = vpack.c.b16 %v767, %v763
        %v972 = vpack.c.b16 %v768, %v764
        %v973 = vpack.c.b16 %v769, %v765
        %v974 = vpack.c.b16 %v774, %v770
        %v975 = vpack.c.b16 %v775, %v771
        %v976 = vpack.c.b16 %v776, %v772
        %v977 = vpack.c.b16 %v777, %v773
        %v978 = vpack.c.b16 %v782, %v778
        %v979 = vpack.c.b16 %v783, %v779
        %v980 = vpack.c.b16 %v784, %v780
        %v981 = vpack.c.b16 %v785, %v781
        %v982 = vpack.c.b16 %v790, %v786
        %v983 = vpack.c.b16 %v791, %v787
        %v984 = vpack.c.b16 %v792, %v788
        %v985 = vpack.c.b16 %v793, %v789
        %v986 = vpack.c.b16 %v798, %v794
        %v987 = vpack.c.b16 %v799, %v795
        %v988 = vpack.c.b16 %v800, %v796
        %v989 = vpack.c.b16 %v801, %v797
        %v990 = vpack.c.b16 %v806, %v802
        %v991 = vpack.c.b16 %v807, %v803
        %v992 = vpack.c.b16 %v808, %v804
        %v993 = vpack.c.b16 %v809, %v805
        %v994 = vpack.c.b16 %v814, %v810
        %v995 = vpack.c.b16 %v815, %v811
        %v996 = vpack.c.b16 %v816, %v812
        %v997 = vpack.c.b16 %v817, %v813
        %v998 = vpack.c.b16 %v822, %v818
        %v999 = vpack.c.b16 %v823, %v819
        %v1000 = vpack.c.b16 %v824, %v820
        %v1001 = vpack.c.b16 %v825, %v821
        %v1002 = vpack.c.b16 %v830, %v826
        %v1003 = vpack.c.b16 %v831, %v827
        %v1004 = vpack.c.b16 %v832, %v828
        %v1005 = vpack.c.b16 %v833, %v829
        %v1006 = vpack.c.b16 %v838, %v834
        %v1007 = vpack.c.b16 %v839, %v835
        %v1008 = vpack.c.b16 %v840, %v836
        %v1009 = vpack.c.b16 %v841, %v837
        %v1010 = vpack.c.b16 %v846, %v842
        %v1011 = vpack.c.b16 %v847, %v843
        %v1012 = vpack.c.b16 %v848, %v844
        %v1013 = vpack.c.b16 %v849, %v845
        %v1014 = vpack.c.b16 %v854, %v850
        %v1015 = vpack.c.b16 %v855, %v851
        %v1016 = vpack.c.b16 %v856, %v852
        %v1017 = vpack.c.b16 %v857, %v853
        %v1018 = vpack.c.b16 %v862, %v858
        %v1019 = vpack.c.b16 %v863, %v859
        %v1020 = vpack.c.b16 %v864, %v860
        %v1021 = vpack.c.b16 %v865, %v861
        %v1022 = vpack.c.b16 %v870, %v866
        %v1023 = vpack.c.b16 %v871, %v867
        %v1024 = vpack.c.b16 %v872, %v868
        %v1025 = vpack.c.b16 %v873, %v869
        %v1026 = vpack.c.b16 %v878, %v874
        %v1027 = vpack.c.b16 %v879, %v875
        %v1028 = vpack.c.b16 %v880, %v876
        %v1029 = vpack.c.b16 %v881, %v877
        %v1030 = vpack.c.b16 %v886, %v882
        %v1031 = vpack.c.b16 %v887, %v883
        %v1032 = vpack.c.b16 %v888, %v884
        %v1033 = vpack.c.b16 %v889, %v885
        %v1034 = vpack.c.b16 %v894, %v890
        %v1035 = vpack.c.b16 %v895, %v891
        %v1036 = vpack.c.b16 %v896, %v892
        %v1037 = vpack.c.b16 %v897, %v893
        %v1038 = vpack.c.b16 %v902, %v898
        %v1039 = vpack.c.b16 %v903, %v899
        %v1040 = vpack.c.b16 %v904, %v900
        %v1041 = vpack.c.b16 %v905, %v901
        %v1042 = vpack.c.b16 %v910, %v906
        %v1043 = vpack.c.b16 %v911, %v907
        %v1044 = vpack.c.b16 %v912, %v908
        %v1045 = vpack.c.b16 %v913, %v909
        %v1046 = vpack.c.b16 %v918, %v914
        %v1047 = vpack.c.b16 %v919, %v915
        %v1048 = vpack.c.b16 %v920, %v916
        %v1049 = vpack.c.b16 %v921, %v917
        %1178 = vmatpush.bf16.msra.mxu0 %v950
        %1179 = vmatpush.bf16.msra.mxu0 %v946
        %1180 = vmatpush.bf16.msra.mxu0 %v942
        %1181 = vmatpush.bf16.msra.mxu0 %v938
        %1182 = vmatpush.bf16.msra.mxu0 %v934
        %1183 = vmatpush.bf16.msra.mxu0 %v930
        %1184 = vmatpush.bf16.msra.mxu0 %v926
        %1185 = vmatpush.bf16.msra.mxu0 %v922
        %1186 = vmatmul.bf16.gmra.mxu0 %v530
        %v1187 = vpop.f32.mrf.mxu0
        %v1188 = vadd.f32 %v520, %v1187
        %v1189 = vpop.f32.mrf.mxu0
        %1190 = vdwg.mxu0
        %1191 = vmatpush.bf16.msra.mxu0 %v982
        %1192 = vmatpush.bf16.msra.mxu0 %v978
        %1193 = vmatpush.bf16.msra.mxu0 %v974
        %1194 = vmatpush.bf16.msra.mxu0 %v970
        %1195 = vmatpush.bf16.msra.mxu0 %v966
        %1196 = vmatpush.bf16.msra.mxu0 %v962
        %1197 = vmatpush.bf16.msra.mxu0 %v958
        %1198 = vmatpush.bf16.msra.mxu0 %v954
        %1199 = vmatmul.bf16.gmra.mxu0 %v531
        %v1200 = vpop.f32.mrf.mxu0
        %v1201 = vadd.f32 %v1188, %v1200
        %v1202 = vpop.f32.mrf.mxu0
        %1203 = vdwg.mxu0
        %1204 = vmatpush.bf16.msra.mxu0 %v1014
        %1205 = vmatpush.bf16.msra.mxu0 %v1010
        %1206 = vmatpush.bf16.msra.mxu0 %v1006
        %1207 = vmatpush.bf16.msra.mxu0 %v1002
        %1208 = vmatpush.bf16.msra.mxu0 %v998
        %1209 = vmatpush.bf16.msra.mxu0 %v994
        %1210 = vmatpush.bf16.msra.mxu0 %v990
        %1211 = vmatpush.bf16.msra.mxu0 %v986
        %1212 = vmatmul.bf16.gmra.mxu0 %v532
        %v1213 = vpop.f32.mrf.mxu0
        %v1214 = vadd.f32 %v1201, %v1213
        %v1215 = vpop.f32.mrf.mxu0
        %1216 = vdwg.mxu0
        %1217 = vmatpush.bf16.msra.mxu0 %v1046
        %1218 = vmatpush.bf16.msra.mxu0 %v1042
        %1219 = vmatpush.bf16.msra.mxu0 %v1038
        %1220 = vmatpush.bf16.msra.mxu0 %v1034
        %1221 = vmatpush.bf16.msra.mxu0 %v1030
        %1222 = vmatpush.bf16.msra.mxu0 %v1026
        %1223 = vmatpush.bf16.msra.mxu0 %v1022
        %1224 = vmatpush.bf16.msra.mxu0 %v1018
        %1225 = vmatmul.bf16.gmra.mxu0 %v533
        %v1226 = vpop.f32.mrf.mxu0
        %v1227 = vadd.f32 %v1214, %v1226
        %v1228 = vpop.f32.mrf.mxu0
        %1229 = vdwg.mxu0
        %1230 = vmatpush.bf16.msra.mxu0 %v951
        %1231 = vmatpush.bf16.msra.mxu0 %v947
        %1232 = vmatpush.bf16.msra.mxu0 %v943
        %1233 = vmatpush.bf16.msra.mxu0 %v939
        %1234 = vmatpush.bf16.msra.mxu0 %v935
        %1235 = vmatpush.bf16.msra.mxu0 %v931
        %1236 = vmatpush.bf16.msra.mxu0 %v927
        %1237 = vmatpush.bf16.msra.mxu0 %v923
        %1238 = vmatmul.bf16.gmra.mxu0 %v530
        %v1239 = vpop.f32.mrf.mxu0
        %v1240 = vadd.f32 %v521, %v1239
        %v1241 = vpop.f32.mrf.mxu0
        %1242 = vdwg.mxu0
        %1243 = vmatpush.bf16.msra.mxu0 %v983
        %1244 = vmatpush.bf16.msra.mxu0 %v979
        %1245 = vmatpush.bf16.msra.mxu0 %v975
        %1246 = vmatpush.bf16.msra.mxu0 %v971
        %1247 = vmatpush.bf16.msra.mxu0 %v967
        %1248 = vmatpush.bf16.msra.mxu0 %v963
        %1249 = vmatpush.bf16.msra.mxu0 %v959
        %1250 = vmatpush.bf16.msra.mxu0 %v955
        %1251 = vmatmul.bf16.gmra.mxu0 %v531
        %v1252 = vpop.f32.mrf.mxu0
        %v1253 = vadd.f32 %v1240, %v1252
        %v1254 = vpop.f32.mrf.mxu0
        %1255 = vdwg.mxu0
        %1256 = vmatpush.bf16.msra.mxu0 %v1015
        %1257 = vmatpush.bf16.msra.mxu0 %v1011
        %1258 = vmatpush.bf16.msra.mxu0 %v1007
        %1259 = vmatpush.bf16.msra.mxu0 %v1003
        %1260 = vmatpush.bf16.msra.mxu0 %v999
        %1261 = vmatpush.bf16.msra.mxu0 %v995
        %1262 = vmatpush.bf16.msra.mxu0 %v991
        %1263 = vmatpush.bf16.msra.mxu0 %v987
        %1264 = vmatmul.bf16.gmra.mxu0 %v532
        %v1265 = vpop.f32.mrf.mxu0
        %v1266 = vadd.f32 %v1253, %v1265
        %v1267 = vpop.f32.mrf.mxu0
        %1268 = vdwg.mxu0
        %1269 = vmatpush.bf16.msra.mxu0 %v1047
        %1270 = vmatpush.bf16.msra.mxu0 %v1043
        %1271 = vmatpush.bf16.msra.mxu0 %v1039
        %1272 = vmatpush.bf16.msra.mxu0 %v1035
        %1273 = vmatpush.bf16.msra.mxu0 %v1031
        %1274 = vmatpush.bf16.msra.mxu0 %v1027
        %1275 = vmatpush.bf16.msra.mxu0 %v1023
        %1276 = vmatpush.bf16.msra.mxu0 %v1019
        %1277 = vmatmul.bf16.gmra.mxu0 %v533
        %v1278 = vpop.f32.mrf.mxu0
        %v1279 = vadd.f32 %v1266, %v1278
        %v1280 = vpop.f32.mrf.mxu0
        %1281 = vdwg.mxu0
        %1282 = vmatpush.bf16.msra.mxu0 %v952
        %1283 = vmatpush.bf16.msra.mxu0 %v948
        %1284 = vmatpush.bf16.msra.mxu0 %v944
        %1285 = vmatpush.bf16.msra.mxu0 %v940
        %1286 = vmatpush.bf16.msra.mxu0 %v936
        %1287 = vmatpush.bf16.msra.mxu0 %v932
        %1288 = vmatpush.bf16.msra.mxu0 %v928
        %1289 = vmatpush.bf16.msra.mxu0 %v924
        %1290 = vmatmul.bf16.gmra.mxu0 %v530
        %v1291 = vpop.f32.mrf.mxu0
        %v1292 = vadd.f32 %v522, %v1291
        %v1293 = vpop.f32.mrf.mxu0
        %1294 = vdwg.mxu0
        %1295 = vmatpush.bf16.msra.mxu0 %v984
        %1296 = vmatpush.bf16.msra.mxu0 %v980
        %1297 = vmatpush.bf16.msra.mxu0 %v976
        %1298 = vmatpush.bf16.msra.mxu0 %v972
        %1299 = vmatpush.bf16.msra.mxu0 %v968
        %1300 = vmatpush.bf16.msra.mxu0 %v964
        %1301 = vmatpush.bf16.msra.mxu0 %v960
        %1302 = vmatpush.bf16.msra.mxu0 %v956
        %1303 = vmatmul.bf16.gmra.mxu0 %v531
        %v1304 = vpop.f32.mrf.mxu0
        %v1305 = vadd.f32 %v1292, %v1304
        %v1306 = vpop.f32.mrf.mxu0
        %1307 = vdwg.mxu0
        %1308 = vmatpush.bf16.msra.mxu0 %v1016
        %1309 = vmatpush.bf16.msra.mxu0 %v1012
        %1310 = vmatpush.bf16.msra.mxu0 %v1008
        %1311 = vmatpush.bf16.msra.mxu0 %v1004
        %1312 = vmatpush.bf16.msra.mxu0 %v1000
        %1313 = vmatpush.bf16.msra.mxu0 %v996
        %1314 = vmatpush.bf16.msra.mxu0 %v992
        %1315 = vmatpush.bf16.msra.mxu0 %v988
        %1316 = vmatmul.bf16.gmra.mxu0 %v532
        %v1317 = vpop.f32.mrf.mxu0
        %v1318 = vadd.f32 %v1305, %v1317
        %v1319 = vpop.f32.mrf.mxu0
        %1320 = vdwg.mxu0
        %1321 = vmatpush.bf16.msra.mxu0 %v1048
        %1322 = vmatpush.bf16.msra.mxu0 %v1044
        %1323 = vmatpush.bf16.msra.mxu0 %v1040
        %1324 = vmatpush.bf16.msra.mxu0 %v1036
        %1325 = vmatpush.bf16.msra.mxu0 %v1032
        %1326 = vmatpush.bf16.msra.mxu0 %v1028
        %1327 = vmatpush.bf16.msra.mxu0 %v1024
        %1328 = vmatpush.bf16.msra.mxu0 %v1020
        %1329 = vmatmul.bf16.gmra.mxu0 %v533
        %v1330 = vpop.f32.mrf.mxu0
        %v1331 = vadd.f32 %v1318, %v1330
        %v1332 = vpop.f32.mrf.mxu0
        %1333 = vdwg.mxu0
        %1334 = vmatpush.bf16.msra.mxu0 %v953
        %1335 = vmatpush.bf16.msra.mxu0 %v949
        %1336 = vmatpush.bf16.msra.mxu0 %v945
        %1337 = vmatpush.bf16.msra.mxu0 %v941
        %1338 = vmatpush.bf16.msra.mxu0 %v937
        %1339 = vmatpush.bf16.msra.mxu0 %v933
        %1340 = vmatpush.bf16.msra.mxu0 %v929
        %1341 = vmatpush.bf16.msra.mxu0 %v925
        %1342 = vmatmul.bf16.gmra.mxu0 %v530
        %v1343 = vpop.f32.mrf.mxu0
        %v1344 = vadd.f32 %v523, %v1343
        %v1345 = vpop.f32.mrf.mxu0
        %1346 = vdwg.mxu0
        %1347 = vmatpush.bf16.msra.mxu0 %v985
        %1348 = vmatpush.bf16.msra.mxu0 %v981
        %1349 = vmatpush.bf16.msra.mxu0 %v977
        %1350 = vmatpush.bf16.msra.mxu0 %v973
        %1351 = vmatpush.bf16.msra.mxu0 %v969
        %1352 = vmatpush.bf16.msra.mxu0 %v965
        %1353 = vmatpush.bf16.msra.mxu0 %v961
        %1354 = vmatpush.bf16.msra.mxu0 %v957
        %1355 = vmatmul.bf16.gmra.mxu0 %v531
        %v1356 = vpop.f32.mrf.mxu0
        %v1357 = vadd.f32 %v1344, %v1356
        %v1358 = vpop.f32.mrf.mxu0
        %1359 = vdwg.mxu0
        %1360 = vmatpush.bf16.msra.mxu0 %v1017
        %1361 = vmatpush.bf16.msra.mxu0 %v1013
        %1362 = vmatpush.bf16.msra.mxu0 %v1009
        %1363 = vmatpush.bf16.msra.mxu0 %v1005
        %1364 = vmatpush.bf16.msra.mxu0 %v1001
        %1365 = vmatpush.bf16.msra.mxu0 %v997
        %1366 = vmatpush.bf16.msra.mxu0 %v993
        %1367 = vmatpush.bf16.msra.mxu0 %v989
        %1368 = vmatmul.bf16.gmra.mxu0 %v532
        %v1369 = vpop.f32.mrf.mxu0
        %v1370 = vadd.f32 %v1357, %v1369
        %v1371 = vpop.f32.mrf.mxu0
        %1372 = vdwg.mxu0
        %1373 = vmatpush.bf16.msra.mxu0 %v1049
        %1374 = vmatpush.bf16.msra.mxu0 %v1045
        %1375 = vmatpush.bf16.msra.mxu0 %v1041
        %1376 = vmatpush.bf16.msra.mxu0 %v1037
        %1377 = vmatpush.bf16.msra.mxu0 %v1033
        %1378 = vmatpush.bf16.msra.mxu0 %v1029
        %1379 = vmatpush.bf16.msra.mxu0 %v1025
        %1380 = vmatpush.bf16.msra.mxu0 %v1021
        %1381 = vmatmul.bf16.gmra.mxu0 %v533
        %v1382 = vpop.f32.mrf.mxu0
        %v1383 = vadd.f32 %v1370, %v1382
        %v1384 = vpop.f32.mrf.mxu0
        %1385 = vdwg.mxu0
        %v1386 = vmax.f32 %v1227, 0.0
        %v1387 = vmax.f32 %v1279, 0.0
        %v1388 = vmax.f32 %v1331, 0.0
        %v1389 = vmax.f32 %v1383, 0.0
        %v1390 = vpack.c.bf16 %v1386, %v1386
        %v1391 = vpack.c.bf16 %v1387, %v1387
        %v1392 = vpack.c.bf16 %v1388, %v1388
        %v1393 = vpack.c.bf16 %v1389, %v1389
        %v1394 = vld [vmem:[#allocation2] sm:$0xff]
        %v1395 = vld [vmem:[#allocation2 + $0x8] sm:$0xff]
        %v1396 = vld [vmem:[#allocation2 + $0x10] sm:$0xff]
        %v1397 = vld [vmem:[#allocation2 + $0x18] sm:$0xff]
        %v1398 = vld [vmem:[%s325] sm:$0xff]
        %v1399 = vld [vmem:[%s325 + $0x8] sm:$0xff]
        %v1400 = vld [vmem:[%s325 + $0x10] sm:$0xff]
        %v1401 = vld [vmem:[%s325 + $0x18] sm:$0xff]
        %v1402 = vld [vmem:[%s325 + $0x20] sm:$0xff]
        %v1403 = vld [vmem:[%s325 + $0x28] sm:$0xff]
        %v1404 = vld [vmem:[%s325 + $0x30] sm:$0xff]
        %v1405 = vld [vmem:[%s325 + $0x38] sm:$0xff]
        %v1406 = vld [vmem:[%s325 + $0x40] sm:$0xff]
        %v1407 = vld [vmem:[%s325 + $0x48] sm:$0xff]
        %v1408 = vld [vmem:[%s325 + $0x50] sm:$0xff]
        %v1409 = vld [vmem:[%s325 + $0x58] sm:$0xff]
        %v1410 = vld [vmem:[%s325 + $0x60] sm:$0xff]
        %v1411 = vld [vmem:[%s325 + $0x68] sm:$0xff]
        %v1412 = vld [vmem:[%s325 + $0x70] sm:$0xff]
        %v1413 = vld [vmem:[%s325 + $0x78] sm:$0xff]
        %v1414 = vld [vmem:[%s325 + $0x80] sm:$0xff]
        %v1415 = vld [vmem:[%s325 + $0x88] sm:$0xff]
        %v1416 = vld [vmem:[%s325 + $0x90] sm:$0xff]
        %v1417 = vld [vmem:[%s325 + $0x98] sm:$0xff]
        %v1418 = vld [vmem:[%s325 + $0xa0] sm:$0xff]
        %v1419 = vld [vmem:[%s325 + $0xa8] sm:$0xff]
        %v1420 = vld [vmem:[%s325 + $0xb0] sm:$0xff]
        %v1421 = vld [vmem:[%s325 + $0xb8] sm:$0xff]
        %v1422 = vld [vmem:[%s325 + $0xc0] sm:$0xff]
        %v1423 = vld [vmem:[%s325 + $0xc8] sm:$0xff]
        %v1424 = vld [vmem:[%s325 + $0xd0] sm:$0xff]
        %v1425 = vld [vmem:[%s325 + $0xd8] sm:$0xff]
        %v1426 = vld [vmem:[%s325 + $0xe0] sm:$0xff]
        %v1427 = vld [vmem:[%s325 + $0xe8] sm:$0xff]
        %v1428 = vld [vmem:[%s325 + $0xf0] sm:$0xff]
        %v1429 = vld [vmem:[%s325 + $0xf8] sm:$0xff]
        %v1430 = vld [vmem:[%s325 + $0x100] sm:$0xff]
        %v1431 = vld [vmem:[%s325 + $0x108] sm:$0xff]
        %v1432 = vld [vmem:[%s325 + $0x110] sm:$0xff]
        %v1433 = vld [vmem:[%s325 + $0x118] sm:$0xff]
        %v1434 = vld [vmem:[%s325 + $0x120] sm:$0xff]
        %v1435 = vld [vmem:[%s325 + $0x128] sm:$0xff]
        %v1436 = vld [vmem:[%s325 + $0x130] sm:$0xff]
        %v1437 = vld [vmem:[%s325 + $0x138] sm:$0xff]
        %v1438 = vld [vmem:[%s325 + $0x140] sm:$0xff]
        %v1439 = vld [vmem:[%s325 + $0x148] sm:$0xff]
        %v1440 = vld [vmem:[%s325 + $0x150] sm:$0xff]
        %v1441 = vld [vmem:[%s325 + $0x158] sm:$0xff]
        %v1442 = vld [vmem:[%s325 + $0x160] sm:$0xff]
        %v1443 = vld [vmem:[%s325 + $0x168] sm:$0xff]
        %v1444 = vld [vmem:[%s325 + $0x170] sm:$0xff]
        %v1445 = vld [vmem:[%s325 + $0x178] sm:$0xff]
        %v1446 = vld [vmem:[%s325 + $0x180] sm:$0xff]
        %v1447 = vld [vmem:[%s325 + $0x188] sm:$0xff]
        %v1448 = vld [vmem:[%s325 + $0x190] sm:$0xff]
        %v1449 = vld [vmem:[%s325 + $0x198] sm:$0xff]
        %v1450 = vld [vmem:[%s325 + $0x1a0] sm:$0xff]
        %v1451 = vld [vmem:[%s325 + $0x1a8] sm:$0xff]
        %v1452 = vld [vmem:[%s325 + $0x1b0] sm:$0xff]
        %v1453 = vld [vmem:[%s325 + $0x1b8] sm:$0xff]
        %v1454 = vld [vmem:[%s325 + $0x1c0] sm:$0xff]
        %v1455 = vld [vmem:[%s325 + $0x1c8] sm:$0xff]
        %v1456 = vld [vmem:[%s325 + $0x1d0] sm:$0xff]
        %v1457 = vld [vmem:[%s325 + $0x1d8] sm:$0xff]
        %v1458 = vld [vmem:[%s325 + $0x1e0] sm:$0xff]
        %v1459 = vld [vmem:[%s325 + $0x1e8] sm:$0xff]
        %v1460 = vld [vmem:[%s325 + $0x1f0] sm:$0xff]
        %v1461 = vld [vmem:[%s325 + $0x1f8] sm:$0xff]
        %v1462 = vld [vmem:[%s325 + $0x200] sm:$0xff]
        %v1463 = vld [vmem:[%s325 + $0x208] sm:$0xff]
        %v1464 = vld [vmem:[%s325 + $0x210] sm:$0xff]
        %v1465 = vld [vmem:[%s325 + $0x218] sm:$0xff]
        %v1466 = vld [vmem:[%s325 + $0x220] sm:$0xff]
        %v1467 = vld [vmem:[%s325 + $0x228] sm:$0xff]
        %v1468 = vld [vmem:[%s325 + $0x230] sm:$0xff]
        %v1469 = vld [vmem:[%s325 + $0x238] sm:$0xff]
        %v1470 = vld [vmem:[%s325 + $0x240] sm:$0xff]
        %v1471 = vld [vmem:[%s325 + $0x248] sm:$0xff]
        %v1472 = vld [vmem:[%s325 + $0x250] sm:$0xff]
        %v1473 = vld [vmem:[%s325 + $0x258] sm:$0xff]
        %v1474 = vld [vmem:[%s325 + $0x260] sm:$0xff]
        %v1475 = vld [vmem:[%s325 + $0x268] sm:$0xff]
        %v1476 = vld [vmem:[%s325 + $0x270] sm:$0xff]
        %v1477 = vld [vmem:[%s325 + $0x278] sm:$0xff]
        %v1478 = vld [vmem:[%s325 + $0x280] sm:$0xff]
        %v1479 = vld [vmem:[%s325 + $0x288] sm:$0xff]
        %v1480 = vld [vmem:[%s325 + $0x290] sm:$0xff]
        %v1481 = vld [vmem:[%s325 + $0x298] sm:$0xff]
        %v1482 = vld [vmem:[%s325 + $0x2a0] sm:$0xff]
        %v1483 = vld [vmem:[%s325 + $0x2a8] sm:$0xff]
        %v1484 = vld [vmem:[%s325 + $0x2b0] sm:$0xff]
        %v1485 = vld [vmem:[%s325 + $0x2b8] sm:$0xff]
        %v1486 = vld [vmem:[%s325 + $0x2c0] sm:$0xff]
        %v1487 = vld [vmem:[%s325 + $0x2c8] sm:$0xff]
        %v1488 = vld [vmem:[%s325 + $0x2d0] sm:$0xff]
        %v1489 = vld [vmem:[%s325 + $0x2d8] sm:$0xff]
        %v1490 = vld [vmem:[%s325 + $0x2e0] sm:$0xff]
        %v1491 = vld [vmem:[%s325 + $0x2e8] sm:$0xff]
        %v1492 = vld [vmem:[%s325 + $0x2f0] sm:$0xff]
        %v1493 = vld [vmem:[%s325 + $0x2f8] sm:$0xff]
        %v1494 = vld [vmem:[%s325 + $0x300] sm:$0xff]
        %v1495 = vld [vmem:[%s325 + $0x308] sm:$0xff]
        %v1496 = vld [vmem:[%s325 + $0x310] sm:$0xff]
        %v1497 = vld [vmem:[%s325 + $0x318] sm:$0xff]
        %v1498 = vld [vmem:[%s325 + $0x320] sm:$0xff]
        %v1499 = vld [vmem:[%s325 + $0x328] sm:$0xff]
        %v1500 = vld [vmem:[%s325 + $0x330] sm:$0xff]
        %v1501 = vld [vmem:[%s325 + $0x338] sm:$0xff]
        %v1502 = vld [vmem:[%s325 + $0x340] sm:$0xff]
        %v1503 = vld [vmem:[%s325 + $0x348] sm:$0xff]
        %v1504 = vld [vmem:[%s325 + $0x350] sm:$0xff]
        %v1505 = vld [vmem:[%s325 + $0x358] sm:$0xff]
        %v1506 = vld [vmem:[%s325 + $0x360] sm:$0xff]
        %v1507 = vld [vmem:[%s325 + $0x368] sm:$0xff]
        %v1508 = vld [vmem:[%s325 + $0x370] sm:$0xff]
        %v1509 = vld [vmem:[%s325 + $0x378] sm:$0xff]
        %v1510 = vld [vmem:[%s325 + $0x380] sm:$0xff]
        %v1511 = vld [vmem:[%s325 + $0x388] sm:$0xff]
        %v1512 = vld [vmem:[%s325 + $0x390] sm:$0xff]
        %v1513 = vld [vmem:[%s325 + $0x398] sm:$0xff]
        %v1514 = vld [vmem:[%s325 + $0x3a0] sm:$0xff]
        %v1515 = vld [vmem:[%s325 + $0x3a8] sm:$0xff]
        %v1516 = vld [vmem:[%s325 + $0x3b0] sm:$0xff]
        %v1517 = vld [vmem:[%s325 + $0x3b8] sm:$0xff]
        %v1518 = vld [vmem:[%s325 + $0x3c0] sm:$0xff]
        %v1519 = vld [vmem:[%s325 + $0x3c8] sm:$0xff]
        %v1520 = vld [vmem:[%s325 + $0x3d0] sm:$0xff]
        %v1521 = vld [vmem:[%s325 + $0x3d8] sm:$0xff]
        %v1522 = vld [vmem:[%s325 + $0x3e0] sm:$0xff]
        %v1523 = vld [vmem:[%s325 + $0x3e8] sm:$0xff]
        %v1524 = vld [vmem:[%s325 + $0x3f0] sm:$0xff]
        %v1525 = vld [vmem:[%s325 + $0x3f8] sm:$0xff]
        %v1526 = vld [vmem:[%s325 + $0x400] sm:$0xff]
        %v1527 = vld [vmem:[%s325 + $0x408] sm:$0xff]
        %v1528 = vld [vmem:[%s325 + $0x410] sm:$0xff]
        %v1529 = vld [vmem:[%s325 + $0x418] sm:$0xff]
        %v1530 = vld [vmem:[%s325 + $0x420] sm:$0xff]
        %v1531 = vld [vmem:[%s325 + $0x428] sm:$0xff]
        %v1532 = vld [vmem:[%s325 + $0x430] sm:$0xff]
        %v1533 = vld [vmem:[%s325 + $0x438] sm:$0xff]
        %v1534 = vld [vmem:[%s325 + $0x440] sm:$0xff]
        %v1535 = vld [vmem:[%s325 + $0x448] sm:$0xff]
        %v1536 = vld [vmem:[%s325 + $0x450] sm:$0xff]
        %v1537 = vld [vmem:[%s325 + $0x458] sm:$0xff]
        %v1538 = vld [vmem:[%s325 + $0x460] sm:$0xff]
        %v1539 = vld [vmem:[%s325 + $0x468] sm:$0xff]
        %v1540 = vld [vmem:[%s325 + $0x470] sm:$0xff]
        %v1541 = vld [vmem:[%s325 + $0x478] sm:$0xff]
        %v1542 = vld [vmem:[%s325 + $0x480] sm:$0xff]
        %v1543 = vld [vmem:[%s325 + $0x488] sm:$0xff]
        %v1544 = vld [vmem:[%s325 + $0x490] sm:$0xff]
        %v1545 = vld [vmem:[%s325 + $0x498] sm:$0xff]
        %v1546 = vld [vmem:[%s325 + $0x4a0] sm:$0xff]
        %v1547 = vld [vmem:[%s325 + $0x4a8] sm:$0xff]
        %v1548 = vld [vmem:[%s325 + $0x4b0] sm:$0xff]
        %v1549 = vld [vmem:[%s325 + $0x4b8] sm:$0xff]
        %v1550 = vld [vmem:[%s325 + $0x4c0] sm:$0xff]
        %v1551 = vld [vmem:[%s325 + $0x4c8] sm:$0xff]
        %v1552 = vld [vmem:[%s325 + $0x4d0] sm:$0xff]
        %v1553 = vld [vmem:[%s325 + $0x4d8] sm:$0xff]
        %v1554 = vld [vmem:[%s325 + $0x4e0] sm:$0xff]
        %v1555 = vld [vmem:[%s325 + $0x4e8] sm:$0xff]
        %v1556 = vld [vmem:[%s325 + $0x4f0] sm:$0xff]
        %v1557 = vld [vmem:[%s325 + $0x4f8] sm:$0xff]
        %v1558 = vld [vmem:[%s325 + $0x500] sm:$0xff]
        %v1559 = vld [vmem:[%s325 + $0x508] sm:$0xff]
        %v1560 = vld [vmem:[%s325 + $0x510] sm:$0xff]
        %v1561 = vld [vmem:[%s325 + $0x518] sm:$0xff]
        %v1562 = vld [vmem:[%s325 + $0x520] sm:$0xff]
        %v1563 = vld [vmem:[%s325 + $0x528] sm:$0xff]
        %v1564 = vld [vmem:[%s325 + $0x530] sm:$0xff]
        %v1565 = vld [vmem:[%s325 + $0x538] sm:$0xff]
        %v1566 = vld [vmem:[%s325 + $0x540] sm:$0xff]
        %v1567 = vld [vmem:[%s325 + $0x548] sm:$0xff]
        %v1568 = vld [vmem:[%s325 + $0x550] sm:$0xff]
        %v1569 = vld [vmem:[%s325 + $0x558] sm:$0xff]
        %v1570 = vld [vmem:[%s325 + $0x560] sm:$0xff]
        %v1571 = vld [vmem:[%s325 + $0x568] sm:$0xff]
        %v1572 = vld [vmem:[%s325 + $0x570] sm:$0xff]
        %v1573 = vld [vmem:[%s325 + $0x578] sm:$0xff]
        %v1574 = vld [vmem:[%s325 + $0x580] sm:$0xff]
        %v1575 = vld [vmem:[%s325 + $0x588] sm:$0xff]
        %v1576 = vld [vmem:[%s325 + $0x590] sm:$0xff]
        %v1577 = vld [vmem:[%s325 + $0x598] sm:$0xff]
        %v1578 = vld [vmem:[%s325 + $0x5a0] sm:$0xff]
        %v1579 = vld [vmem:[%s325 + $0x5a8] sm:$0xff]
        %v1580 = vld [vmem:[%s325 + $0x5b0] sm:$0xff]
        %v1581 = vld [vmem:[%s325 + $0x5b8] sm:$0xff]
        %v1582 = vld [vmem:[%s325 + $0x5c0] sm:$0xff]
        %v1583 = vld [vmem:[%s325 + $0x5c8] sm:$0xff]
        %v1584 = vld [vmem:[%s325 + $0x5d0] sm:$0xff]
        %v1585 = vld [vmem:[%s325 + $0x5d8] sm:$0xff]
        %v1586 = vld [vmem:[%s325 + $0x5e0] sm:$0xff]
        %v1587 = vld [vmem:[%s325 + $0x5e8] sm:$0xff]
        %v1588 = vld [vmem:[%s325 + $0x5f0] sm:$0xff]
        %v1589 = vld [vmem:[%s325 + $0x5f8] sm:$0xff]
        %v1590 = vld [vmem:[%s325 + $0x600] sm:$0xff]
        %v1591 = vld [vmem:[%s325 + $0x608] sm:$0xff]
        %v1592 = vld [vmem:[%s325 + $0x610] sm:$0xff]
        %v1593 = vld [vmem:[%s325 + $0x618] sm:$0xff]
        %v1594 = vld [vmem:[%s325 + $0x620] sm:$0xff]
        %v1595 = vld [vmem:[%s325 + $0x628] sm:$0xff]
        %v1596 = vld [vmem:[%s325 + $0x630] sm:$0xff]
        %v1597 = vld [vmem:[%s325 + $0x638] sm:$0xff]
        %v1598 = vld [vmem:[%s325 + $0x640] sm:$0xff]
        %v1599 = vld [vmem:[%s325 + $0x648] sm:$0xff]
        %v1600 = vld [vmem:[%s325 + $0x650] sm:$0xff]
        %v1601 = vld [vmem:[%s325 + $0x658] sm:$0xff]
        %v1602 = vld [vmem:[%s325 + $0x660] sm:$0xff]
        %v1603 = vld [vmem:[%s325 + $0x668] sm:$0xff]
        %v1604 = vld [vmem:[%s325 + $0x670] sm:$0xff]
        %v1605 = vld [vmem:[%s325 + $0x678] sm:$0xff]
        %v1606 = vld [vmem:[%s325 + $0x680] sm:$0xff]
        %v1607 = vld [vmem:[%s325 + $0x688] sm:$0xff]
        %v1608 = vld [vmem:[%s325 + $0x690] sm:$0xff]
        %v1609 = vld [vmem:[%s325 + $0x698] sm:$0xff]
        %v1610 = vld [vmem:[%s325 + $0x6a0] sm:$0xff]
        %v1611 = vld [vmem:[%s325 + $0x6a8] sm:$0xff]
        %v1612 = vld [vmem:[%s325 + $0x6b0] sm:$0xff]
        %v1613 = vld [vmem:[%s325 + $0x6b8] sm:$0xff]
        %v1614 = vld [vmem:[%s325 + $0x6c0] sm:$0xff]
        %v1615 = vld [vmem:[%s325 + $0x6c8] sm:$0xff]
        %v1616 = vld [vmem:[%s325 + $0x6d0] sm:$0xff]
        %v1617 = vld [vmem:[%s325 + $0x6d8] sm:$0xff]
        %v1618 = vld [vmem:[%s325 + $0x6e0] sm:$0xff]
        %v1619 = vld [vmem:[%s325 + $0x6e8] sm:$0xff]
        %v1620 = vld [vmem:[%s325 + $0x6f0] sm:$0xff]
        %v1621 = vld [vmem:[%s325 + $0x6f8] sm:$0xff]
        %v1622 = vld [vmem:[%s325 + $0x700] sm:$0xff]
        %v1623 = vld [vmem:[%s325 + $0x708] sm:$0xff]
        %v1624 = vld [vmem:[%s325 + $0x710] sm:$0xff]
        %v1625 = vld [vmem:[%s325 + $0x718] sm:$0xff]
        %v1626 = vld [vmem:[%s325 + $0x720] sm:$0xff]
        %v1627 = vld [vmem:[%s325 + $0x728] sm:$0xff]
        %v1628 = vld [vmem:[%s325 + $0x730] sm:$0xff]
        %v1629 = vld [vmem:[%s325 + $0x738] sm:$0xff]
        %v1630 = vld [vmem:[%s325 + $0x740] sm:$0xff]
        %v1631 = vld [vmem:[%s325 + $0x748] sm:$0xff]
        %v1632 = vld [vmem:[%s325 + $0x750] sm:$0xff]
        %v1633 = vld [vmem:[%s325 + $0x758] sm:$0xff]
        %v1634 = vld [vmem:[%s325 + $0x760] sm:$0xff]
        %v1635 = vld [vmem:[%s325 + $0x768] sm:$0xff]
        %v1636 = vld [vmem:[%s325 + $0x770] sm:$0xff]
        %v1637 = vld [vmem:[%s325 + $0x778] sm:$0xff]
        %v1638 = vld [vmem:[%s325 + $0x780] sm:$0xff]
        %v1639 = vld [vmem:[%s325 + $0x788] sm:$0xff]
        %v1640 = vld [vmem:[%s325 + $0x790] sm:$0xff]
        %v1641 = vld [vmem:[%s325 + $0x798] sm:$0xff]
        %v1642 = vld [vmem:[%s325 + $0x7a0] sm:$0xff]
        %v1643 = vld [vmem:[%s325 + $0x7a8] sm:$0xff]
        %v1644 = vld [vmem:[%s325 + $0x7b0] sm:$0xff]
        %v1645 = vld [vmem:[%s325 + $0x7b8] sm:$0xff]
        %v1646 = vld [vmem:[%s325 + $0x7c0] sm:$0xff]
        %v1647 = vld [vmem:[%s325 + $0x7c8] sm:$0xff]
        %v1648 = vld [vmem:[%s325 + $0x7d0] sm:$0xff]
        %v1649 = vld [vmem:[%s325 + $0x7d8] sm:$0xff]
        %v1650 = vld [vmem:[%s325 + $0x7e0] sm:$0xff]
        %v1651 = vld [vmem:[%s325 + $0x7e8] sm:$0xff]
        %v1652 = vld [vmem:[%s325 + $0x7f0] sm:$0xff]
        %v1653 = vld [vmem:[%s325 + $0x7f8] sm:$0xff]
        %v1654 = vld [vmem:[%s325 + $0x800] sm:$0xff]
        %v1655 = vld [vmem:[%s325 + $0x808] sm:$0xff]
        %v1656 = vld [vmem:[%s325 + $0x810] sm:$0xff]
        %v1657 = vld [vmem:[%s325 + $0x818] sm:$0xff]
        %v1658 = vld [vmem:[%s325 + $0x820] sm:$0xff]
        %v1659 = vld [vmem:[%s325 + $0x828] sm:$0xff]
        %v1660 = vld [vmem:[%s325 + $0x830] sm:$0xff]
        %v1661 = vld [vmem:[%s325 + $0x838] sm:$0xff]
        %v1662 = vld [vmem:[%s325 + $0x840] sm:$0xff]
        %v1663 = vld [vmem:[%s325 + $0x848] sm:$0xff]
        %v1664 = vld [vmem:[%s325 + $0x850] sm:$0xff]
        %v1665 = vld [vmem:[%s325 + $0x858] sm:$0xff]
        %v1666 = vld [vmem:[%s325 + $0x860] sm:$0xff]
        %v1667 = vld [vmem:[%s325 + $0x868] sm:$0xff]
        %v1668 = vld [vmem:[%s325 + $0x870] sm:$0xff]
        %v1669 = vld [vmem:[%s325 + $0x878] sm:$0xff]
        %v1670 = vld [vmem:[%s325 + $0x880] sm:$0xff]
        %v1671 = vld [vmem:[%s325 + $0x888] sm:$0xff]
        %v1672 = vld [vmem:[%s325 + $0x890] sm:$0xff]
        %v1673 = vld [vmem:[%s325 + $0x898] sm:$0xff]
        %v1674 = vld [vmem:[%s325 + $0x8a0] sm:$0xff]
        %v1675 = vld [vmem:[%s325 + $0x8a8] sm:$0xff]
        %v1676 = vld [vmem:[%s325 + $0x8b0] sm:$0xff]
        %v1677 = vld [vmem:[%s325 + $0x8b8] sm:$0xff]
        %v1678 = vld [vmem:[%s325 + $0x8c0] sm:$0xff]
        %v1679 = vld [vmem:[%s325 + $0x8c8] sm:$0xff]
        %v1680 = vld [vmem:[%s325 + $0x8d0] sm:$0xff]
        %v1681 = vld [vmem:[%s325 + $0x8d8] sm:$0xff]
        %v1682 = vld [vmem:[%s325 + $0x8e0] sm:$0xff]
        %v1683 = vld [vmem:[%s325 + $0x8e8] sm:$0xff]
        %v1684 = vld [vmem:[%s325 + $0x8f0] sm:$0xff]
        %v1685 = vld [vmem:[%s325 + $0x8f8] sm:$0xff]
        %v1686 = vld [vmem:[%s325 + $0x900] sm:$0xff]
        %v1687 = vld [vmem:[%s325 + $0x908] sm:$0xff]
        %v1688 = vld [vmem:[%s325 + $0x910] sm:$0xff]
        %v1689 = vld [vmem:[%s325 + $0x918] sm:$0xff]
        %v1690 = vld [vmem:[%s325 + $0x920] sm:$0xff]
        %v1691 = vld [vmem:[%s325 + $0x928] sm:$0xff]
        %v1692 = vld [vmem:[%s325 + $0x930] sm:$0xff]
        %v1693 = vld [vmem:[%s325 + $0x938] sm:$0xff]
        %v1694 = vld [vmem:[%s325 + $0x940] sm:$0xff]
        %v1695 = vld [vmem:[%s325 + $0x948] sm:$0xff]
        %v1696 = vld [vmem:[%s325 + $0x950] sm:$0xff]
        %v1697 = vld [vmem:[%s325 + $0x958] sm:$0xff]
        %v1698 = vld [vmem:[%s325 + $0x960] sm:$0xff]
        %v1699 = vld [vmem:[%s325 + $0x968] sm:$0xff]
        %v1700 = vld [vmem:[%s325 + $0x970] sm:$0xff]
        %v1701 = vld [vmem:[%s325 + $0x978] sm:$0xff]
        %v1702 = vld [vmem:[%s325 + $0x980] sm:$0xff]
        %v1703 = vld [vmem:[%s325 + $0x988] sm:$0xff]
        %v1704 = vld [vmem:[%s325 + $0x990] sm:$0xff]
        %v1705 = vld [vmem:[%s325 + $0x998] sm:$0xff]
        %v1706 = vld [vmem:[%s325 + $0x9a0] sm:$0xff]
        %v1707 = vld [vmem:[%s325 + $0x9a8] sm:$0xff]
        %v1708 = vld [vmem:[%s325 + $0x9b0] sm:$0xff]
        %v1709 = vld [vmem:[%s325 + $0x9b8] sm:$0xff]
        %v1710 = vld [vmem:[%s325 + $0x9c0] sm:$0xff]
        %v1711 = vld [vmem:[%s325 + $0x9c8] sm:$0xff]
        %v1712 = vld [vmem:[%s325 + $0x9d0] sm:$0xff]
        %v1713 = vld [vmem:[%s325 + $0x9d8] sm:$0xff]
        %v1714 = vld [vmem:[%s325 + $0x9e0] sm:$0xff]
        %v1715 = vld [vmem:[%s325 + $0x9e8] sm:$0xff]
        %v1716 = vld [vmem:[%s325 + $0x9f0] sm:$0xff]
        %v1717 = vld [vmem:[%s325 + $0x9f8] sm:$0xff]
        %v1718 = vld [vmem:[%s325 + $0xa00] sm:$0xff]
        %v1719 = vld [vmem:[%s325 + $0xa08] sm:$0xff]
        %v1720 = vld [vmem:[%s325 + $0xa10] sm:$0xff]
        %v1721 = vld [vmem:[%s325 + $0xa18] sm:$0xff]
        %v1722 = vld [vmem:[%s325 + $0xa20] sm:$0xff]
        %v1723 = vld [vmem:[%s325 + $0xa28] sm:$0xff]
        %v1724 = vld [vmem:[%s325 + $0xa30] sm:$0xff]
        %v1725 = vld [vmem:[%s325 + $0xa38] sm:$0xff]
        %v1726 = vld [vmem:[%s325 + $0xa40] sm:$0xff]
        %v1727 = vld [vmem:[%s325 + $0xa48] sm:$0xff]
        %v1728 = vld [vmem:[%s325 + $0xa50] sm:$0xff]
        %v1729 = vld [vmem:[%s325 + $0xa58] sm:$0xff]
        %v1730 = vld [vmem:[%s325 + $0xa60] sm:$0xff]
        %v1731 = vld [vmem:[%s325 + $0xa68] sm:$0xff]
        %v1732 = vld [vmem:[%s325 + $0xa70] sm:$0xff]
        %v1733 = vld [vmem:[%s325 + $0xa78] sm:$0xff]
        %v1734 = vld [vmem:[%s325 + $0xa80] sm:$0xff]
        %v1735 = vld [vmem:[%s325 + $0xa88] sm:$0xff]
        %v1736 = vld [vmem:[%s325 + $0xa90] sm:$0xff]
        %v1737 = vld [vmem:[%s325 + $0xa98] sm:$0xff]
        %v1738 = vld [vmem:[%s325 + $0xaa0] sm:$0xff]
        %v1739 = vld [vmem:[%s325 + $0xaa8] sm:$0xff]
        %v1740 = vld [vmem:[%s325 + $0xab0] sm:$0xff]
        %v1741 = vld [vmem:[%s325 + $0xab8] sm:$0xff]
        %v1742 = vld [vmem:[%s325 + $0xac0] sm:$0xff]
        %v1743 = vld [vmem:[%s325 + $0xac8] sm:$0xff]
        %v1744 = vld [vmem:[%s325 + $0xad0] sm:$0xff]
        %v1745 = vld [vmem:[%s325 + $0xad8] sm:$0xff]
        %v1746 = vld [vmem:[%s325 + $0xae0] sm:$0xff]
        %v1747 = vld [vmem:[%s325 + $0xae8] sm:$0xff]
        %v1748 = vld [vmem:[%s325 + $0xaf0] sm:$0xff]
        %v1749 = vld [vmem:[%s325 + $0xaf8] sm:$0xff]
        %v1750 = vld [vmem:[%s325 + $0xb00] sm:$0xff]
        %v1751 = vld [vmem:[%s325 + $0xb08] sm:$0xff]
        %v1752 = vld [vmem:[%s325 + $0xb10] sm:$0xff]
        %v1753 = vld [vmem:[%s325 + $0xb18] sm:$0xff]
        %v1754 = vld [vmem:[%s325 + $0xb20] sm:$0xff]
        %v1755 = vld [vmem:[%s325 + $0xb28] sm:$0xff]
        %v1756 = vld [vmem:[%s325 + $0xb30] sm:$0xff]
        %v1757 = vld [vmem:[%s325 + $0xb38] sm:$0xff]
        %v1758 = vld [vmem:[%s325 + $0xb40] sm:$0xff]
        %v1759 = vld [vmem:[%s325 + $0xb48] sm:$0xff]
        %v1760 = vld [vmem:[%s325 + $0xb50] sm:$0xff]
        %v1761 = vld [vmem:[%s325 + $0xb58] sm:$0xff]
        %v1762 = vld [vmem:[%s325 + $0xb60] sm:$0xff]
        %v1763 = vld [vmem:[%s325 + $0xb68] sm:$0xff]
        %v1764 = vld [vmem:[%s325 + $0xb70] sm:$0xff]
        %v1765 = vld [vmem:[%s325 + $0xb78] sm:$0xff]
        %v1766 = vld [vmem:[%s325 + $0xb80] sm:$0xff]
        %v1767 = vld [vmem:[%s325 + $0xb88] sm:$0xff]
        %v1768 = vld [vmem:[%s325 + $0xb90] sm:$0xff]
        %v1769 = vld [vmem:[%s325 + $0xb98] sm:$0xff]
        %v1770 = vld [vmem:[%s325 + $0xba0] sm:$0xff]
        %v1771 = vld [vmem:[%s325 + $0xba8] sm:$0xff]
        %v1772 = vld [vmem:[%s325 + $0xbb0] sm:$0xff]
        %v1773 = vld [vmem:[%s325 + $0xbb8] sm:$0xff]
        %v1774 = vld [vmem:[%s325 + $0xbc0] sm:$0xff]
        %v1775 = vld [vmem:[%s325 + $0xbc8] sm:$0xff]
        %v1776 = vld [vmem:[%s325 + $0xbd0] sm:$0xff]
        %v1777 = vld [vmem:[%s325 + $0xbd8] sm:$0xff]
        %v1778 = vld [vmem:[%s325 + $0xbe0] sm:$0xff]
        %v1779 = vld [vmem:[%s325 + $0xbe8] sm:$0xff]
        %v1780 = vld [vmem:[%s325 + $0xbf0] sm:$0xff]
        %v1781 = vld [vmem:[%s325 + $0xbf8] sm:$0xff]
        %v1782 = vld [vmem:[%s325 + $0xc00] sm:$0xff]
        %v1783 = vld [vmem:[%s325 + $0xc08] sm:$0xff]
        %v1784 = vld [vmem:[%s325 + $0xc10] sm:$0xff]
        %v1785 = vld [vmem:[%s325 + $0xc18] sm:$0xff]
        %v1786 = vld [vmem:[%s325 + $0xc20] sm:$0xff]
        %v1787 = vld [vmem:[%s325 + $0xc28] sm:$0xff]
        %v1788 = vld [vmem:[%s325 + $0xc30] sm:$0xff]
        %v1789 = vld [vmem:[%s325 + $0xc38] sm:$0xff]
        %v1790 = vld [vmem:[%s325 + $0xc40] sm:$0xff]
        %v1791 = vld [vmem:[%s325 + $0xc48] sm:$0xff]
        %v1792 = vld [vmem:[%s325 + $0xc50] sm:$0xff]
        %v1793 = vld [vmem:[%s325 + $0xc58] sm:$0xff]
        %v1794 = vld [vmem:[%s325 + $0xc60] sm:$0xff]
        %v1795 = vld [vmem:[%s325 + $0xc68] sm:$0xff]
        %v1796 = vld [vmem:[%s325 + $0xc70] sm:$0xff]
        %v1797 = vld [vmem:[%s325 + $0xc78] sm:$0xff]
        %v1798 = vld [vmem:[%s325 + $0xc80] sm:$0xff]
        %v1799 = vld [vmem:[%s325 + $0xc88] sm:$0xff]
        %v1800 = vld [vmem:[%s325 + $0xc90] sm:$0xff]
        %v1801 = vld [vmem:[%s325 + $0xc98] sm:$0xff]
        %v1802 = vld [vmem:[%s325 + $0xca0] sm:$0xff]
        %v1803 = vld [vmem:[%s325 + $0xca8] sm:$0xff]
        %v1804 = vld [vmem:[%s325 + $0xcb0] sm:$0xff]
        %v1805 = vld [vmem:[%s325 + $0xcb8] sm:$0xff]
        %v1806 = vld [vmem:[%s325 + $0xcc0] sm:$0xff]
        %v1807 = vld [vmem:[%s325 + $0xcc8] sm:$0xff]
        %v1808 = vld [vmem:[%s325 + $0xcd0] sm:$0xff]
        %v1809 = vld [vmem:[%s325 + $0xcd8] sm:$0xff]
        %v1810 = vld [vmem:[%s325 + $0xce0] sm:$0xff]
        %v1811 = vld [vmem:[%s325 + $0xce8] sm:$0xff]
        %v1812 = vld [vmem:[%s325 + $0xcf0] sm:$0xff]
        %v1813 = vld [vmem:[%s325 + $0xcf8] sm:$0xff]
        %v1814 = vld [vmem:[%s325 + $0xd00] sm:$0xff]
        %v1815 = vld [vmem:[%s325 + $0xd08] sm:$0xff]
        %v1816 = vld [vmem:[%s325 + $0xd10] sm:$0xff]
        %v1817 = vld [vmem:[%s325 + $0xd18] sm:$0xff]
        %v1818 = vld [vmem:[%s325 + $0xd20] sm:$0xff]
        %v1819 = vld [vmem:[%s325 + $0xd28] sm:$0xff]
        %v1820 = vld [vmem:[%s325 + $0xd30] sm:$0xff]
        %v1821 = vld [vmem:[%s325 + $0xd38] sm:$0xff]
        %v1822 = vld [vmem:[%s325 + $0xd40] sm:$0xff]
        %v1823 = vld [vmem:[%s325 + $0xd48] sm:$0xff]
        %v1824 = vld [vmem:[%s325 + $0xd50] sm:$0xff]
        %v1825 = vld [vmem:[%s325 + $0xd58] sm:$0xff]
        %v1826 = vld [vmem:[%s325 + $0xd60] sm:$0xff]
        %v1827 = vld [vmem:[%s325 + $0xd68] sm:$0xff]
        %v1828 = vld [vmem:[%s325 + $0xd70] sm:$0xff]
        %v1829 = vld [vmem:[%s325 + $0xd78] sm:$0xff]
        %v1830 = vld [vmem:[%s325 + $0xd80] sm:$0xff]
        %v1831 = vld [vmem:[%s325 + $0xd88] sm:$0xff]
        %v1832 = vld [vmem:[%s325 + $0xd90] sm:$0xff]
        %v1833 = vld [vmem:[%s325 + $0xd98] sm:$0xff]
        %v1834 = vld [vmem:[%s325 + $0xda0] sm:$0xff]
        %v1835 = vld [vmem:[%s325 + $0xda8] sm:$0xff]
        %v1836 = vld [vmem:[%s325 + $0xdb0] sm:$0xff]
        %v1837 = vld [vmem:[%s325 + $0xdb8] sm:$0xff]
        %v1838 = vld [vmem:[%s325 + $0xdc0] sm:$0xff]
        %v1839 = vld [vmem:[%s325 + $0xdc8] sm:$0xff]
        %v1840 = vld [vmem:[%s325 + $0xdd0] sm:$0xff]
        %v1841 = vld [vmem:[%s325 + $0xdd8] sm:$0xff]
        %v1842 = vld [vmem:[%s325 + $0xde0] sm:$0xff]
        %v1843 = vld [vmem:[%s325 + $0xde8] sm:$0xff]
        %v1844 = vld [vmem:[%s325 + $0xdf0] sm:$0xff]
        %v1845 = vld [vmem:[%s325 + $0xdf8] sm:$0xff]
        %v1846 = vld [vmem:[%s325 + $0xe00] sm:$0xff]
        %v1847 = vld [vmem:[%s325 + $0xe08] sm:$0xff]
        %v1848 = vld [vmem:[%s325 + $0xe10] sm:$0xff]
        %v1849 = vld [vmem:[%s325 + $0xe18] sm:$0xff]
        %v1850 = vld [vmem:[%s325 + $0xe20] sm:$0xff]
        %v1851 = vld [vmem:[%s325 + $0xe28] sm:$0xff]
        %v1852 = vld [vmem:[%s325 + $0xe30] sm:$0xff]
        %v1853 = vld [vmem:[%s325 + $0xe38] sm:$0xff]
        %v1854 = vld [vmem:[%s325 + $0xe40] sm:$0xff]
        %v1855 = vld [vmem:[%s325 + $0xe48] sm:$0xff]
        %v1856 = vld [vmem:[%s325 + $0xe50] sm:$0xff]
        %v1857 = vld [vmem:[%s325 + $0xe58] sm:$0xff]
        %v1858 = vld [vmem:[%s325 + $0xe60] sm:$0xff]
        %v1859 = vld [vmem:[%s325 + $0xe68] sm:$0xff]
        %v1860 = vld [vmem:[%s325 + $0xe70] sm:$0xff]
        %v1861 = vld [vmem:[%s325 + $0xe78] sm:$0xff]
        %v1862 = vld [vmem:[%s325 + $0xe80] sm:$0xff]
        %v1863 = vld [vmem:[%s325 + $0xe88] sm:$0xff]
        %v1864 = vld [vmem:[%s325 + $0xe90] sm:$0xff]
        %v1865 = vld [vmem:[%s325 + $0xe98] sm:$0xff]
        %v1866 = vld [vmem:[%s325 + $0xea0] sm:$0xff]
        %v1867 = vld [vmem:[%s325 + $0xea8] sm:$0xff]
        %v1868 = vld [vmem:[%s325 + $0xeb0] sm:$0xff]
        %v1869 = vld [vmem:[%s325 + $0xeb8] sm:$0xff]
        %v1870 = vld [vmem:[%s325 + $0xec0] sm:$0xff]
        %v1871 = vld [vmem:[%s325 + $0xec8] sm:$0xff]
        %v1872 = vld [vmem:[%s325 + $0xed0] sm:$0xff]
        %v1873 = vld [vmem:[%s325 + $0xed8] sm:$0xff]
        %v1874 = vld [vmem:[%s325 + $0xee0] sm:$0xff]
        %v1875 = vld [vmem:[%s325 + $0xee8] sm:$0xff]
        %v1876 = vld [vmem:[%s325 + $0xef0] sm:$0xff]
        %v1877 = vld [vmem:[%s325 + $0xef8] sm:$0xff]
        %v1878 = vld [vmem:[%s325 + $0xf00] sm:$0xff]
        %v1879 = vld [vmem:[%s325 + $0xf08] sm:$0xff]
        %v1880 = vld [vmem:[%s325 + $0xf10] sm:$0xff]
        %v1881 = vld [vmem:[%s325 + $0xf18] sm:$0xff]
        %v1882 = vld [vmem:[%s325 + $0xf20] sm:$0xff]
        %v1883 = vld [vmem:[%s325 + $0xf28] sm:$0xff]
        %v1884 = vld [vmem:[%s325 + $0xf30] sm:$0xff]
        %v1885 = vld [vmem:[%s325 + $0xf38] sm:$0xff]
        %v1886 = vld [vmem:[%s325 + $0xf40] sm:$0xff]
        %v1887 = vld [vmem:[%s325 + $0xf48] sm:$0xff]
        %v1888 = vld [vmem:[%s325 + $0xf50] sm:$0xff]
        %v1889 = vld [vmem:[%s325 + $0xf58] sm:$0xff]
        %v1890 = vld [vmem:[%s325 + $0xf60] sm:$0xff]
        %v1891 = vld [vmem:[%s325 + $0xf68] sm:$0xff]
        %v1892 = vld [vmem:[%s325 + $0xf70] sm:$0xff]
        %v1893 = vld [vmem:[%s325 + $0xf78] sm:$0xff]
        %v1894 = vld [vmem:[%s325 + $0xf80] sm:$0xff]
        %v1895 = vld [vmem:[%s325 + $0xf88] sm:$0xff]
        %v1896 = vld [vmem:[%s325 + $0xf90] sm:$0xff]
        %v1897 = vld [vmem:[%s325 + $0xf98] sm:$0xff]
        %v1898 = vld [vmem:[%s325 + $0xfa0] sm:$0xff]
        %v1899 = vld [vmem:[%s325 + $0xfa8] sm:$0xff]
        %v1900 = vld [vmem:[%s325 + $0xfb0] sm:$0xff]
        %v1901 = vld [vmem:[%s325 + $0xfb8] sm:$0xff]
        %v1902 = vld [vmem:[%s325 + $0xfc0] sm:$0xff]
        %v1903 = vld [vmem:[%s325 + $0xfc8] sm:$0xff]
        %v1904 = vld [vmem:[%s325 + $0xfd0] sm:$0xff]
        %v1905 = vld [vmem:[%s325 + $0xfd8] sm:$0xff]
        %v1906 = vld [vmem:[%s325 + $0xfe0] sm:$0xff]
        %v1907 = vld [vmem:[%s325 + $0xfe8] sm:$0xff]
        %v1908 = vld [vmem:[%s325 + $0xff0] sm:$0xff]
        %v1909 = vld [vmem:[%s325 + $0xff8] sm:$0xff]
        %v2422 = vunpack.c.l.b16 %v1398
        %v2423 = vunpack.c.h.b16 %v1398
        %v2424 = vunpack.c.l.b16 %v1399
        %v2425 = vunpack.c.h.b16 %v1399
        %v2426 = vunpack.c.l.b16 %v1400
        %v2427 = vunpack.c.h.b16 %v1400
        %v2428 = vunpack.c.l.b16 %v1401
        %v2429 = vunpack.c.h.b16 %v1401
        %v2430 = vunpack.c.l.b16 %v1402
        %v2431 = vunpack.c.h.b16 %v1402
        %v2432 = vunpack.c.l.b16 %v1403
        %v2433 = vunpack.c.h.b16 %v1403
        %v2434 = vunpack.c.l.b16 %v1404
        %v2435 = vunpack.c.h.b16 %v1404
        %v2436 = vunpack.c.l.b16 %v1405
        %v2437 = vunpack.c.h.b16 %v1405
        %v2438 = vunpack.c.l.b16 %v1406
        %v2439 = vunpack.c.h.b16 %v1406
        %v2440 = vunpack.c.l.b16 %v1407
        %v2441 = vunpack.c.h.b16 %v1407
        %v2442 = vunpack.c.l.b16 %v1408
        %v2443 = vunpack.c.h.b16 %v1408
        %v2444 = vunpack.c.l.b16 %v1409
        %v2445 = vunpack.c.h.b16 %v1409
        %v2446 = vunpack.c.l.b16 %v1410
        %v2447 = vunpack.c.h.b16 %v1410
        %v2448 = vunpack.c.l.b16 %v1411
        %v2449 = vunpack.c.h.b16 %v1411
        %v2450 = vunpack.c.l.b16 %v1412
        %v2451 = vunpack.c.h.b16 %v1412
        %v2452 = vunpack.c.l.b16 %v1413
        %v2453 = vunpack.c.h.b16 %v1413
        %v2454 = vunpack.c.l.b16 %v1414
        %v2455 = vunpack.c.h.b16 %v1414
        %v2456 = vunpack.c.l.b16 %v1415
        %v2457 = vunpack.c.h.b16 %v1415
        %v2458 = vunpack.c.l.b16 %v1416
        %v2459 = vunpack.c.h.b16 %v1416
        %v2460 = vunpack.c.l.b16 %v1417
        %v2461 = vunpack.c.h.b16 %v1417
        %v2462 = vunpack.c.l.b16 %v1418
        %v2463 = vunpack.c.h.b16 %v1418
        %v2464 = vunpack.c.l.b16 %v1419
        %v2465 = vunpack.c.h.b16 %v1419
        %v2466 = vunpack.c.l.b16 %v1420
        %v2467 = vunpack.c.h.b16 %v1420
        %v2468 = vunpack.c.l.b16 %v1421
        %v2469 = vunpack.c.h.b16 %v1421
        %v2470 = vunpack.c.l.b16 %v1422
        %v2471 = vunpack.c.h.b16 %v1422
        %v2472 = vunpack.c.l.b16 %v1423
        %v2473 = vunpack.c.h.b16 %v1423
        %v2474 = vunpack.c.l.b16 %v1424
        %v2475 = vunpack.c.h.b16 %v1424
        %v2476 = vunpack.c.l.b16 %v1425
        %v2477 = vunpack.c.h.b16 %v1425
        %v2478 = vunpack.c.l.b16 %v1426
        %v2479 = vunpack.c.h.b16 %v1426
        %v2480 = vunpack.c.l.b16 %v1427
        %v2481 = vunpack.c.h.b16 %v1427
        %v2482 = vunpack.c.l.b16 %v1428
        %v2483 = vunpack.c.h.b16 %v1428
        %v2484 = vunpack.c.l.b16 %v1429
        %v2485 = vunpack.c.h.b16 %v1429
        %v2486 = vunpack.c.l.b16 %v1430
        %v2487 = vunpack.c.h.b16 %v1430
        %v2488 = vunpack.c.l.b16 %v1431
        %v2489 = vunpack.c.h.b16 %v1431
        %v2490 = vunpack.c.l.b16 %v1432
        %v2491 = vunpack.c.h.b16 %v1432
        %v2492 = vunpack.c.l.b16 %v1433
        %v2493 = vunpack.c.h.b16 %v1433
        %v2494 = vunpack.c.l.b16 %v1434
        %v2495 = vunpack.c.h.b16 %v1434
        %v2496 = vunpack.c.l.b16 %v1435
        %v2497 = vunpack.c.h.b16 %v1435
        %v2498 = vunpack.c.l.b16 %v1436
        %v2499 = vunpack.c.h.b16 %v1436
        %v2500 = vunpack.c.l.b16 %v1437
        %v2501 = vunpack.c.h.b16 %v1437
        %v2502 = vunpack.c.l.b16 %v1438
        %v2503 = vunpack.c.h.b16 %v1438
        %v2504 = vunpack.c.l.b16 %v1439
        %v2505 = vunpack.c.h.b16 %v1439
        %v2506 = vunpack.c.l.b16 %v1440
        %v2507 = vunpack.c.h.b16 %v1440
        %v2508 = vunpack.c.l.b16 %v1441
        %v2509 = vunpack.c.h.b16 %v1441
        %v2510 = vunpack.c.l.b16 %v1442
        %v2511 = vunpack.c.h.b16 %v1442
        %v2512 = vunpack.c.l.b16 %v1443
        %v2513 = vunpack.c.h.b16 %v1443
        %v2514 = vunpack.c.l.b16 %v1444
        %v2515 = vunpack.c.h.b16 %v1444
        %v2516 = vunpack.c.l.b16 %v1445
        %v2517 = vunpack.c.h.b16 %v1445
        %v2518 = vunpack.c.l.b16 %v1446
        %v2519 = vunpack.c.h.b16 %v1446
        %v2520 = vunpack.c.l.b16 %v1447
        %v2521 = vunpack.c.h.b16 %v1447
        %v2522 = vunpack.c.l.b16 %v1448
        %v2523 = vunpack.c.h.b16 %v1448
        %v2524 = vunpack.c.l.b16 %v1449
        %v2525 = vunpack.c.h.b16 %v1449
        %v2526 = vunpack.c.l.b16 %v1450
        %v2527 = vunpack.c.h.b16 %v1450
        %v2528 = vunpack.c.l.b16 %v1451
        %v2529 = vunpack.c.h.b16 %v1451
        %v2530 = vunpack.c.l.b16 %v1452
        %v2531 = vunpack.c.h.b16 %v1452
        %v2532 = vunpack.c.l.b16 %v1453
        %v2533 = vunpack.c.h.b16 %v1453
        %v2534 = vunpack.c.l.b16 %v1454
        %v2535 = vunpack.c.h.b16 %v1454
        %v2536 = vunpack.c.l.b16 %v1455
        %v2537 = vunpack.c.h.b16 %v1455
        %v2538 = vunpack.c.l.b16 %v1456
        %v2539 = vunpack.c.h.b16 %v1456
        %v2540 = vunpack.c.l.b16 %v1457
        %v2541 = vunpack.c.h.b16 %v1457
        %v2542 = vunpack.c.l.b16 %v1458
        %v2543 = vunpack.c.h.b16 %v1458
        %v2544 = vunpack.c.l.b16 %v1459
        %v2545 = vunpack.c.h.b16 %v1459
        %v2546 = vunpack.c.l.b16 %v1460
        %v2547 = vunpack.c.h.b16 %v1460
        %v2548 = vunpack.c.l.b16 %v1461
        %v2549 = vunpack.c.h.b16 %v1461
        %v2550 = vunpack.c.l.b16 %v1462
        %v2551 = vunpack.c.h.b16 %v1462
        %v2552 = vunpack.c.l.b16 %v1463
        %v2553 = vunpack.c.h.b16 %v1463
        %v2554 = vunpack.c.l.b16 %v1464
        %v2555 = vunpack.c.h.b16 %v1464
        %v2556 = vunpack.c.l.b16 %v1465
        %v2557 = vunpack.c.h.b16 %v1465
        %v2558 = vunpack.c.l.b16 %v1466
        %v2559 = vunpack.c.h.b16 %v1466
        %v2560 = vunpack.c.l.b16 %v1467
        %v2561 = vunpack.c.h.b16 %v1467
        %v2562 = vunpack.c.l.b16 %v1468
        %v2563 = vunpack.c.h.b16 %v1468
        %v2564 = vunpack.c.l.b16 %v1469
        %v2565 = vunpack.c.h.b16 %v1469
        %v2566 = vunpack.c.l.b16 %v1470
        %v2567 = vunpack.c.h.b16 %v1470
        %v2568 = vunpack.c.l.b16 %v1471
        %v2569 = vunpack.c.h.b16 %v1471
        %v2570 = vunpack.c.l.b16 %v1472
        %v2571 = vunpack.c.h.b16 %v1472
        %v2572 = vunpack.c.l.b16 %v1473
        %v2573 = vunpack.c.h.b16 %v1473
        %v2574 = vunpack.c.l.b16 %v1474
        %v2575 = vunpack.c.h.b16 %v1474
        %v2576 = vunpack.c.l.b16 %v1475
        %v2577 = vunpack.c.h.b16 %v1475
        %v2578 = vunpack.c.l.b16 %v1476
        %v2579 = vunpack.c.h.b16 %v1476
        %v2580 = vunpack.c.l.b16 %v1477
        %v2581 = vunpack.c.h.b16 %v1477
        %v2582 = vunpack.c.l.b16 %v1478
        %v2583 = vunpack.c.h.b16 %v1478
        %v2584 = vunpack.c.l.b16 %v1479
        %v2585 = vunpack.c.h.b16 %v1479
        %v2586 = vunpack.c.l.b16 %v1480
        %v2587 = vunpack.c.h.b16 %v1480
        %v2588 = vunpack.c.l.b16 %v1481
        %v2589 = vunpack.c.h.b16 %v1481
        %v2590 = vunpack.c.l.b16 %v1482
        %v2591 = vunpack.c.h.b16 %v1482
        %v2592 = vunpack.c.l.b16 %v1483
        %v2593 = vunpack.c.h.b16 %v1483
        %v2594 = vunpack.c.l.b16 %v1484
        %v2595 = vunpack.c.h.b16 %v1484
        %v2596 = vunpack.c.l.b16 %v1485
        %v2597 = vunpack.c.h.b16 %v1485
        %v2598 = vunpack.c.l.b16 %v1486
        %v2599 = vunpack.c.h.b16 %v1486
        %v2600 = vunpack.c.l.b16 %v1487
        %v2601 = vunpack.c.h.b16 %v1487
        %v2602 = vunpack.c.l.b16 %v1488
        %v2603 = vunpack.c.h.b16 %v1488
        %v2604 = vunpack.c.l.b16 %v1489
        %v2605 = vunpack.c.h.b16 %v1489
        %v2606 = vunpack.c.l.b16 %v1490
        %v2607 = vunpack.c.h.b16 %v1490
        %v2608 = vunpack.c.l.b16 %v1491
        %v2609 = vunpack.c.h.b16 %v1491
        %v2610 = vunpack.c.l.b16 %v1492
        %v2611 = vunpack.c.h.b16 %v1492
        %v2612 = vunpack.c.l.b16 %v1493
        %v2613 = vunpack.c.h.b16 %v1493
        %v2614 = vunpack.c.l.b16 %v1494
        %v2615 = vunpack.c.h.b16 %v1494
        %v2616 = vunpack.c.l.b16 %v1495
        %v2617 = vunpack.c.h.b16 %v1495
        %v2618 = vunpack.c.l.b16 %v1496
        %v2619 = vunpack.c.h.b16 %v1496
        %v2620 = vunpack.c.l.b16 %v1497
        %v2621 = vunpack.c.h.b16 %v1497
        %v2622 = vunpack.c.l.b16 %v1498
        %v2623 = vunpack.c.h.b16 %v1498
        %v2624 = vunpack.c.l.b16 %v1499
        %v2625 = vunpack.c.h.b16 %v1499
        %v2626 = vunpack.c.l.b16 %v1500
        %v2627 = vunpack.c.h.b16 %v1500
        %v2628 = vunpack.c.l.b16 %v1501
        %v2629 = vunpack.c.h.b16 %v1501
        %v2630 = vunpack.c.l.b16 %v1502
        %v2631 = vunpack.c.h.b16 %v1502
        %v2632 = vunpack.c.l.b16 %v1503
        %v2633 = vunpack.c.h.b16 %v1503
        %v2634 = vunpack.c.l.b16 %v1504
        %v2635 = vunpack.c.h.b16 %v1504
        %v2636 = vunpack.c.l.b16 %v1505
        %v2637 = vunpack.c.h.b16 %v1505
        %v2638 = vunpack.c.l.b16 %v1506
        %v2639 = vunpack.c.h.b16 %v1506
        %v2640 = vunpack.c.l.b16 %v1507
        %v2641 = vunpack.c.h.b16 %v1507
        %v2642 = vunpack.c.l.b16 %v1508
        %v2643 = vunpack.c.h.b16 %v1508
        %v2644 = vunpack.c.l.b16 %v1509
        %v2645 = vunpack.c.h.b16 %v1509
        %v2646 = vunpack.c.l.b16 %v1510
        %v2647 = vunpack.c.h.b16 %v1510
        %v2648 = vunpack.c.l.b16 %v1511
        %v2649 = vunpack.c.h.b16 %v1511
        %v2650 = vunpack.c.l.b16 %v1512
        %v2651 = vunpack.c.h.b16 %v1512
        %v2652 = vunpack.c.l.b16 %v1513
        %v2653 = vunpack.c.h.b16 %v1513
        %v2654 = vunpack.c.l.b16 %v1514
        %v2655 = vunpack.c.h.b16 %v1514
        %v2656 = vunpack.c.l.b16 %v1515
        %v2657 = vunpack.c.h.b16 %v1515
        %v2658 = vunpack.c.l.b16 %v1516
        %v2659 = vunpack.c.h.b16 %v1516
        %v2660 = vunpack.c.l.b16 %v1517
        %v2661 = vunpack.c.h.b16 %v1517
        %v2662 = vunpack.c.l.b16 %v1518
        %v2663 = vunpack.c.h.b16 %v1518
        %v2664 = vunpack.c.l.b16 %v1519
        %v2665 = vunpack.c.h.b16 %v1519
        %v2666 = vunpack.c.l.b16 %v1520
        %v2667 = vunpack.c.h.b16 %v1520
        %v2668 = vunpack.c.l.b16 %v1521
        %v2669 = vunpack.c.h.b16 %v1521
        %v2670 = vunpack.c.l.b16 %v1522
        %v2671 = vunpack.c.h.b16 %v1522
        %v2672 = vunpack.c.l.b16 %v1523
        %v2673 = vunpack.c.h.b16 %v1523
        %v2674 = vunpack.c.l.b16 %v1524
        %v2675 = vunpack.c.h.b16 %v1524
        %v2676 = vunpack.c.l.b16 %v1525
        %v2677 = vunpack.c.h.b16 %v1525
        %v2678 = vunpack.c.l.b16 %v1526
        %v2679 = vunpack.c.h.b16 %v1526
        %v2680 = vunpack.c.l.b16 %v1527
        %v2681 = vunpack.c.h.b16 %v1527
        %v2682 = vunpack.c.l.b16 %v1528
        %v2683 = vunpack.c.h.b16 %v1528
        %v2684 = vunpack.c.l.b16 %v1529
        %v2685 = vunpack.c.h.b16 %v1529
        %v2686 = vunpack.c.l.b16 %v1530
        %v2687 = vunpack.c.h.b16 %v1530
        %v2688 = vunpack.c.l.b16 %v1531
        %v2689 = vunpack.c.h.b16 %v1531
        %v2690 = vunpack.c.l.b16 %v1532
        %v2691 = vunpack.c.h.b16 %v1532
        %v2692 = vunpack.c.l.b16 %v1533
        %v2693 = vunpack.c.h.b16 %v1533
        %v2694 = vunpack.c.l.b16 %v1534
        %v2695 = vunpack.c.h.b16 %v1534
        %v2696 = vunpack.c.l.b16 %v1535
        %v2697 = vunpack.c.h.b16 %v1535
        %v2698 = vunpack.c.l.b16 %v1536
        %v2699 = vunpack.c.h.b16 %v1536
        %v2700 = vunpack.c.l.b16 %v1537
        %v2701 = vunpack.c.h.b16 %v1537
        %v2702 = vunpack.c.l.b16 %v1538
        %v2703 = vunpack.c.h.b16 %v1538
        %v2704 = vunpack.c.l.b16 %v1539
        %v2705 = vunpack.c.h.b16 %v1539
        %v2706 = vunpack.c.l.b16 %v1540
        %v2707 = vunpack.c.h.b16 %v1540
        %v2708 = vunpack.c.l.b16 %v1541
        %v2709 = vunpack.c.h.b16 %v1541
        %v2710 = vunpack.c.l.b16 %v1542
        %v2711 = vunpack.c.h.b16 %v1542
        %v2712 = vunpack.c.l.b16 %v1543
        %v2713 = vunpack.c.h.b16 %v1543
        %v2714 = vunpack.c.l.b16 %v1544
        %v2715 = vunpack.c.h.b16 %v1544
        %v2716 = vunpack.c.l.b16 %v1545
        %v2717 = vunpack.c.h.b16 %v1545
        %v2718 = vunpack.c.l.b16 %v1546
        %v2719 = vunpack.c.h.b16 %v1546
        %v2720 = vunpack.c.l.b16 %v1547
        %v2721 = vunpack.c.h.b16 %v1547
        %v2722 = vunpack.c.l.b16 %v1548
        %v2723 = vunpack.c.h.b16 %v1548
        %v2724 = vunpack.c.l.b16 %v1549
        %v2725 = vunpack.c.h.b16 %v1549
        %v2726 = vunpack.c.l.b16 %v1550
        %v2727 = vunpack.c.h.b16 %v1550
        %v2728 = vunpack.c.l.b16 %v1551
        %v2729 = vunpack.c.h.b16 %v1551
        %v2730 = vunpack.c.l.b16 %v1552
        %v2731 = vunpack.c.h.b16 %v1552
        %v2732 = vunpack.c.l.b16 %v1553
        %v2733 = vunpack.c.h.b16 %v1553
        %v2734 = vunpack.c.l.b16 %v1554
        %v2735 = vunpack.c.h.b16 %v1554
        %v2736 = vunpack.c.l.b16 %v1555
        %v2737 = vunpack.c.h.b16 %v1555
        %v2738 = vunpack.c.l.b16 %v1556
        %v2739 = vunpack.c.h.b16 %v1556
        %v2740 = vunpack.c.l.b16 %v1557
        %v2741 = vunpack.c.h.b16 %v1557
        %v2742 = vunpack.c.l.b16 %v1558
        %v2743 = vunpack.c.h.b16 %v1558
        %v2744 = vunpack.c.l.b16 %v1559
        %v2745 = vunpack.c.h.b16 %v1559
        %v2746 = vunpack.c.l.b16 %v1560
        %v2747 = vunpack.c.h.b16 %v1560
        %v2748 = vunpack.c.l.b16 %v1561
        %v2749 = vunpack.c.h.b16 %v1561
        %v2750 = vunpack.c.l.b16 %v1562
        %v2751 = vunpack.c.h.b16 %v1562
        %v2752 = vunpack.c.l.b16 %v1563
        %v2753 = vunpack.c.h.b16 %v1563
        %v2754 = vunpack.c.l.b16 %v1564
        %v2755 = vunpack.c.h.b16 %v1564
        %v2756 = vunpack.c.l.b16 %v1565
        %v2757 = vunpack.c.h.b16 %v1565
        %v2758 = vunpack.c.l.b16 %v1566
        %v2759 = vunpack.c.h.b16 %v1566
        %v2760 = vunpack.c.l.b16 %v1567
        %v2761 = vunpack.c.h.b16 %v1567
        %v2762 = vunpack.c.l.b16 %v1568
        %v2763 = vunpack.c.h.b16 %v1568
        %v2764 = vunpack.c.l.b16 %v1569
        %v2765 = vunpack.c.h.b16 %v1569
        %v2766 = vunpack.c.l.b16 %v1570
        %v2767 = vunpack.c.h.b16 %v1570
        %v2768 = vunpack.c.l.b16 %v1571
        %v2769 = vunpack.c.h.b16 %v1571
        %v2770 = vunpack.c.l.b16 %v1572
        %v2771 = vunpack.c.h.b16 %v1572
        %v2772 = vunpack.c.l.b16 %v1573
        %v2773 = vunpack.c.h.b16 %v1573
        %v2774 = vunpack.c.l.b16 %v1574
        %v2775 = vunpack.c.h.b16 %v1574
        %v2776 = vunpack.c.l.b16 %v1575
        %v2777 = vunpack.c.h.b16 %v1575
        %v2778 = vunpack.c.l.b16 %v1576
        %v2779 = vunpack.c.h.b16 %v1576
        %v2780 = vunpack.c.l.b16 %v1577
        %v2781 = vunpack.c.h.b16 %v1577
        %v2782 = vunpack.c.l.b16 %v1578
        %v2783 = vunpack.c.h.b16 %v1578
        %v2784 = vunpack.c.l.b16 %v1579
        %v2785 = vunpack.c.h.b16 %v1579
        %v2786 = vunpack.c.l.b16 %v1580
        %v2787 = vunpack.c.h.b16 %v1580
        %v2788 = vunpack.c.l.b16 %v1581
        %v2789 = vunpack.c.h.b16 %v1581
        %v2790 = vunpack.c.l.b16 %v1582
        %v2791 = vunpack.c.h.b16 %v1582
        %v2792 = vunpack.c.l.b16 %v1583
        %v2793 = vunpack.c.h.b16 %v1583
        %v2794 = vunpack.c.l.b16 %v1584
        %v2795 = vunpack.c.h.b16 %v1584
        %v2796 = vunpack.c.l.b16 %v1585
        %v2797 = vunpack.c.h.b16 %v1585
        %v2798 = vunpack.c.l.b16 %v1586
        %v2799 = vunpack.c.h.b16 %v1586
        %v2800 = vunpack.c.l.b16 %v1587
        %v2801 = vunpack.c.h.b16 %v1587
        %v2802 = vunpack.c.l.b16 %v1588
        %v2803 = vunpack.c.h.b16 %v1588
        %v2804 = vunpack.c.l.b16 %v1589
        %v2805 = vunpack.c.h.b16 %v1589
        %v2806 = vunpack.c.l.b16 %v1590
        %v2807 = vunpack.c.h.b16 %v1590
        %v2808 = vunpack.c.l.b16 %v1591
        %v2809 = vunpack.c.h.b16 %v1591
        %v2810 = vunpack.c.l.b16 %v1592
        %v2811 = vunpack.c.h.b16 %v1592
        %v2812 = vunpack.c.l.b16 %v1593
        %v2813 = vunpack.c.h.b16 %v1593
        %v2814 = vunpack.c.l.b16 %v1594
        %v2815 = vunpack.c.h.b16 %v1594
        %v2816 = vunpack.c.l.b16 %v1595
        %v2817 = vunpack.c.h.b16 %v1595
        %v2818 = vunpack.c.l.b16 %v1596
        %v2819 = vunpack.c.h.b16 %v1596
        %v2820 = vunpack.c.l.b16 %v1597
        %v2821 = vunpack.c.h.b16 %v1597
        %v2822 = vunpack.c.l.b16 %v1598
        %v2823 = vunpack.c.h.b16 %v1598
        %v2824 = vunpack.c.l.b16 %v1599
        %v2825 = vunpack.c.h.b16 %v1599
        %v2826 = vunpack.c.l.b16 %v1600
        %v2827 = vunpack.c.h.b16 %v1600
        %v2828 = vunpack.c.l.b16 %v1601
        %v2829 = vunpack.c.h.b16 %v1601
        %v2830 = vunpack.c.l.b16 %v1602
        %v2831 = vunpack.c.h.b16 %v1602
        %v2832 = vunpack.c.l.b16 %v1603
        %v2833 = vunpack.c.h.b16 %v1603
        %v2834 = vunpack.c.l.b16 %v1604
        %v2835 = vunpack.c.h.b16 %v1604
        %v2836 = vunpack.c.l.b16 %v1605
        %v2837 = vunpack.c.h.b16 %v1605
        %v2838 = vunpack.c.l.b16 %v1606
        %v2839 = vunpack.c.h.b16 %v1606
        %v2840 = vunpack.c.l.b16 %v1607
        %v2841 = vunpack.c.h.b16 %v1607
        %v2842 = vunpack.c.l.b16 %v1608
        %v2843 = vunpack.c.h.b16 %v1608
        %v2844 = vunpack.c.l.b16 %v1609
        %v2845 = vunpack.c.h.b16 %v1609
        %v2846 = vunpack.c.l.b16 %v1610
        %v2847 = vunpack.c.h.b16 %v1610
        %v2848 = vunpack.c.l.b16 %v1611
        %v2849 = vunpack.c.h.b16 %v1611
        %v2850 = vunpack.c.l.b16 %v1612
        %v2851 = vunpack.c.h.b16 %v1612
        %v2852 = vunpack.c.l.b16 %v1613
        %v2853 = vunpack.c.h.b16 %v1613
        %v2854 = vunpack.c.l.b16 %v1614
        %v2855 = vunpack.c.h.b16 %v1614
        %v2856 = vunpack.c.l.b16 %v1615
        %v2857 = vunpack.c.h.b16 %v1615
        %v2858 = vunpack.c.l.b16 %v1616
        %v2859 = vunpack.c.h.b16 %v1616
        %v2860 = vunpack.c.l.b16 %v1617
        %v2861 = vunpack.c.h.b16 %v1617
        %v2862 = vunpack.c.l.b16 %v1618
        %v2863 = vunpack.c.h.b16 %v1618
        %v2864 = vunpack.c.l.b16 %v1619
        %v2865 = vunpack.c.h.b16 %v1619
        %v2866 = vunpack.c.l.b16 %v1620
        %v2867 = vunpack.c.h.b16 %v1620
        %v2868 = vunpack.c.l.b16 %v1621
        %v2869 = vunpack.c.h.b16 %v1621
        %v2870 = vunpack.c.l.b16 %v1622
        %v2871 = vunpack.c.h.b16 %v1622
        %v2872 = vunpack.c.l.b16 %v1623
        %v2873 = vunpack.c.h.b16 %v1623
        %v2874 = vunpack.c.l.b16 %v1624
        %v2875 = vunpack.c.h.b16 %v1624
        %v2876 = vunpack.c.l.b16 %v1625
        %v2877 = vunpack.c.h.b16 %v1625
        %v2878 = vunpack.c.l.b16 %v1626
        %v2879 = vunpack.c.h.b16 %v1626
        %v2880 = vunpack.c.l.b16 %v1627
        %v2881 = vunpack.c.h.b16 %v1627
        %v2882 = vunpack.c.l.b16 %v1628
        %v2883 = vunpack.c.h.b16 %v1628
        %v2884 = vunpack.c.l.b16 %v1629
        %v2885 = vunpack.c.h.b16 %v1629
        %v2886 = vunpack.c.l.b16 %v1630
        %v2887 = vunpack.c.h.b16 %v1630
        %v2888 = vunpack.c.l.b16 %v1631
        %v2889 = vunpack.c.h.b16 %v1631
        %v2890 = vunpack.c.l.b16 %v1632
        %v2891 = vunpack.c.h.b16 %v1632
        %v2892 = vunpack.c.l.b16 %v1633
        %v2893 = vunpack.c.h.b16 %v1633
        %v2894 = vunpack.c.l.b16 %v1634
        %v2895 = vunpack.c.h.b16 %v1634
        %v2896 = vunpack.c.l.b16 %v1635
        %v2897 = vunpack.c.h.b16 %v1635
        %v2898 = vunpack.c.l.b16 %v1636
        %v2899 = vunpack.c.h.b16 %v1636
        %v2900 = vunpack.c.l.b16 %v1637
        %v2901 = vunpack.c.h.b16 %v1637
        %v2902 = vunpack.c.l.b16 %v1638
        %v2903 = vunpack.c.h.b16 %v1638
        %v2904 = vunpack.c.l.b16 %v1639
        %v2905 = vunpack.c.h.b16 %v1639
        %v2906 = vunpack.c.l.b16 %v1640
        %v2907 = vunpack.c.h.b16 %v1640
        %v2908 = vunpack.c.l.b16 %v1641
        %v2909 = vunpack.c.h.b16 %v1641
        %v2910 = vunpack.c.l.b16 %v1642
        %v2911 = vunpack.c.h.b16 %v1642
        %v2912 = vunpack.c.l.b16 %v1643
        %v2913 = vunpack.c.h.b16 %v1643
        %v2914 = vunpack.c.l.b16 %v1644
        %v2915 = vunpack.c.h.b16 %v1644
        %v2916 = vunpack.c.l.b16 %v1645
        %v2917 = vunpack.c.h.b16 %v1645
        %v2918 = vunpack.c.l.b16 %v1646
        %v2919 = vunpack.c.h.b16 %v1646
        %v2920 = vunpack.c.l.b16 %v1647
        %v2921 = vunpack.c.h.b16 %v1647
        %v2922 = vunpack.c.l.b16 %v1648
        %v2923 = vunpack.c.h.b16 %v1648
        %v2924 = vunpack.c.l.b16 %v1649
        %v2925 = vunpack.c.h.b16 %v1649
        %v2926 = vunpack.c.l.b16 %v1650
        %v2927 = vunpack.c.h.b16 %v1650
        %v2928 = vunpack.c.l.b16 %v1651
        %v2929 = vunpack.c.h.b16 %v1651
        %v2930 = vunpack.c.l.b16 %v1652
        %v2931 = vunpack.c.h.b16 %v1652
        %v2932 = vunpack.c.l.b16 %v1653
        %v2933 = vunpack.c.h.b16 %v1653
        %v2934 = vunpack.c.l.b16 %v1654
        %v2935 = vunpack.c.h.b16 %v1654
        %v2936 = vunpack.c.l.b16 %v1655
        %v2937 = vunpack.c.h.b16 %v1655
        %v2938 = vunpack.c.l.b16 %v1656
        %v2939 = vunpack.c.h.b16 %v1656
        %v2940 = vunpack.c.l.b16 %v1657
        %v2941 = vunpack.c.h.b16 %v1657
        %v2942 = vunpack.c.l.b16 %v1658
        %v2943 = vunpack.c.h.b16 %v1658
        %v2944 = vunpack.c.l.b16 %v1659
        %v2945 = vunpack.c.h.b16 %v1659
        %v2946 = vunpack.c.l.b16 %v1660
        %v2947 = vunpack.c.h.b16 %v1660
        %v2948 = vunpack.c.l.b16 %v1661
        %v2949 = vunpack.c.h.b16 %v1661
        %v2950 = vunpack.c.l.b16 %v1662
        %v2951 = vunpack.c.h.b16 %v1662
        %v2952 = vunpack.c.l.b16 %v1663
        %v2953 = vunpack.c.h.b16 %v1663
        %v2954 = vunpack.c.l.b16 %v1664
        %v2955 = vunpack.c.h.b16 %v1664
        %v2956 = vunpack.c.l.b16 %v1665
        %v2957 = vunpack.c.h.b16 %v1665
        %v2958 = vunpack.c.l.b16 %v1666
        %v2959 = vunpack.c.h.b16 %v1666
        %v2960 = vunpack.c.l.b16 %v1667
        %v2961 = vunpack.c.h.b16 %v1667
        %v2962 = vunpack.c.l.b16 %v1668
        %v2963 = vunpack.c.h.b16 %v1668
        %v2964 = vunpack.c.l.b16 %v1669
        %v2965 = vunpack.c.h.b16 %v1669
        %v2966 = vunpack.c.l.b16 %v1670
        %v2967 = vunpack.c.h.b16 %v1670
        %v2968 = vunpack.c.l.b16 %v1671
        %v2969 = vunpack.c.h.b16 %v1671
        %v2970 = vunpack.c.l.b16 %v1672
        %v2971 = vunpack.c.h.b16 %v1672
        %v2972 = vunpack.c.l.b16 %v1673
        %v2973 = vunpack.c.h.b16 %v1673
        %v2974 = vunpack.c.l.b16 %v1674
        %v2975 = vunpack.c.h.b16 %v1674
        %v2976 = vunpack.c.l.b16 %v1675
        %v2977 = vunpack.c.h.b16 %v1675
        %v2978 = vunpack.c.l.b16 %v1676
        %v2979 = vunpack.c.h.b16 %v1676
        %v2980 = vunpack.c.l.b16 %v1677
        %v2981 = vunpack.c.h.b16 %v1677
        %v2982 = vunpack.c.l.b16 %v1678
        %v2983 = vunpack.c.h.b16 %v1678
        %v2984 = vunpack.c.l.b16 %v1679
        %v2985 = vunpack.c.h.b16 %v1679
        %v2986 = vunpack.c.l.b16 %v1680
        %v2987 = vunpack.c.h.b16 %v1680
        %v2988 = vunpack.c.l.b16 %v1681
        %v2989 = vunpack.c.h.b16 %v1681
        %v2990 = vunpack.c.l.b16 %v1682
        %v2991 = vunpack.c.h.b16 %v1682
        %v2992 = vunpack.c.l.b16 %v1683
        %v2993 = vunpack.c.h.b16 %v1683
        %v2994 = vunpack.c.l.b16 %v1684
        %v2995 = vunpack.c.h.b16 %v1684
        %v2996 = vunpack.c.l.b16 %v1685
        %v2997 = vunpack.c.h.b16 %v1685
        %v2998 = vunpack.c.l.b16 %v1686
        %v2999 = vunpack.c.h.b16 %v1686
        %v3000 = vunpack.c.l.b16 %v1687
        %v3001 = vunpack.c.h.b16 %v1687
        %v3002 = vunpack.c.l.b16 %v1688
        %v3003 = vunpack.c.h.b16 %v1688
        %v3004 = vunpack.c.l.b16 %v1689
        %v3005 = vunpack.c.h.b16 %v1689
        %v3006 = vunpack.c.l.b16 %v1690
        %v3007 = vunpack.c.h.b16 %v1690
        %v3008 = vunpack.c.l.b16 %v1691
        %v3009 = vunpack.c.h.b16 %v1691
        %v3010 = vunpack.c.l.b16 %v1692
        %v3011 = vunpack.c.h.b16 %v1692
        %v3012 = vunpack.c.l.b16 %v1693
        %v3013 = vunpack.c.h.b16 %v1693
        %v3014 = vunpack.c.l.b16 %v1694
        %v3015 = vunpack.c.h.b16 %v1694
        %v3016 = vunpack.c.l.b16 %v1695
        %v3017 = vunpack.c.h.b16 %v1695
        %v3018 = vunpack.c.l.b16 %v1696
        %v3019 = vunpack.c.h.b16 %v1696
        %v3020 = vunpack.c.l.b16 %v1697
        %v3021 = vunpack.c.h.b16 %v1697
        %v3022 = vunpack.c.l.b16 %v1698
        %v3023 = vunpack.c.h.b16 %v1698
        %v3024 = vunpack.c.l.b16 %v1699
        %v3025 = vunpack.c.h.b16 %v1699
        %v3026 = vunpack.c.l.b16 %v1700
        %v3027 = vunpack.c.h.b16 %v1700
        %v3028 = vunpack.c.l.b16 %v1701
        %v3029 = vunpack.c.h.b16 %v1701
        %v3030 = vunpack.c.l.b16 %v1702
        %v3031 = vunpack.c.h.b16 %v1702
        %v3032 = vunpack.c.l.b16 %v1703
        %v3033 = vunpack.c.h.b16 %v1703
        %v3034 = vunpack.c.l.b16 %v1704
        %v3035 = vunpack.c.h.b16 %v1704
        %v3036 = vunpack.c.l.b16 %v1705
        %v3037 = vunpack.c.h.b16 %v1705
        %v3038 = vunpack.c.l.b16 %v1706
        %v3039 = vunpack.c.h.b16 %v1706
        %v3040 = vunpack.c.l.b16 %v1707
        %v3041 = vunpack.c.h.b16 %v1707
        %v3042 = vunpack.c.l.b16 %v1708
        %v3043 = vunpack.c.h.b16 %v1708
        %v3044 = vunpack.c.l.b16 %v1709
        %v3045 = vunpack.c.h.b16 %v1709
        %v3046 = vunpack.c.l.b16 %v1710
        %v3047 = vunpack.c.h.b16 %v1710
        %v3048 = vunpack.c.l.b16 %v1711
        %v3049 = vunpack.c.h.b16 %v1711
        %v3050 = vunpack.c.l.b16 %v1712
        %v3051 = vunpack.c.h.b16 %v1712
        %v3052 = vunpack.c.l.b16 %v1713
        %v3053 = vunpack.c.h.b16 %v1713
        %v3054 = vunpack.c.l.b16 %v1714
        %v3055 = vunpack.c.h.b16 %v1714
        %v3056 = vunpack.c.l.b16 %v1715
        %v3057 = vunpack.c.h.b16 %v1715
        %v3058 = vunpack.c.l.b16 %v1716
        %v3059 = vunpack.c.h.b16 %v1716
        %v3060 = vunpack.c.l.b16 %v1717
        %v3061 = vunpack.c.h.b16 %v1717
        %v3062 = vunpack.c.l.b16 %v1718
        %v3063 = vunpack.c.h.b16 %v1718
        %v3064 = vunpack.c.l.b16 %v1719
        %v3065 = vunpack.c.h.b16 %v1719
        %v3066 = vunpack.c.l.b16 %v1720
        %v3067 = vunpack.c.h.b16 %v1720
        %v3068 = vunpack.c.l.b16 %v1721
        %v3069 = vunpack.c.h.b16 %v1721
        %v3070 = vunpack.c.l.b16 %v1722
        %v3071 = vunpack.c.h.b16 %v1722
        %v3072 = vunpack.c.l.b16 %v1723
        %v3073 = vunpack.c.h.b16 %v1723
        %v3074 = vunpack.c.l.b16 %v1724
        %v3075 = vunpack.c.h.b16 %v1724
        %v3076 = vunpack.c.l.b16 %v1725
        %v3077 = vunpack.c.h.b16 %v1725
        %v3078 = vunpack.c.l.b16 %v1726
        %v3079 = vunpack.c.h.b16 %v1726
        %v3080 = vunpack.c.l.b16 %v1727
        %v3081 = vunpack.c.h.b16 %v1727
        %v3082 = vunpack.c.l.b16 %v1728
        %v3083 = vunpack.c.h.b16 %v1728
        %v3084 = vunpack.c.l.b16 %v1729
        %v3085 = vunpack.c.h.b16 %v1729
        %v3086 = vunpack.c.l.b16 %v1730
        %v3087 = vunpack.c.h.b16 %v1730
        %v3088 = vunpack.c.l.b16 %v1731
        %v3089 = vunpack.c.h.b16 %v1731
        %v3090 = vunpack.c.l.b16 %v1732
        %v3091 = vunpack.c.h.b16 %v1732
        %v3092 = vunpack.c.l.b16 %v1733
        %v3093 = vunpack.c.h.b16 %v1733
        %v3094 = vunpack.c.l.b16 %v1734
        %v3095 = vunpack.c.h.b16 %v1734
        %v3096 = vunpack.c.l.b16 %v1735
        %v3097 = vunpack.c.h.b16 %v1735
        %v3098 = vunpack.c.l.b16 %v1736
        %v3099 = vunpack.c.h.b16 %v1736
        %v3100 = vunpack.c.l.b16 %v1737
        %v3101 = vunpack.c.h.b16 %v1737
        %v3102 = vunpack.c.l.b16 %v1738
        %v3103 = vunpack.c.h.b16 %v1738
        %v3104 = vunpack.c.l.b16 %v1739
        %v3105 = vunpack.c.h.b16 %v1739
        %v3106 = vunpack.c.l.b16 %v1740
        %v3107 = vunpack.c.h.b16 %v1740
        %v3108 = vunpack.c.l.b16 %v1741
        %v3109 = vunpack.c.h.b16 %v1741
        %v3110 = vunpack.c.l.b16 %v1742
        %v3111 = vunpack.c.h.b16 %v1742
        %v3112 = vunpack.c.l.b16 %v1743
        %v3113 = vunpack.c.h.b16 %v1743
        %v3114 = vunpack.c.l.b16 %v1744
        %v3115 = vunpack.c.h.b16 %v1744
        %v3116 = vunpack.c.l.b16 %v1745
        %v3117 = vunpack.c.h.b16 %v1745
        %v3118 = vunpack.c.l.b16 %v1746
        %v3119 = vunpack.c.h.b16 %v1746
        %v3120 = vunpack.c.l.b16 %v1747
        %v3121 = vunpack.c.h.b16 %v1747
        %v3122 = vunpack.c.l.b16 %v1748
        %v3123 = vunpack.c.h.b16 %v1748
        %v3124 = vunpack.c.l.b16 %v1749
        %v3125 = vunpack.c.h.b16 %v1749
        %v3126 = vunpack.c.l.b16 %v1750
        %v3127 = vunpack.c.h.b16 %v1750
        %v3128 = vunpack.c.l.b16 %v1751
        %v3129 = vunpack.c.h.b16 %v1751
        %v3130 = vunpack.c.l.b16 %v1752
        %v3131 = vunpack.c.h.b16 %v1752
        %v3132 = vunpack.c.l.b16 %v1753
        %v3133 = vunpack.c.h.b16 %v1753
        %v3134 = vunpack.c.l.b16 %v1754
        %v3135 = vunpack.c.h.b16 %v1754
        %v3136 = vunpack.c.l.b16 %v1755
        %v3137 = vunpack.c.h.b16 %v1755
        %v3138 = vunpack.c.l.b16 %v1756
        %v3139 = vunpack.c.h.b16 %v1756
        %v3140 = vunpack.c.l.b16 %v1757
        %v3141 = vunpack.c.h.b16 %v1757
        %v3142 = vunpack.c.l.b16 %v1758
        %v3143 = vunpack.c.h.b16 %v1758
        %v3144 = vunpack.c.l.b16 %v1759
        %v3145 = vunpack.c.h.b16 %v1759
        %v3146 = vunpack.c.l.b16 %v1760
        %v3147 = vunpack.c.h.b16 %v1760
        %v3148 = vunpack.c.l.b16 %v1761
        %v3149 = vunpack.c.h.b16 %v1761
        %v3150 = vunpack.c.l.b16 %v1762
        %v3151 = vunpack.c.h.b16 %v1762
        %v3152 = vunpack.c.l.b16 %v1763
        %v3153 = vunpack.c.h.b16 %v1763
        %v3154 = vunpack.c.l.b16 %v1764
        %v3155 = vunpack.c.h.b16 %v1764
        %v3156 = vunpack.c.l.b16 %v1765
        %v3157 = vunpack.c.h.b16 %v1765
        %v3158 = vunpack.c.l.b16 %v1766
        %v3159 = vunpack.c.h.b16 %v1766
        %v3160 = vunpack.c.l.b16 %v1767
        %v3161 = vunpack.c.h.b16 %v1767
        %v3162 = vunpack.c.l.b16 %v1768
        %v3163 = vunpack.c.h.b16 %v1768
        %v3164 = vunpack.c.l.b16 %v1769
        %v3165 = vunpack.c.h.b16 %v1769
        %v3166 = vunpack.c.l.b16 %v1770
        %v3167 = vunpack.c.h.b16 %v1770
        %v3168 = vunpack.c.l.b16 %v1771
        %v3169 = vunpack.c.h.b16 %v1771
        %v3170 = vunpack.c.l.b16 %v1772
        %v3171 = vunpack.c.h.b16 %v1772
        %v3172 = vunpack.c.l.b16 %v1773
        %v3173 = vunpack.c.h.b16 %v1773
        %v3174 = vunpack.c.l.b16 %v1774
        %v3175 = vunpack.c.h.b16 %v1774
        %v3176 = vunpack.c.l.b16 %v1775
        %v3177 = vunpack.c.h.b16 %v1775
        %v3178 = vunpack.c.l.b16 %v1776
        %v3179 = vunpack.c.h.b16 %v1776
        %v3180 = vunpack.c.l.b16 %v1777
        %v3181 = vunpack.c.h.b16 %v1777
        %v3182 = vunpack.c.l.b16 %v1778
        %v3183 = vunpack.c.h.b16 %v1778
        %v3184 = vunpack.c.l.b16 %v1779
        %v3185 = vunpack.c.h.b16 %v1779
        %v3186 = vunpack.c.l.b16 %v1780
        %v3187 = vunpack.c.h.b16 %v1780
        %v3188 = vunpack.c.l.b16 %v1781
        %v3189 = vunpack.c.h.b16 %v1781
        %v3190 = vunpack.c.l.b16 %v1782
        %v3191 = vunpack.c.h.b16 %v1782
        %v3192 = vunpack.c.l.b16 %v1783
        %v3193 = vunpack.c.h.b16 %v1783
        %v3194 = vunpack.c.l.b16 %v1784
        %v3195 = vunpack.c.h.b16 %v1784
        %v3196 = vunpack.c.l.b16 %v1785
        %v3197 = vunpack.c.h.b16 %v1785
        %v3198 = vunpack.c.l.b16 %v1786
        %v3199 = vunpack.c.h.b16 %v1786
        %v3200 = vunpack.c.l.b16 %v1787
        %v3201 = vunpack.c.h.b16 %v1787
        %v3202 = vunpack.c.l.b16 %v1788
        %v3203 = vunpack.c.h.b16 %v1788
        %v3204 = vunpack.c.l.b16 %v1789
        %v3205 = vunpack.c.h.b16 %v1789
        %v3206 = vunpack.c.l.b16 %v1790
        %v3207 = vunpack.c.h.b16 %v1790
        %v3208 = vunpack.c.l.b16 %v1791
        %v3209 = vunpack.c.h.b16 %v1791
        %v3210 = vunpack.c.l.b16 %v1792
        %v3211 = vunpack.c.h.b16 %v1792
        %v3212 = vunpack.c.l.b16 %v1793
        %v3213 = vunpack.c.h.b16 %v1793
        %v3214 = vunpack.c.l.b16 %v1794
        %v3215 = vunpack.c.h.b16 %v1794
        %v3216 = vunpack.c.l.b16 %v1795
        %v3217 = vunpack.c.h.b16 %v1795
        %v3218 = vunpack.c.l.b16 %v1796
        %v3219 = vunpack.c.h.b16 %v1796
        %v3220 = vunpack.c.l.b16 %v1797
        %v3221 = vunpack.c.h.b16 %v1797
        %v3222 = vunpack.c.l.b16 %v1798
        %v3223 = vunpack.c.h.b16 %v1798
        %v3224 = vunpack.c.l.b16 %v1799
        %v3225 = vunpack.c.h.b16 %v1799
        %v3226 = vunpack.c.l.b16 %v1800
        %v3227 = vunpack.c.h.b16 %v1800
        %v3228 = vunpack.c.l.b16 %v1801
        %v3229 = vunpack.c.h.b16 %v1801
        %v3230 = vunpack.c.l.b16 %v1802
        %v3231 = vunpack.c.h.b16 %v1802
        %v3232 = vunpack.c.l.b16 %v1803
        %v3233 = vunpack.c.h.b16 %v1803
        %v3234 = vunpack.c.l.b16 %v1804
        %v3235 = vunpack.c.h.b16 %v1804
        %v3236 = vunpack.c.l.b16 %v1805
        %v3237 = vunpack.c.h.b16 %v1805
        %v3238 = vunpack.c.l.b16 %v1806
        %v3239 = vunpack.c.h.b16 %v1806
        %v3240 = vunpack.c.l.b16 %v1807
        %v3241 = vunpack.c.h.b16 %v1807
        %v3242 = vunpack.c.l.b16 %v1808
        %v3243 = vunpack.c.h.b16 %v1808
        %v3244 = vunpack.c.l.b16 %v1809
        %v3245 = vunpack.c.h.b16 %v1809
        %v3246 = vunpack.c.l.b16 %v1810
        %v3247 = vunpack.c.h.b16 %v1810
        %v3248 = vunpack.c.l.b16 %v1811
        %v3249 = vunpack.c.h.b16 %v1811
        %v3250 = vunpack.c.l.b16 %v1812
        %v3251 = vunpack.c.h.b16 %v1812
        %v3252 = vunpack.c.l.b16 %v1813
        %v3253 = vunpack.c.h.b16 %v1813
        %v3254 = vunpack.c.l.b16 %v1814
        %v3255 = vunpack.c.h.b16 %v1814
        %v3256 = vunpack.c.l.b16 %v1815
        %v3257 = vunpack.c.h.b16 %v1815
        %v3258 = vunpack.c.l.b16 %v1816
        %v3259 = vunpack.c.h.b16 %v1816
        %v3260 = vunpack.c.l.b16 %v1817
        %v3261 = vunpack.c.h.b16 %v1817
        %v3262 = vunpack.c.l.b16 %v1818
        %v3263 = vunpack.c.h.b16 %v1818
        %v3264 = vunpack.c.l.b16 %v1819
        %v3265 = vunpack.c.h.b16 %v1819
        %v3266 = vunpack.c.l.b16 %v1820
        %v3267 = vunpack.c.h.b16 %v1820
        %v3268 = vunpack.c.l.b16 %v1821
        %v3269 = vunpack.c.h.b16 %v1821
        %v3270 = vunpack.c.l.b16 %v1822
        %v3271 = vunpack.c.h.b16 %v1822
        %v3272 = vunpack.c.l.b16 %v1823
        %v3273 = vunpack.c.h.b16 %v1823
        %v3274 = vunpack.c.l.b16 %v1824
        %v3275 = vunpack.c.h.b16 %v1824
        %v3276 = vunpack.c.l.b16 %v1825
        %v3277 = vunpack.c.h.b16 %v1825
        %v3278 = vunpack.c.l.b16 %v1826
        %v3279 = vunpack.c.h.b16 %v1826
        %v3280 = vunpack.c.l.b16 %v1827
        %v3281 = vunpack.c.h.b16 %v1827
        %v3282 = vunpack.c.l.b16 %v1828
        %v3283 = vunpack.c.h.b16 %v1828
        %v3284 = vunpack.c.l.b16 %v1829
        %v3285 = vunpack.c.h.b16 %v1829
        %v3286 = vunpack.c.l.b16 %v1830
        %v3287 = vunpack.c.h.b16 %v1830
        %v3288 = vunpack.c.l.b16 %v1831
        %v3289 = vunpack.c.h.b16 %v1831
        %v3290 = vunpack.c.l.b16 %v1832
        %v3291 = vunpack.c.h.b16 %v1832
        %v3292 = vunpack.c.l.b16 %v1833
        %v3293 = vunpack.c.h.b16 %v1833
        %v3294 = vunpack.c.l.b16 %v1834
        %v3295 = vunpack.c.h.b16 %v1834
        %v3296 = vunpack.c.l.b16 %v1835
        %v3297 = vunpack.c.h.b16 %v1835
        %v3298 = vunpack.c.l.b16 %v1836
        %v3299 = vunpack.c.h.b16 %v1836
        %v3300 = vunpack.c.l.b16 %v1837
        %v3301 = vunpack.c.h.b16 %v1837
        %v3302 = vunpack.c.l.b16 %v1838
        %v3303 = vunpack.c.h.b16 %v1838
        %v3304 = vunpack.c.l.b16 %v1839
        %v3305 = vunpack.c.h.b16 %v1839
        %v3306 = vunpack.c.l.b16 %v1840
        %v3307 = vunpack.c.h.b16 %v1840
        %v3308 = vunpack.c.l.b16 %v1841
        %v3309 = vunpack.c.h.b16 %v1841
        %v3310 = vunpack.c.l.b16 %v1842
        %v3311 = vunpack.c.h.b16 %v1842
        %v3312 = vunpack.c.l.b16 %v1843
        %v3313 = vunpack.c.h.b16 %v1843
        %v3314 = vunpack.c.l.b16 %v1844
        %v3315 = vunpack.c.h.b16 %v1844
        %v3316 = vunpack.c.l.b16 %v1845
        %v3317 = vunpack.c.h.b16 %v1845
        %v3318 = vunpack.c.l.b16 %v1846
        %v3319 = vunpack.c.h.b16 %v1846
        %v3320 = vunpack.c.l.b16 %v1847
        %v3321 = vunpack.c.h.b16 %v1847
        %v3322 = vunpack.c.l.b16 %v1848
        %v3323 = vunpack.c.h.b16 %v1848
        %v3324 = vunpack.c.l.b16 %v1849
        %v3325 = vunpack.c.h.b16 %v1849
        %v3326 = vunpack.c.l.b16 %v1850
        %v3327 = vunpack.c.h.b16 %v1850
        %v3328 = vunpack.c.l.b16 %v1851
        %v3329 = vunpack.c.h.b16 %v1851
        %v3330 = vunpack.c.l.b16 %v1852
        %v3331 = vunpack.c.h.b16 %v1852
        %v3332 = vunpack.c.l.b16 %v1853
        %v3333 = vunpack.c.h.b16 %v1853
        %v3334 = vunpack.c.l.b16 %v1854
        %v3335 = vunpack.c.h.b16 %v1854
        %v3336 = vunpack.c.l.b16 %v1855
        %v3337 = vunpack.c.h.b16 %v1855
        %v3338 = vunpack.c.l.b16 %v1856
        %v3339 = vunpack.c.h.b16 %v1856
        %v3340 = vunpack.c.l.b16 %v1857
        %v3341 = vunpack.c.h.b16 %v1857
        %v3342 = vunpack.c.l.b16 %v1858
        %v3343 = vunpack.c.h.b16 %v1858
        %v3344 = vunpack.c.l.b16 %v1859
        %v3345 = vunpack.c.h.b16 %v1859
        %v3346 = vunpack.c.l.b16 %v1860
        %v3347 = vunpack.c.h.b16 %v1860
        %v3348 = vunpack.c.l.b16 %v1861
        %v3349 = vunpack.c.h.b16 %v1861
        %v3350 = vunpack.c.l.b16 %v1862
        %v3351 = vunpack.c.h.b16 %v1862
        %v3352 = vunpack.c.l.b16 %v1863
        %v3353 = vunpack.c.h.b16 %v1863
        %v3354 = vunpack.c.l.b16 %v1864
        %v3355 = vunpack.c.h.b16 %v1864
        %v3356 = vunpack.c.l.b16 %v1865
        %v3357 = vunpack.c.h.b16 %v1865
        %v3358 = vunpack.c.l.b16 %v1866
        %v3359 = vunpack.c.h.b16 %v1866
        %v3360 = vunpack.c.l.b16 %v1867
        %v3361 = vunpack.c.h.b16 %v1867
        %v3362 = vunpack.c.l.b16 %v1868
        %v3363 = vunpack.c.h.b16 %v1868
        %v3364 = vunpack.c.l.b16 %v1869
        %v3365 = vunpack.c.h.b16 %v1869
        %v3366 = vunpack.c.l.b16 %v1870
        %v3367 = vunpack.c.h.b16 %v1870
        %v3368 = vunpack.c.l.b16 %v1871
        %v3369 = vunpack.c.h.b16 %v1871
        %v3370 = vunpack.c.l.b16 %v1872
        %v3371 = vunpack.c.h.b16 %v1872
        %v3372 = vunpack.c.l.b16 %v1873
        %v3373 = vunpack.c.h.b16 %v1873
        %v3374 = vunpack.c.l.b16 %v1874
        %v3375 = vunpack.c.h.b16 %v1874
        %v3376 = vunpack.c.l.b16 %v1875
        %v3377 = vunpack.c.h.b16 %v1875
        %v3378 = vunpack.c.l.b16 %v1876
        %v3379 = vunpack.c.h.b16 %v1876
        %v3380 = vunpack.c.l.b16 %v1877
        %v3381 = vunpack.c.h.b16 %v1877
        %v3382 = vunpack.c.l.b16 %v1878
        %v3383 = vunpack.c.h.b16 %v1878
        %v3384 = vunpack.c.l.b16 %v1879
        %v3385 = vunpack.c.h.b16 %v1879
        %v3386 = vunpack.c.l.b16 %v1880
        %v3387 = vunpack.c.h.b16 %v1880
        %v3388 = vunpack.c.l.b16 %v1881
        %v3389 = vunpack.c.h.b16 %v1881
        %v3390 = vunpack.c.l.b16 %v1882
        %v3391 = vunpack.c.h.b16 %v1882
        %v3392 = vunpack.c.l.b16 %v1883
        %v3393 = vunpack.c.h.b16 %v1883
        %v3394 = vunpack.c.l.b16 %v1884
        %v3395 = vunpack.c.h.b16 %v1884
        %v3396 = vunpack.c.l.b16 %v1885
        %v3397 = vunpack.c.h.b16 %v1885
        %v3398 = vunpack.c.l.b16 %v1886
        %v3399 = vunpack.c.h.b16 %v1886
        %v3400 = vunpack.c.l.b16 %v1887
        %v3401 = vunpack.c.h.b16 %v1887
        %v3402 = vunpack.c.l.b16 %v1888
        %v3403 = vunpack.c.h.b16 %v1888
        %v3404 = vunpack.c.l.b16 %v1889
        %v3405 = vunpack.c.h.b16 %v1889
        %v3406 = vunpack.c.l.b16 %v1890
        %v3407 = vunpack.c.h.b16 %v1890
        %v3408 = vunpack.c.l.b16 %v1891
        %v3409 = vunpack.c.h.b16 %v1891
        %v3410 = vunpack.c.l.b16 %v1892
        %v3411 = vunpack.c.h.b16 %v1892
        %v3412 = vunpack.c.l.b16 %v1893
        %v3413 = vunpack.c.h.b16 %v1893
        %v3414 = vunpack.c.l.b16 %v1894
        %v3415 = vunpack.c.h.b16 %v1894
        %v3416 = vunpack.c.l.b16 %v1895
        %v3417 = vunpack.c.h.b16 %v1895
        %v3418 = vunpack.c.l.b16 %v1896
        %v3419 = vunpack.c.h.b16 %v1896
        %v3420 = vunpack.c.l.b16 %v1897
        %v3421 = vunpack.c.h.b16 %v1897
        %v3422 = vunpack.c.l.b16 %v1898
        %v3423 = vunpack.c.h.b16 %v1898
        %v3424 = vunpack.c.l.b16 %v1899
        %v3425 = vunpack.c.h.b16 %v1899
        %v3426 = vunpack.c.l.b16 %v1900
        %v3427 = vunpack.c.h.b16 %v1900
        %v3428 = vunpack.c.l.b16 %v1901
        %v3429 = vunpack.c.h.b16 %v1901
        %v3430 = vunpack.c.l.b16 %v1902
        %v3431 = vunpack.c.h.b16 %v1902
        %v3432 = vunpack.c.l.b16 %v1903
        %v3433 = vunpack.c.h.b16 %v1903
        %v3434 = vunpack.c.l.b16 %v1904
        %v3435 = vunpack.c.h.b16 %v1904
        %v3436 = vunpack.c.l.b16 %v1905
        %v3437 = vunpack.c.h.b16 %v1905
        %v3438 = vunpack.c.l.b16 %v1906
        %v3439 = vunpack.c.h.b16 %v1906
        %v3440 = vunpack.c.l.b16 %v1907
        %v3441 = vunpack.c.h.b16 %v1907
        %v3442 = vunpack.c.l.b16 %v1908
        %v3443 = vunpack.c.h.b16 %v1908
        %v3444 = vunpack.c.l.b16 %v1909
        %v3445 = vunpack.c.h.b16 %v1909
        %v3446 = vpack.c.b16 %v2438, %v2422
        %v3447 = vpack.c.b16 %v2439, %v2423
        %v3448 = vpack.c.b16 %v2440, %v2424
        %v3449 = vpack.c.b16 %v2441, %v2425
        %v3450 = vpack.c.b16 %v2442, %v2426
        %v3451 = vpack.c.b16 %v2443, %v2427
        %v3452 = vpack.c.b16 %v2444, %v2428
        %v3453 = vpack.c.b16 %v2445, %v2429
        %v3454 = vpack.c.b16 %v2446, %v2430
        %v3455 = vpack.c.b16 %v2447, %v2431
        %v3456 = vpack.c.b16 %v2448, %v2432
        %v3457 = vpack.c.b16 %v2449, %v2433
        %v3458 = vpack.c.b16 %v2450, %v2434
        %v3459 = vpack.c.b16 %v2451, %v2435
        %v3460 = vpack.c.b16 %v2452, %v2436
        %v3461 = vpack.c.b16 %v2453, %v2437
        %v3462 = vpack.c.b16 %v2470, %v2454
        %v3463 = vpack.c.b16 %v2471, %v2455
        %v3464 = vpack.c.b16 %v2472, %v2456
        %v3465 = vpack.c.b16 %v2473, %v2457
        %v3466 = vpack.c.b16 %v2474, %v2458
        %v3467 = vpack.c.b16 %v2475, %v2459
        %v3468 = vpack.c.b16 %v2476, %v2460
        %v3469 = vpack.c.b16 %v2477, %v2461
        %v3470 = vpack.c.b16 %v2478, %v2462
        %v3471 = vpack.c.b16 %v2479, %v2463
        %v3472 = vpack.c.b16 %v2480, %v2464
        %v3473 = vpack.c.b16 %v2481, %v2465
        %v3474 = vpack.c.b16 %v2482, %v2466
        %v3475 = vpack.c.b16 %v2483, %v2467
        %v3476 = vpack.c.b16 %v2484, %v2468
        %v3477 = vpack.c.b16 %v2485, %v2469
        %v3478 = vpack.c.b16 %v2502, %v2486
        %v3479 = vpack.c.b16 %v2503, %v2487
        %v3480 = vpack.c.b16 %v2504, %v2488
        %v3481 = vpack.c.b16 %v2505, %v2489
        %v3482 = vpack.c.b16 %v2506, %v2490
        %v3483 = vpack.c.b16 %v2507, %v2491
        %v3484 = vpack.c.b16 %v2508, %v2492
        %v3485 = vpack.c.b16 %v2509, %v2493
        %v3486 = vpack.c.b16 %v2510, %v2494
        %v3487 = vpack.c.b16 %v2511, %v2495
        %v3488 = vpack.c.b16 %v2512, %v2496
        %v3489 = vpack.c.b16 %v2513, %v2497
        %v3490 = vpack.c.b16 %v2514, %v2498
        %v3491 = vpack.c.b16 %v2515, %v2499
        %v3492 = vpack.c.b16 %v2516, %v2500
        %v3493 = vpack.c.b16 %v2517, %v2501
        %v3494 = vpack.c.b16 %v2534, %v2518
        %v3495 = vpack.c.b16 %v2535, %v2519
        %v3496 = vpack.c.b16 %v2536, %v2520
        %v3497 = vpack.c.b16 %v2537, %v2521
        %v3498 = vpack.c.b16 %v2538, %v2522
        %v3499 = vpack.c.b16 %v2539, %v2523
        %v3500 = vpack.c.b16 %v2540, %v2524
        %v3501 = vpack.c.b16 %v2541, %v2525
        %v3502 = vpack.c.b16 %v2542, %v2526
        %v3503 = vpack.c.b16 %v2543, %v2527
        %v3504 = vpack.c.b16 %v2544, %v2528
        %v3505 = vpack.c.b16 %v2545, %v2529
        %v3506 = vpack.c.b16 %v2546, %v2530
        %v3507 = vpack.c.b16 %v2547, %v2531
        %v3508 = vpack.c.b16 %v2548, %v2532
        %v3509 = vpack.c.b16 %v2549, %v2533
        %v3510 = vpack.c.b16 %v2566, %v2550
        %v3511 = vpack.c.b16 %v2567, %v2551
        %v3512 = vpack.c.b16 %v2568, %v2552
        %v3513 = vpack.c.b16 %v2569, %v2553
        %v3514 = vpack.c.b16 %v2570, %v2554
        %v3515 = vpack.c.b16 %v2571, %v2555
        %v3516 = vpack.c.b16 %v2572, %v2556
        %v3517 = vpack.c.b16 %v2573, %v2557
        %v3518 = vpack.c.b16 %v2574, %v2558
        %v3519 = vpack.c.b16 %v2575, %v2559
        %v3520 = vpack.c.b16 %v2576, %v2560
        %v3521 = vpack.c.b16 %v2577, %v2561
        %v3522 = vpack.c.b16 %v2578, %v2562
        %v3523 = vpack.c.b16 %v2579, %v2563
        %v3524 = vpack.c.b16 %v2580, %v2564
        %v3525 = vpack.c.b16 %v2581, %v2565
        %v3526 = vpack.c.b16 %v2598, %v2582
        %v3527 = vpack.c.b16 %v2599, %v2583
        %v3528 = vpack.c.b16 %v2600, %v2584
        %v3529 = vpack.c.b16 %v2601, %v2585
        %v3530 = vpack.c.b16 %v2602, %v2586
        %v3531 = vpack.c.b16 %v2603, %v2587
        %v3532 = vpack.c.b16 %v2604, %v2588
        %v3533 = vpack.c.b16 %v2605, %v2589
        %v3534 = vpack.c.b16 %v2606, %v2590
        %v3535 = vpack.c.b16 %v2607, %v2591
        %v3536 = vpack.c.b16 %v2608, %v2592
        %v3537 = vpack.c.b16 %v2609, %v2593
        %v3538 = vpack.c.b16 %v2610, %v2594
        %v3539 = vpack.c.b16 %v2611, %v2595
        %v3540 = vpack.c.b16 %v2612, %v2596
        %v3541 = vpack.c.b16 %v2613, %v2597
        %v3542 = vpack.c.b16 %v2630, %v2614
        %v3543 = vpack.c.b16 %v2631, %v2615
        %v3544 = vpack.c.b16 %v2632, %v2616
        %v3545 = vpack.c.b16 %v2633, %v2617
        %v3546 = vpack.c.b16 %v2634, %v2618
        %v3547 = vpack.c.b16 %v2635, %v2619
        %v3548 = vpack.c.b16 %v2636, %v2620
        %v3549 = vpack.c.b16 %v2637, %v2621
        %v3550 = vpack.c.b16 %v2638, %v2622
        %v3551 = vpack.c.b16 %v2639, %v2623
        %v3552 = vpack.c.b16 %v2640, %v2624
        %v3553 = vpack.c.b16 %v2641, %v2625
        %v3554 = vpack.c.b16 %v2642, %v2626
        %v3555 = vpack.c.b16 %v2643, %v2627
        %v3556 = vpack.c.b16 %v2644, %v2628
        %v3557 = vpack.c.b16 %v2645, %v2629
        %v3558 = vpack.c.b16 %v2662, %v2646
        %v3559 = vpack.c.b16 %v2663, %v2647
        %v3560 = vpack.c.b16 %v2664, %v2648
        %v3561 = vpack.c.b16 %v2665, %v2649
        %v3562 = vpack.c.b16 %v2666, %v2650
        %v3563 = vpack.c.b16 %v2667, %v2651
        %v3564 = vpack.c.b16 %v2668, %v2652
        %v3565 = vpack.c.b16 %v2669, %v2653
        %v3566 = vpack.c.b16 %v2670, %v2654
        %v3567 = vpack.c.b16 %v2671, %v2655
        %v3568 = vpack.c.b16 %v2672, %v2656
        %v3569 = vpack.c.b16 %v2673, %v2657
        %v3570 = vpack.c.b16 %v2674, %v2658
        %v3571 = vpack.c.b16 %v2675, %v2659
        %v3572 = vpack.c.b16 %v2676, %v2660
        %v3573 = vpack.c.b16 %v2677, %v2661
        %v3574 = vpack.c.b16 %v2694, %v2678
        %v3575 = vpack.c.b16 %v2695, %v2679
        %v3576 = vpack.c.b16 %v2696, %v2680
        %v3577 = vpack.c.b16 %v2697, %v2681
        %v3578 = vpack.c.b16 %v2698, %v2682
        %v3579 = vpack.c.b16 %v2699, %v2683
        %v3580 = vpack.c.b16 %v2700, %v2684
        %v3581 = vpack.c.b16 %v2701, %v2685
        %v3582 = vpack.c.b16 %v2702, %v2686
        %v3583 = vpack.c.b16 %v2703, %v2687
        %v3584 = vpack.c.b16 %v2704, %v2688
        %v3585 = vpack.c.b16 %v2705, %v2689
        %v3586 = vpack.c.b16 %v2706, %v2690
        %v3587 = vpack.c.b16 %v2707, %v2691
        %v3588 = vpack.c.b16 %v2708, %v2692
        %v3589 = vpack.c.b16 %v2709, %v2693
        %v3590 = vpack.c.b16 %v2726, %v2710
        %v3591 = vpack.c.b16 %v2727, %v2711
        %v3592 = vpack.c.b16 %v2728, %v2712
        %v3593 = vpack.c.b16 %v2729, %v2713
        %v3594 = vpack.c.b16 %v2730, %v2714
        %v3595 = vpack.c.b16 %v2731, %v2715
        %v3596 = vpack.c.b16 %v2732, %v2716
        %v3597 = vpack.c.b16 %v2733, %v2717
        %v3598 = vpack.c.b16 %v2734, %v2718
        %v3599 = vpack.c.b16 %v2735, %v2719
        %v3600 = vpack.c.b16 %v2736, %v2720
        %v3601 = vpack.c.b16 %v2737, %v2721
        %v3602 = vpack.c.b16 %v2738, %v2722
        %v3603 = vpack.c.b16 %v2739, %v2723
        %v3604 = vpack.c.b16 %v2740, %v2724
        %v3605 = vpack.c.b16 %v2741, %v2725
        %v3606 = vpack.c.b16 %v2758, %v2742
        %v3607 = vpack.c.b16 %v2759, %v2743
        %v3608 = vpack.c.b16 %v2760, %v2744
        %v3609 = vpack.c.b16 %v2761, %v2745
        %v3610 = vpack.c.b16 %v2762, %v2746
        %v3611 = vpack.c.b16 %v2763, %v2747
        %v3612 = vpack.c.b16 %v2764, %v2748
        %v3613 = vpack.c.b16 %v2765, %v2749
        %v3614 = vpack.c.b16 %v2766, %v2750
        %v3615 = vpack.c.b16 %v2767, %v2751
        %v3616 = vpack.c.b16 %v2768, %v2752
        %v3617 = vpack.c.b16 %v2769, %v2753
        %v3618 = vpack.c.b16 %v2770, %v2754
        %v3619 = vpack.c.b16 %v2771, %v2755
        %v3620 = vpack.c.b16 %v2772, %v2756
        %v3621 = vpack.c.b16 %v2773, %v2757
        %v3622 = vpack.c.b16 %v2790, %v2774
        %v3623 = vpack.c.b16 %v2791, %v2775
        %v3624 = vpack.c.b16 %v2792, %v2776
        %v3625 = vpack.c.b16 %v2793, %v2777
        %v3626 = vpack.c.b16 %v2794, %v2778
        %v3627 = vpack.c.b16 %v2795, %v2779
        %v3628 = vpack.c.b16 %v2796, %v2780
        %v3629 = vpack.c.b16 %v2797, %v2781
        %v3630 = vpack.c.b16 %v2798, %v2782
        %v3631 = vpack.c.b16 %v2799, %v2783
        %v3632 = vpack.c.b16 %v2800, %v2784
        %v3633 = vpack.c.b16 %v2801, %v2785
        %v3634 = vpack.c.b16 %v2802, %v2786
        %v3635 = vpack.c.b16 %v2803, %v2787
        %v3636 = vpack.c.b16 %v2804, %v2788
        %v3637 = vpack.c.b16 %v2805, %v2789
        %v3638 = vpack.c.b16 %v2822, %v2806
        %v3639 = vpack.c.b16 %v2823, %v2807
        %v3640 = vpack.c.b16 %v2824, %v2808
        %v3641 = vpack.c.b16 %v2825, %v2809
        %v3642 = vpack.c.b16 %v2826, %v2810
        %v3643 = vpack.c.b16 %v2827, %v2811
        %v3644 = vpack.c.b16 %v2828, %v2812
        %v3645 = vpack.c.b16 %v2829, %v2813
        %v3646 = vpack.c.b16 %v2830, %v2814
        %v3647 = vpack.c.b16 %v2831, %v2815
        %v3648 = vpack.c.b16 %v2832, %v2816
        %v3649 = vpack.c.b16 %v2833, %v2817
        %v3650 = vpack.c.b16 %v2834, %v2818
        %v3651 = vpack.c.b16 %v2835, %v2819
        %v3652 = vpack.c.b16 %v2836, %v2820
        %v3653 = vpack.c.b16 %v2837, %v2821
        %v3654 = vpack.c.b16 %v2854, %v2838
        %v3655 = vpack.c.b16 %v2855, %v2839
        %v3656 = vpack.c.b16 %v2856, %v2840
        %v3657 = vpack.c.b16 %v2857, %v2841
        %v3658 = vpack.c.b16 %v2858, %v2842
        %v3659 = vpack.c.b16 %v2859, %v2843
        %v3660 = vpack.c.b16 %v2860, %v2844
        %v3661 = vpack.c.b16 %v2861, %v2845
        %v3662 = vpack.c.b16 %v2862, %v2846
        %v3663 = vpack.c.b16 %v2863, %v2847
        %v3664 = vpack.c.b16 %v2864, %v2848
        %v3665 = vpack.c.b16 %v2865, %v2849
        %v3666 = vpack.c.b16 %v2866, %v2850
        %v3667 = vpack.c.b16 %v2867, %v2851
        %v3668 = vpack.c.b16 %v2868, %v2852
        %v3669 = vpack.c.b16 %v2869, %v2853
        %v3670 = vpack.c.b16 %v2886, %v2870
        %v3671 = vpack.c.b16 %v2887, %v2871
        %v3672 = vpack.c.b16 %v2888, %v2872
        %v3673 = vpack.c.b16 %v2889, %v2873
        %v3674 = vpack.c.b16 %v2890, %v2874
        %v3675 = vpack.c.b16 %v2891, %v2875
        %v3676 = vpack.c.b16 %v2892, %v2876
        %v3677 = vpack.c.b16 %v2893, %v2877
        %v3678 = vpack.c.b16 %v2894, %v2878
        %v3679 = vpack.c.b16 %v2895, %v2879
        %v3680 = vpack.c.b16 %v2896, %v2880
        %v3681 = vpack.c.b16 %v2897, %v2881
        %v3682 = vpack.c.b16 %v2898, %v2882
        %v3683 = vpack.c.b16 %v2899, %v2883
        %v3684 = vpack.c.b16 %v2900, %v2884
        %v3685 = vpack.c.b16 %v2901, %v2885
        %v3686 = vpack.c.b16 %v2918, %v2902
        %v3687 = vpack.c.b16 %v2919, %v2903
        %v3688 = vpack.c.b16 %v2920, %v2904
        %v3689 = vpack.c.b16 %v2921, %v2905
        %v3690 = vpack.c.b16 %v2922, %v2906
        %v3691 = vpack.c.b16 %v2923, %v2907
        %v3692 = vpack.c.b16 %v2924, %v2908
        %v3693 = vpack.c.b16 %v2925, %v2909
        %v3694 = vpack.c.b16 %v2926, %v2910
        %v3695 = vpack.c.b16 %v2927, %v2911
        %v3696 = vpack.c.b16 %v2928, %v2912
        %v3697 = vpack.c.b16 %v2929, %v2913
        %v3698 = vpack.c.b16 %v2930, %v2914
        %v3699 = vpack.c.b16 %v2931, %v2915
        %v3700 = vpack.c.b16 %v2932, %v2916
        %v3701 = vpack.c.b16 %v2933, %v2917
        %v3702 = vpack.c.b16 %v2950, %v2934
        %v3703 = vpack.c.b16 %v2951, %v2935
        %v3704 = vpack.c.b16 %v2952, %v2936
        %v3705 = vpack.c.b16 %v2953, %v2937
        %v3706 = vpack.c.b16 %v2954, %v2938
        %v3707 = vpack.c.b16 %v2955, %v2939
        %v3708 = vpack.c.b16 %v2956, %v2940
        %v3709 = vpack.c.b16 %v2957, %v2941
        %v3710 = vpack.c.b16 %v2958, %v2942
        %v3711 = vpack.c.b16 %v2959, %v2943
        %v3712 = vpack.c.b16 %v2960, %v2944
        %v3713 = vpack.c.b16 %v2961, %v2945
        %v3714 = vpack.c.b16 %v2962, %v2946
        %v3715 = vpack.c.b16 %v2963, %v2947
        %v3716 = vpack.c.b16 %v2964, %v2948
        %v3717 = vpack.c.b16 %v2965, %v2949
        %v3718 = vpack.c.b16 %v2982, %v2966
        %v3719 = vpack.c.b16 %v2983, %v2967
        %v3720 = vpack.c.b16 %v2984, %v2968
        %v3721 = vpack.c.b16 %v2985, %v2969
        %v3722 = vpack.c.b16 %v2986, %v2970
        %v3723 = vpack.c.b16 %v2987, %v2971
        %v3724 = vpack.c.b16 %v2988, %v2972
        %v3725 = vpack.c.b16 %v2989, %v2973
        %v3726 = vpack.c.b16 %v2990, %v2974
        %v3727 = vpack.c.b16 %v2991, %v2975
        %v3728 = vpack.c.b16 %v2992, %v2976
        %v3729 = vpack.c.b16 %v2993, %v2977
        %v3730 = vpack.c.b16 %v2994, %v2978
        %v3731 = vpack.c.b16 %v2995, %v2979
        %v3732 = vpack.c.b16 %v2996, %v2980
        %v3733 = vpack.c.b16 %v2997, %v2981
        %v3734 = vpack.c.b16 %v3014, %v2998
        %v3735 = vpack.c.b16 %v3015, %v2999
        %v3736 = vpack.c.b16 %v3016, %v3000
        %v3737 = vpack.c.b16 %v3017, %v3001
        %v3738 = vpack.c.b16 %v3018, %v3002
        %v3739 = vpack.c.b16 %v3019, %v3003
        %v3740 = vpack.c.b16 %v3020, %v3004
        %v3741 = vpack.c.b16 %v3021, %v3005
        %v3742 = vpack.c.b16 %v3022, %v3006
        %v3743 = vpack.c.b16 %v3023, %v3007
        %v3744 = vpack.c.b16 %v3024, %v3008
        %v3745 = vpack.c.b16 %v3025, %v3009
        %v3746 = vpack.c.b16 %v3026, %v3010
        %v3747 = vpack.c.b16 %v3027, %v3011
        %v3748 = vpack.c.b16 %v3028, %v3012
        %v3749 = vpack.c.b16 %v3029, %v3013
        %v3750 = vpack.c.b16 %v3046, %v3030
        %v3751 = vpack.c.b16 %v3047, %v3031
        %v3752 = vpack.c.b16 %v3048, %v3032
        %v3753 = vpack.c.b16 %v3049, %v3033
        %v3754 = vpack.c.b16 %v3050, %v3034
        %v3755 = vpack.c.b16 %v3051, %v3035
        %v3756 = vpack.c.b16 %v3052, %v3036
        %v3757 = vpack.c.b16 %v3053, %v3037
        %v3758 = vpack.c.b16 %v3054, %v3038
        %v3759 = vpack.c.b16 %v3055, %v3039
        %v3760 = vpack.c.b16 %v3056, %v3040
        %v3761 = vpack.c.b16 %v3057, %v3041
        %v3762 = vpack.c.b16 %v3058, %v3042
        %v3763 = vpack.c.b16 %v3059, %v3043
        %v3764 = vpack.c.b16 %v3060, %v3044
        %v3765 = vpack.c.b16 %v3061, %v3045
        %v3766 = vpack.c.b16 %v3078, %v3062
        %v3767 = vpack.c.b16 %v3079, %v3063
        %v3768 = vpack.c.b16 %v3080, %v3064
        %v3769 = vpack.c.b16 %v3081, %v3065
        %v3770 = vpack.c.b16 %v3082, %v3066
        %v3771 = vpack.c.b16 %v3083, %v3067
        %v3772 = vpack.c.b16 %v3084, %v3068
        %v3773 = vpack.c.b16 %v3085, %v3069
        %v3774 = vpack.c.b16 %v3086, %v3070
        %v3775 = vpack.c.b16 %v3087, %v3071
        %v3776 = vpack.c.b16 %v3088, %v3072
        %v3777 = vpack.c.b16 %v3089, %v3073
        %v3778 = vpack.c.b16 %v3090, %v3074
        %v3779 = vpack.c.b16 %v3091, %v3075
        %v3780 = vpack.c.b16 %v3092, %v3076
        %v3781 = vpack.c.b16 %v3093, %v3077
        %v3782 = vpack.c.b16 %v3110, %v3094
        %v3783 = vpack.c.b16 %v3111, %v3095
        %v3784 = vpack.c.b16 %v3112, %v3096
        %v3785 = vpack.c.b16 %v3113, %v3097
        %v3786 = vpack.c.b16 %v3114, %v3098
        %v3787 = vpack.c.b16 %v3115, %v3099
        %v3788 = vpack.c.b16 %v3116, %v3100
        %v3789 = vpack.c.b16 %v3117, %v3101
        %v3790 = vpack.c.b16 %v3118, %v3102
        %v3791 = vpack.c.b16 %v3119, %v3103
        %v3792 = vpack.c.b16 %v3120, %v3104
        %v3793 = vpack.c.b16 %v3121, %v3105
        %v3794 = vpack.c.b16 %v3122, %v3106
        %v3795 = vpack.c.b16 %v3123, %v3107
        %v3796 = vpack.c.b16 %v3124, %v3108
        %v3797 = vpack.c.b16 %v3125, %v3109
        %v3798 = vpack.c.b16 %v3142, %v3126
        %v3799 = vpack.c.b16 %v3143, %v3127
        %v3800 = vpack.c.b16 %v3144, %v3128
        %v3801 = vpack.c.b16 %v3145, %v3129
        %v3802 = vpack.c.b16 %v3146, %v3130
        %v3803 = vpack.c.b16 %v3147, %v3131
        %v3804 = vpack.c.b16 %v3148, %v3132
        %v3805 = vpack.c.b16 %v3149, %v3133
        %v3806 = vpack.c.b16 %v3150, %v3134
        %v3807 = vpack.c.b16 %v3151, %v3135
        %v3808 = vpack.c.b16 %v3152, %v3136
        %v3809 = vpack.c.b16 %v3153, %v3137
        %v3810 = vpack.c.b16 %v3154, %v3138
        %v3811 = vpack.c.b16 %v3155, %v3139
        %v3812 = vpack.c.b16 %v3156, %v3140
        %v3813 = vpack.c.b16 %v3157, %v3141
        %v3814 = vpack.c.b16 %v3174, %v3158
        %v3815 = vpack.c.b16 %v3175, %v3159
        %v3816 = vpack.c.b16 %v3176, %v3160
        %v3817 = vpack.c.b16 %v3177, %v3161
        %v3818 = vpack.c.b16 %v3178, %v3162
        %v3819 = vpack.c.b16 %v3179, %v3163
        %v3820 = vpack.c.b16 %v3180, %v3164
        %v3821 = vpack.c.b16 %v3181, %v3165
        %v3822 = vpack.c.b16 %v3182, %v3166
        %v3823 = vpack.c.b16 %v3183, %v3167
        %v3824 = vpack.c.b16 %v3184, %v3168
        %v3825 = vpack.c.b16 %v3185, %v3169
        %v3826 = vpack.c.b16 %v3186, %v3170
        %v3827 = vpack.c.b16 %v3187, %v3171
        %v3828 = vpack.c.b16 %v3188, %v3172
        %v3829 = vpack.c.b16 %v3189, %v3173
        %v3830 = vpack.c.b16 %v3206, %v3190
        %v3831 = vpack.c.b16 %v3207, %v3191
        %v3832 = vpack.c.b16 %v3208, %v3192
        %v3833 = vpack.c.b16 %v3209, %v3193
        %v3834 = vpack.c.b16 %v3210, %v3194
        %v3835 = vpack.c.b16 %v3211, %v3195
        %v3836 = vpack.c.b16 %v3212, %v3196
        %v3837 = vpack.c.b16 %v3213, %v3197
        %v3838 = vpack.c.b16 %v3214, %v3198
        %v3839 = vpack.c.b16 %v3215, %v3199
        %v3840 = vpack.c.b16 %v3216, %v3200
        %v3841 = vpack.c.b16 %v3217, %v3201
        %v3842 = vpack.c.b16 %v3218, %v3202
        %v3843 = vpack.c.b16 %v3219, %v3203
        %v3844 = vpack.c.b16 %v3220, %v3204
        %v3845 = vpack.c.b16 %v3221, %v3205
        %v3846 = vpack.c.b16 %v3238, %v3222
        %v3847 = vpack.c.b16 %v3239, %v3223
        %v3848 = vpack.c.b16 %v3240, %v3224
        %v3849 = vpack.c.b16 %v3241, %v3225
        %v3850 = vpack.c.b16 %v3242, %v3226
        %v3851 = vpack.c.b16 %v3243, %v3227
        %v3852 = vpack.c.b16 %v3244, %v3228
        %v3853 = vpack.c.b16 %v3245, %v3229
        %v3854 = vpack.c.b16 %v3246, %v3230
        %v3855 = vpack.c.b16 %v3247, %v3231
        %v3856 = vpack.c.b16 %v3248, %v3232
        %v3857 = vpack.c.b16 %v3249, %v3233
        %v3858 = vpack.c.b16 %v3250, %v3234
        %v3859 = vpack.c.b16 %v3251, %v3235
        %v3860 = vpack.c.b16 %v3252, %v3236
        %v3861 = vpack.c.b16 %v3253, %v3237
        %v3862 = vpack.c.b16 %v3270, %v3254
        %v3863 = vpack.c.b16 %v3271, %v3255
        %v3864 = vpack.c.b16 %v3272, %v3256
        %v3865 = vpack.c.b16 %v3273, %v3257
        %v3866 = vpack.c.b16 %v3274, %v3258
        %v3867 = vpack.c.b16 %v3275, %v3259
        %v3868 = vpack.c.b16 %v3276, %v3260
        %v3869 = vpack.c.b16 %v3277, %v3261
        %v3870 = vpack.c.b16 %v3278, %v3262
        %v3871 = vpack.c.b16 %v3279, %v3263
        %v3872 = vpack.c.b16 %v3280, %v3264
        %v3873 = vpack.c.b16 %v3281, %v3265
        %v3874 = vpack.c.b16 %v3282, %v3266
        %v3875 = vpack.c.b16 %v3283, %v3267
        %v3876 = vpack.c.b16 %v3284, %v3268
        %v3877 = vpack.c.b16 %v3285, %v3269
        %v3878 = vpack.c.b16 %v3302, %v3286
        %v3879 = vpack.c.b16 %v3303, %v3287
        %v3880 = vpack.c.b16 %v3304, %v3288
        %v3881 = vpack.c.b16 %v3305, %v3289
        %v3882 = vpack.c.b16 %v3306, %v3290
        %v3883 = vpack.c.b16 %v3307, %v3291
        %v3884 = vpack.c.b16 %v3308, %v3292
        %v3885 = vpack.c.b16 %v3309, %v3293
        %v3886 = vpack.c.b16 %v3310, %v3294
        %v3887 = vpack.c.b16 %v3311, %v3295
        %v3888 = vpack.c.b16 %v3312, %v3296
        %v3889 = vpack.c.b16 %v3313, %v3297
        %v3890 = vpack.c.b16 %v3314, %v3298
        %v3891 = vpack.c.b16 %v3315, %v3299
        %v3892 = vpack.c.b16 %v3316, %v3300
        %v3893 = vpack.c.b16 %v3317, %v3301
        %v3894 = vpack.c.b16 %v3334, %v3318
        %v3895 = vpack.c.b16 %v3335, %v3319
        %v3896 = vpack.c.b16 %v3336, %v3320
        %v3897 = vpack.c.b16 %v3337, %v3321
        %v3898 = vpack.c.b16 %v3338, %v3322
        %v3899 = vpack.c.b16 %v3339, %v3323
        %v3900 = vpack.c.b16 %v3340, %v3324
        %v3901 = vpack.c.b16 %v3341, %v3325
        %v3902 = vpack.c.b16 %v3342, %v3326
        %v3903 = vpack.c.b16 %v3343, %v3327
        %v3904 = vpack.c.b16 %v3344, %v3328
        %v3905 = vpack.c.b16 %v3345, %v3329
        %v3906 = vpack.c.b16 %v3346, %v3330
        %v3907 = vpack.c.b16 %v3347, %v3331
        %v3908 = vpack.c.b16 %v3348, %v3332
        %v3909 = vpack.c.b16 %v3349, %v3333
        %v3910 = vpack.c.b16 %v3366, %v3350
        %v3911 = vpack.c.b16 %v3367, %v3351
        %v3912 = vpack.c.b16 %v3368, %v3352
        %v3913 = vpack.c.b16 %v3369, %v3353
        %v3914 = vpack.c.b16 %v3370, %v3354
        %v3915 = vpack.c.b16 %v3371, %v3355
        %v3916 = vpack.c.b16 %v3372, %v3356
        %v3917 = vpack.c.b16 %v3373, %v3357
        %v3918 = vpack.c.b16 %v3374, %v3358
        %v3919 = vpack.c.b16 %v3375, %v3359
        %v3920 = vpack.c.b16 %v3376, %v3360
        %v3921 = vpack.c.b16 %v3377, %v3361
        %v3922 = vpack.c.b16 %v3378, %v3362
        %v3923 = vpack.c.b16 %v3379, %v3363
        %v3924 = vpack.c.b16 %v3380, %v3364
        %v3925 = vpack.c.b16 %v3381, %v3365
        %v3926 = vpack.c.b16 %v3398, %v3382
        %v3927 = vpack.c.b16 %v3399, %v3383
        %v3928 = vpack.c.b16 %v3400, %v3384
        %v3929 = vpack.c.b16 %v3401, %v3385
        %v3930 = vpack.c.b16 %v3402, %v3386
        %v3931 = vpack.c.b16 %v3403, %v3387
        %v3932 = vpack.c.b16 %v3404, %v3388
        %v3933 = vpack.c.b16 %v3405, %v3389
        %v3934 = vpack.c.b16 %v3406, %v3390
        %v3935 = vpack.c.b16 %v3407, %v3391
        %v3936 = vpack.c.b16 %v3408, %v3392
        %v3937 = vpack.c.b16 %v3409, %v3393
        %v3938 = vpack.c.b16 %v3410, %v3394
        %v3939 = vpack.c.b16 %v3411, %v3395
        %v3940 = vpack.c.b16 %v3412, %v3396
        %v3941 = vpack.c.b16 %v3413, %v3397
        %v3942 = vpack.c.b16 %v3430, %v3414
        %v3943 = vpack.c.b16 %v3431, %v3415
        %v3944 = vpack.c.b16 %v3432, %v3416
        %v3945 = vpack.c.b16 %v3433, %v3417
        %v3946 = vpack.c.b16 %v3434, %v3418
        %v3947 = vpack.c.b16 %v3435, %v3419
        %v3948 = vpack.c.b16 %v3436, %v3420
        %v3949 = vpack.c.b16 %v3437, %v3421
        %v3950 = vpack.c.b16 %v3438, %v3422
        %v3951 = vpack.c.b16 %v3439, %v3423
        %v3952 = vpack.c.b16 %v3440, %v3424
        %v3953 = vpack.c.b16 %v3441, %v3425
        %v3954 = vpack.c.b16 %v3442, %v3426
        %v3955 = vpack.c.b16 %v3443, %v3427
        %v3956 = vpack.c.b16 %v3444, %v3428
        %v3957 = vpack.c.b16 %v3445, %v3429
        %4470 = vmatpush.bf16.msra.mxu0 %v3558
        %4471 = vmatpush.bf16.msra.mxu0 %v3542
        %4472 = vmatpush.bf16.msra.mxu0 %v3526
        %4473 = vmatpush.bf16.msra.mxu0 %v3510
        %4474 = vmatpush.bf16.msra.mxu0 %v3494
        %4475 = vmatpush.bf16.msra.mxu0 %v3478
        %4476 = vmatpush.bf16.msra.mxu0 %v3462
        %4477 = vmatpush.bf16.msra.mxu0 %v3446
        %4478 = vmatmul.bf16.gmra.mxu0 %v1390
        %v4479 = vpop.f32.mrf.mxu0
        %v4480 = vadd.f32 0.0, %v4479
        %v4481 = vpop.f32.mrf.mxu0
        %4482 = vdwg.mxu0
        %4483 = vmatpush.bf16.msra.mxu0 %v3686
        %4484 = vmatpush.bf16.msra.mxu0 %v3670
        %4485 = vmatpush.bf16.msra.mxu0 %v3654
        %4486 = vmatpush.bf16.msra.mxu0 %v3638
        %4487 = vmatpush.bf16.msra.mxu0 %v3622
        %4488 = vmatpush.bf16.msra.mxu0 %v3606
        %4489 = vmatpush.bf16.msra.mxu0 %v3590
        %4490 = vmatpush.bf16.msra.mxu0 %v3574
        %4491 = vmatmul.bf16.gmra.mxu0 %v1391
        %v4492 = vpop.f32.mrf.mxu0
        %v4493 = vadd.f32 %v4480, %v4492
        %v4494 = vpop.f32.mrf.mxu0
        %4495 = vdwg.mxu0
        %4496 = vmatpush.bf16.msra.mxu0 %v3814
        %4497 = vmatpush.bf16.msra.mxu0 %v3798
        %4498 = vmatpush.bf16.msra.mxu0 %v3782
        %4499 = vmatpush.bf16.msra.mxu0 %v3766
        %4500 = vmatpush.bf16.msra.mxu0 %v3750
        %4501 = vmatpush.bf16.msra.mxu0 %v3734
        %4502 = vmatpush.bf16.msra.mxu0 %v3718
        %4503 = vmatpush.bf16.msra.mxu0 %v3702
        %4504 = vmatmul.bf16.gmra.mxu0 %v1392
        %v4505 = vpop.f32.mrf.mxu0
        %v4506 = vadd.f32 %v4493, %v4505
        %v4507 = vpop.f32.mrf.mxu0
        %4508 = vdwg.mxu0
        %4509 = vmatpush.bf16.msra.mxu0 %v3942
        %4510 = vmatpush.bf16.msra.mxu0 %v3926
        %4511 = vmatpush.bf16.msra.mxu0 %v3910
        %4512 = vmatpush.bf16.msra.mxu0 %v3894
        %4513 = vmatpush.bf16.msra.mxu0 %v3878
        %4514 = vmatpush.bf16.msra.mxu0 %v3862
        %4515 = vmatpush.bf16.msra.mxu0 %v3846
        %4516 = vmatpush.bf16.msra.mxu0 %v3830
        %4517 = vmatmul.bf16.gmra.mxu0 %v1393
        %v4518 = vpop.f32.mrf.mxu0
        %v4519 = vadd.f32 %v4506, %v4518
        %v4520 = vpop.f32.mrf.mxu0
        %4521 = vdwg.mxu0
        %4522 = vmatpush.bf16.msra.mxu0 %v3559
        %4523 = vmatpush.bf16.msra.mxu0 %v3543
        %4524 = vmatpush.bf16.msra.mxu0 %v3527
        %4525 = vmatpush.bf16.msra.mxu0 %v3511
        %4526 = vmatpush.bf16.msra.mxu0 %v3495
        %4527 = vmatpush.bf16.msra.mxu0 %v3479
        %4528 = vmatpush.bf16.msra.mxu0 %v3463
        %4529 = vmatpush.bf16.msra.mxu0 %v3447
        %4530 = vmatmul.bf16.gmra.mxu0 %v1390
        %v4531 = vpop.f32.mrf.mxu0
        %v4532 = vadd.f32 0.0, %v4531
        %v4533 = vpop.f32.mrf.mxu0
        %4534 = vdwg.mxu0
        %4535 = vmatpush.bf16.msra.mxu0 %v3687
        %4536 = vmatpush.bf16.msra.mxu0 %v3671
        %4537 = vmatpush.bf16.msra.mxu0 %v3655
        %4538 = vmatpush.bf16.msra.mxu0 %v3639
        %4539 = vmatpush.bf16.msra.mxu0 %v3623
        %4540 = vmatpush.bf16.msra.mxu0 %v3607
        %4541 = vmatpush.bf16.msra.mxu0 %v3591
        %4542 = vmatpush.bf16.msra.mxu0 %v3575
        %4543 = vmatmul.bf16.gmra.mxu0 %v1391
        %v4544 = vpop.f32.mrf.mxu0
        %v4545 = vadd.f32 %v4532, %v4544
        %v4546 = vpop.f32.mrf.mxu0
        %4547 = vdwg.mxu0
        %4548 = vmatpush.bf16.msra.mxu0 %v3815
        %4549 = vmatpush.bf16.msra.mxu0 %v3799
        %4550 = vmatpush.bf16.msra.mxu0 %v3783
        %4551 = vmatpush.bf16.msra.mxu0 %v3767
        %4552 = vmatpush.bf16.msra.mxu0 %v3751
        %4553 = vmatpush.bf16.msra.mxu0 %v3735
        %4554 = vmatpush.bf16.msra.mxu0 %v3719
        %4555 = vmatpush.bf16.msra.mxu0 %v3703
        %4556 = vmatmul.bf16.gmra.mxu0 %v1392
        %v4557 = vpop.f32.mrf.mxu0
        %v4558 = vadd.f32 %v4545, %v4557
        %v4559 = vpop.f32.mrf.mxu0
        %4560 = vdwg.mxu0
        %4561 = vmatpush.bf16.msra.mxu0 %v3943
        %4562 = vmatpush.bf16.msra.mxu0 %v3927
        %4563 = vmatpush.bf16.msra.mxu0 %v3911
        %4564 = vmatpush.bf16.msra.mxu0 %v3895
        %4565 = vmatpush.bf16.msra.mxu0 %v3879
        %4566 = vmatpush.bf16.msra.mxu0 %v3863
        %4567 = vmatpush.bf16.msra.mxu0 %v3847
        %4568 = vmatpush.bf16.msra.mxu0 %v3831
        %4569 = vmatmul.bf16.gmra.mxu0 %v1393
        %v4570 = vpop.f32.mrf.mxu0
        %v4571 = vadd.f32 %v4558, %v4570
        %v4572 = vpop.f32.mrf.mxu0
        %4573 = vdwg.mxu0
        %4574 = vmatpush.bf16.msra.mxu0 %v3560
        %4575 = vmatpush.bf16.msra.mxu0 %v3544
        %4576 = vmatpush.bf16.msra.mxu0 %v3528
        %4577 = vmatpush.bf16.msra.mxu0 %v3512
        %4578 = vmatpush.bf16.msra.mxu0 %v3496
        %4579 = vmatpush.bf16.msra.mxu0 %v3480
        %4580 = vmatpush.bf16.msra.mxu0 %v3464
        %4581 = vmatpush.bf16.msra.mxu0 %v3448
        %4582 = vmatmul.bf16.gmra.mxu0 %v1390
        %v4583 = vpop.f32.mrf.mxu0
        %v4584 = vadd.f32 0.0, %v4583
        %v4585 = vpop.f32.mrf.mxu0
        %4586 = vdwg.mxu0
        %4587 = vmatpush.bf16.msra.mxu0 %v3688
        %4588 = vmatpush.bf16.msra.mxu0 %v3672
        %4589 = vmatpush.bf16.msra.mxu0 %v3656
        %4590 = vmatpush.bf16.msra.mxu0 %v3640
        %4591 = vmatpush.bf16.msra.mxu0 %v3624
        %4592 = vmatpush.bf16.msra.mxu0 %v3608
        %4593 = vmatpush.bf16.msra.mxu0 %v3592
        %4594 = vmatpush.bf16.msra.mxu0 %v3576
        %4595 = vmatmul.bf16.gmra.mxu0 %v1391
        %v4596 = vpop.f32.mrf.mxu0
        %v4597 = vadd.f32 %v4584, %v4596
        %v4598 = vpop.f32.mrf.mxu0
        %4599 = vdwg.mxu0
        %4600 = vmatpush.bf16.msra.mxu0 %v3816
        %4601 = vmatpush.bf16.msra.mxu0 %v3800
        %4602 = vmatpush.bf16.msra.mxu0 %v3784
        %4603 = vmatpush.bf16.msra.mxu0 %v3768
        %4604 = vmatpush.bf16.msra.mxu0 %v3752
        %4605 = vmatpush.bf16.msra.mxu0 %v3736
        %4606 = vmatpush.bf16.msra.mxu0 %v3720
        %4607 = vmatpush.bf16.msra.mxu0 %v3704
        %4608 = vmatmul.bf16.gmra.mxu0 %v1392
        %v4609 = vpop.f32.mrf.mxu0
        %v4610 = vadd.f32 %v4597, %v4609
        %v4611 = vpop.f32.mrf.mxu0
        %4612 = vdwg.mxu0
        %4613 = vmatpush.bf16.msra.mxu0 %v3944
        %4614 = vmatpush.bf16.msra.mxu0 %v3928
        %4615 = vmatpush.bf16.msra.mxu0 %v3912
        %4616 = vmatpush.bf16.msra.mxu0 %v3896
        %4617 = vmatpush.bf16.msra.mxu0 %v3880
        %4618 = vmatpush.bf16.msra.mxu0 %v3864
        %4619 = vmatpush.bf16.msra.mxu0 %v3848
        %4620 = vmatpush.bf16.msra.mxu0 %v3832
        %4621 = vmatmul.bf16.gmra.mxu0 %v1393
        %v4622 = vpop.f32.mrf.mxu0
        %v4623 = vadd.f32 %v4610, %v4622
        %v4624 = vpop.f32.mrf.mxu0
        %4625 = vdwg.mxu0
        %4626 = vmatpush.bf16.msra.mxu0 %v3561
        %4627 = vmatpush.bf16.msra.mxu0 %v3545
        %4628 = vmatpush.bf16.msra.mxu0 %v3529
        %4629 = vmatpush.bf16.msra.mxu0 %v3513
        %4630 = vmatpush.bf16.msra.mxu0 %v3497
        %4631 = vmatpush.bf16.msra.mxu0 %v3481
        %4632 = vmatpush.bf16.msra.mxu0 %v3465
        %4633 = vmatpush.bf16.msra.mxu0 %v3449
        %4634 = vmatmul.bf16.gmra.mxu0 %v1390
        %v4635 = vpop.f32.mrf.mxu0
        %v4636 = vadd.f32 0.0, %v4635
        %v4637 = vpop.f32.mrf.mxu0
        %4638 = vdwg.mxu0
        %4639 = vmatpush.bf16.msra.mxu0 %v3689
        %4640 = vmatpush.bf16.msra.mxu0 %v3673
        %4641 = vmatpush.bf16.msra.mxu0 %v3657
        %4642 = vmatpush.bf16.msra.mxu0 %v3641
        %4643 = vmatpush.bf16.msra.mxu0 %v3625
        %4644 = vmatpush.bf16.msra.mxu0 %v3609
        %4645 = vmatpush.bf16.msra.mxu0 %v3593
        %4646 = vmatpush.bf16.msra.mxu0 %v3577
        %4647 = vmatmul.bf16.gmra.mxu0 %v1391
        %v4648 = vpop.f32.mrf.mxu0
        %v4649 = vadd.f32 %v4636, %v4648
        %v4650 = vpop.f32.mrf.mxu0
        %4651 = vdwg.mxu0
        %4652 = vmatpush.bf16.msra.mxu0 %v3817
        %4653 = vmatpush.bf16.msra.mxu0 %v3801
        %4654 = vmatpush.bf16.msra.mxu0 %v3785
        %4655 = vmatpush.bf16.msra.mxu0 %v3769
        %4656 = vmatpush.bf16.msra.mxu0 %v3753
        %4657 = vmatpush.bf16.msra.mxu0 %v3737
        %4658 = vmatpush.bf16.msra.mxu0 %v3721
        %4659 = vmatpush.bf16.msra.mxu0 %v3705
        %4660 = vmatmul.bf16.gmra.mxu0 %v1392
        %v4661 = vpop.f32.mrf.mxu0
        %v4662 = vadd.f32 %v4649, %v4661
        %v4663 = vpop.f32.mrf.mxu0
        %4664 = vdwg.mxu0
        %4665 = vmatpush.bf16.msra.mxu0 %v3945
        %4666 = vmatpush.bf16.msra.mxu0 %v3929
        %4667 = vmatpush.bf16.msra.mxu0 %v3913
        %4668 = vmatpush.bf16.msra.mxu0 %v3897
        %4669 = vmatpush.bf16.msra.mxu0 %v3881
        %4670 = vmatpush.bf16.msra.mxu0 %v3865
        %4671 = vmatpush.bf16.msra.mxu0 %v3849
        %4672 = vmatpush.bf16.msra.mxu0 %v3833
        %4673 = vmatmul.bf16.gmra.mxu0 %v1393
        %v4674 = vpop.f32.mrf.mxu0
        %v4675 = vadd.f32 %v4662, %v4674
        %v4676 = vpop.f32.mrf.mxu0
        %4677 = vdwg.mxu0
        %4678 = vmatpush.bf16.msra.mxu0 %v3562
        %4679 = vmatpush.bf16.msra.mxu0 %v3546
        %4680 = vmatpush.bf16.msra.mxu0 %v3530
        %4681 = vmatpush.bf16.msra.mxu0 %v3514
        %4682 = vmatpush.bf16.msra.mxu0 %v3498
        %4683 = vmatpush.bf16.msra.mxu0 %v3482
        %4684 = vmatpush.bf16.msra.mxu0 %v3466
        %4685 = vmatpush.bf16.msra.mxu0 %v3450
        %4686 = vmatmul.bf16.gmra.mxu0 %v1390
        %v4687 = vpop.f32.mrf.mxu0
        %v4688 = vadd.f32 0.0, %v4687
        %v4689 = vpop.f32.mrf.mxu0
        %4690 = vdwg.mxu0
        %4691 = vmatpush.bf16.msra.mxu0 %v3690
        %4692 = vmatpush.bf16.msra.mxu0 %v3674
        %4693 = vmatpush.bf16.msra.mxu0 %v3658
        %4694 = vmatpush.bf16.msra.mxu0 %v3642
        %4695 = vmatpush.bf16.msra.mxu0 %v3626
        %4696 = vmatpush.bf16.msra.mxu0 %v3610
        %4697 = vmatpush.bf16.msra.mxu0 %v3594
        %4698 = vmatpush.bf16.msra.mxu0 %v3578
        %4699 = vmatmul.bf16.gmra.mxu0 %v1391
        %v4700 = vpop.f32.mrf.mxu0
        %v4701 = vadd.f32 %v4688, %v4700
        %v4702 = vpop.f32.mrf.mxu0
        %4703 = vdwg.mxu0
        %4704 = vmatpush.bf16.msra.mxu0 %v3818
        %4705 = vmatpush.bf16.msra.mxu0 %v3802
        %4706 = vmatpush.bf16.msra.mxu0 %v3786
        %4707 = vmatpush.bf16.msra.mxu0 %v3770
        %4708 = vmatpush.bf16.msra.mxu0 %v3754
        %4709 = vmatpush.bf16.msra.mxu0 %v3738
        %4710 = vmatpush.bf16.msra.mxu0 %v3722
        %4711 = vmatpush.bf16.msra.mxu0 %v3706
        %4712 = vmatmul.bf16.gmra.mxu0 %v1392
        %v4713 = vpop.f32.mrf.mxu0
        %v4714 = vadd.f32 %v4701, %v4713
        %v4715 = vpop.f32.mrf.mxu0
        %4716 = vdwg.mxu0
        %4717 = vmatpush.bf16.msra.mxu0 %v3946
        %4718 = vmatpush.bf16.msra.mxu0 %v3930
        %4719 = vmatpush.bf16.msra.mxu0 %v3914
        %4720 = vmatpush.bf16.msra.mxu0 %v3898
        %4721 = vmatpush.bf16.msra.mxu0 %v3882
        %4722 = vmatpush.bf16.msra.mxu0 %v3866
        %4723 = vmatpush.bf16.msra.mxu0 %v3850
        %4724 = vmatpush.bf16.msra.mxu0 %v3834
        %4725 = vmatmul.bf16.gmra.mxu0 %v1393
        %v4726 = vpop.f32.mrf.mxu0
        %v4727 = vadd.f32 %v4714, %v4726
        %v4728 = vpop.f32.mrf.mxu0
        %4729 = vdwg.mxu0
        %4730 = vmatpush.bf16.msra.mxu0 %v3563
        %4731 = vmatpush.bf16.msra.mxu0 %v3547
        %4732 = vmatpush.bf16.msra.mxu0 %v3531
        %4733 = vmatpush.bf16.msra.mxu0 %v3515
        %4734 = vmatpush.bf16.msra.mxu0 %v3499
        %4735 = vmatpush.bf16.msra.mxu0 %v3483
        %4736 = vmatpush.bf16.msra.mxu0 %v3467
        %4737 = vmatpush.bf16.msra.mxu0 %v3451
        %4738 = vmatmul.bf16.gmra.mxu0 %v1390
        %v4739 = vpop.f32.mrf.mxu0
        %v4740 = vadd.f32 0.0, %v4739
        %v4741 = vpop.f32.mrf.mxu0
        %4742 = vdwg.mxu0
        %4743 = vmatpush.bf16.msra.mxu0 %v3691
        %4744 = vmatpush.bf16.msra.mxu0 %v3675
        %4745 = vmatpush.bf16.msra.mxu0 %v3659
        %4746 = vmatpush.bf16.msra.mxu0 %v3643
        %4747 = vmatpush.bf16.msra.mxu0 %v3627
        %4748 = vmatpush.bf16.msra.mxu0 %v3611
        %4749 = vmatpush.bf16.msra.mxu0 %v3595
        %4750 = vmatpush.bf16.msra.mxu0 %v3579
        %4751 = vmatmul.bf16.gmra.mxu0 %v1391
        %v4752 = vpop.f32.mrf.mxu0
        %v4753 = vadd.f32 %v4740, %v4752
        %v4754 = vpop.f32.mrf.mxu0
        %4755 = vdwg.mxu0
        %4756 = vmatpush.bf16.msra.mxu0 %v3819
        %4757 = vmatpush.bf16.msra.mxu0 %v3803
        %4758 = vmatpush.bf16.msra.mxu0 %v3787
        %4759 = vmatpush.bf16.msra.mxu0 %v3771
        %4760 = vmatpush.bf16.msra.mxu0 %v3755
        %4761 = vmatpush.bf16.msra.mxu0 %v3739
        %4762 = vmatpush.bf16.msra.mxu0 %v3723
        %4763 = vmatpush.bf16.msra.mxu0 %v3707
        %4764 = vmatmul.bf16.gmra.mxu0 %v1392
        %v4765 = vpop.f32.mrf.mxu0
        %v4766 = vadd.f32 %v4753, %v4765
        %v4767 = vpop.f32.mrf.mxu0
        %4768 = vdwg.mxu0
        %4769 = vmatpush.bf16.msra.mxu0 %v3947
        %4770 = vmatpush.bf16.msra.mxu0 %v3931
        %4771 = vmatpush.bf16.msra.mxu0 %v3915
        %4772 = vmatpush.bf16.msra.mxu0 %v3899
        %4773 = vmatpush.bf16.msra.mxu0 %v3883
        %4774 = vmatpush.bf16.msra.mxu0 %v3867
        %4775 = vmatpush.bf16.msra.mxu0 %v3851
        %4776 = vmatpush.bf16.msra.mxu0 %v3835
        %4777 = vmatmul.bf16.gmra.mxu0 %v1393
        %v4778 = vpop.f32.mrf.mxu0
        %v4779 = vadd.f32 %v4766, %v4778
        %v4780 = vpop.f32.mrf.mxu0
        %4781 = vdwg.mxu0
        %4782 = vmatpush.bf16.msra.mxu0 %v3564
        %4783 = vmatpush.bf16.msra.mxu0 %v3548
        %4784 = vmatpush.bf16.msra.mxu0 %v3532
        %4785 = vmatpush.bf16.msra.mxu0 %v3516
        %4786 = vmatpush.bf16.msra.mxu0 %v3500
        %4787 = vmatpush.bf16.msra.mxu0 %v3484
        %4788 = vmatpush.bf16.msra.mxu0 %v3468
        %4789 = vmatpush.bf16.msra.mxu0 %v3452
        %4790 = vmatmul.bf16.gmra.mxu0 %v1390
        %v4791 = vpop.f32.mrf.mxu0
        %v4792 = vadd.f32 0.0, %v4791
        %v4793 = vpop.f32.mrf.mxu0
        %4794 = vdwg.mxu0
        %4795 = vmatpush.bf16.msra.mxu0 %v3692
        %4796 = vmatpush.bf16.msra.mxu0 %v3676
        %4797 = vmatpush.bf16.msra.mxu0 %v3660
        %4798 = vmatpush.bf16.msra.mxu0 %v3644
        %4799 = vmatpush.bf16.msra.mxu0 %v3628
        %4800 = vmatpush.bf16.msra.mxu0 %v3612
        %4801 = vmatpush.bf16.msra.mxu0 %v3596
        %4802 = vmatpush.bf16.msra.mxu0 %v3580
        %4803 = vmatmul.bf16.gmra.mxu0 %v1391
        %v4804 = vpop.f32.mrf.mxu0
        %v4805 = vadd.f32 %v4792, %v4804
        %v4806 = vpop.f32.mrf.mxu0
        %4807 = vdwg.mxu0
        %4808 = vmatpush.bf16.msra.mxu0 %v3820
        %4809 = vmatpush.bf16.msra.mxu0 %v3804
        %4810 = vmatpush.bf16.msra.mxu0 %v3788
        %4811 = vmatpush.bf16.msra.mxu0 %v3772
        %4812 = vmatpush.bf16.msra.mxu0 %v3756
        %4813 = vmatpush.bf16.msra.mxu0 %v3740
        %4814 = vmatpush.bf16.msra.mxu0 %v3724
        %4815 = vmatpush.bf16.msra.mxu0 %v3708
        %4816 = vmatmul.bf16.gmra.mxu0 %v1392
        %v4817 = vpop.f32.mrf.mxu0
        %v4818 = vadd.f32 %v4805, %v4817
        %v4819 = vpop.f32.mrf.mxu0
        %4820 = vdwg.mxu0
        %4821 = vmatpush.bf16.msra.mxu0 %v3948
        %4822 = vmatpush.bf16.msra.mxu0 %v3932
        %4823 = vmatpush.bf16.msra.mxu0 %v3916
        %4824 = vmatpush.bf16.msra.mxu0 %v3900
        %4825 = vmatpush.bf16.msra.mxu0 %v3884
        %4826 = vmatpush.bf16.msra.mxu0 %v3868
        %4827 = vmatpush.bf16.msra.mxu0 %v3852
        %4828 = vmatpush.bf16.msra.mxu0 %v3836
        %4829 = vmatmul.bf16.gmra.mxu0 %v1393
        %v4830 = vpop.f32.mrf.mxu0
        %v4831 = vadd.f32 %v4818, %v4830
        %v4832 = vpop.f32.mrf.mxu0
        %4833 = vdwg.mxu0
        %4834 = vmatpush.bf16.msra.mxu0 %v3565
        %4835 = vmatpush.bf16.msra.mxu0 %v3549
        %4836 = vmatpush.bf16.msra.mxu0 %v3533
        %4837 = vmatpush.bf16.msra.mxu0 %v3517
        %4838 = vmatpush.bf16.msra.mxu0 %v3501
        %4839 = vmatpush.bf16.msra.mxu0 %v3485
        %4840 = vmatpush.bf16.msra.mxu0 %v3469
        %4841 = vmatpush.bf16.msra.mxu0 %v3453
        %4842 = vmatmul.bf16.gmra.mxu0 %v1390
        %v4843 = vpop.f32.mrf.mxu0
        %v4844 = vadd.f32 0.0, %v4843
        %v4845 = vpop.f32.mrf.mxu0
        %4846 = vdwg.mxu0
        %4847 = vmatpush.bf16.msra.mxu0 %v3693
        %4848 = vmatpush.bf16.msra.mxu0 %v3677
        %4849 = vmatpush.bf16.msra.mxu0 %v3661
        %4850 = vmatpush.bf16.msra.mxu0 %v3645
        %4851 = vmatpush.bf16.msra.mxu0 %v3629
        %4852 = vmatpush.bf16.msra.mxu0 %v3613
        %4853 = vmatpush.bf16.msra.mxu0 %v3597
        %4854 = vmatpush.bf16.msra.mxu0 %v3581
        %4855 = vmatmul.bf16.gmra.mxu0 %v1391
        %v4856 = vpop.f32.mrf.mxu0
        %v4857 = vadd.f32 %v4844, %v4856
        %v4858 = vpop.f32.mrf.mxu0
        %4859 = vdwg.mxu0
        %4860 = vmatpush.bf16.msra.mxu0 %v3821
        %4861 = vmatpush.bf16.msra.mxu0 %v3805
        %4862 = vmatpush.bf16.msra.mxu0 %v3789
        %4863 = vmatpush.bf16.msra.mxu0 %v3773
        %4864 = vmatpush.bf16.msra.mxu0 %v3757
        %4865 = vmatpush.bf16.msra.mxu0 %v3741
        %4866 = vmatpush.bf16.msra.mxu0 %v3725
        %4867 = vmatpush.bf16.msra.mxu0 %v3709
        %4868 = vmatmul.bf16.gmra.mxu0 %v1392
        %v4869 = vpop.f32.mrf.mxu0
        %v4870 = vadd.f32 %v4857, %v4869
        %v4871 = vpop.f32.mrf.mxu0
        %4872 = vdwg.mxu0
        %4873 = vmatpush.bf16.msra.mxu0 %v3949
        %4874 = vmatpush.bf16.msra.mxu0 %v3933
        %4875 = vmatpush.bf16.msra.mxu0 %v3917
        %4876 = vmatpush.bf16.msra.mxu0 %v3901
        %4877 = vmatpush.bf16.msra.mxu0 %v3885
        %4878 = vmatpush.bf16.msra.mxu0 %v3869
        %4879 = vmatpush.bf16.msra.mxu0 %v3853
        %4880 = vmatpush.bf16.msra.mxu0 %v3837
        %4881 = vmatmul.bf16.gmra.mxu0 %v1393
        %v4882 = vpop.f32.mrf.mxu0
        %v4883 = vadd.f32 %v4870, %v4882
        %v4884 = vpop.f32.mrf.mxu0
        %4885 = vdwg.mxu0
        %4886 = vmatpush.bf16.msra.mxu0 %v3566
        %4887 = vmatpush.bf16.msra.mxu0 %v3550
        %4888 = vmatpush.bf16.msra.mxu0 %v3534
        %4889 = vmatpush.bf16.msra.mxu0 %v3518
        %4890 = vmatpush.bf16.msra.mxu0 %v3502
        %4891 = vmatpush.bf16.msra.mxu0 %v3486
        %4892 = vmatpush.bf16.msra.mxu0 %v3470
        %4893 = vmatpush.bf16.msra.mxu0 %v3454
        %4894 = vmatmul.bf16.gmra.mxu0 %v1390
        %v4895 = vpop.f32.mrf.mxu0
        %v4896 = vadd.f32 0.0, %v4895
        %v4897 = vpop.f32.mrf.mxu0
        %4898 = vdwg.mxu0
        %4899 = vmatpush.bf16.msra.mxu0 %v3694
        %4900 = vmatpush.bf16.msra.mxu0 %v3678
        %4901 = vmatpush.bf16.msra.mxu0 %v3662
        %4902 = vmatpush.bf16.msra.mxu0 %v3646
        %4903 = vmatpush.bf16.msra.mxu0 %v3630
        %4904 = vmatpush.bf16.msra.mxu0 %v3614
        %4905 = vmatpush.bf16.msra.mxu0 %v3598
        %4906 = vmatpush.bf16.msra.mxu0 %v3582
        %4907 = vmatmul.bf16.gmra.mxu0 %v1391
        %v4908 = vpop.f32.mrf.mxu0
        %v4909 = vadd.f32 %v4896, %v4908
        %v4910 = vpop.f32.mrf.mxu0
        %4911 = vdwg.mxu0
        %4912 = vmatpush.bf16.msra.mxu0 %v3822
        %4913 = vmatpush.bf16.msra.mxu0 %v3806
        %4914 = vmatpush.bf16.msra.mxu0 %v3790
        %4915 = vmatpush.bf16.msra.mxu0 %v3774
        %4916 = vmatpush.bf16.msra.mxu0 %v3758
        %4917 = vmatpush.bf16.msra.mxu0 %v3742
        %4918 = vmatpush.bf16.msra.mxu0 %v3726
        %4919 = vmatpush.bf16.msra.mxu0 %v3710
        %4920 = vmatmul.bf16.gmra.mxu0 %v1392
        %v4921 = vpop.f32.mrf.mxu0
        %v4922 = vadd.f32 %v4909, %v4921
        %v4923 = vpop.f32.mrf.mxu0
        %4924 = vdwg.mxu0
        %4925 = vmatpush.bf16.msra.mxu0 %v3950
        %4926 = vmatpush.bf16.msra.mxu0 %v3934
        %4927 = vmatpush.bf16.msra.mxu0 %v3918
        %4928 = vmatpush.bf16.msra.mxu0 %v3902
        %4929 = vmatpush.bf16.msra.mxu0 %v3886
        %4930 = vmatpush.bf16.msra.mxu0 %v3870
        %4931 = vmatpush.bf16.msra.mxu0 %v3854
        %4932 = vmatpush.bf16.msra.mxu0 %v3838
        %4933 = vmatmul.bf16.gmra.mxu0 %v1393
        %v4934 = vpop.f32.mrf.mxu0
        %v4935 = vadd.f32 %v4922, %v4934
        %v4936 = vpop.f32.mrf.mxu0
        %4937 = vdwg.mxu0
        %4938 = vmatpush.bf16.msra.mxu0 %v3567
        %4939 = vmatpush.bf16.msra.mxu0 %v3551
        %4940 = vmatpush.bf16.msra.mxu0 %v3535
        %4941 = vmatpush.bf16.msra.mxu0 %v3519
        %4942 = vmatpush.bf16.msra.mxu0 %v3503
        %4943 = vmatpush.bf16.msra.mxu0 %v3487
        %4944 = vmatpush.bf16.msra.mxu0 %v3471
        %4945 = vmatpush.bf16.msra.mxu0 %v3455
        %4946 = vmatmul.bf16.gmra.mxu0 %v1390
        %v4947 = vpop.f32.mrf.mxu0
        %v4948 = vadd.f32 0.0, %v4947
        %v4949 = vpop.f32.mrf.mxu0
        %4950 = vdwg.mxu0
        %4951 = vmatpush.bf16.msra.mxu0 %v3695
        %4952 = vmatpush.bf16.msra.mxu0 %v3679
        %4953 = vmatpush.bf16.msra.mxu0 %v3663
        %4954 = vmatpush.bf16.msra.mxu0 %v3647
        %4955 = vmatpush.bf16.msra.mxu0 %v3631
        %4956 = vmatpush.bf16.msra.mxu0 %v3615
        %4957 = vmatpush.bf16.msra.mxu0 %v3599
        %4958 = vmatpush.bf16.msra.mxu0 %v3583
        %4959 = vmatmul.bf16.gmra.mxu0 %v1391
        %v4960 = vpop.f32.mrf.mxu0
        %v4961 = vadd.f32 %v4948, %v4960
        %v4962 = vpop.f32.mrf.mxu0
        %4963 = vdwg.mxu0
        %4964 = vmatpush.bf16.msra.mxu0 %v3823
        %4965 = vmatpush.bf16.msra.mxu0 %v3807
        %4966 = vmatpush.bf16.msra.mxu0 %v3791
        %4967 = vmatpush.bf16.msra.mxu0 %v3775
        %4968 = vmatpush.bf16.msra.mxu0 %v3759
        %4969 = vmatpush.bf16.msra.mxu0 %v3743
        %4970 = vmatpush.bf16.msra.mxu0 %v3727
        %4971 = vmatpush.bf16.msra.mxu0 %v3711
        %4972 = vmatmul.bf16.gmra.mxu0 %v1392
        %v4973 = vpop.f32.mrf.mxu0
        %v4974 = vadd.f32 %v4961, %v4973
        %v4975 = vpop.f32.mrf.mxu0
        %4976 = vdwg.mxu0
        %4977 = vmatpush.bf16.msra.mxu0 %v3951
        %4978 = vmatpush.bf16.msra.mxu0 %v3935
        %4979 = vmatpush.bf16.msra.mxu0 %v3919
        %4980 = vmatpush.bf16.msra.mxu0 %v3903
        %4981 = vmatpush.bf16.msra.mxu0 %v3887
        %4982 = vmatpush.bf16.msra.mxu0 %v3871
        %4983 = vmatpush.bf16.msra.mxu0 %v3855
        %4984 = vmatpush.bf16.msra.mxu0 %v3839
        %4985 = vmatmul.bf16.gmra.mxu0 %v1393
        %v4986 = vpop.f32.mrf.mxu0
        %v4987 = vadd.f32 %v4974, %v4986
        %v4988 = vpop.f32.mrf.mxu0
        %4989 = vdwg.mxu0
        %4990 = vmatpush.bf16.msra.mxu0 %v3568
        %4991 = vmatpush.bf16.msra.mxu0 %v3552
        %4992 = vmatpush.bf16.msra.mxu0 %v3536
        %4993 = vmatpush.bf16.msra.mxu0 %v3520
        %4994 = vmatpush.bf16.msra.mxu0 %v3504
        %4995 = vmatpush.bf16.msra.mxu0 %v3488
        %4996 = vmatpush.bf16.msra.mxu0 %v3472
        %4997 = vmatpush.bf16.msra.mxu0 %v3456
        %4998 = vmatmul.bf16.gmra.mxu0 %v1390
        %v4999 = vpop.f32.mrf.mxu0
        %v5000 = vadd.f32 0.0, %v4999
        %v5001 = vpop.f32.mrf.mxu0
        %5002 = vdwg.mxu0
        %5003 = vmatpush.bf16.msra.mxu0 %v3696
        %5004 = vmatpush.bf16.msra.mxu0 %v3680
        %5005 = vmatpush.bf16.msra.mxu0 %v3664
        %5006 = vmatpush.bf16.msra.mxu0 %v3648
        %5007 = vmatpush.bf16.msra.mxu0 %v3632
        %5008 = vmatpush.bf16.msra.mxu0 %v3616
        %5009 = vmatpush.bf16.msra.mxu0 %v3600
        %5010 = vmatpush.bf16.msra.mxu0 %v3584
        %5011 = vmatmul.bf16.gmra.mxu0 %v1391
        %v5012 = vpop.f32.mrf.mxu0
        %v5013 = vadd.f32 %v5000, %v5012
        %v5014 = vpop.f32.mrf.mxu0
        %5015 = vdwg.mxu0
        %5016 = vmatpush.bf16.msra.mxu0 %v3824
        %5017 = vmatpush.bf16.msra.mxu0 %v3808
        %5018 = vmatpush.bf16.msra.mxu0 %v3792
        %5019 = vmatpush.bf16.msra.mxu0 %v3776
        %5020 = vmatpush.bf16.msra.mxu0 %v3760
        %5021 = vmatpush.bf16.msra.mxu0 %v3744
        %5022 = vmatpush.bf16.msra.mxu0 %v3728
        %5023 = vmatpush.bf16.msra.mxu0 %v3712
        %5024 = vmatmul.bf16.gmra.mxu0 %v1392
        %v5025 = vpop.f32.mrf.mxu0
        %v5026 = vadd.f32 %v5013, %v5025
        %v5027 = vpop.f32.mrf.mxu0
        %5028 = vdwg.mxu0
        %5029 = vmatpush.bf16.msra.mxu0 %v3952
        %5030 = vmatpush.bf16.msra.mxu0 %v3936
        %5031 = vmatpush.bf16.msra.mxu0 %v3920
        %5032 = vmatpush.bf16.msra.mxu0 %v3904
        %5033 = vmatpush.bf16.msra.mxu0 %v3888
        %5034 = vmatpush.bf16.msra.mxu0 %v3872
        %5035 = vmatpush.bf16.msra.mxu0 %v3856
        %5036 = vmatpush.bf16.msra.mxu0 %v3840
        %5037 = vmatmul.bf16.gmra.mxu0 %v1393
        %v5038 = vpop.f32.mrf.mxu0
        %v5039 = vadd.f32 %v5026, %v5038
        %v5040 = vpop.f32.mrf.mxu0
        %5041 = vdwg.mxu0
        %5042 = vmatpush.bf16.msra.mxu0 %v3569
        %5043 = vmatpush.bf16.msra.mxu0 %v3553
        %5044 = vmatpush.bf16.msra.mxu0 %v3537
        %5045 = vmatpush.bf16.msra.mxu0 %v3521
        %5046 = vmatpush.bf16.msra.mxu0 %v3505
        %5047 = vmatpush.bf16.msra.mxu0 %v3489
        %5048 = vmatpush.bf16.msra.mxu0 %v3473
        %5049 = vmatpush.bf16.msra.mxu0 %v3457
        %5050 = vmatmul.bf16.gmra.mxu0 %v1390
        %v5051 = vpop.f32.mrf.mxu0
        %v5052 = vadd.f32 0.0, %v5051
        %v5053 = vpop.f32.mrf.mxu0
        %5054 = vdwg.mxu0
        %5055 = vmatpush.bf16.msra.mxu0 %v3697
        %5056 = vmatpush.bf16.msra.mxu0 %v3681
        %5057 = vmatpush.bf16.msra.mxu0 %v3665
        %5058 = vmatpush.bf16.msra.mxu0 %v3649
        %5059 = vmatpush.bf16.msra.mxu0 %v3633
        %5060 = vmatpush.bf16.msra.mxu0 %v3617
        %5061 = vmatpush.bf16.msra.mxu0 %v3601
        %5062 = vmatpush.bf16.msra.mxu0 %v3585
        %5063 = vmatmul.bf16.gmra.mxu0 %v1391
        %v5064 = vpop.f32.mrf.mxu0
        %v5065 = vadd.f32 %v5052, %v5064
        %v5066 = vpop.f32.mrf.mxu0
        %5067 = vdwg.mxu0
        %5068 = vmatpush.bf16.msra.mxu0 %v3825
        %5069 = vmatpush.bf16.msra.mxu0 %v3809
        %5070 = vmatpush.bf16.msra.mxu0 %v3793
        %5071 = vmatpush.bf16.msra.mxu0 %v3777
        %5072 = vmatpush.bf16.msra.mxu0 %v3761
        %5073 = vmatpush.bf16.msra.mxu0 %v3745
        %5074 = vmatpush.bf16.msra.mxu0 %v3729
        %5075 = vmatpush.bf16.msra.mxu0 %v3713
        %5076 = vmatmul.bf16.gmra.mxu0 %v1392
        %v5077 = vpop.f32.mrf.mxu0
        %v5078 = vadd.f32 %v5065, %v5077
        %v5079 = vpop.f32.mrf.mxu0
        %5080 = vdwg.mxu0
        %5081 = vmatpush.bf16.msra.mxu0 %v3953
        %5082 = vmatpush.bf16.msra.mxu0 %v3937
        %5083 = vmatpush.bf16.msra.mxu0 %v3921
        %5084 = vmatpush.bf16.msra.mxu0 %v3905
        %5085 = vmatpush.bf16.msra.mxu0 %v3889
        %5086 = vmatpush.bf16.msra.mxu0 %v3873
        %5087 = vmatpush.bf16.msra.mxu0 %v3857
        %5088 = vmatpush.bf16.msra.mxu0 %v3841
        %5089 = vmatmul.bf16.gmra.mxu0 %v1393
        %v5090 = vpop.f32.mrf.mxu0
        %v5091 = vadd.f32 %v5078, %v5090
        %v5092 = vpop.f32.mrf.mxu0
        %5093 = vdwg.mxu0
        %5094 = vmatpush.bf16.msra.mxu0 %v3570
        %5095 = vmatpush.bf16.msra.mxu0 %v3554
        %5096 = vmatpush.bf16.msra.mxu0 %v3538
        %5097 = vmatpush.bf16.msra.mxu0 %v3522
        %5098 = vmatpush.bf16.msra.mxu0 %v3506
        %5099 = vmatpush.bf16.msra.mxu0 %v3490
        %5100 = vmatpush.bf16.msra.mxu0 %v3474
        %5101 = vmatpush.bf16.msra.mxu0 %v3458
        %5102 = vmatmul.bf16.gmra.mxu0 %v1390
        %v5103 = vpop.f32.mrf.mxu0
        %v5104 = vadd.f32 0.0, %v5103
        %v5105 = vpop.f32.mrf.mxu0
        %5106 = vdwg.mxu0
        %5107 = vmatpush.bf16.msra.mxu0 %v3698
        %5108 = vmatpush.bf16.msra.mxu0 %v3682
        %5109 = vmatpush.bf16.msra.mxu0 %v3666
        %5110 = vmatpush.bf16.msra.mxu0 %v3650
        %5111 = vmatpush.bf16.msra.mxu0 %v3634
        %5112 = vmatpush.bf16.msra.mxu0 %v3618
        %5113 = vmatpush.bf16.msra.mxu0 %v3602
        %5114 = vmatpush.bf16.msra.mxu0 %v3586
        %5115 = vmatmul.bf16.gmra.mxu0 %v1391
        %v5116 = vpop.f32.mrf.mxu0
        %v5117 = vadd.f32 %v5104, %v5116
        %v5118 = vpop.f32.mrf.mxu0
        %5119 = vdwg.mxu0
        %5120 = vmatpush.bf16.msra.mxu0 %v3826
        %5121 = vmatpush.bf16.msra.mxu0 %v3810
        %5122 = vmatpush.bf16.msra.mxu0 %v3794
        %5123 = vmatpush.bf16.msra.mxu0 %v3778
        %5124 = vmatpush.bf16.msra.mxu0 %v3762
        %5125 = vmatpush.bf16.msra.mxu0 %v3746
        %5126 = vmatpush.bf16.msra.mxu0 %v3730
        %5127 = vmatpush.bf16.msra.mxu0 %v3714
        %5128 = vmatmul.bf16.gmra.mxu0 %v1392
        %v5129 = vpop.f32.mrf.mxu0
        %v5130 = vadd.f32 %v5117, %v5129
        %v5131 = vpop.f32.mrf.mxu0
        %5132 = vdwg.mxu0
        %5133 = vmatpush.bf16.msra.mxu0 %v3954
        %5134 = vmatpush.bf16.msra.mxu0 %v3938
        %5135 = vmatpush.bf16.msra.mxu0 %v3922
        %5136 = vmatpush.bf16.msra.mxu0 %v3906
        %5137 = vmatpush.bf16.msra.mxu0 %v3890
        %5138 = vmatpush.bf16.msra.mxu0 %v3874
        %5139 = vmatpush.bf16.msra.mxu0 %v3858
        %5140 = vmatpush.bf16.msra.mxu0 %v3842
        %5141 = vmatmul.bf16.gmra.mxu0 %v1393
        %v5142 = vpop.f32.mrf.mxu0
        %v5143 = vadd.f32 %v5130, %v5142
        %v5144 = vpop.f32.mrf.mxu0
        %5145 = vdwg.mxu0
        %5146 = vmatpush.bf16.msra.mxu0 %v3571
        %5147 = vmatpush.bf16.msra.mxu0 %v3555
        %5148 = vmatpush.bf16.msra.mxu0 %v3539
        %5149 = vmatpush.bf16.msra.mxu0 %v3523
        %5150 = vmatpush.bf16.msra.mxu0 %v3507
        %5151 = vmatpush.bf16.msra.mxu0 %v3491
        %5152 = vmatpush.bf16.msra.mxu0 %v3475
        %5153 = vmatpush.bf16.msra.mxu0 %v3459
        %5154 = vmatmul.bf16.gmra.mxu0 %v1390
        %v5155 = vpop.f32.mrf.mxu0
        %v5156 = vadd.f32 0.0, %v5155
        %v5157 = vpop.f32.mrf.mxu0
        %5158 = vdwg.mxu0
        %5159 = vmatpush.bf16.msra.mxu0 %v3699
        %5160 = vmatpush.bf16.msra.mxu0 %v3683
        %5161 = vmatpush.bf16.msra.mxu0 %v3667
        %5162 = vmatpush.bf16.msra.mxu0 %v3651
        %5163 = vmatpush.bf16.msra.mxu0 %v3635
        %5164 = vmatpush.bf16.msra.mxu0 %v3619
        %5165 = vmatpush.bf16.msra.mxu0 %v3603
        %5166 = vmatpush.bf16.msra.mxu0 %v3587
        %5167 = vmatmul.bf16.gmra.mxu0 %v1391
        %v5168 = vpop.f32.mrf.mxu0
        %v5169 = vadd.f32 %v5156, %v5168
        %v5170 = vpop.f32.mrf.mxu0
        %5171 = vdwg.mxu0
        %5172 = vmatpush.bf16.msra.mxu0 %v3827
        %5173 = vmatpush.bf16.msra.mxu0 %v3811
        %5174 = vmatpush.bf16.msra.mxu0 %v3795
        %5175 = vmatpush.bf16.msra.mxu0 %v3779
        %5176 = vmatpush.bf16.msra.mxu0 %v3763
        %5177 = vmatpush.bf16.msra.mxu0 %v3747
        %5178 = vmatpush.bf16.msra.mxu0 %v3731
        %5179 = vmatpush.bf16.msra.mxu0 %v3715
        %5180 = vmatmul.bf16.gmra.mxu0 %v1392
        %v5181 = vpop.f32.mrf.mxu0
        %v5182 = vadd.f32 %v5169, %v5181
        %v5183 = vpop.f32.mrf.mxu0
        %5184 = vdwg.mxu0
        %5185 = vmatpush.bf16.msra.mxu0 %v3955
        %5186 = vmatpush.bf16.msra.mxu0 %v3939
        %5187 = vmatpush.bf16.msra.mxu0 %v3923
        %5188 = vmatpush.bf16.msra.mxu0 %v3907
        %5189 = vmatpush.bf16.msra.mxu0 %v3891
        %5190 = vmatpush.bf16.msra.mxu0 %v3875
        %5191 = vmatpush.bf16.msra.mxu0 %v3859
        %5192 = vmatpush.bf16.msra.mxu0 %v3843
        %5193 = vmatmul.bf16.gmra.mxu0 %v1393
        %v5194 = vpop.f32.mrf.mxu0
        %v5195 = vadd.f32 %v5182, %v5194
        %v5196 = vpop.f32.mrf.mxu0
        %5197 = vdwg.mxu0
        %5198 = vmatpush.bf16.msra.mxu0 %v3572
        %5199 = vmatpush.bf16.msra.mxu0 %v3556
        %5200 = vmatpush.bf16.msra.mxu0 %v3540
        %5201 = vmatpush.bf16.msra.mxu0 %v3524
        %5202 = vmatpush.bf16.msra.mxu0 %v3508
        %5203 = vmatpush.bf16.msra.mxu0 %v3492
        %5204 = vmatpush.bf16.msra.mxu0 %v3476
        %5205 = vmatpush.bf16.msra.mxu0 %v3460
        %5206 = vmatmul.bf16.gmra.mxu0 %v1390
        %v5207 = vpop.f32.mrf.mxu0
        %v5208 = vadd.f32 0.0, %v5207
        %v5209 = vpop.f32.mrf.mxu0
        %5210 = vdwg.mxu0
        %5211 = vmatpush.bf16.msra.mxu0 %v3700
        %5212 = vmatpush.bf16.msra.mxu0 %v3684
        %5213 = vmatpush.bf16.msra.mxu0 %v3668
        %5214 = vmatpush.bf16.msra.mxu0 %v3652
        %5215 = vmatpush.bf16.msra.mxu0 %v3636
        %5216 = vmatpush.bf16.msra.mxu0 %v3620
        %5217 = vmatpush.bf16.msra.mxu0 %v3604
        %5218 = vmatpush.bf16.msra.mxu0 %v3588
        %5219 = vmatmul.bf16.gmra.mxu0 %v1391
        %v5220 = vpop.f32.mrf.mxu0
        %v5221 = vadd.f32 %v5208, %v5220
        %v5222 = vpop.f32.mrf.mxu0
        %5223 = vdwg.mxu0
        %5224 = vmatpush.bf16.msra.mxu0 %v3828
        %5225 = vmatpush.bf16.msra.mxu0 %v3812
        %5226 = vmatpush.bf16.msra.mxu0 %v3796
        %5227 = vmatpush.bf16.msra.mxu0 %v3780
        %5228 = vmatpush.bf16.msra.mxu0 %v3764
        %5229 = vmatpush.bf16.msra.mxu0 %v3748
        %5230 = vmatpush.bf16.msra.mxu0 %v3732
        %5231 = vmatpush.bf16.msra.mxu0 %v3716
        %5232 = vmatmul.bf16.gmra.mxu0 %v1392
        %v5233 = vpop.f32.mrf.mxu0
        %v5234 = vadd.f32 %v5221, %v5233
        %v5235 = vpop.f32.mrf.mxu0
        %5236 = vdwg.mxu0
        %5237 = vmatpush.bf16.msra.mxu0 %v3956
        %5238 = vmatpush.bf16.msra.mxu0 %v3940
        %5239 = vmatpush.bf16.msra.mxu0 %v3924
        %5240 = vmatpush.bf16.msra.mxu0 %v3908
        %5241 = vmatpush.bf16.msra.mxu0 %v3892
        %5242 = vmatpush.bf16.msra.mxu0 %v3876
        %5243 = vmatpush.bf16.msra.mxu0 %v3860
        %5244 = vmatpush.bf16.msra.mxu0 %v3844
        %5245 = vmatmul.bf16.gmra.mxu0 %v1393
        %v5246 = vpop.f32.mrf.mxu0
        %v5247 = vadd.f32 %v5234, %v5246
        %v5248 = vpop.f32.mrf.mxu0
        %5249 = vdwg.mxu0
        %5250 = vmatpush.bf16.msra.mxu0 %v3573
        %5251 = vmatpush.bf16.msra.mxu0 %v3557
        %5252 = vmatpush.bf16.msra.mxu0 %v3541
        %5253 = vmatpush.bf16.msra.mxu0 %v3525
        %5254 = vmatpush.bf16.msra.mxu0 %v3509
        %5255 = vmatpush.bf16.msra.mxu0 %v3493
        %5256 = vmatpush.bf16.msra.mxu0 %v3477
        %5257 = vmatpush.bf16.msra.mxu0 %v3461
        %5258 = vmatmul.bf16.gmra.mxu0 %v1390
        %v5259 = vpop.f32.mrf.mxu0
        %v5260 = vadd.f32 0.0, %v5259
        %v5261 = vpop.f32.mrf.mxu0
        %5262 = vdwg.mxu0
        %5263 = vmatpush.bf16.msra.mxu0 %v3701
        %5264 = vmatpush.bf16.msra.mxu0 %v3685
        %5265 = vmatpush.bf16.msra.mxu0 %v3669
        %5266 = vmatpush.bf16.msra.mxu0 %v3653
        %5267 = vmatpush.bf16.msra.mxu0 %v3637
        %5268 = vmatpush.bf16.msra.mxu0 %v3621
        %5269 = vmatpush.bf16.msra.mxu0 %v3605
        %5270 = vmatpush.bf16.msra.mxu0 %v3589
        %5271 = vmatmul.bf16.gmra.mxu0 %v1391
        %v5272 = vpop.f32.mrf.mxu0
        %v5273 = vadd.f32 %v5260, %v5272
        %v5274 = vpop.f32.mrf.mxu0
        %5275 = vdwg.mxu0
        %5276 = vmatpush.bf16.msra.mxu0 %v3829
        %5277 = vmatpush.bf16.msra.mxu0 %v3813
        %5278 = vmatpush.bf16.msra.mxu0 %v3797
        %5279 = vmatpush.bf16.msra.mxu0 %v3781
        %5280 = vmatpush.bf16.msra.mxu0 %v3765
        %5281 = vmatpush.bf16.msra.mxu0 %v3749
        %5282 = vmatpush.bf16.msra.mxu0 %v3733
        %5283 = vmatpush.bf16.msra.mxu0 %v3717
        %5284 = vmatmul.bf16.gmra.mxu0 %v1392
        %v5285 = vpop.f32.mrf.mxu0
        %v5286 = vadd.f32 %v5273, %v5285
        %v5287 = vpop.f32.mrf.mxu0
        %5288 = vdwg.mxu0
        %5289 = vmatpush.bf16.msra.mxu0 %v3957
        %5290 = vmatpush.bf16.msra.mxu0 %v3941
        %5291 = vmatpush.bf16.msra.mxu0 %v3925
        %5292 = vmatpush.bf16.msra.mxu0 %v3909
        %5293 = vmatpush.bf16.msra.mxu0 %v3893
        %5294 = vmatpush.bf16.msra.mxu0 %v3877
        %5295 = vmatpush.bf16.msra.mxu0 %v3861
        %5296 = vmatpush.bf16.msra.mxu0 %v3845
        %5297 = vmatmul.bf16.gmra.mxu0 %v1393
        %v5298 = vpop.f32.mrf.mxu0
        %v5299 = vadd.f32 %v5286, %v5298
        %v5300 = vpop.f32.mrf.mxu0
        %5301 = vdwg.mxu0
        %v5318 = vrot.slane %v4571, 6
        %v5319 = vrot.slane %v4623, 4
        %v5320 = vrot.slane %v4675, 2
        %v5321 = vrot.slane %v4779, 6
        %v5322 = vrot.slane %v4831, 4
        %v5323 = vrot.slane %v4883, 2
        %v5324 = vrot.slane %v4987, 6
        %v5325 = vrot.slane %v5039, 4
        %v5326 = vrot.slane %v5091, 2
        %v5327 = vrot.slane %v5195, 6
        %v5328 = vrot.slane %v5247, 4
        %v5329 = vrot.slane %v5299, 2
        %vm5330 = vcmask 1041408
        %v5331 = vsel %vm5330, %v4519, %v5318
        %vm5332 = vcmask 1045508
        %v5333 = vsel %vm5332, %v5319, %v5320
        %vm5334 = vcmask 1043456
        %v5335 = vsel %vm5334, %v5331, %v5333
        %v5336 = vsel %vm5330, %v4727, %v5321
        %v5337 = vsel %vm5332, %v5322, %v5323
        %v5338 = vsel %vm5334, %v5336, %v5337
        %v5339 = vsel %vm5330, %v4935, %v5324
        %v5340 = vsel %vm5332, %v5325, %v5326
        %v5341 = vsel %vm5334, %v5339, %v5340
        %v5342 = vsel %vm5330, %v5143, %v5327
        %v5343 = vsel %vm5332, %v5328, %v5329
        %v5344 = vsel %vm5334, %v5342, %v5343
        %v5349 = vadd.f32 %v1394, %v5335
        %v5350 = vadd.f32 %v1395, %v5338
        %v5351 = vadd.f32 %v1396, %v5341
        %v5352 = vadd.f32 %v1397, %v5344
        %5353 = vst [vmem:[#allocation2] sm:$0xff] %v5349
        %5354 = vst [vmem:[#allocation2 + $0x8] sm:$0xff] %v5350
        %5355 = vst [vmem:[#allocation2 + $0x10] sm:$0xff] %v5351
        %5356 = vst [vmem:[#allocation2 + $0x18] sm:$0xff] %v5352
        %p5357 = scmp.eq.s32.totalorder %s33, 7
        // Predicated region
        $region61: #{vgg_mid_forward.3} parent=39 // pred_check
          %p5358 = pneg %p5357
        $region62: #{vgg_mid_forward.3} parent=39 // pred_check_branch
          %5360 = sbr.rel (%p5358) target = $region64
        $region63: #{vgg_mid_forward.3} parent=39 // pred_region
          %v5361 = vld [vmem:[#allocation2] sm:$0xff]
          %v5362 = vld [vmem:[#allocation2 + $0x8] sm:$0xff]
          %v5363 = vld [vmem:[#allocation2 + $0x10] sm:$0xff]
          %v5364 = vld [vmem:[#allocation2 + $0x18] sm:$0xff]
          %v5365 = vld [vmem:[%s335] sm:$0xff]
          %v5366 = vld [vmem:[%s335 + $0x8] sm:$0xff]
          %v5369 = vperm.slane %v5365, 0
          %v5370 = vperm.slane %v5365, 1
          %v5371 = vperm.slane %v5365, 2
          %v5372 = vperm.slane %v5365, 3
          %v5373 = vperm.slane %v5365, 4
          %v5374 = vperm.slane %v5365, 5
          %v5375 = vperm.slane %v5365, 6
          %v5376 = vperm.slane %v5365, 7
          %v5377 = vperm.slane %v5366, 0
          %v5378 = vperm.slane %v5366, 1
          %v5379 = vperm.slane %v5366, 2
          %v5380 = vperm.slane %v5366, 3
          %v5381 = vperm.slane %v5366, 4
          %v5382 = vperm.slane %v5366, 5
          %v5383 = vperm.slane %v5366, 6
          %v5384 = vperm.slane %v5366, 7
          %v5385 = vrot.slane %v5370, 6
          %v5386 = vrot.slane %v5371, 4
          %v5387 = vrot.slane %v5372, 2
          %v5388 = vrot.slane %v5374, 6
          %v5389 = vrot.slane %v5375, 4
          %v5390 = vrot.slane %v5376, 2
          %v5391 = vrot.slane %v5378, 6
          %v5392 = vrot.slane %v5379, 4
          %v5393 = vrot.slane %v5380, 2
          %v5394 = vrot.slane %v5382, 6
          %v5395 = vrot.slane %v5383, 4
          %v5396 = vrot.slane %v5384, 2
          %v5397 = vsel %vm5330, %v5369, %v5385
          %v5398 = vsel %vm5332, %v5386, %v5387
          %v5399 = vsel %vm5334, %v5397, %v5398
          %v5400 = vsel %vm5330, %v5373, %v5388
          %v5401 = vsel %vm5332, %v5389, %v5390
          %v5402 = vsel %vm5334, %v5400, %v5401
          %v5403 = vsel %vm5330, %v5377, %v5391
          %v5404 = vsel %vm5332, %v5392, %v5393
          %v5405 = vsel %vm5334, %v5403, %v5404
          %v5406 = vsel %vm5330, %v5381, %v5394
          %v5407 = vsel %vm5332, %v5395, %v5396
          %v5408 = vsel %vm5334, %v5406, %v5407
          %v5413 = vadd.f32 %v5361, %v5399
          %v5414 = vadd.f32 %v5362, %v5402
          %v5415 = vadd.f32 %v5363, %v5405
          %v5416 = vadd.f32 %v5364, %v5408
          %v5417 = vmax.f32 %v5413, 0.0
          %v5418 = vmax.f32 %v5414, 0.0
          %v5419 = vmax.f32 %v5415, 0.0
          %v5420 = vmax.f32 %v5416, 0.0
          %5421 = vst [vmem:[%s377] sm:$0xff] %v5417
          %5422 = vst [vmem:[%s377 + $0x8] sm:$0xff] %v5418
          %5423 = vst [vmem:[%s377 + $0x10] sm:$0xff] %v5419
          %5424 = vst [vmem:[%s377 + $0x18] sm:$0xff] %v5420
        $region64: #{vgg_mid_forward.3} parent=39 // pred_fallthru
          _
        %s5425 = sand.u32 %s175, 1
        %s5426 = scalar_lea.sflag [#allocation5], %s5425
        %s5427 = sand.u32 %s175, 1
        %s5428 = smul.addr %s5427, 32
        %s5429 = scalar_lea.vmem [#allocation11], %s5428
        // Predicated region
        $region65: #{vgg_mid_forward.3} parent=39 // pred_check
          %p5430 = pneg %p185
        $region66: #{vgg_mid_forward.3} parent=39 // pred_check_branch
          %5432 = sbr.rel (%p5430) target = $region68
        $region67: #{vgg_mid_forward.3} parent=39 // pred_region
          %s5433 = smul.u32 16, %s32
          %5435 = vsyncadd %s5426, 0
          %s5436 = smul.addr %s5433, 2
          %s5437 = scalar_lea.hbm %s5, %s5436
          %s5439 = sshll.u32 %s5429, 4
          %s5440 = int_to_ptr.vmem [resolvable:$true] %s5439
          %s5441 = sshll.u32 %s5437, 4
          %s5442 = int_to_ptr.hbm [resolvable:$true] %s5441
          %5444 = dma.vmem_to_hbm [thread:$0]  %s5440, 512, %s5442, %s5426
        $region68: #{vgg_mid_forward.3} parent=39 // pred_fallthru
          _
      $region40: #{vgg_mid_forward.3} parent=5 // pred_fallthru
        _
      %p5445 = scmp.le.s32.totalorder 2, %s23
      // Predicated region
      $region69: #{vgg_mid_forward.3} parent=5 // pred_check
        %p5446 = pneg %p5445
      $region70: #{vgg_mid_forward.3} parent=5 // pred_check_branch
        %5448 = sbr.rel (%p5446) target = $region72
      $region71: #{vgg_mid_forward.3} parent=5 // pred_region
        %s5449 = ssub.s32 %s23, 2
        // Predicated region
        $region73: #{vgg_mid_forward.3} parent=71 // pred_check
          %p5450 = pneg %p191
        $region74: #{vgg_mid_forward.3} parent=71 // pred_check_branch
          %5452 = sbr.rel (%p5450) target = $region76
        $region75: #{vgg_mid_forward.3} parent=71 // pred_region
          %s5453 = sand.u32 %s176, 1
          %s5454 = scalar_lea.sflag [#allocation5], %s5453
          %s5455 = sand.u32 %s176, 1
          %s5456 = smul.addr %s5455, 32
          %s5457 = scalar_lea.vmem [#allocation11], %s5456
          %5459 = dma.done %s5454, 512
        $region76: #{vgg_mid_forward.3} parent=71 // pred_fallthru
          _
      $region72: #{vgg_mid_forward.3} parent=5 // pred_fallthru
        _
    $region6: #{vgg_mid_forward.3} parent=1 // loop_footer
      %s27 = sadd.s32 1, %s23
    $region7: #{vgg_mid_forward.3} parent=1 // loop_footer_branch
      %22 = sbr.rel target = $region3
    $region8: #{vgg_mid_forward.3} parent=1 // loop_exit
      _
    %5460 = vsyncpa [#allocation4], 1
    %s5461 = scalar_lea.sflag [#allocation4], 1
    %5462 = vsyncpa %s5461, 1
    %5463 = vsyncpa [#allocation7], 1
    %s5464 = scalar_lea.sflag [#allocation7], 1
    %5465 = vsyncpa %s5464, 1
    %5466 = vsyncpa [#allocation10], 1
    %s5467 = scalar_lea.sflag [#allocation10], 1
    %5468 = vsyncpa %s5467, 1
    %5469 = vsyncpa [#allocation5], 1
    %s5470 = scalar_lea.sflag [#allocation5], 1
    %5471 = vsyncpa %s5470, 1

</llo_original>
